<compile_context>
chip_gen: v5e
topology: v5e:2x2
jax: 0.10.0
libtpu: 0.0.40
codegen_flags: <defaults>
</compile_context>

<pallas_src>
import jax
import jax.numpy as jnp
from jax import lax
from jax.experimental import pallas as pl
from jax.experimental.pallas import tpu as pltpu


# ----------------------------------------------------------------------------
# In-kernel helpers (bf16 MXU operands, f32 accumulation).
# ----------------------------------------------------------------------------
def _mm(a, b):
    return jnp.dot(a.astype(jnp.bfloat16), b.astype(jnp.bfloat16),
                   preferred_element_type=jnp.float32)


def _scores(q, k):
    # (Bt,L,D) x (Bt,L,D) -> (Bt,Lq,Lk); rhs contracted on its last dim so the
    # MXU takes K transposed natively (no XLU vxpose).
    return lax.dot_general(q.astype(jnp.bfloat16), k.astype(jnp.bfloat16),
                           dimension_numbers=(((2,), (2,)), ((0,), (0,))),
                           preferred_element_type=jnp.float32)


def _context(p, v):
    # (Bt,Lq,Lk) x (Bt,Lk,D) -> (Bt,Lq,D)
    return lax.dot_general(p.astype(jnp.bfloat16), v.astype(jnp.bfloat16),
                           dimension_numbers=(((2,), (1,)), ((0,), (0,))),
                           preferred_element_type=jnp.float32)


def _softmax_lastdim(s):
    s = s - jnp.max(s, axis=-1, keepdims=True)
    p = jnp.exp(s)
    return p * pl.reciprocal(jnp.sum(p, axis=-1, keepdims=True), approx=True)


def _encoder_layer(x, wq, wk, wv, w1, b1, w2, b2, mask):
    """Self-attention + (optional CDM mask) + position-wise FFN on bf16 (Bt,L,D)."""
    Bt, L, D = x.shape
    xf = x.reshape(Bt * L, D)                                   # bf16
    q = _mm(xf, wq).astype(jnp.bfloat16).reshape(Bt, L, D)      # scale folded in wq
    k = _mm(xf, wk).astype(jnp.bfloat16).reshape(Bt, L, D)
    v = _mm(xf, wv).astype(jnp.bfloat16).reshape(Bt, L, D)

    s = _scores(q, k)                                           # (Bt,L,L) f32
    p = _softmax_lastdim(s).astype(jnp.bfloat16)
    ctx = _context(p, v)                                        # (Bt,L,D) f32

    if mask is not None:                                        # CDM, local branch
        ctx = ctx * mask

    cf = ctx.astype(jnp.bfloat16).reshape(Bt * L, D)
    h = jnp.maximum(_mm(cf, w1) + b1, 0.0).astype(jnp.bfloat16)
    out = (_mm(h, w2) + b2).astype(jnp.bfloat16)
    return out.reshape(Bt, L, D)


# ----------------------------------------------------------------------------
# Fused forward kernel: both encoder branches + fusion + pooler + classifier.
# ----------------------------------------------------------------------------
def _make_kernel(n_layers, Bt, L, D):
    def kernel(lo_ref, hi_ref,                       # (Bt,1,1) int32
               xg_ref, xl_ref,                       # (Bt,L,D) bf16
               g_wq, g_wk, g_wv, g_w1, g_b1, g_w2, g_b2,
               l_wq, l_wk, l_wv, l_w1, l_b1, l_w2, l_b2,
               h_wg, h_wl, h_bf, h_wq, h_wk, h_wv, h_wp, h_bp, h_wd, h_bd,
               o_ref):
        # --- CDM mask: one broadcasted compare, (Bt,L,1) f32 -----------------
        pos = lax.broadcasted_iota(jnp.int32, (Bt, L, 1), 1)
        local_mask = ((pos >= lo_ref[...]) & (pos < hi_ref[...])).astype(jnp.float32)

        hg = xg_ref[...]                             # bf16
        hl = xl_ref[...]

        # --- global branch (no mask) -----------------------------------------
        for li in range(n_layers):
            hg = _encoder_layer(hg, g_wq[li], g_wk[li], g_wv[li],
                                g_w1[li], g_b1[li], g_w2[li], g_b2[li], mask=None)

        # --- local branch (CDM-masked context) -------------------------------
        for li in range(n_layers):
            hl = _encoder_layer(hl, l_wq[li], l_wk[li], l_wv[li],
                                l_w1[li], l_b1[li], l_w2[li], l_b2[li],
                                mask=local_mask)

        # --- hierarchical fusion: two MXU pushes summed (no lane concat) -----
        hgf = hg.reshape(Bt * L, D)
        hlf = hl.reshape(Bt * L, D)
        h = _mm(hgf, h_wg[...]) + _mm(hlf, h_wl[...]) + h_bf[...]   # f32
        hb = h.astype(jnp.bfloat16)
        h3 = hb.reshape(Bt, L, D)

        # --- fused self-attention: only the first-token (pooler) row ---------
        k = _mm(hb, h_wk[...]).astype(jnp.bfloat16).reshape(Bt, L, D)
        v = _mm(hb, h_wv[...]).astype(jnp.bfloat16).reshape(Bt, L, D)
        q0 = _mm(h3[:, 0:1, :].reshape(Bt, D), h_wq[...])
        q0 = q0.astype(jnp.bfloat16).reshape(Bt, 1, D)

        s = _scores(q0, k)                            # (Bt,1,L); scale in h_wq
        p = _softmax_lastdim(s).astype(jnp.bfloat16)
        ctx0 = _context(p, v).reshape(Bt, D)          # f32

        # --- pooler + polarity classifier (lane-dense padded logits) ---------
        pooled = jnp.tanh(_mm(ctx0.astype(jnp.bfloat16), h_wp[...]) + h_bp[...])
        logits = _mm(pooled.astype(jnp.bfloat16), h_wd[...]) + h_bd[...]
        o_ref[...] = logits[:, None, :]

    return kernel


# ----------------------------------------------------------------------------
# Grid / spec selection.
# ----------------------------------------------------------------------------
def _pick_batch_block(B, L, rows_target=256):
    """Single fat grid step unless a 2-TC chip can get >=2 fat blocks per core.

    v5e/v6e have one TensorCore, so extra grid steps are pure serialization;
    v7x (2 TCs) only wins from splitting when each core gets >= 2 blocks that
    each carry >= ~256 flattened rows (otherwise the activation DMA is exposed
    and weight residency is amortized over a single step).
    """
    bt_min = max(1, -(-rows_target // L))            # ceil(rows_target / L)
    if B <= 4 * bt_min:
        return B                                     # grid=(1,)
    for bt in range(bt_min, B + 1):
        nb = B // bt
        if B % bt == 0 and nb % 2 == 0 and nb >= 4:
            return bt
    return B


def _const_spec(arr, pipeline_mode):
    nd = arr.ndim
    idx = lambda b: (0,) * nd
    if pipeline_mode is None:
        return pl.BlockSpec(arr.shape, idx)
    return pl.BlockSpec(arr.shape, idx, pipeline_mode=pipeline_mode)


def _vmem_limit_bytes(weights, Bt, L, D, H):
    w_bytes = sum(int(w.size) * w.dtype.itemsize for w in weights)
    act_bytes = 2 * 2 * (Bt * L * D * 2)                   # xg/xl bf16, 2 bufs
    act_bytes += Bt * L * (6 * D + 2 * H + 2 * L) * 4      # f32 working set
    total = 2 * w_bytes + act_bytes                        # worst case: 2x buffered
    return int(min(64 * 2 ** 20, max(32 * 2 ** 20, 2 * total)))


_WEIGHT_ORDER = (
    "g_wq", "g_wk", "g_wv", "g_w1", "g_b1", "g_w2", "g_b2",
    "l_wq", "l_wk", "l_wv", "l_w1", "l_b1", "l_w2", "l_b2",
    "h_wg", "h_wl", "h_bf", "h_wq", "h_wk", "h_wv", "h_wp", "h_bp", "h_wd", "h_bd",
)


def hlcf_glove_forward(xg_emb, xl_emb, asp_lo, asp_hi, packed,
                       *, n_layers, n_classes):
    B, L, D = xg_emb.shape                    # D already padded to a mult of 128
    H = packed["g_w1"].shape[-1]
    P_pad = packed["h_wd"].shape[-1]
    Bt = _pick_batch_block(B, L)
    n_blocks = B // Bt

    kernel = _make_kernel(n_layers, Bt, L, D)
    weights = [packed[name] for name in _WEIGHT_ORDER]

    seq_spec = pl.BlockSpec((Bt, L, D), lambda b: (b, 0, 0))
    asp_spec = pl.BlockSpec((Bt, 1, 1), lambda b: (b, 0, 0))
    out_spec = pl.BlockSpec((Bt, 1, P_pad), lambda b: (b, 0, 0))
    vmem_limit = _vmem_limit_bytes(weights, Bt, L, D, H)

    def build(weight_pipeline_mode):
        w_specs = [_const_spec(w, weight_pipeline_mode) for w in weights]
        return pl.pallas_call(
            kernel,
            out_shape=jax.ShapeDtypeStruct((B, 1, P_pad), jnp.float32),
            grid_spec=pltpu.PrefetchScalarGridSpec(
                num_scalar_prefetch=0,
                grid=(n_blocks,),
                in_specs=[asp_spec, asp_spec, seq_spec, seq_spec] + w_specs,
                out_specs=out_spec),
            compiler_params=pltpu.CompilerParams(
                dimension_semantics=("parallel",),
                vmem_limit_bytes=vmem_limit),
        )

    try:
        # Constant-index weights: single-buffered (their index_map never moves).
        out = build(pl.Buffered(1))(asp_lo, asp_hi, xg_emb, xl_emb, *weights)
        out = jax.block_until_ready(out)
    except Exception:
        # Fallback if this jax build rejects pipeline_mode=Buffered(1) on
        # top-level pallas_call BlockSpecs (default double-buffering instead).
        out = build(None)(asp_lo, asp_hi, xg_emb, xl_emb, *weights)
        out = jax.block_until_ready(out)

    return out[:, 0, :n_classes]              # (B, P)


# ----------------------------------------------------------------------------
# Parameter initialization (deterministic, synthetic) + tile-friendly packing.
# ----------------------------------------------------------------------------
def _init_layer(key, D, H, scale=0.08):
    ks = jax.random.split(key, 5)
    return {
        "wq": jax.random.normal(ks[0], (D, D), jnp.float32) * scale,
        "wk": jax.random.normal(ks[1], (D, D), jnp.float32) * scale,
        "wv": jax.random.normal(ks[2], (D, D), jnp.float32) * scale,
        "w1": jax.random.normal(ks[3], (D, H), jnp.float32) * scale,
        "b1": jnp.zeros((1, H), jnp.float32),
        "w2": jax.random.normal(ks[4], (H, D), jnp.float32) * scale,
        "b2": jnp.zeros((1, D), jnp.float32),
    }


def init_params(key, D, H, P, n_layers=2, scale=0.08):
    keys = jax.random.split(key, 2 * n_layers + 1)
    params = {
        "global_layers": [_init_layer(keys[i], D, H, scale)
                          for i in range(n_layers)],
        "local_layers": [_init_layer(keys[n_layers + i], D, H, scale)
                         for i in range(n_layers)],
    }
    hk = jax.random.split(keys[-1], 7)
    params["head"] = {
        "wg": jax.random.normal(hk[0], (D, D), jnp.float32) * scale,
        "wl": jax.random.normal(hk[1], (D, D), jnp.float32) * scale,
        "bf": jnp.zeros((1, D), jnp.float32),
        "wq": jax.random.normal(hk[2], (D, D), jnp.float32) * scale,
        "wk": jax.random.normal(hk[3], (D, D), jnp.float32) * scale,
        "wv": jax.random.normal(hk[4], (D, D), jnp.float32) * scale,
        "wp": jax.random.normal(hk[5], (D, D), jnp.float32) * scale,
        "bp": jnp.zeros((1, D), jnp.float32),
        "wd": jax.random.normal(hk[6], (D, P), jnp.float32) * scale,
        "bd": jnp.zeros((1, P), jnp.float32),
    }
    return params


def _round_up(n, m):
    return ((n + m - 1) // m) * m


def _pad2(w, rows, cols, dtype):
    out = jnp.zeros((rows, cols), dtype)
    return out.at[: w.shape[0], : w.shape[1]].set(w.astype(dtype))


def pack_params(params):
    """Stack per-layer weights, zero-pad D/H/P to lane-dense multiples of 128,
    cast matmul operands to bf16, fold 1/sqrt(D) into every Wq."""
    g, l, h = params["global_layers"], params["local_layers"], params["head"]
    D = h["wq"].shape[0]
    H = g[0]["w1"].shape[1]
    P = h["wd"].shape[1]
    D_pad = max(128, _round_up(D, 128))
    H_pad = max(128, _round_up(H, 128))
    P_pad = max(128, _round_up(P, 128))
    scale = 1.0 / float(D) ** 0.5              # folded into wq (original D)

    def stack_w(layers, name, r, c, mult=1.0):
        return jnp.stack([_pad2(lyr[name] * mult, r, c, jnp.bfloat16)
                          for lyr in layers])

    def stack_b(layers, name, c):
        return jnp.stack([_pad2(lyr[name], 1, c, jnp.float32) for lyr in layers])

    packed = {
        "g_wq": stack_w(g, "wq", D_pad, D_pad, scale),
        "g_wk": stack_w(g, "wk", D_pad, D_pad),
        "g_wv": stack_w(g, "wv", D_pad, D_pad),
        "g_w1": stack_w(g, "w1", D_pad, H_pad),
        "g_b1": stack_b(g, "b1", H_pad),
        "g_w2": stack_w(g, "w2", H_pad, D_pad),
        "g_b2": stack_b(g, "b2", D_pad),
        "l_wq": stack_w(l, "wq", D_pad, D_pad, scale),
        "l_wk": stack_w(l, "wk", D_pad, D_pad),
        "l_wv": stack_w(l, "wv", D_pad, D_pad),
        "l_w1": stack_w(l, "w1", D_pad, H_pad),
        "l_b1": stack_b(l, "b1", H_pad),
        "l_w2": stack_w(l, "w2", H_pad, D_pad),
        "l_b2": stack_b(l, "b2", D_pad),
        "h_wg": _pad2(h["wg"], D_pad, D_pad, jnp.bfloat16),
        "h_wl": _pad2(h["wl"], D_pad, D_pad, jnp.bfloat16),
        "h_bf": _pad2(h["bf"], 1, D_pad, jnp.float32),
        "h_wq": _pad2(h["wq"] * scale, D_pad, D_pad, jnp.bfloat16),
        "h_wk": _pad2(h["wk"], D_pad, D_pad, jnp.bfloat16),
        "h_wv": _pad2(h["wv"], D_pad, D_pad, jnp.bfloat16),
        "h_wp": _pad2(h["wp"], D_pad, D_pad, jnp.bfloat16),
        "h_bp": _pad2(h["bp"], 1, D_pad, jnp.float32),
        "h_wd": _pad2(h["wd"], D_pad, P_pad, jnp.bfloat16),
        "h_bd": _pad2(h["bd"], 1, P_pad, jnp.float32),
    }
    return packed, P, D_pad


class HLCFGlove:
    """JAX/Pallas re-implementation of HLCF_GLOVE's forward pass."""

    def __init__(self, embedding_matrix, params, srd=3):
        self.srd = srd
        self.n_layers = len(params["global_layers"])
        self.packed, self.n_classes, self.d_pad = pack_params(params)
        V, D = embedding_matrix.shape
        emb = jnp.zeros((V, self.d_pad), jnp.bfloat16)
        self.embedding_matrix = emb.at[:, :D].set(
            embedding_matrix.astype(jnp.bfloat16))

    def __call__(self, inputs):
        text_global_indices, text_local_indices, asp_begin, asp_len = inputs
        # TODO(synk): embedding row-gather stays in plain JAX (no rectangular
        # BlockSpec tile); lane-dense padded bf16 rows keep the DMA cheap.
        xg = jnp.take(self.embedding_matrix, text_global_indices, axis=0)
        xl = jnp.take(self.embedding_matrix, text_local_indices, axis=0)
        asp_begin = asp_begin.astype(jnp.int32)
        asp_len = asp_len.astype(jnp.int32)
        lo = (asp_begin - self.srd).reshape(-1, 1, 1)
        hi = (asp_begin + asp_len + self.srd).reshape(-1, 1, 1)
        return hlcf_glove_forward(xg, xl, lo, hi, self.packed,
                                  n_layers=self.n_layers,
                                  n_classes=self.n_classes)


if __name__ == "__main__":
    B, L, D, H, V, P = 2, 16, 32, 64, 50, 3

    key = jax.random.PRNGKey(0)
    k_emb, k_par, k_txt = jax.random.split(key, 3)

    embedding_matrix = jax.random.normal(k_emb, (V, D), jnp.float32) * 0.1
    params = init_params(k_par, D, H, P, n_layers=2)

    text_global_indices = jax.random.randint(k_txt, (B, L), 1, V, dtype=jnp.int32)
    text_local_indices = text_global_indices
    asp_begin = jnp.array([2, 4], dtype=jnp.int32)
    asp_len = jnp.array([3, 2], dtype=jnp.int32)

    model = HLCFGlove(embedding_matrix, params, srd=3)
    logits = model((text_global_indices, text_local_indices, asp_begin, asp_len))
    logits = jax.block_until_ready(logits)

    assert logits.shape == (B, P), logits.shape
    assert bool(jnp.all(jnp.isfinite(logits)))
    print("KERNEL_OK")
</pallas_src>

<mosaic_0001>
module attributes {stable_mosaic.version = 11 : i64} {
  func.func @kernel(%arg0: i32, %arg1: memref<2x1x1xi32, #tpu.memory_space<vmem>>, %arg2: memref<2x1x1xi32, #tpu.memory_space<vmem>>, %arg3: memref<2x16x128xbf16, #tpu.memory_space<vmem>>, %arg4: memref<2x16x128xbf16, #tpu.memory_space<vmem>>, %arg5: memref<2x128x128xbf16, #tpu.memory_space<vmem>>, %arg6: memref<2x128x128xbf16, #tpu.memory_space<vmem>>, %arg7: memref<2x128x128xbf16, #tpu.memory_space<vmem>>, %arg8: memref<2x128x128xbf16, #tpu.memory_space<vmem>>, %arg9: memref<2x1x128xf32, #tpu.memory_space<vmem>>, %arg10: memref<2x128x128xbf16, #tpu.memory_space<vmem>>, %arg11: memref<2x1x128xf32, #tpu.memory_space<vmem>>, %arg12: memref<2x128x128xbf16, #tpu.memory_space<vmem>>, %arg13: memref<2x128x128xbf16, #tpu.memory_space<vmem>>, %arg14: memref<2x128x128xbf16, #tpu.memory_space<vmem>>, %arg15: memref<2x128x128xbf16, #tpu.memory_space<vmem>>, %arg16: memref<2x1x128xf32, #tpu.memory_space<vmem>>, %arg17: memref<2x128x128xbf16, #tpu.memory_space<vmem>>, %arg18: memref<2x1x128xf32, #tpu.memory_space<vmem>>, %arg19: memref<128x128xbf16, #tpu.memory_space<vmem>>, %arg20: memref<128x128xbf16, #tpu.memory_space<vmem>>, %arg21: memref<1x128xf32, #tpu.memory_space<vmem>>, %arg22: memref<128x128xbf16, #tpu.memory_space<vmem>>, %arg23: memref<128x128xbf16, #tpu.memory_space<vmem>>, %arg24: memref<128x128xbf16, #tpu.memory_space<vmem>>, %arg25: memref<128x128xbf16, #tpu.memory_space<vmem>>, %arg26: memref<1x128xf32, #tpu.memory_space<vmem>>, %arg27: memref<128x128xbf16, #tpu.memory_space<vmem>>, %arg28: memref<1x128xf32, #tpu.memory_space<vmem>>, %arg29: memref<2x1x128xf32, #tpu.memory_space<vmem>>) attributes {dimension_semantics = [#tpu.dimension_semantics<parallel>], iteration_bounds = array<i64: 1>, scalar_prefetch = 0 : i64, scratch_operands = 0 : i64, tpu.core_type = #tpu.core_type<tc>, window_params = [{transform_indices = @transform_0, window_bounds = array<i64: 2, 1, 1>}, {transform_indices = @transform_1, window_bounds = array<i64: 2, 1, 1>}, {transform_indices = @transform_2, window_bounds = array<i64: 2, 16, 128>}, {transform_indices = @transform_3, window_bounds = array<i64: 2, 16, 128>}, {pipeline_mode = #tpu.pipeline_mode<synchronous>, transform_indices = @transform_4, window_bounds = array<i64: 2, 128, 128>}, {pipeline_mode = #tpu.pipeline_mode<synchronous>, transform_indices = @transform_5, window_bounds = array<i64: 2, 128, 128>}, {pipeline_mode = #tpu.pipeline_mode<synchronous>, transform_indices = @transform_6, window_bounds = array<i64: 2, 128, 128>}, {pipeline_mode = #tpu.pipeline_mode<synchronous>, transform_indices = @transform_7, window_bounds = array<i64: 2, 128, 128>}, {pipeline_mode = #tpu.pipeline_mode<synchronous>, transform_indices = @transform_8, window_bounds = array<i64: 2, 1, 128>}, {pipeline_mode = #tpu.pipeline_mode<synchronous>, transform_indices = @transform_9, window_bounds = array<i64: 2, 128, 128>}, {pipeline_mode = #tpu.pipeline_mode<synchronous>, transform_indices = @transform_10, window_bounds = array<i64: 2, 1, 128>}, {pipeline_mode = #tpu.pipeline_mode<synchronous>, transform_indices = @transform_11, window_bounds = array<i64: 2, 128, 128>}, {pipeline_mode = #tpu.pipeline_mode<synchronous>, transform_indices = @transform_12, window_bounds = array<i64: 2, 128, 128>}, {pipeline_mode = #tpu.pipeline_mode<synchronous>, transform_indices = @transform_13, window_bounds = array<i64: 2, 128, 128>}, {pipeline_mode = #tpu.pipeline_mode<synchronous>, transform_indices = @transform_14, window_bounds = array<i64: 2, 128, 128>}, {pipeline_mode = #tpu.pipeline_mode<synchronous>, transform_indices = @transform_15, window_bounds = array<i64: 2, 1, 128>}, {pipeline_mode = #tpu.pipeline_mode<synchronous>, transform_indices = @transform_16, window_bounds = array<i64: 2, 128, 128>}, {pipeline_mode = #tpu.pipeline_mode<synchronous>, transform_indices = @transform_17, window_bounds = array<i64: 2, 1, 128>}, {pipeline_mode = #tpu.pipeline_mode<synchronous>, transform_indices = @transform_18, window_bounds = array<i64: 128, 128>}, {pipeline_mode = #tpu.pipeline_mode<synchronous>, transform_indices = @transform_19, window_bounds = array<i64: 128, 128>}, {pipeline_mode = #tpu.pipeline_mode<synchronous>, transform_indices = @transform_20, window_bounds = array<i64: 1, 128>}, {pipeline_mode = #tpu.pipeline_mode<synchronous>, transform_indices = @transform_21, window_bounds = array<i64: 128, 128>}, {pipeline_mode = #tpu.pipeline_mode<synchronous>, transform_indices = @transform_22, window_bounds = array<i64: 128, 128>}, {pipeline_mode = #tpu.pipeline_mode<synchronous>, transform_indices = @transform_23, window_bounds = array<i64: 128, 128>}, {pipeline_mode = #tpu.pipeline_mode<synchronous>, transform_indices = @transform_24, window_bounds = array<i64: 128, 128>}, {pipeline_mode = #tpu.pipeline_mode<synchronous>, transform_indices = @transform_25, window_bounds = array<i64: 1, 128>}, {pipeline_mode = #tpu.pipeline_mode<synchronous>, transform_indices = @transform_26, window_bounds = array<i64: 128, 128>}, {pipeline_mode = #tpu.pipeline_mode<synchronous>, transform_indices = @transform_27, window_bounds = array<i64: 1, 128>}, {transform_indices = @transform_28, window_bounds = array<i64: 2, 1, 128>}]} {
    %0 = tpu.iota {dimensions = array<i32: 1>} : vector<2x16x1xi32>
    %c0 = arith.constant 0 : index
    %c0_0 = arith.constant 0 : index
    %c0_1 = arith.constant 0 : index
    %1 = vector.load %arg1[%c0, %c0_0, %c0_1] : memref<2x1x1xi32, #tpu.memory_space<vmem>>, vector<2x1x1xi32>
    %2 = vector.broadcast %1 : vector<2x1x1xi32> to vector<2x16x1xi32>
    %3 = arith.cmpi sge, %0, %2 : vector<2x16x1xi32>
    %c0_2 = arith.constant 0 : index
    %c0_3 = arith.constant 0 : index
    %c0_4 = arith.constant 0 : index
    %4 = vector.load %arg2[%c0_2, %c0_3, %c0_4] : memref<2x1x1xi32, #tpu.memory_space<vmem>>, vector<2x1x1xi32>
    %5 = vector.broadcast %4 : vector<2x1x1xi32> to vector<2x16x1xi32>
    %6 = arith.cmpi slt, %0, %5 : vector<2x16x1xi32>
    %7 = arith.andi %3, %6 : vector<2x16x1xi1>
    %8 = arith.extui %7 : vector<2x16x1xi1> to vector<2x16x1xi32>
    %9 = arith.sitofp %8 : vector<2x16x1xi32> to vector<2x16x1xf32>
    %c0_5 = arith.constant 0 : index
    %c0_6 = arith.constant 0 : index
    %c0_7 = arith.constant 0 : index
    %10 = vector.load %arg3[%c0_5, %c0_6, %c0_7] : memref<2x16x128xbf16, #tpu.memory_space<vmem>>, vector<2x16x128xbf16>
    %c0_8 = arith.constant 0 : index
    %c0_9 = arith.constant 0 : index
    %c0_10 = arith.constant 0 : index
    %11 = vector.load %arg4[%c0_8, %c0_9, %c0_10] : memref<2x16x128xbf16, #tpu.memory_space<vmem>>, vector<2x16x128xbf16>
    %c0_11 = arith.constant 0 : index
    %c0_12 = arith.constant 0 : index
    %c0_13 = arith.constant 0 : index
    %12 = vector.load %arg5[%c0_11, %c0_12, %c0_13] : memref<2x128x128xbf16, #tpu.memory_space<vmem>>, vector<1x128x128xbf16>
    %13 = vector.shape_cast %12 : vector<1x128x128xbf16> to vector<128x128xbf16>
    %c0_14 = arith.constant 0 : index
    %c0_15 = arith.constant 0 : index
    %c0_16 = arith.constant 0 : index
    %14 = vector.load %arg6[%c0_14, %c0_15, %c0_16] : memref<2x128x128xbf16, #tpu.memory_space<vmem>>, vector<1x128x128xbf16>
    %15 = vector.shape_cast %14 : vector<1x128x128xbf16> to vector<128x128xbf16>
    %c0_17 = arith.constant 0 : index
    %c0_18 = arith.constant 0 : index
    %c0_19 = arith.constant 0 : index
    %16 = vector.load %arg7[%c0_17, %c0_18, %c0_19] : memref<2x128x128xbf16, #tpu.memory_space<vmem>>, vector<1x128x128xbf16>
    %17 = vector.shape_cast %16 : vector<1x128x128xbf16> to vector<128x128xbf16>
    %c0_20 = arith.constant 0 : index
    %c0_21 = arith.constant 0 : index
    %c0_22 = arith.constant 0 : index
    %18 = vector.load %arg8[%c0_20, %c0_21, %c0_22] : memref<2x128x128xbf16, #tpu.memory_space<vmem>>, vector<1x128x128xbf16>
    %19 = vector.shape_cast %18 : vector<1x128x128xbf16> to vector<128x128xbf16>
    %c0_23 = arith.constant 0 : index
    %c0_24 = arith.constant 0 : index
    %c0_25 = arith.constant 0 : index
    %20 = vector.load %arg9[%c0_23, %c0_24, %c0_25] : memref<2x1x128xf32, #tpu.memory_space<vmem>>, vector<1x1x128xf32>
    %21 = vector.shape_cast %20 : vector<1x1x128xf32> to vector<1x128xf32>
    %c0_26 = arith.constant 0 : index
    %c0_27 = arith.constant 0 : index
    %c0_28 = arith.constant 0 : index
    %22 = vector.load %arg10[%c0_26, %c0_27, %c0_28] : memref<2x128x128xbf16, #tpu.memory_space<vmem>>, vector<1x128x128xbf16>
    %23 = vector.shape_cast %22 : vector<1x128x128xbf16> to vector<128x128xbf16>
    %c0_29 = arith.constant 0 : index
    %c0_30 = arith.constant 0 : index
    %c0_31 = arith.constant 0 : index
    %24 = vector.load %arg11[%c0_29, %c0_30, %c0_31] : memref<2x1x128xf32, #tpu.memory_space<vmem>>, vector<1x1x128xf32>
    %25 = vector.shape_cast %24 : vector<1x1x128xf32> to vector<1x128xf32>
    %26 = vector.shape_cast %10 : vector<2x16x128xbf16> to vector<32x128xbf16>
    %cst = arith.constant dense<0.000000e+00> : vector<32x128xf32>
    %27 = tpu.matmul %26, %13, %cst {dimension_numbers = #tpu.dot_dimension_numbers<[1], [0], [0], [1], [0, 0, 1, 1], [], []>} : vector<32x128xbf16>, vector<128x128xbf16>, vector<32x128xf32> -> vector<32x128xf32>
    %28 = arith.truncf %27 : vector<32x128xf32> to vector<32x128xbf16>
    %29 = vector.shape_cast %28 : vector<32x128xbf16> to vector<2x16x128xbf16>
    %cst_32 = arith.constant dense<0.000000e+00> : vector<32x128xf32>
    %30 = tpu.matmul %26, %15, %cst_32 {dimension_numbers = #tpu.dot_dimension_numbers<[1], [0], [0], [1], [0, 0, 1, 1], [], []>} : vector<32x128xbf16>, vector<128x128xbf16>, vector<32x128xf32> -> vector<32x128xf32>
    %31 = arith.truncf %30 : vector<32x128xf32> to vector<32x128xbf16>
    %32 = vector.shape_cast %31 : vector<32x128xbf16> to vector<2x16x128xbf16>
    %cst_33 = arith.constant dense<0.000000e+00> : vector<32x128xf32>
    %33 = tpu.matmul %26, %17, %cst_33 {dimension_numbers = #tpu.dot_dimension_numbers<[1], [0], [0], [1], [0, 0, 1, 1], [], []>} : vector<32x128xbf16>, vector<128x128xbf16>, vector<32x128xf32> -> vector<32x128xf32>
    %34 = arith.truncf %33 : vector<32x128xf32> to vector<32x128xbf16>
    %35 = vector.shape_cast %34 : vector<32x128xbf16> to vector<2x16x128xbf16>
    %cst_34 = arith.constant dense<0.000000e+00> : vector<2x16x16xf32>
    %36 = tpu.matmul %29, %32, %cst_34 {dimension_numbers = #tpu.dot_dimension_numbers<[2], [2], [1], [1], [0, 0, 0, 1, 1, 1], [0], [0]>} : vector<2x16x128xbf16>, vector<2x16x128xbf16>, vector<2x16x16xf32> -> vector<2x16x16xf32>
    %cst_35 = arith.constant dense<0xFF800000> : vector<2x16xf32>
    %37 = vector.multi_reduction <maximumf>, %36, %cst_35 [2] : vector<2x16x16xf32> to vector<2x16xf32>
    %38 = vector.shape_cast %37 : vector<2x16xf32> to vector<2x16x1xf32>
    %39 = vector.broadcast %38 : vector<2x16x1xf32> to vector<2x16x16xf32>
    %40 = arith.subf %36, %39 : vector<2x16x16xf32>
    %41 = math.exp %40 : vector<2x16x16xf32>
    %cst_36 = arith.constant dense<0.000000e+00> : vector<2x16xf32>
    %42 = vector.multi_reduction <add>, %41, %cst_36 [2] : vector<2x16x16xf32> to vector<2x16xf32>
    %43 = vector.shape_cast %42 : vector<2x16xf32> to vector<2x16x1xf32>
    %44 = tpu.reciprocal %43 {approx = true} : vector<2x16x1xf32> -> vector<2x16x1xf32>
    %45 = vector.broadcast %44 : vector<2x16x1xf32> to vector<2x16x16xf32>
    %46 = arith.mulf %41, %45 : vector<2x16x16xf32>
    %47 = arith.truncf %46 : vector<2x16x16xf32> to vector<2x16x16xbf16>
    %cst_37 = arith.constant dense<0.000000e+00> : vector<2x16x128xf32>
    %48 = tpu.matmul %47, %35, %cst_37 {dimension_numbers = #tpu.dot_dimension_numbers<[2], [1], [1], [2], [0, 0, 0, 1, 1, 2], [0], [0]>} : vector<2x16x16xbf16>, vector<2x16x128xbf16>, vector<2x16x128xf32> -> vector<2x16x128xf32>
    %49 = arith.truncf %48 : vector<2x16x128xf32> to vector<2x16x128xbf16>
    %50 = vector.shape_cast %49 : vector<2x16x128xbf16> to vector<32x128xbf16>
    %cst_38 = arith.constant dense<0.000000e+00> : vector<32x128xf32>
    %51 = tpu.matmul %50, %19, %cst_38 {dimension_numbers = #tpu.dot_dimension_numbers<[1], [0], [0], [1], [0, 0, 1, 1], [], []>} : vector<32x128xbf16>, vector<128x128xbf16>, vector<32x128xf32> -> vector<32x128xf32>
    %52 = vector.broadcast %21 : vector<1x128xf32> to vector<32x128xf32>
    %53 = arith.addf %51, %52 : vector<32x128xf32>
    %cst_39 = arith.constant 0.000000e+00 : f32
    %54 = vector.broadcast %cst_39 : f32 to vector<32x128xf32>
    %55 = arith.maximumf %53, %54 : vector<32x128xf32>
    %56 = arith.truncf %55 : vector<32x128xf32> to vector<32x128xbf16>
    %cst_40 = arith.constant dense<0.000000e+00> : vector<32x128xf32>
    %57 = tpu.matmul %56, %23, %cst_40 {dimension_numbers = #tpu.dot_dimension_numbers<[1], [0], [0], [1], [0, 0, 1, 1], [], []>} : vector<32x128xbf16>, vector<128x128xbf16>, vector<32x128xf32> -> vector<32x128xf32>
    %58 = vector.broadcast %25 : vector<1x128xf32> to vector<32x128xf32>
    %59 = arith.addf %57, %58 : vector<32x128xf32>
    %60 = arith.truncf %59 : vector<32x128xf32> to vector<32x128xbf16>
    %61 = vector.shape_cast %60 : vector<32x128xbf16> to vector<2x16x128xbf16>
    %c1 = arith.constant 1 : index
    %c0_41 = arith.constant 0 : index
    %c0_42 = arith.constant 0 : index
    %62 = vector.load %arg5[%c1, %c0_41, %c0_42] : memref<2x128x128xbf16, #tpu.memory_space<vmem>>, vector<1x128x128xbf16>
    %63 = vector.shape_cast %62 : vector<1x128x128xbf16> to vector<128x128xbf16>
    %c1_43 = arith.constant 1 : index
    %c0_44 = arith.constant 0 : index
    %c0_45 = arith.constant 0 : index
    %64 = vector.load %arg6[%c1_43, %c0_44, %c0_45] : memref<2x128x128xbf16, #tpu.memory_space<vmem>>, vector<1x128x128xbf16>
    %65 = vector.shape_cast %64 : vector<1x128x128xbf16> to vector<128x128xbf16>
    %c1_46 = arith.constant 1 : index
    %c0_47 = arith.constant 0 : index
    %c0_48 = arith.constant 0 : index
    %66 = vector.load %arg7[%c1_46, %c0_47, %c0_48] : memref<2x128x128xbf16, #tpu.memory_space<vmem>>, vector<1x128x128xbf16>
    %67 = vector.shape_cast %66 : vector<1x128x128xbf16> to vector<128x128xbf16>
    %c1_49 = arith.constant 1 : index
    %c0_50 = arith.constant 0 : index
    %c0_51 = arith.constant 0 : index
    %68 = vector.load %arg8[%c1_49, %c0_50, %c0_51] : memref<2x128x128xbf16, #tpu.memory_space<vmem>>, vector<1x128x128xbf16>
    %69 = vector.shape_cast %68 : vector<1x128x128xbf16> to vector<128x128xbf16>
    %c1_52 = arith.constant 1 : index
    %c0_53 = arith.constant 0 : index
    %c0_54 = arith.constant 0 : index
    %70 = vector.load %arg9[%c1_52, %c0_53, %c0_54] : memref<2x1x128xf32, #tpu.memory_space<vmem>>, vector<1x1x128xf32>
    %71 = vector.shape_cast %70 : vector<1x1x128xf32> to vector<1x128xf32>
    %c1_55 = arith.constant 1 : index
    %c0_56 = arith.constant 0 : index
    %c0_57 = arith.constant 0 : index
    %72 = vector.load %arg10[%c1_55, %c0_56, %c0_57] : memref<2x128x128xbf16, #tpu.memory_space<vmem>>, vector<1x128x128xbf16>
    %73 = vector.shape_cast %72 : vector<1x128x128xbf16> to vector<128x128xbf16>
    %c1_58 = arith.constant 1 : index
    %c0_59 = arith.constant 0 : index
    %c0_60 = arith.constant 0 : index
    %74 = vector.load %arg11[%c1_58, %c0_59, %c0_60] : memref<2x1x128xf32, #tpu.memory_space<vmem>>, vector<1x1x128xf32>
    %75 = vector.shape_cast %74 : vector<1x1x128xf32> to vector<1x128xf32>
    %76 = vector.shape_cast %61 : vector<2x16x128xbf16> to vector<32x128xbf16>
    %cst_61 = arith.constant dense<0.000000e+00> : vector<32x128xf32>
    %77 = tpu.matmul %76, %63, %cst_61 {dimension_numbers = #tpu.dot_dimension_numbers<[1], [0], [0], [1], [0, 0, 1, 1], [], []>} : vector<32x128xbf16>, vector<128x128xbf16>, vector<32x128xf32> -> vector<32x128xf32>
    %78 = arith.truncf %77 : vector<32x128xf32> to vector<32x128xbf16>
    %79 = vector.shape_cast %78 : vector<32x128xbf16> to vector<2x16x128xbf16>
    %cst_62 = arith.constant dense<0.000000e+00> : vector<32x128xf32>
    %80 = tpu.matmul %76, %65, %cst_62 {dimension_numbers = #tpu.dot_dimension_numbers<[1], [0], [0], [1], [0, 0, 1, 1], [], []>} : vector<32x128xbf16>, vector<128x128xbf16>, vector<32x128xf32> -> vector<32x128xf32>
    %81 = arith.truncf %80 : vector<32x128xf32> to vector<32x128xbf16>
    %82 = vector.shape_cast %81 : vector<32x128xbf16> to vector<2x16x128xbf16>
    %cst_63 = arith.constant dense<0.000000e+00> : vector<32x128xf32>
    %83 = tpu.matmul %76, %67, %cst_63 {dimension_numbers = #tpu.dot_dimension_numbers<[1], [0], [0], [1], [0, 0, 1, 1], [], []>} : vector<32x128xbf16>, vector<128x128xbf16>, vector<32x128xf32> -> vector<32x128xf32>
    %84 = arith.truncf %83 : vector<32x128xf32> to vector<32x128xbf16>
    %85 = vector.shape_cast %84 : vector<32x128xbf16> to vector<2x16x128xbf16>
    %cst_64 = arith.constant dense<0.000000e+00> : vector<2x16x16xf32>
    %86 = tpu.matmul %79, %82, %cst_64 {dimension_numbers = #tpu.dot_dimension_numbers<[2], [2], [1], [1], [0, 0, 0, 1, 1, 1], [0], [0]>} : vector<2x16x128xbf16>, vector<2x16x128xbf16>, vector<2x16x16xf32> -> vector<2x16x16xf32>
    %cst_65 = arith.constant dense<0xFF800000> : vector<2x16xf32>
    %87 = vector.multi_reduction <maximumf>, %86, %cst_65 [2] : vector<2x16x16xf32> to vector<2x16xf32>
    %88 = vector.shape_cast %87 : vector<2x16xf32> to vector<2x16x1xf32>
    %89 = vector.broadcast %88 : vector<2x16x1xf32> to vector<2x16x16xf32>
    %90 = arith.subf %86, %89 : vector<2x16x16xf32>
    %91 = math.exp %90 : vector<2x16x16xf32>
    %cst_66 = arith.constant dense<0.000000e+00> : vector<2x16xf32>
    %92 = vector.multi_reduction <add>, %91, %cst_66 [2] : vector<2x16x16xf32> to vector<2x16xf32>
    %93 = vector.shape_cast %92 : vector<2x16xf32> to vector<2x16x1xf32>
    %94 = tpu.reciprocal %93 {approx = true} : vector<2x16x1xf32> -> vector<2x16x1xf32>
    %95 = vector.broadcast %94 : vector<2x16x1xf32> to vector<2x16x16xf32>
    %96 = arith.mulf %91, %95 : vector<2x16x16xf32>
    %97 = arith.truncf %96 : vector<2x16x16xf32> to vector<2x16x16xbf16>
    %cst_67 = arith.constant dense<0.000000e+00> : vector<2x16x128xf32>
    %98 = tpu.matmul %97, %85, %cst_67 {dimension_numbers = #tpu.dot_dimension_numbers<[2], [1], [1], [2], [0, 0, 0, 1, 1, 2], [0], [0]>} : vector<2x16x16xbf16>, vector<2x16x128xbf16>, vector<2x16x128xf32> -> vector<2x16x128xf32>
    %99 = arith.truncf %98 : vector<2x16x128xf32> to vector<2x16x128xbf16>
    %100 = vector.shape_cast %99 : vector<2x16x128xbf16> to vector<32x128xbf16>
    %cst_68 = arith.constant dense<0.000000e+00> : vector<32x128xf32>
    %101 = tpu.matmul %100, %69, %cst_68 {dimension_numbers = #tpu.dot_dimension_numbers<[1], [0], [0], [1], [0, 0, 1, 1], [], []>} : vector<32x128xbf16>, vector<128x128xbf16>, vector<32x128xf32> -> vector<32x128xf32>
    %102 = vector.broadcast %71 : vector<1x128xf32> to vector<32x128xf32>
    %103 = arith.addf %101, %102 : vector<32x128xf32>
    %cst_69 = arith.constant 0.000000e+00 : f32
    %104 = vector.broadcast %cst_69 : f32 to vector<32x128xf32>
    %105 = arith.maximumf %103, %104 : vector<32x128xf32>
    %106 = arith.truncf %105 : vector<32x128xf32> to vector<32x128xbf16>
    %cst_70 = arith.constant dense<0.000000e+00> : vector<32x128xf32>
    %107 = tpu.matmul %106, %73, %cst_70 {dimension_numbers = #tpu.dot_dimension_numbers<[1], [0], [0], [1], [0, 0, 1, 1], [], []>} : vector<32x128xbf16>, vector<128x128xbf16>, vector<32x128xf32> -> vector<32x128xf32>
    %108 = vector.broadcast %75 : vector<1x128xf32> to vector<32x128xf32>
    %109 = arith.addf %107, %108 : vector<32x128xf32>
    %110 = arith.truncf %109 : vector<32x128xf32> to vector<32x128xbf16>
    %111 = vector.shape_cast %110 : vector<32x128xbf16> to vector<2x16x128xbf16>
    %c0_71 = arith.constant 0 : index
    %c0_72 = arith.constant 0 : index
    %c0_73 = arith.constant 0 : index
    %112 = vector.load %arg12[%c0_71, %c0_72, %c0_73] : memref<2x128x128xbf16, #tpu.memory_space<vmem>>, vector<1x128x128xbf16>
    %113 = vector.shape_cast %112 : vector<1x128x128xbf16> to vector<128x128xbf16>
    %c0_74 = arith.constant 0 : index
    %c0_75 = arith.constant 0 : index
    %c0_76 = arith.constant 0 : index
    %114 = vector.load %arg13[%c0_74, %c0_75, %c0_76] : memref<2x128x128xbf16, #tpu.memory_space<vmem>>, vector<1x128x128xbf16>
    %115 = vector.shape_cast %114 : vector<1x128x128xbf16> to vector<128x128xbf16>
    %c0_77 = arith.constant 0 : index
    %c0_78 = arith.constant 0 : index
    %c0_79 = arith.constant 0 : index
    %116 = vector.load %arg14[%c0_77, %c0_78, %c0_79] : memref<2x128x128xbf16, #tpu.memory_space<vmem>>, vector<1x128x128xbf16>
    %117 = vector.shape_cast %116 : vector<1x128x128xbf16> to vector<128x128xbf16>
    %c0_80 = arith.constant 0 : index
    %c0_81 = arith.constant 0 : index
    %c0_82 = arith.constant 0 : index
    %118 = vector.load %arg15[%c0_80, %c0_81, %c0_82] : memref<2x128x128xbf16, #tpu.memory_space<vmem>>, vector<1x128x128xbf16>
    %119 = vector.shape_cast %118 : vector<1x128x128xbf16> to vector<128x128xbf16>
    %c0_83 = arith.constant 0 : index
    %c0_84 = arith.constant 0 : index
    %c0_85 = arith.constant 0 : index
    %120 = vector.load %arg16[%c0_83, %c0_84, %c0_85] : memref<2x1x128xf32, #tpu.memory_space<vmem>>, vector<1x1x128xf32>
    %121 = vector.shape_cast %120 : vector<1x1x128xf32> to vector<1x128xf32>
    %c0_86 = arith.constant 0 : index
    %c0_87 = arith.constant 0 : index
    %c0_88 = arith.constant 0 : index
    %122 = vector.load %arg17[%c0_86, %c0_87, %c0_88] : memref<2x128x128xbf16, #tpu.memory_space<vmem>>, vector<1x128x128xbf16>
    %123 = vector.shape_cast %122 : vector<1x128x128xbf16> to vector<128x128xbf16>
    %c0_89 = arith.constant 0 : index
    %c0_90 = arith.constant 0 : index
    %c0_91 = arith.constant 0 : index
    %124 = vector.load %arg18[%c0_89, %c0_90, %c0_91] : memref<2x1x128xf32, #tpu.memory_space<vmem>>, vector<1x1x128xf32>
    %125 = vector.shape_cast %124 : vector<1x1x128xf32> to vector<1x128xf32>
    %126 = vector.shape_cast %11 : vector<2x16x128xbf16> to vector<32x128xbf16>
    %cst_92 = arith.constant dense<0.000000e+00> : vector<32x128xf32>
    %127 = tpu.matmul %126, %113, %cst_92 {dimension_numbers = #tpu.dot_dimension_numbers<[1], [0], [0], [1], [0, 0, 1, 1], [], []>} : vector<32x128xbf16>, vector<128x128xbf16>, vector<32x128xf32> -> vector<32x128xf32>
    %128 = arith.truncf %127 : vector<32x128xf32> to vector<32x128xbf16>
    %129 = vector.shape_cast %128 : vector<32x128xbf16> to vector<2x16x128xbf16>
    %cst_93 = arith.constant dense<0.000000e+00> : vector<32x128xf32>
    %130 = tpu.matmul %126, %115, %cst_93 {dimension_numbers = #tpu.dot_dimension_numbers<[1], [0], [0], [1], [0, 0, 1, 1], [], []>} : vector<32x128xbf16>, vector<128x128xbf16>, vector<32x128xf32> -> vector<32x128xf32>
    %131 = arith.truncf %130 : vector<32x128xf32> to vector<32x128xbf16>
    %132 = vector.shape_cast %131 : vector<32x128xbf16> to vector<2x16x128xbf16>
    %cst_94 = arith.constant dense<0.000000e+00> : vector<32x128xf32>
    %133 = tpu.matmul %126, %117, %cst_94 {dimension_numbers = #tpu.dot_dimension_numbers<[1], [0], [0], [1], [0, 0, 1, 1], [], []>} : vector<32x128xbf16>, vector<128x128xbf16>, vector<32x128xf32> -> vector<32x128xf32>
    %134 = arith.truncf %133 : vector<32x128xf32> to vector<32x128xbf16>
    %135 = vector.shape_cast %134 : vector<32x128xbf16> to vector<2x16x128xbf16>
    %cst_95 = arith.constant dense<0.000000e+00> : vector<2x16x16xf32>
    %136 = tpu.matmul %129, %132, %cst_95 {dimension_numbers = #tpu.dot_dimension_numbers<[2], [2], [1], [1], [0, 0, 0, 1, 1, 1], [0], [0]>} : vector<2x16x128xbf16>, vector<2x16x128xbf16>, vector<2x16x16xf32> -> vector<2x16x16xf32>
    %cst_96 = arith.constant dense<0xFF800000> : vector<2x16xf32>
    %137 = vector.multi_reduction <maximumf>, %136, %cst_96 [2] : vector<2x16x16xf32> to vector<2x16xf32>
    %138 = vector.shape_cast %137 : vector<2x16xf32> to vector<2x16x1xf32>
    %139 = vector.broadcast %138 : vector<2x16x1xf32> to vector<2x16x16xf32>
    %140 = arith.subf %136, %139 : vector<2x16x16xf32>
    %141 = math.exp %140 : vector<2x16x16xf32>
    %cst_97 = arith.constant dense<0.000000e+00> : vector<2x16xf32>
    %142 = vector.multi_reduction <add>, %141, %cst_97 [2] : vector<2x16x16xf32> to vector<2x16xf32>
    %143 = vector.shape_cast %142 : vector<2x16xf32> to vector<2x16x1xf32>
    %144 = tpu.reciprocal %143 {approx = true} : vector<2x16x1xf32> -> vector<2x16x1xf32>
    %145 = vector.broadcast %144 : vector<2x16x1xf32> to vector<2x16x16xf32>
    %146 = arith.mulf %141, %145 : vector<2x16x16xf32>
    %147 = arith.truncf %146 : vector<2x16x16xf32> to vector<2x16x16xbf16>
    %cst_98 = arith.constant dense<0.000000e+00> : vector<2x16x128xf32>
    %148 = tpu.matmul %147, %135, %cst_98 {dimension_numbers = #tpu.dot_dimension_numbers<[2], [1], [1], [2], [0, 0, 0, 1, 1, 2], [0], [0]>} : vector<2x16x16xbf16>, vector<2x16x128xbf16>, vector<2x16x128xf32> -> vector<2x16x128xf32>
    %149 = vector.broadcast %9 : vector<2x16x1xf32> to vector<2x16x128xf32>
    %150 = arith.mulf %148, %149 : vector<2x16x128xf32>
    %151 = arith.truncf %150 : vector<2x16x128xf32> to vector<2x16x128xbf16>
    %152 = vector.shape_cast %151 : vector<2x16x128xbf16> to vector<32x128xbf16>
    %cst_99 = arith.constant dense<0.000000e+00> : vector<32x128xf32>
    %153 = tpu.matmul %152, %119, %cst_99 {dimension_numbers = #tpu.dot_dimension_numbers<[1], [0], [0], [1], [0, 0, 1, 1], [], []>} : vector<32x128xbf16>, vector<128x128xbf16>, vector<32x128xf32> -> vector<32x128xf32>
    %154 = vector.broadcast %121 : vector<1x128xf32> to vector<32x128xf32>
    %155 = arith.addf %153, %154 : vector<32x128xf32>
    %cst_100 = arith.constant 0.000000e+00 : f32
    %156 = vector.broadcast %cst_100 : f32 to vector<32x128xf32>
    %157 = arith.maximumf %155, %156 : vector<32x128xf32>
    %158 = arith.truncf %157 : vector<32x128xf32> to vector<32x128xbf16>
    %cst_101 = arith.constant dense<0.000000e+00> : vector<32x128xf32>
    %159 = tpu.matmul %158, %123, %cst_101 {dimension_numbers = #tpu.dot_dimension_numbers<[1], [0], [0], [1], [0, 0, 1, 1], [], []>} : vector<32x128xbf16>, vector<128x128xbf16>, vector<32x128xf32> -> vector<32x128xf32>
    %160 = vector.broadcast %125 : vector<1x128xf32> to vector<32x128xf32>
    %161 = arith.addf %159, %160 : vector<32x128xf32>
    %162 = arith.truncf %161 : vector<32x128xf32> to vector<32x128xbf16>
    %163 = vector.shape_cast %162 : vector<32x128xbf16> to vector<2x16x128xbf16>
    %c1_102 = arith.constant 1 : index
    %c0_103 = arith.constant 0 : index
    %c0_104 = arith.constant 0 : index
    %164 = vector.load %arg12[%c1_102, %c0_103, %c0_104] : memref<2x128x128xbf16, #tpu.memory_space<vmem>>, vector<1x128x128xbf16>
    %165 = vector.shape_cast %164 : vector<1x128x128xbf16> to vector<128x128xbf16>
    %c1_105 = arith.constant 1 : index
    %c0_106 = arith.constant 0 : index
    %c0_107 = arith.constant 0 : index
    %166 = vector.load %arg13[%c1_105, %c0_106, %c0_107] : memref<2x128x128xbf16, #tpu.memory_space<vmem>>, vector<1x128x128xbf16>
    %167 = vector.shape_cast %166 : vector<1x128x128xbf16> to vector<128x128xbf16>
    %c1_108 = arith.constant 1 : index
    %c0_109 = arith.constant 0 : index
    %c0_110 = arith.constant 0 : index
    %168 = vector.load %arg14[%c1_108, %c0_109, %c0_110] : memref<2x128x128xbf16, #tpu.memory_space<vmem>>, vector<1x128x128xbf16>
    %169 = vector.shape_cast %168 : vector<1x128x128xbf16> to vector<128x128xbf16>
    %c1_111 = arith.constant 1 : index
    %c0_112 = arith.constant 0 : index
    %c0_113 = arith.constant 0 : index
    %170 = vector.load %arg15[%c1_111, %c0_112, %c0_113] : memref<2x128x128xbf16, #tpu.memory_space<vmem>>, vector<1x128x128xbf16>
    %171 = vector.shape_cast %170 : vector<1x128x128xbf16> to vector<128x128xbf16>
    %c1_114 = arith.constant 1 : index
    %c0_115 = arith.constant 0 : index
    %c0_116 = arith.constant 0 : index
    %172 = vector.load %arg16[%c1_114, %c0_115, %c0_116] : memref<2x1x128xf32, #tpu.memory_space<vmem>>, vector<1x1x128xf32>
    %173 = vector.shape_cast %172 : vector<1x1x128xf32> to vector<1x128xf32>
    %c1_117 = arith.constant 1 : index
    %c0_118 = arith.constant 0 : index
    %c0_119 = arith.constant 0 : index
    %174 = vector.load %arg17[%c1_117, %c0_118, %c0_119] : memref<2x128x128xbf16, #tpu.memory_space<vmem>>, vector<1x128x128xbf16>
    %175 = vector.shape_cast %174 : vector<1x128x128xbf16> to vector<128x128xbf16>
    %c1_120 = arith.constant 1 : index
    %c0_121 = arith.constant 0 : index
    %c0_122 = arith.constant 0 : index
    %176 = vector.load %arg18[%c1_120, %c0_121, %c0_122] : memref<2x1x128xf32, #tpu.memory_space<vmem>>, vector<1x1x128xf32>
    %177 = vector.shape_cast %176 : vector<1x1x128xf32> to vector<1x128xf32>
    %178 = vector.shape_cast %163 : vector<2x16x128xbf16> to vector<32x128xbf16>
    %cst_123 = arith.constant dense<0.000000e+00> : vector<32x128xf32>
    %179 = tpu.matmul %178, %165, %cst_123 {dimension_numbers = #tpu.dot_dimension_numbers<[1], [0], [0], [1], [0, 0, 1, 1], [], []>} : vector<32x128xbf16>, vector<128x128xbf16>, vector<32x128xf32> -> vector<32x128xf32>
    %180 = arith.truncf %179 : vector<32x128xf32> to vector<32x128xbf16>
    %181 = vector.shape_cast %180 : vector<32x128xbf16> to vector<2x16x128xbf16>
    %cst_124 = arith.constant dense<0.000000e+00> : vector<32x128xf32>
    %182 = tpu.matmul %178, %167, %cst_124 {dimension_numbers = #tpu.dot_dimension_numbers<[1], [0], [0], [1], [0, 0, 1, 1], [], []>} : vector<32x128xbf16>, vector<128x128xbf16>, vector<32x128xf32> -> vector<32x128xf32>
    %183 = arith.truncf %182 : vector<32x128xf32> to vector<32x128xbf16>
    %184 = vector.shape_cast %183 : vector<32x128xbf16> to vector<2x16x128xbf16>
    %cst_125 = arith.constant dense<0.000000e+00> : vector<32x128xf32>
    %185 = tpu.matmul %178, %169, %cst_125 {dimension_numbers = #tpu.dot_dimension_numbers<[1], [0], [0], [1], [0, 0, 1, 1], [], []>} : vector<32x128xbf16>, vector<128x128xbf16>, vector<32x128xf32> -> vector<32x128xf32>
    %186 = arith.truncf %185 : vector<32x128xf32> to vector<32x128xbf16>
    %187 = vector.shape_cast %186 : vector<32x128xbf16> to vector<2x16x128xbf16>
    %cst_126 = arith.constant dense<0.000000e+00> : vector<2x16x16xf32>
    %188 = tpu.matmul %181, %184, %cst_126 {dimension_numbers = #tpu.dot_dimension_numbers<[2], [2], [1], [1], [0, 0, 0, 1, 1, 1], [0], [0]>} : vector<2x16x128xbf16>, vector<2x16x128xbf16>, vector<2x16x16xf32> -> vector<2x16x16xf32>
    %cst_127 = arith.constant dense<0xFF800000> : vector<2x16xf32>
    %189 = vector.multi_reduction <maximumf>, %188, %cst_127 [2] : vector<2x16x16xf32> to vector<2x16xf32>
    %190 = vector.shape_cast %189 : vector<2x16xf32> to vector<2x16x1xf32>
    %191 = vector.broadcast %190 : vector<2x16x1xf32> to vector<2x16x16xf32>
    %192 = arith.subf %188, %191 : vector<2x16x16xf32>
    %193 = math.exp %192 : vector<2x16x16xf32>
    %cst_128 = arith.constant dense<0.000000e+00> : vector<2x16xf32>
    %194 = vector.multi_reduction <add>, %193, %cst_128 [2] : vector<2x16x16xf32> to vector<2x16xf32>
    %195 = vector.shape_cast %194 : vector<2x16xf32> to vector<2x16x1xf32>
    %196 = tpu.reciprocal %195 {approx = true} : vector<2x16x1xf32> -> vector<2x16x1xf32>
    %197 = vector.broadcast %196 : vector<2x16x1xf32> to vector<2x16x16xf32>
    %198 = arith.mulf %193, %197 : vector<2x16x16xf32>
    %199 = arith.truncf %198 : vector<2x16x16xf32> to vector<2x16x16xbf16>
    %cst_129 = arith.constant dense<0.000000e+00> : vector<2x16x128xf32>
    %200 = tpu.matmul %199, %187, %cst_129 {dimension_numbers = #tpu.dot_dimension_numbers<[2], [1], [1], [2], [0, 0, 0, 1, 1, 2], [0], [0]>} : vector<2x16x16xbf16>, vector<2x16x128xbf16>, vector<2x16x128xf32> -> vector<2x16x128xf32>
    %201 = vector.broadcast %9 : vector<2x16x1xf32> to vector<2x16x128xf32>
    %202 = arith.mulf %200, %201 : vector<2x16x128xf32>
    %203 = arith.truncf %202 : vector<2x16x128xf32> to vector<2x16x128xbf16>
    %204 = vector.shape_cast %203 : vector<2x16x128xbf16> to vector<32x128xbf16>
    %cst_130 = arith.constant dense<0.000000e+00> : vector<32x128xf32>
    %205 = tpu.matmul %204, %171, %cst_130 {dimension_numbers = #tpu.dot_dimension_numbers<[1], [0], [0], [1], [0, 0, 1, 1], [], []>} : vector<32x128xbf16>, vector<128x128xbf16>, vector<32x128xf32> -> vector<32x128xf32>
    %206 = vector.broadcast %173 : vector<1x128xf32> to vector<32x128xf32>
    %207 = arith.addf %205, %206 : vector<32x128xf32>
    %cst_131 = arith.constant 0.000000e+00 : f32
    %208 = vector.broadcast %cst_131 : f32 to vector<32x128xf32>
    %209 = arith.maximumf %207, %208 : vector<32x128xf32>
    %210 = arith.truncf %209 : vector<32x128xf32> to vector<32x128xbf16>
    %cst_132 = arith.constant dense<0.000000e+00> : vector<32x128xf32>
    %211 = tpu.matmul %210, %175, %cst_132 {dimension_numbers = #tpu.dot_dimension_numbers<[1], [0], [0], [1], [0, 0, 1, 1], [], []>} : vector<32x128xbf16>, vector<128x128xbf16>, vector<32x128xf32> -> vector<32x128xf32>
    %212 = vector.broadcast %177 : vector<1x128xf32> to vector<32x128xf32>
    %213 = arith.addf %211, %212 : vector<32x128xf32>
    %214 = arith.truncf %213 : vector<32x128xf32> to vector<32x128xbf16>
    %215 = vector.shape_cast %214 : vector<32x128xbf16> to vector<2x16x128xbf16>
    %216 = vector.shape_cast %111 : vector<2x16x128xbf16> to vector<32x128xbf16>
    %217 = vector.shape_cast %215 : vector<2x16x128xbf16> to vector<32x128xbf16>
    %c0_133 = arith.constant 0 : index
    %c0_134 = arith.constant 0 : index
    %218 = vector.load %arg19[%c0_133, %c0_134] : memref<128x128xbf16, #tpu.memory_space<vmem>>, vector<128x128xbf16>
    %cst_135 = arith.constant dense<0.000000e+00> : vector<32x128xf32>
    %219 = tpu.matmul %216, %218, %cst_135 {dimension_numbers = #tpu.dot_dimension_numbers<[1], [0], [0], [1], [0, 0, 1, 1], [], []>} : vector<32x128xbf16>, vector<128x128xbf16>, vector<32x128xf32> -> vector<32x128xf32>
    %c0_136 = arith.constant 0 : index
    %c0_137 = arith.constant 0 : index
    %220 = vector.load %arg20[%c0_136, %c0_137] : memref<128x128xbf16, #tpu.memory_space<vmem>>, vector<128x128xbf16>
    %cst_138 = arith.constant dense<0.000000e+00> : vector<32x128xf32>
    %221 = tpu.matmul %217, %220, %cst_138 {dimension_numbers = #tpu.dot_dimension_numbers<[1], [0], [0], [1], [0, 0, 1, 1], [], []>} : vector<32x128xbf16>, vector<128x128xbf16>, vector<32x128xf32> -> vector<32x128xf32>
    %222 = arith.addf %219, %221 : vector<32x128xf32>
    %c0_139 = arith.constant 0 : index
    %c0_140 = arith.constant 0 : index
    %223 = vector.load %arg21[%c0_139, %c0_140] : memref<1x128xf32, #tpu.memory_space<vmem>>, vector<1x128xf32>
    %224 = vector.broadcast %223 : vector<1x128xf32> to vector<32x128xf32>
    %225 = arith.addf %222, %224 : vector<32x128xf32>
    %226 = arith.truncf %225 : vector<32x128xf32> to vector<32x128xbf16>
    %227 = vector.shape_cast %226 : vector<32x128xbf16> to vector<2x16x128xbf16>
    %c0_141 = arith.constant 0 : index
    %c0_142 = arith.constant 0 : index
    %228 = vector.load %arg23[%c0_141, %c0_142] : memref<128x128xbf16, #tpu.memory_space<vmem>>, vector<128x128xbf16>
    %cst_143 = arith.constant dense<0.000000e+00> : vector<32x128xf32>
    %229 = tpu.matmul %226, %228, %cst_143 {dimension_numbers = #tpu.dot_dimension_numbers<[1], [0], [0], [1], [0, 0, 1, 1], [], []>} : vector<32x128xbf16>, vector<128x128xbf16>, vector<32x128xf32> -> vector<32x128xf32>
    %230 = arith.truncf %229 : vector<32x128xf32> to vector<32x128xbf16>
    %231 = vector.shape_cast %230 : vector<32x128xbf16> to vector<2x16x128xbf16>
    %c0_144 = arith.constant 0 : index
    %c0_145 = arith.constant 0 : index
    %232 = vector.load %arg24[%c0_144, %c0_145] : memref<128x128xbf16, #tpu.memory_space<vmem>>, vector<128x128xbf16>
    %cst_146 = arith.constant dense<0.000000e+00> : vector<32x128xf32>
    %233 = tpu.matmul %226, %232, %cst_146 {dimension_numbers = #tpu.dot_dimension_numbers<[1], [0], [0], [1], [0, 0, 1, 1], [], []>} : vector<32x128xbf16>, vector<128x128xbf16>, vector<32x128xf32> -> vector<32x128xf32>
    %234 = arith.truncf %233 : vector<32x128xf32> to vector<32x128xbf16>
    %235 = vector.shape_cast %234 : vector<32x128xbf16> to vector<2x16x128xbf16>
    %236 = vector.extract_strided_slice %227 {offsets = [0, 0, 0], sizes = [2, 1, 128], strides = [1, 1, 1]} : vector<2x16x128xbf16> to vector<2x1x128xbf16>
    %237 = vector.shape_cast %236 : vector<2x1x128xbf16> to vector<2x128xbf16>
    %c0_147 = arith.constant 0 : index
    %c0_148 = arith.constant 0 : index
    %238 = vector.load %arg22[%c0_147, %c0_148] : memref<128x128xbf16, #tpu.memory_space<vmem>>, vector<128x128xbf16>
    %cst_149 = arith.constant dense<0.000000e+00> : vector<2x128xf32>
    %239 = tpu.matmul %237, %238, %cst_149 {dimension_numbers = #tpu.dot_dimension_numbers<[1], [0], [0], [1], [0, 0, 1, 1], [], []>} : vector<2x128xbf16>, vector<128x128xbf16>, vector<2x128xf32> -> vector<2x128xf32>
    %240 = arith.truncf %239 : vector<2x128xf32> to vector<2x128xbf16>
    %241 = vector.shape_cast %240 : vector<2x128xbf16> to vector<2x1x128xbf16>
    %cst_150 = arith.constant dense<0.000000e+00> : vector<2x1x16xf32>
    %242 = tpu.matmul %241, %231, %cst_150 {dimension_numbers = #tpu.dot_dimension_numbers<[2], [2], [1], [1], [0, 0, 0, 1, 1, 1], [0], [0]>} : vector<2x1x128xbf16>, vector<2x16x128xbf16>, vector<2x1x16xf32> -> vector<2x1x16xf32>
    %cst_151 = arith.constant dense<0xFF800000> : vector<2x1xf32>
    %243 = vector.multi_reduction <maximumf>, %242, %cst_151 [2] : vector<2x1x16xf32> to vector<2x1xf32>
    %244 = vector.shape_cast %243 : vector<2x1xf32> to vector<2x1x1xf32>
    %245 = vector.broadcast %244 : vector<2x1x1xf32> to vector<2x1x16xf32>
    %246 = arith.subf %242, %245 : vector<2x1x16xf32>
    %247 = math.exp %246 : vector<2x1x16xf32>
    %cst_152 = arith.constant dense<0.000000e+00> : vector<2x1xf32>
    %248 = vector.multi_reduction <add>, %247, %cst_152 [2] : vector<2x1x16xf32> to vector<2x1xf32>
    %249 = vector.shape_cast %248 : vector<2x1xf32> to vector<2x1x1xf32>
    %250 = tpu.reciprocal %249 {approx = true} : vector<2x1x1xf32> -> vector<2x1x1xf32>
    %251 = vector.broadcast %250 : vector<2x1x1xf32> to vector<2x1x16xf32>
    %252 = arith.mulf %247, %251 : vector<2x1x16xf32>
    %253 = arith.truncf %252 : vector<2x1x16xf32> to vector<2x1x16xbf16>
    %cst_153 = arith.constant dense<0.000000e+00> : vector<2x1x128xf32>
    %254 = tpu.matmul %253, %235, %cst_153 {dimension_numbers = #tpu.dot_dimension_numbers<[2], [1], [1], [2], [0, 0, 0, 1, 1, 2], [0], [0]>} : vector<2x1x16xbf16>, vector<2x16x128xbf16>, vector<2x1x128xf32> -> vector<2x1x128xf32>
    %255 = vector.shape_cast %254 : vector<2x1x128xf32> to vector<2x128xf32>
    %256 = arith.truncf %255 : vector<2x128xf32> to vector<2x128xbf16>
    %c0_154 = arith.constant 0 : index
    %c0_155 = arith.constant 0 : index
    %257 = vector.load %arg25[%c0_154, %c0_155] : memref<128x128xbf16, #tpu.memory_space<vmem>>, vector<128x128xbf16>
    %cst_156 = arith.constant dense<0.000000e+00> : vector<2x128xf32>
    %258 = tpu.matmul %256, %257, %cst_156 {dimension_numbers = #tpu.dot_dimension_numbers<[1], [0], [0], [1], [0, 0, 1, 1], [], []>} : vector<2x128xbf16>, vector<128x128xbf16>, vector<2x128xf32> -> vector<2x128xf32>
    %c0_157 = arith.constant 0 : index
    %c0_158 = arith.constant 0 : index
    %259 = vector.load %arg26[%c0_157, %c0_158] : memref<1x128xf32, #tpu.memory_space<vmem>>, vector<1x128xf32>
    %260 = vector.broadcast %259 : vector<1x128xf32> to vector<2x128xf32>
    %261 = arith.addf %258, %260 : vector<2x128xf32>
    %262 = math.tanh %261 : vector<2x128xf32>
    %263 = arith.truncf %262 : vector<2x128xf32> to vector<2x128xbf16>
    %c0_159 = arith.constant 0 : index
    %c0_160 = arith.constant 0 : index
    %264 = vector.load %arg27[%c0_159, %c0_160] : memref<128x128xbf16, #tpu.memory_space<vmem>>, vector<128x128xbf16>
    %cst_161 = arith.constant dense<0.000000e+00> : vector<2x128xf32>
    %265 = tpu.matmul %263, %264, %cst_161 {dimension_numbers = #tpu.dot_dimension_numbers<[1], [0], [0], [1], [0, 0, 1, 1], [], []>} : vector<2x128xbf16>, vector<128x128xbf16>, vector<2x128xf32> -> vector<2x128xf32>
    %c0_162 = arith.constant 0 : index
    %c0_163 = arith.constant 0 : index
    %266 = vector.load %arg28[%c0_162, %c0_163] : memref<1x128xf32, #tpu.memory_space<vmem>>, vector<1x128xf32>
    %267 = vector.broadcast %266 : vector<1x128xf32> to vector<2x128xf32>
    %268 = arith.addf %265, %267 : vector<2x128xf32>
    %269 = vector.shape_cast %268 : vector<2x128xf32> to vector<2x1x128xf32>
    %c0_164 = arith.constant 0 : index
    %c0_165 = arith.constant 0 : index
    %c0_166 = arith.constant 0 : index
    %270 = vector.load %arg29[%c0_164, %c0_165, %c0_166] : memref<2x1x128xf32, #tpu.memory_space<vmem>>, vector<2x1x128xf32>
    tpu.vector_store %arg29[%c0_164, %c0_165, %c0_166], %269 {strides = array<i32>} : memref<2x1x128xf32, #tpu.memory_space<vmem>>, vector<2x1x128xf32>,
    return
  }
  func.func @transform_0(%arg0: i32) -> (i32, i32, i32) {
    %c0_i32 = arith.constant 0 : i32
    %c0_i32_0 = arith.constant 0 : i32
    %c0_i32_1 = arith.constant 0 : i32
    return %arg0, %c0_i32, %c0_i32_0 : i32, i32, i32
  }
  func.func @transform_1(%arg0: i32) -> (i32, i32, i32) {
    %c0_i32 = arith.constant 0 : i32
    %c0_i32_0 = arith.constant 0 : i32
    %c0_i32_1 = arith.constant 0 : i32
    return %arg0, %c0_i32, %c0_i32_0 : i32, i32, i32
  }
  func.func @transform_2(%arg0: i32) -> (i32, i32, i32) {
    %c0_i32 = arith.constant 0 : i32
    %c0_i32_0 = arith.constant 0 : i32
    %c0_i32_1 = arith.constant 0 : i32
    return %arg0, %c0_i32, %c0_i32_0 : i32, i32, i32
  }
  func.func @transform_3(%arg0: i32) -> (i32, i32, i32) {
    %c0_i32 = arith.constant 0 : i32
    %c0_i32_0 = arith.constant 0 : i32
    %c0_i32_1 = arith.constant 0 : i32
    return %arg0, %c0_i32, %c0_i32_0 : i32, i32, i32
  }
  func.func @transform_4(%arg0: i32) -> (i32, i32, i32) {
    %c0_i32 = arith.constant 0 : i32
    %c0_i32_0 = arith.constant 0 : i32
    %c0_i32_1 = arith.constant 0 : i32
    %c0_i32_2 = arith.constant 0 : i32
    return %c0_i32, %c0_i32_0, %c0_i32_1 : i32, i32, i32
  }
  func.func @transform_5(%arg0: i32) -> (i32, i32, i32) {
    %c0_i32 = arith.constant 0 : i32
    %c0_i32_0 = arith.constant 0 : i32
    %c0_i32_1 = arith.constant 0 : i32
    %c0_i32_2 = arith.constant 0 : i32
    return %c0_i32, %c0_i32_0, %c0_i32_1 : i32, i32, i32
  }
  func.func @transform_6(%arg0: i32) -> (i32, i32, i32) {
    %c0_i32 = arith.constant 0 : i32
    %c0_i32_0 = arith.constant 0 : i32
    %c0_i32_1 = arith.constant 0 : i32
    %c0_i32_2 = arith.constant 0 : i32
    return %c0_i32, %c0_i32_0, %c0_i32_1 : i32, i32, i32
  }
  func.func @transform_7(%arg0: i32) -> (i32, i32, i32) {
    %c0_i32 = arith.constant 0 : i32
    %c0_i32_0 = arith.constant 0 : i32
    %c0_i32_1 = arith.constant 0 : i32
    %c0_i32_2 = arith.constant 0 : i32
    return %c0_i32, %c0_i32_0, %c0_i32_1 : i32, i32, i32
  }
  func.func @transform_8(%arg0: i32) -> (i32, i32, i32) {
    %c0_i32 = arith.constant 0 : i32
    %c0_i32_0 = arith.constant 0 : i32
    %c0_i32_1 = arith.constant 0 : i32
    %c0_i32_2 = arith.constant 0 : i32
    return %c0_i32, %c0_i32_0, %c0_i32_1 : i32, i32, i32
  }
  func.func @transform_9(%arg0: i32) -> (i32, i32, i32) {
    %c0_i32 = arith.constant 0 : i32
    %c0_i32_0 = arith.constant 0 : i32
    %c0_i32_1 = arith.constant 0 : i32
    %c0_i32_2 = arith.constant 0 : i32
    return %c0_i32, %c0_i32_0, %c0_i32_1 : i32, i32, i32
  }
  func.func @transform_10(%arg0: i32) -> (i32, i32, i32) {
    %c0_i32 = arith.constant 0 : i32
    %c0_i32_0 = arith.constant 0 : i32
    %c0_i32_1 = arith.constant 0 : i32
    %c0_i32_2 = arith.constant 0 : i32
    return %c0_i32, %c0_i32_0, %c0_i32_1 : i32, i32, i32
  }
  func.func @transform_11(%arg0: i32) -> (i32, i32, i32) {
    %c0_i32 = arith.constant 0 : i32
    %c0_i32_0 = arith.constant 0 : i32
    %c0_i32_1 = arith.constant 0 : i32
    %c0_i32_2 = arith.constant 0 : i32
    return %c0_i32, %c0_i32_0, %c0_i32_1 : i32, i32, i32
  }
  func.func @transform_12(%arg0: i32) -> (i32, i32, i32) {
    %c0_i32 = arith.constant 0 : i32
    %c0_i32_0 = arith.constant 0 : i32
    %c0_i32_1 = arith.constant 0 : i32
    %c0_i32_2 = arith.constant 0 : i32
    return %c0_i32, %c0_i32_0, %c0_i32_1 : i32, i32, i32
  }
  func.func @transform_13(%arg0: i32) -> (i32, i32, i32) {
    %c0_i32 = arith.constant 0 : i32
    %c0_i32_0 = arith.constant 0 : i32
    %c0_i32_1 = arith.constant 0 : i32
    %c0_i32_2 = arith.constant 0 : i32
    return %c0_i32, %c0_i32_0, %c0_i32_1 : i32, i32, i32
  }
  func.func @transform_14(%arg0: i32) -> (i32, i32, i32) {
    %c0_i32 = arith.constant 0 : i32
    %c0_i32_0 = arith.constant 0 : i32
    %c0_i32_1 = arith.constant 0 : i32
    %c0_i32_2 = arith.constant 0 : i32
    return %c0_i32, %c0_i32_0, %c0_i32_1 : i32, i32, i32
  }
  func.func @transform_15(%arg0: i32) -> (i32, i32, i32) {
    %c0_i32 = arith.constant 0 : i32
    %c0_i32_0 = arith.constant 0 : i32
    %c0_i32_1 = arith.constant 0 : i32
    %c0_i32_2 = arith.constant 0 : i32
    return %c0_i32, %c0_i32_0, %c0_i32_1 : i32, i32, i32
  }
  func.func @transform_16(%arg0: i32) -> (i32, i32, i32) {
    %c0_i32 = arith.constant 0 : i32
    %c0_i32_0 = arith.constant 0 : i32
    %c0_i32_1 = arith.constant 0 : i32
    %c0_i32_2 = arith.constant 0 : i32
    return %c0_i32, %c0_i32_0, %c0_i32_1 : i32, i32, i32
  }
  func.func @transform_17(%arg0: i32) -> (i32, i32, i32) {
    %c0_i32 = arith.constant 0 : i32
    %c0_i32_0 = arith.constant 0 : i32
    %c0_i32_1 = arith.constant 0 : i32
    %c0_i32_2 = arith.constant 0 : i32
    return %c0_i32, %c0_i32_0, %c0_i32_1 : i32, i32, i32
  }
  func.func @transform_18(%arg0: i32) -> (i32, i32) {
    %c0_i32 = arith.constant 0 : i32
    %c0_i32_0 = arith.constant 0 : i32
    %c0_i32_1 = arith.constant 0 : i32
    return %c0_i32, %c0_i32_0 : i32, i32
  }
  func.func @transform_19(%arg0: i32) -> (i32, i32) {
    %c0_i32 = arith.constant 0 : i32
    %c0_i32_0 = arith.constant 0 : i32
    %c0_i32_1 = arith.constant 0 : i32
    return %c0_i32, %c0_i32_0 : i32, i32
  }
  func.func @transform_20(%arg0: i32) -> (i32, i32) {
    %c0_i32 = arith.constant 0 : i32
    %c0_i32_0 = arith.constant 0 : i32
    %c0_i32_1 = arith.constant 0 : i32
    return %c0_i32, %c0_i32_0 : i32, i32
  }
  func.func @transform_21(%arg0: i32) -> (i32, i32) {
    %c0_i32 = arith.constant 0 : i32
    %c0_i32_0 = arith.constant 0 : i32
    %c0_i32_1 = arith.constant 0 : i32
    return %c0_i32, %c0_i32_0 : i32, i32
  }
  func.func @transform_22(%arg0: i32) -> (i32, i32) {
    %c0_i32 = arith.constant 0 : i32
    %c0_i32_0 = arith.constant 0 : i32
    %c0_i32_1 = arith.constant 0 : i32
    return %c0_i32, %c0_i32_0 : i32, i32
  }
  func.func @transform_23(%arg0: i32) -> (i32, i32) {
    %c0_i32 = arith.constant 0 : i32
    %c0_i32_0 = arith.constant 0 : i32
    %c0_i32_1 = arith.constant 0 : i32
    return %c0_i32, %c0_i32_0 : i32, i32
  }
  func.func @transform_24(%arg0: i32) -> (i32, i32) {
    %c0_i32 = arith.constant 0 : i32
    %c0_i32_0 = arith.constant 0 : i32
    %c0_i32_1 = arith.constant 0 : i32
    return %c0_i32, %c0_i32_0 : i32, i32
  }
  func.func @transform_25(%arg0: i32) -> (i32, i32) {
    %c0_i32 = arith.constant 0 : i32
    %c0_i32_0 = arith.constant 0 : i32
    %c0_i32_1 = arith.constant 0 : i32
    return %c0_i32, %c0_i32_0 : i32, i32
  }
  func.func @transform_26(%arg0: i32) -> (i32, i32) {
    %c0_i32 = arith.constant 0 : i32
    %c0_i32_0 = arith.constant 0 : i32
    %c0_i32_1 = arith.constant 0 : i32
    return %c0_i32, %c0_i32_0 : i32, i32
  }
  func.func @transform_27(%arg0: i32) -> (i32, i32) {
    %c0_i32 = arith.constant 0 : i32
    %c0_i32_0 = arith.constant 0 : i32
    %c0_i32_1 = arith.constant 0 : i32
    return %c0_i32, %c0_i32_0 : i32, i32
  }
  func.func @transform_28(%arg0: i32) -> (i32, i32, i32) {
    %c0_i32 = arith.constant 0 : i32
    %c0_i32_0 = arith.constant 0 : i32
    %c0_i32_1 = arith.constant 0 : i32
    return %arg0, %c0_i32, %c0_i32_0 : i32, i32, i32
  }
}

module attributes {stable_mosaic.version = 11 : i64} {
  func.func @kernel(%arg0: i32, %arg1: memref<2x1x1xi32, #tpu.memory_space<vmem>>, %arg2: memref<2x1x1xi32, #tpu.memory_space<vmem>>, %arg3: memref<2x16x128xbf16, #tpu.memory_space<vmem>>, %arg4: memref<2x16x128xbf16, #tpu.memory_space<vmem>>, %arg5: memref<2x128x128xbf16, #tpu.memory_space<vmem>>, %arg6: memref<2x128x128xbf16, #tpu.memory_space<vmem>>, %arg7: memref<2x128x128xbf16, #tpu.memory_space<vmem>>, %arg8: memref<2x128x128xbf16, #tpu.memory_space<vmem>>, %arg9: memref<2x1x128xf32, #tpu.memory_space<vmem>>, %arg10: memref<2x128x128xbf16, #tpu.memory_space<vmem>>, %arg11: memref<2x1x128xf32, #tpu.memory_space<vmem>>, %arg12: memref<2x128x128xbf16, #tpu.memory_space<vmem>>, %arg13: memref<2x128x128xbf16, #tpu.memory_space<vmem>>, %arg14: memref<2x128x128xbf16, #tpu.memory_space<vmem>>, %arg15: memref<2x128x128xbf16, #tpu.memory_space<vmem>>, %arg16: memref<2x1x128xf32, #tpu.memory_space<vmem>>, %arg17: memref<2x128x128xbf16, #tpu.memory_space<vmem>>, %arg18: memref<2x1x128xf32, #tpu.memory_space<vmem>>, %arg19: memref<128x128xbf16, #tpu.memory_space<vmem>>, %arg20: memref<128x128xbf16, #tpu.memory_space<vmem>>, %arg21: memref<1x128xf32, #tpu.memory_space<vmem>>, %arg22: memref<128x128xbf16, #tpu.memory_space<vmem>>, %arg23: memref<128x128xbf16, #tpu.memory_space<vmem>>, %arg24: memref<128x128xbf16, #tpu.memory_space<vmem>>, %arg25: memref<128x128xbf16, #tpu.memory_space<vmem>>, %arg26: memref<1x128xf32, #tpu.memory_space<vmem>>, %arg27: memref<128x128xbf16, #tpu.memory_space<vmem>>, %arg28: memref<1x128xf32, #tpu.memory_space<vmem>>, %arg29: memref<2x1x128xf32, #tpu.memory_space<vmem>>) attributes {dimension_semantics = [#tpu.dimension_semantics<parallel>], iteration_bounds = array<i64: 1>, scalar_prefetch = 0 : i64, scratch_operands = 0 : i64, tpu.core_type = #tpu.core_type<tc>, window_params = [{transform_indices = @transform_0, window_bounds = array<i64: 2, 1, 1>}, {transform_indices = @transform_1, window_bounds = array<i64: 2, 1, 1>}, {transform_indices = @transform_2, window_bounds = array<i64: 2, 16, 128>}, {transform_indices = @transform_3, window_bounds = array<i64: 2, 16, 128>}, {pipeline_mode = #tpu.pipeline_mode<synchronous>, transform_indices = @transform_4, window_bounds = array<i64: 2, 128, 128>}, {pipeline_mode = #tpu.pipeline_mode<synchronous>, transform_indices = @transform_5, window_bounds = array<i64: 2, 128, 128>}, {pipeline_mode = #tpu.pipeline_mode<synchronous>, transform_indices = @transform_6, window_bounds = array<i64: 2, 128, 128>}, {pipeline_mode = #tpu.pipeline_mode<synchronous>, transform_indices = @transform_7, window_bounds = array<i64: 2, 128, 128>}, {pipeline_mode = #tpu.pipeline_mode<synchronous>, transform_indices = @transform_8, window_bounds = array<i64: 2, 1, 128>}, {pipeline_mode = #tpu.pipeline_mode<synchronous>, transform_indices = @transform_9, window_bounds = array<i64: 2, 128, 128>}, {pipeline_mode = #tpu.pipeline_mode<synchronous>, transform_indices = @transform_10, window_bounds = array<i64: 2, 1, 128>}, {pipeline_mode = #tpu.pipeline_mode<synchronous>, transform_indices = @transform_11, window_bounds = array<i64: 2, 128, 128>}, {pipeline_mode = #tpu.pipeline_mode<synchronous>, transform_indices = @transform_12, window_bounds = array<i64: 2, 128, 128>}, {pipeline_mode = #tpu.pipeline_mode<synchronous>, transform_indices = @transform_13, window_bounds = array<i64: 2, 128, 128>}, {pipeline_mode = #tpu.pipeline_mode<synchronous>, transform_indices = @transform_14, window_bounds = array<i64: 2, 128, 128>}, {pipeline_mode = #tpu.pipeline_mode<synchronous>, transform_indices = @transform_15, window_bounds = array<i64: 2, 1, 128>}, {pipeline_mode = #tpu.pipeline_mode<synchronous>, transform_indices = @transform_16, window_bounds = array<i64: 2, 128, 128>}, {pipeline_mode = #tpu.pipeline_mode<synchronous>, transform_indices = @transform_17, window_bounds = array<i64: 2, 1, 128>}, {pipeline_mode = #tpu.pipeline_mode<synchronous>, transform_indices = @transform_18, window_bounds = array<i64: 128, 128>}, {pipeline_mode = #tpu.pipeline_mode<synchronous>, transform_indices = @transform_19, window_bounds = array<i64: 128, 128>}, {pipeline_mode = #tpu.pipeline_mode<synchronous>, transform_indices = @transform_20, window_bounds = array<i64: 1, 128>}, {pipeline_mode = #tpu.pipeline_mode<synchronous>, transform_indices = @transform_21, window_bounds = array<i64: 128, 128>}, {pipeline_mode = #tpu.pipeline_mode<synchronous>, transform_indices = @transform_22, window_bounds = array<i64: 128, 128>}, {pipeline_mode = #tpu.pipeline_mode<synchronous>, transform_indices = @transform_23, window_bounds = array<i64: 128, 128>}, {pipeline_mode = #tpu.pipeline_mode<synchronous>, transform_indices = @transform_24, window_bounds = array<i64: 128, 128>}, {pipeline_mode = #tpu.pipeline_mode<synchronous>, transform_indices = @transform_25, window_bounds = array<i64: 1, 128>}, {pipeline_mode = #tpu.pipeline_mode<synchronous>, transform_indices = @transform_26, window_bounds = array<i64: 128, 128>}, {pipeline_mode = #tpu.pipeline_mode<synchronous>, transform_indices = @transform_27, window_bounds = array<i64: 1, 128>}, {transform_indices = @transform_28, window_bounds = array<i64: 2, 1, 128>}]} {
    %0 = tpu.iota {dimensions = array<i32: 1>} : vector<2x16x1xi32>
    %c0 = arith.constant 0 : index
    %c0_0 = arith.constant 0 : index
    %c0_1 = arith.constant 0 : index
    %1 = vector.load %arg1[%c0, %c0_0, %c0_1] : memref<2x1x1xi32, #tpu.memory_space<vmem>>, vector<2x1x1xi32>
    %2 = vector.broadcast %1 : vector<2x1x1xi32> to vector<2x16x1xi32>
    %3 = arith.cmpi sge, %0, %2 : vector<2x16x1xi32>
    %c0_2 = arith.constant 0 : index
    %c0_3 = arith.constant 0 : index
    %c0_4 = arith.constant 0 : index
    %4 = vector.load %arg2[%c0_2, %c0_3, %c0_4] : memref<2x1x1xi32, #tpu.memory_space<vmem>>, vector<2x1x1xi32>
    %5 = vector.broadcast %4 : vector<2x1x1xi32> to vector<2x16x1xi32>
    %6 = arith.cmpi slt, %0, %5 : vector<2x16x1xi32>
    %7 = arith.andi %3, %6 : vector<2x16x1xi1>
    %8 = arith.extui %7 : vector<2x16x1xi1> to vector<2x16x1xi32>
    %9 = arith.sitofp %8 : vector<2x16x1xi32> to vector<2x16x1xf32>
    %c0_5 = arith.constant 0 : index
    %c0_6 = arith.constant 0 : index
    %c0_7 = arith.constant 0 : index
    %10 = vector.load %arg3[%c0_5, %c0_6, %c0_7] : memref<2x16x128xbf16, #tpu.memory_space<vmem>>, vector<2x16x128xbf16>
    %c0_8 = arith.constant 0 : index
    %c0_9 = arith.constant 0 : index
    %c0_10 = arith.constant 0 : index
    %11 = vector.load %arg4[%c0_8, %c0_9, %c0_10] : memref<2x16x128xbf16, #tpu.memory_space<vmem>>, vector<2x16x128xbf16>
    %c0_11 = arith.constant 0 : index
    %c0_12 = arith.constant 0 : index
    %c0_13 = arith.constant 0 : index
    %12 = vector.load %arg5[%c0_11, %c0_12, %c0_13] : memref<2x128x128xbf16, #tpu.memory_space<vmem>>, vector<1x128x128xbf16>
    %13 = vector.shape_cast %12 : vector<1x128x128xbf16> to vector<128x128xbf16>
    %c0_14 = arith.constant 0 : index
    %c0_15 = arith.constant 0 : index
    %c0_16 = arith.constant 0 : index
    %14 = vector.load %arg6[%c0_14, %c0_15, %c0_16] : memref<2x128x128xbf16, #tpu.memory_space<vmem>>, vector<1x128x128xbf16>
    %15 = vector.shape_cast %14 : vector<1x128x128xbf16> to vector<128x128xbf16>
    %c0_17 = arith.constant 0 : index
    %c0_18 = arith.constant 0 : index
    %c0_19 = arith.constant 0 : index
    %16 = vector.load %arg7[%c0_17, %c0_18, %c0_19] : memref<2x128x128xbf16, #tpu.memory_space<vmem>>, vector<1x128x128xbf16>
    %17 = vector.shape_cast %16 : vector<1x128x128xbf16> to vector<128x128xbf16>
    %c0_20 = arith.constant 0 : index
    %c0_21 = arith.constant 0 : index
    %c0_22 = arith.constant 0 : index
    %18 = vector.load %arg8[%c0_20, %c0_21, %c0_22] : memref<2x128x128xbf16, #tpu.memory_space<vmem>>, vector<1x128x128xbf16>
    %19 = vector.shape_cast %18 : vector<1x128x128xbf16> to vector<128x128xbf16>
    %c0_23 = arith.constant 0 : index
    %c0_24 = arith.constant 0 : index
    %c0_25 = arith.constant 0 : index
    %20 = vector.load %arg9[%c0_23, %c0_24, %c0_25] : memref<2x1x128xf32, #tpu.memory_space<vmem>>, vector<1x1x128xf32>
    %21 = vector.shape_cast %20 : vector<1x1x128xf32> to vector<1x128xf32>
    %c0_26 = arith.constant 0 : index
    %c0_27 = arith.constant 0 : index
    %c0_28 = arith.constant 0 : index
    %22 = vector.load %arg10[%c0_26, %c0_27, %c0_28] : memref<2x128x128xbf16, #tpu.memory_space<vmem>>, vector<1x128x128xbf16>
    %23 = vector.shape_cast %22 : vector<1x128x128xbf16> to vector<128x128xbf16>
    %c0_29 = arith.constant 0 : index
    %c0_30 = arith.constant 0 : index
    %c0_31 = arith.constant 0 : index
    %24 = vector.load %arg11[%c0_29, %c0_30, %c0_31] : memref<2x1x128xf32, #tpu.memory_space<vmem>>, vector<1x1x128xf32>
    %25 = vector.shape_cast %24 : vector<1x1x128xf32> to vector<1x128xf32>
    %26 = vector.shape_cast %10 : vector<2x16x128xbf16> to vector<32x128xbf16>
    %cst = arith.constant dense<0.000000e+00> : vector<32x128xf32>
    %27 = tpu.matmul %26, %13, %cst {dimension_numbers = #tpu.dot_dimension_numbers<[1], [0], [0], [1], [0, 0, 1, 1], [], []>} : vector<32x128xbf16>, vector<128x128xbf16>, vector<32x128xf32> -> vector<32x128xf32>
    %28 = arith.truncf %27 : vector<32x128xf32> to vector<32x128xbf16>
    %29 = vector.shape_cast %28 : vector<32x128xbf16> to vector<2x16x128xbf16>
    %cst_32 = arith.constant dense<0.000000e+00> : vector<32x128xf32>
    %30 = tpu.matmul %26, %15, %cst_32 {dimension_numbers = #tpu.dot_dimension_numbers<[1], [0], [0], [1], [0, 0, 1, 1], [], []>} : vector<32x128xbf16>, vector<128x128xbf16>, vector<32x128xf32> -> vector<32x128xf32>
    %31 = arith.truncf %30 : vector<32x128xf32> to vector<32x128xbf16>
    %32 = vector.shape_cast %31 : vector<32x128xbf16> to vector<2x16x128xbf16>
    %cst_33 = arith.constant dense<0.000000e+00> : vector<32x128xf32>
    %33 = tpu.matmul %26, %17, %cst_33 {dimension_numbers = #tpu.dot_dimension_numbers<[1], [0], [0], [1], [0, 0, 1, 1], [], []>} : vector<32x128xbf16>, vector<128x128xbf16>, vector<32x128xf32> -> vector<32x128xf32>
    %34 = arith.truncf %33 : vector<32x128xf32> to vector<32x128xbf16>
    %35 = vector.shape_cast %34 : vector<32x128xbf16> to vector<2x16x128xbf16>
    %cst_34 = arith.constant dense<0.000000e+00> : vector<2x16x16xf32>
    %36 = tpu.matmul %29, %32, %cst_34 {dimension_numbers = #tpu.dot_dimension_numbers<[2], [2], [1], [1], [0, 0, 0, 1, 1, 1], [0], [0]>} : vector<2x16x128xbf16>, vector<2x16x128xbf16>, vector<2x16x16xf32> -> vector<2x16x16xf32>
    %cst_35 = arith.constant dense<0xFF800000> : vector<2x16xf32>
    %37 = vector.multi_reduction <maximumf>, %36, %cst_35 [2] : vector<2x16x16xf32> to vector<2x16xf32>
    %38 = vector.shape_cast %37 : vector<2x16xf32> to vector<2x16x1xf32>
    %39 = vector.broadcast %38 : vector<2x16x1xf32> to vector<2x16x16xf32>
    %40 = arith.subf %36, %39 : vector<2x16x16xf32>
    %41 = math.exp %40 : vector<2x16x16xf32>
    %cst_36 = arith.constant dense<0.000000e+00> : vector<2x16xf32>
    %42 = vector.multi_reduction <add>, %41, %cst_36 [2] : vector<2x16x16xf32> to vector<2x16xf32>
    %43 = vector.shape_cast %42 : vector<2x16xf32> to vector<2x16x1xf32>
    %44 = tpu.reciprocal %43 {approx = true} : vector<2x16x1xf32> -> vector<2x16x1xf32>
    %45 = vector.broadcast %44 : vector<2x16x1xf32> to vector<2x16x16xf32>
    %46 = arith.mulf %41, %45 : vector<2x16x16xf32>
    %47 = arith.truncf %46 : vector<2x16x16xf32> to vector<2x16x16xbf16>
    %cst_37 = arith.constant dense<0.000000e+00> : vector<2x16x128xf32>
    %48 = tpu.matmul %47, %35, %cst_37 {dimension_numbers = #tpu.dot_dimension_numbers<[2], [1], [1], [2], [0, 0, 0, 1, 1, 2], [0], [0]>} : vector<2x16x16xbf16>, vector<2x16x128xbf16>, vector<2x16x128xf32> -> vector<2x16x128xf32>
    %49 = arith.truncf %48 : vector<2x16x128xf32> to vector<2x16x128xbf16>
    %50 = vector.shape_cast %49 : vector<2x16x128xbf16> to vector<32x128xbf16>
    %cst_38 = arith.constant dense<0.000000e+00> : vector<32x128xf32>
    %51 = tpu.matmul %50, %19, %cst_38 {dimension_numbers = #tpu.dot_dimension_numbers<[1], [0], [0], [1], [0, 0, 1, 1], [], []>} : vector<32x128xbf16>, vector<128x128xbf16>, vector<32x128xf32> -> vector<32x128xf32>
    %52 = vector.broadcast %21 : vector<1x128xf32> to vector<32x128xf32>
    %53 = arith.addf %51, %52 : vector<32x128xf32>
    %cst_39 = arith.constant 0.000000e+00 : f32
    %54 = vector.broadcast %cst_39 : f32 to vector<32x128xf32>
    %55 = arith.maximumf %53, %54 : vector<32x128xf32>
    %56 = arith.truncf %55 : vector<32x128xf32> to vector<32x128xbf16>
    %cst_40 = arith.constant dense<0.000000e+00> : vector<32x128xf32>
    %57 = tpu.matmul %56, %23, %cst_40 {dimension_numbers = #tpu.dot_dimension_numbers<[1], [0], [0], [1], [0, 0, 1, 1], [], []>} : vector<32x128xbf16>, vector<128x128xbf16>, vector<32x128xf32> -> vector<32x128xf32>
    %58 = vector.broadcast %25 : vector<1x128xf32> to vector<32x128xf32>
    %59 = arith.addf %57, %58 : vector<32x128xf32>
    %60 = arith.truncf %59 : vector<32x128xf32> to vector<32x128xbf16>
    %61 = vector.shape_cast %60 : vector<32x128xbf16> to vector<2x16x128xbf16>
    %c1 = arith.constant 1 : index
    %c0_41 = arith.constant 0 : index
    %c0_42 = arith.constant 0 : index
    %62 = vector.load %arg5[%c1, %c0_41, %c0_42] : memref<2x128x128xbf16, #tpu.memory_space<vmem>>, vector<1x128x128xbf16>
    %63 = vector.shape_cast %62 : vector<1x128x128xbf16> to vector<128x128xbf16>
    %c1_43 = arith.constant 1 : index
    %c0_44 = arith.constant 0 : index
    %c0_45 = arith.constant 0 : index
    %64 = vector.load %arg6[%c1_43, %c0_44, %c0_45] : memref<2x128x128xbf16, #tpu.memory_space<vmem>>, vector<1x128x128xbf16>
    %65 = vector.shape_cast %64 : vector<1x128x128xbf16> to vector<128x128xbf16>
    %c1_46 = arith.constant 1 : index
    %c0_47 = arith.constant 0 : index
    %c0_48 = arith.constant 0 : index
    %66 = vector.load %arg7[%c1_46, %c0_47, %c0_48] : memref<2x128x128xbf16, #tpu.memory_space<vmem>>, vector<1x128x128xbf16>
    %67 = vector.shape_cast %66 : vector<1x128x128xbf16> to vector<128x128xbf16>
    %c1_49 = arith.constant 1 : index
    %c0_50 = arith.constant 0 : index
    %c0_51 = arith.constant 0 : index
    %68 = vector.load %arg8[%c1_49, %c0_50, %c0_51] : memref<2x128x128xbf16, #tpu.memory_space<vmem>>, vector<1x128x128xbf16>
    %69 = vector.shape_cast %68 : vector<1x128x128xbf16> to vector<128x128xbf16>
    %c1_52 = arith.constant 1 : index
    %c0_53 = arith.constant 0 : index
    %c0_54 = arith.constant 0 : index
    %70 = vector.load %arg9[%c1_52, %c0_53, %c0_54] : memref<2x1x128xf32, #tpu.memory_space<vmem>>, vector<1x1x128xf32>
    %71 = vector.shape_cast %70 : vector<1x1x128xf32> to vector<1x128xf32>
    %c1_55 = arith.constant 1 : index
    %c0_56 = arith.constant 0 : index
    %c0_57 = arith.constant 0 : index
    %72 = vector.load %arg10[%c1_55, %c0_56, %c0_57] : memref<2x128x128xbf16, #tpu.memory_space<vmem>>, vector<1x128x128xbf16>
    %73 = vector.shape_cast %72 : vector<1x128x128xbf16> to vector<128x128xbf16>
    %c1_58 = arith.constant 1 : index
    %c0_59 = arith.constant 0 : index
    %c0_60 = arith.constant 0 : index
    %74 = vector.load %arg11[%c1_58, %c0_59, %c0_60] : memref<2x1x128xf32, #tpu.memory_space<vmem>>, vector<1x1x128xf32>
    %75 = vector.shape_cast %74 : vector<1x1x128xf32> to vector<1x128xf32>
    %76 = vector.shape_cast %61 : vector<2x16x128xbf16> to vector<32x128xbf16>
    %cst_61 = arith.constant dense<0.000000e+00> : vector<32x128xf32>
    %77 = tpu.matmul %76, %63, %cst_61 {dimension_numbers = #tpu.dot_dimension_numbers<[1], [0], [0], [1], [0, 0, 1, 1], [], []>} : vector<32x128xbf16>, vector<128x128xbf16>, vector<32x128xf32> -> vector<32x128xf32>
    %78 = arith.truncf %77 : vector<32x128xf32> to vector<32x128xbf16>
    %79 = vector.shape_cast %78 : vector<32x128xbf16> to vector<2x16x128xbf16>
    %cst_62 = arith.constant dense<0.000000e+00> : vector<32x128xf32>
    %80 = tpu.matmul %76, %65, %cst_62 {dimension_numbers = #tpu.dot_dimension_numbers<[1], [0], [0], [1], [0, 0, 1, 1], [], []>} : vector<32x128xbf16>, vector<128x128xbf16>, vector<32x128xf32> -> vector<32x128xf32>
    %81 = arith.truncf %80 : vector<32x128xf32> to vector<32x128xbf16>
    %82 = vector.shape_cast %81 : vector<32x128xbf16> to vector<2x16x128xbf16>
    %cst_63 = arith.constant dense<0.000000e+00> : vector<32x128xf32>
    %83 = tpu.matmul %76, %67, %cst_63 {dimension_numbers = #tpu.dot_dimension_numbers<[1], [0], [0], [1], [0, 0, 1, 1], [], []>} : vector<32x128xbf16>, vector<128x128xbf16>, vector<32x128xf32> -> vector<32x128xf32>
    %84 = arith.truncf %83 : vector<32x128xf32> to vector<32x128xbf16>
    %85 = vector.shape_cast %84 : vector<32x128xbf16> to vector<2x16x128xbf16>
    %cst_64 = arith.constant dense<0.000000e+00> : vector<2x16x16xf32>
    %86 = tpu.matmul %79, %82, %cst_64 {dimension_numbers = #tpu.dot_dimension_numbers<[2], [2], [1], [1], [0, 0, 0, 1, 1, 1], [0], [0]>} : vector<2x16x128xbf16>, vector<2x16x128xbf16>, vector<2x16x16xf32> -> vector<2x16x16xf32>
    %cst_65 = arith.constant dense<0xFF800000> : vector<2x16xf32>
    %87 = vector.multi_reduction <maximumf>, %86, %cst_65 [2] : vector<2x16x16xf32> to vector<2x16xf32>
    %88 = vector.shape_cast %87 : vector<2x16xf32> to vector<2x16x1xf32>
    %89 = vector.broadcast %88 : vector<2x16x1xf32> to vector<2x16x16xf32>
    %90 = arith.subf %86, %89 : vector<2x16x16xf32>
    %91 = math.exp %90 : vector<2x16x16xf32>
    %cst_66 = arith.constant dense<0.000000e+00> : vector<2x16xf32>
    %92 = vector.multi_reduction <add>, %91, %cst_66 [2] : vector<2x16x16xf32> to vector<2x16xf32>
    %93 = vector.shape_cast %92 : vector<2x16xf32> to vector<2x16x1xf32>
    %94 = tpu.reciprocal %93 {approx = true} : vector<2x16x1xf32> -> vector<2x16x1xf32>
    %95 = vector.broadcast %94 : vector<2x16x1xf32> to vector<2x16x16xf32>
    %96 = arith.mulf %91, %95 : vector<2x16x16xf32>
    %97 = arith.truncf %96 : vector<2x16x16xf32> to vector<2x16x16xbf16>
    %cst_67 = arith.constant dense<0.000000e+00> : vector<2x16x128xf32>
    %98 = tpu.matmul %97, %85, %cst_67 {dimension_numbers = #tpu.dot_dimension_numbers<[2], [1], [1], [2], [0, 0, 0, 1, 1, 2], [0], [0]>} : vector<2x16x16xbf16>, vector<2x16x128xbf16>, vector<2x16x128xf32> -> vector<2x16x128xf32>
    %99 = arith.truncf %98 : vector<2x16x128xf32> to vector<2x16x128xbf16>
    %100 = vector.shape_cast %99 : vector<2x16x128xbf16> to vector<32x128xbf16>
    %cst_68 = arith.constant dense<0.000000e+00> : vector<32x128xf32>
    %101 = tpu.matmul %100, %69, %cst_68 {dimension_numbers = #tpu.dot_dimension_numbers<[1], [0], [0], [1], [0, 0, 1, 1], [], []>} : vector<32x128xbf16>, vector<128x128xbf16>, vector<32x128xf32> -> vector<32x128xf32>
    %102 = vector.broadcast %71 : vector<1x128xf32> to vector<32x128xf32>
    %103 = arith.addf %101, %102 : vector<32x128xf32>
    %cst_69 = arith.constant 0.000000e+00 : f32
    %104 = vector.broadcast %cst_69 : f32 to vector<32x128xf32>
    %105 = arith.maximumf %103, %104 : vector<32x128xf32>
    %106 = arith.truncf %105 : vector<32x128xf32> to vector<32x128xbf16>
    %cst_70 = arith.constant dense<0.000000e+00> : vector<32x128xf32>
    %107 = tpu.matmul %106, %73, %cst_70 {dimension_numbers = #tpu.dot_dimension_numbers<[1], [0], [0], [1], [0, 0, 1, 1], [], []>} : vector<32x128xbf16>, vector<128x128xbf16>, vector<32x128xf32> -> vector<32x128xf32>
    %108 = vector.broadcast %75 : vector<1x128xf32> to vector<32x128xf32>
    %109 = arith.addf %107, %108 : vector<32x128xf32>
    %110 = arith.truncf %109 : vector<32x128xf32> to vector<32x128xbf16>
    %111 = vector.shape_cast %110 : vector<32x128xbf16> to vector<2x16x128xbf16>
    %c0_71 = arith.constant 0 : index
    %c0_72 = arith.constant 0 : index
    %c0_73 = arith.constant 0 : index
    %112 = vector.load %arg12[%c0_71, %c0_72, %c0_73] : memref<2x128x128xbf16, #tpu.memory_space<vmem>>, vector<1x128x128xbf16>
    %113 = vector.shape_cast %112 : vector<1x128x128xbf16> to vector<128x128xbf16>
    %c0_74 = arith.constant 0 : index
    %c0_75 = arith.constant 0 : index
    %c0_76 = arith.constant 0 : index
    %114 = vector.load %arg13[%c0_74, %c0_75, %c0_76] : memref<2x128x128xbf16, #tpu.memory_space<vmem>>, vector<1x128x128xbf16>
    %115 = vector.shape_cast %114 : vector<1x128x128xbf16> to vector<128x128xbf16>
    %c0_77 = arith.constant 0 : index
    %c0_78 = arith.constant 0 : index
    %c0_79 = arith.constant 0 : index
    %116 = vector.load %arg14[%c0_77, %c0_78, %c0_79] : memref<2x128x128xbf16, #tpu.memory_space<vmem>>, vector<1x128x128xbf16>
    %117 = vector.shape_cast %116 : vector<1x128x128xbf16> to vector<128x128xbf16>
    %c0_80 = arith.constant 0 : index
    %c0_81 = arith.constant 0 : index
    %c0_82 = arith.constant 0 : index
    %118 = vector.load %arg15[%c0_80, %c0_81, %c0_82] : memref<2x128x128xbf16, #tpu.memory_space<vmem>>, vector<1x128x128xbf16>
    %119 = vector.shape_cast %118 : vector<1x128x128xbf16> to vector<128x128xbf16>
    %c0_83 = arith.constant 0 : index
    %c0_84 = arith.constant 0 : index
    %c0_85 = arith.constant 0 : index
    %120 = vector.load %arg16[%c0_83, %c0_84, %c0_85] : memref<2x1x128xf32, #tpu.memory_space<vmem>>, vector<1x1x128xf32>
    %121 = vector.shape_cast %120 : vector<1x1x128xf32> to vector<1x128xf32>
    %c0_86 = arith.constant 0 : index
    %c0_87 = arith.constant 0 : index
    %c0_88 = arith.constant 0 : index
    %122 = vector.load %arg17[%c0_86, %c0_87, %c0_88] : memref<2x128x128xbf16, #tpu.memory_space<vmem>>, vector<1x128x128xbf16>
    %123 = vector.shape_cast %122 : vector<1x128x128xbf16> to vector<128x128xbf16>
    %c0_89 = arith.constant 0 : index
    %c0_90 = arith.constant 0 : index
    %c0_91 = arith.constant 0 : index
    %124 = vector.load %arg18[%c0_89, %c0_90, %c0_91] : memref<2x1x128xf32, #tpu.memory_space<vmem>>, vector<1x1x128xf32>
    %125 = vector.shape_cast %124 : vector<1x1x128xf32> to vector<1x128xf32>
    %126 = vector.shape_cast %11 : vector<2x16x128xbf16> to vector<32x128xbf16>
    %cst_92 = arith.constant dense<0.000000e+00> : vector<32x128xf32>
    %127 = tpu.matmul %126, %113, %cst_92 {dimension_numbers = #tpu.dot_dimension_numbers<[1], [0], [0], [1], [0, 0, 1, 1], [], []>} : vector<32x128xbf16>, vector<128x128xbf16>, vector<32x128xf32> -> vector<32x128xf32>
    %128 = arith.truncf %127 : vector<32x128xf32> to vector<32x128xbf16>
    %129 = vector.shape_cast %128 : vector<32x128xbf16> to vector<2x16x128xbf16>
    %cst_93 = arith.constant dense<0.000000e+00> : vector<32x128xf32>
    %130 = tpu.matmul %126, %115, %cst_93 {dimension_numbers = #tpu.dot_dimension_numbers<[1], [0], [0], [1], [0, 0, 1, 1], [], []>} : vector<32x128xbf16>, vector<128x128xbf16>, vector<32x128xf32> -> vector<32x128xf32>
    %131 = arith.truncf %130 : vector<32x128xf32> to vector<32x128xbf16>
    %132 = vector.shape_cast %131 : vector<32x128xbf16> to vector<2x16x128xbf16>
    %cst_94 = arith.constant dense<0.000000e+00> : vector<32x128xf32>
    %133 = tpu.matmul %126, %117, %cst_94 {dimension_numbers = #tpu.dot_dimension_numbers<[1], [0], [0], [1], [0, 0, 1, 1], [], []>} : vector<32x128xbf16>, vector<128x128xbf16>, vector<32x128xf32> -> vector<32x128xf32>
    %134 = arith.truncf %133 : vector<32x128xf32> to vector<32x128xbf16>
    %135 = vector.shape_cast %134 : vector<32x128xbf16> to vector<2x16x128xbf16>
    %cst_95 = arith.constant dense<0.000000e+00> : vector<2x16x16xf32>
    %136 = tpu.matmul %129, %132, %cst_95 {dimension_numbers = #tpu.dot_dimension_numbers<[2], [2], [1], [1], [0, 0, 0, 1, 1, 1], [0], [0]>} : vector<2x16x128xbf16>, vector<2x16x128xbf16>, vector<2x16x16xf32> -> vector<2x16x16xf32>
    %cst_96 = arith.constant dense<0xFF800000> : vector<2x16xf32>
    %137 = vector.multi_reduction <maximumf>, %136, %cst_96 [2] : vector<2x16x16xf32> to vector<2x16xf32>
    %138 = vector.shape_cast %137 : vector<2x16xf32> to vector<2x16x1xf32>
    %139 = vector.broadcast %138 : vector<2x16x1xf32> to vector<2x16x16xf32>
    %140 = arith.subf %136, %139 : vector<2x16x16xf32>
    %141 = math.exp %140 : vector<2x16x16xf32>
    %cst_97 = arith.constant dense<0.000000e+00> : vector<2x16xf32>
    %142 = vector.multi_reduction <add>, %141, %cst_97 [2] : vector<2x16x16xf32> to vector<2x16xf32>
    %143 = vector.shape_cast %142 : vector<2x16xf32> to vector<2x16x1xf32>
    %144 = tpu.reciprocal %143 {approx = true} : vector<2x16x1xf32> -> vector<2x16x1xf32>
    %145 = vector.broadcast %144 : vector<2x16x1xf32> to vector<2x16x16xf32>
    %146 = arith.mulf %141, %145 : vector<2x16x16xf32>
    %147 = arith.truncf %146 : vector<2x16x16xf32> to vector<2x16x16xbf16>
    %cst_98 = arith.constant dense<0.000000e+00> : vector<2x16x128xf32>
    %148 = tpu.matmul %147, %135, %cst_98 {dimension_numbers = #tpu.dot_dimension_numbers<[2], [1], [1], [2], [0, 0, 0, 1, 1, 2], [0], [0]>} : vector<2x16x16xbf16>, vector<2x16x128xbf16>, vector<2x16x128xf32> -> vector<2x16x128xf32>
    %149 = vector.broadcast %9 : vector<2x16x1xf32> to vector<2x16x128xf32>
    %150 = arith.mulf %148, %149 : vector<2x16x128xf32>
    %151 = arith.truncf %150 : vector<2x16x128xf32> to vector<2x16x128xbf16>
    %152 = vector.shape_cast %151 : vector<2x16x128xbf16> to vector<32x128xbf16>
    %cst_99 = arith.constant dense<0.000000e+00> : vector<32x128xf32>
    %153 = tpu.matmul %152, %119, %cst_99 {dimension_numbers = #tpu.dot_dimension_numbers<[1], [0], [0], [1], [0, 0, 1, 1], [], []>} : vector<32x128xbf16>, vector<128x128xbf16>, vector<32x128xf32> -> vector<32x128xf32>
    %154 = vector.broadcast %121 : vector<1x128xf32> to vector<32x128xf32>
    %155 = arith.addf %153, %154 : vector<32x128xf32>
    %cst_100 = arith.constant 0.000000e+00 : f32
    %156 = vector.broadcast %cst_100 : f32 to vector<32x128xf32>
    %157 = arith.maximumf %155, %156 : vector<32x128xf32>
    %158 = arith.truncf %157 : vector<32x128xf32> to vector<32x128xbf16>
    %cst_101 = arith.constant dense<0.000000e+00> : vector<32x128xf32>
    %159 = tpu.matmul %158, %123, %cst_101 {dimension_numbers = #tpu.dot_dimension_numbers<[1], [0], [0], [1], [0, 0, 1, 1], [], []>} : vector<32x128xbf16>, vector<128x128xbf16>, vector<32x128xf32> -> vector<32x128xf32>
    %160 = vector.broadcast %125 : vector<1x128xf32> to vector<32x128xf32>
    %161 = arith.addf %159, %160 : vector<32x128xf32>
    %162 = arith.truncf %161 : vector<32x128xf32> to vector<32x128xbf16>
    %163 = vector.shape_cast %162 : vector<32x128xbf16> to vector<2x16x128xbf16>
    %c1_102 = arith.constant 1 : index
    %c0_103 = arith.constant 0 : index
    %c0_104 = arith.constant 0 : index
    %164 = vector.load %arg12[%c1_102, %c0_103, %c0_104] : memref<2x128x128xbf16, #tpu.memory_space<vmem>>, vector<1x128x128xbf16>
    %165 = vector.shape_cast %164 : vector<1x128x128xbf16> to vector<128x128xbf16>
    %c1_105 = arith.constant 1 : index
    %c0_106 = arith.constant 0 : index
    %c0_107 = arith.constant 0 : index
    %166 = vector.load %arg13[%c1_105, %c0_106, %c0_107] : memref<2x128x128xbf16, #tpu.memory_space<vmem>>, vector<1x128x128xbf16>
    %167 = vector.shape_cast %166 : vector<1x128x128xbf16> to vector<128x128xbf16>
    %c1_108 = arith.constant 1 : index
    %c0_109 = arith.constant 0 : index
    %c0_110 = arith.constant 0 : index
    %168 = vector.load %arg14[%c1_108, %c0_109, %c0_110] : memref<2x128x128xbf16, #tpu.memory_space<vmem>>, vector<1x128x128xbf16>
    %169 = vector.shape_cast %168 : vector<1x128x128xbf16> to vector<128x128xbf16>
    %c1_111 = arith.constant 1 : index
    %c0_112 = arith.constant 0 : index
    %c0_113 = arith.constant 0 : index
    %170 = vector.load %arg15[%c1_111, %c0_112, %c0_113] : memref<2x128x128xbf16, #tpu.memory_space<vmem>>, vector<1x128x128xbf16>
    %171 = vector.shape_cast %170 : vector<1x128x128xbf16> to vector<128x128xbf16>
    %c1_114 = arith.constant 1 : index
    %c0_115 = arith.constant 0 : index
    %c0_116 = arith.constant 0 : index
    %172 = vector.load %arg16[%c1_114, %c0_115, %c0_116] : memref<2x1x128xf32, #tpu.memory_space<vmem>>, vector<1x1x128xf32>
    %173 = vector.shape_cast %172 : vector<1x1x128xf32> to vector<1x128xf32>
    %c1_117 = arith.constant 1 : index
    %c0_118 = arith.constant 0 : index
    %c0_119 = arith.constant 0 : index
    %174 = vector.load %arg17[%c1_117, %c0_118, %c0_119] : memref<2x128x128xbf16, #tpu.memory_space<vmem>>, vector<1x128x128xbf16>
    %175 = vector.shape_cast %174 : vector<1x128x128xbf16> to vector<128x128xbf16>
    %c1_120 = arith.constant 1 : index
    %c0_121 = arith.constant 0 : index
    %c0_122 = arith.constant 0 : index
    %176 = vector.load %arg18[%c1_120, %c0_121, %c0_122] : memref<2x1x128xf32, #tpu.memory_space<vmem>>, vector<1x1x128xf32>
    %177 = vector.shape_cast %176 : vector<1x1x128xf32> to vector<1x128xf32>
    %178 = vector.shape_cast %163 : vector<2x16x128xbf16> to vector<32x128xbf16>
    %cst_123 = arith.constant dense<0.000000e+00> : vector<32x128xf32>
    %179 = tpu.matmul %178, %165, %cst_123 {dimension_numbers = #tpu.dot_dimension_numbers<[1], [0], [0], [1], [0, 0, 1, 1], [], []>} : vector<32x128xbf16>, vector<128x128xbf16>, vector<32x128xf32> -> vector<32x128xf32>
    %180 = arith.truncf %179 : vector<32x128xf32> to vector<32x128xbf16>
    %181 = vector.shape_cast %180 : vector<32x128xbf16> to vector<2x16x128xbf16>
    %cst_124 = arith.constant dense<0.000000e+00> : vector<32x128xf32>
    %182 = tpu.matmul %178, %167, %cst_124 {dimension_numbers = #tpu.dot_dimension_numbers<[1], [0], [0], [1], [0, 0, 1, 1], [], []>} : vector<32x128xbf16>, vector<128x128xbf16>, vector<32x128xf32> -> vector<32x128xf32>
    %183 = arith.truncf %182 : vector<32x128xf32> to vector<32x128xbf16>
    %184 = vector.shape_cast %183 : vector<32x128xbf16> to vector<2x16x128xbf16>
    %cst_125 = arith.constant dense<0.000000e+00> : vector<32x128xf32>
    %185 = tpu.matmul %178, %169, %cst_125 {dimension_numbers = #tpu.dot_dimension_numbers<[1], [0], [0], [1], [0, 0, 1, 1], [], []>} : vector<32x128xbf16>, vector<128x128xbf16>, vector<32x128xf32> -> vector<32x128xf32>
    %186 = arith.truncf %185 : vector<32x128xf32> to vector<32x128xbf16>
    %187 = vector.shape_cast %186 : vector<32x128xbf16> to vector<2x16x128xbf16>
    %cst_126 = arith.constant dense<0.000000e+00> : vector<2x16x16xf32>
    %188 = tpu.matmul %181, %184, %cst_126 {dimension_numbers = #tpu.dot_dimension_numbers<[2], [2], [1], [1], [0, 0, 0, 1, 1, 1], [0], [0]>} : vector<2x16x128xbf16>, vector<2x16x128xbf16>, vector<2x16x16xf32> -> vector<2x16x16xf32>
    %cst_127 = arith.constant dense<0xFF800000> : vector<2x16xf32>
    %189 = vector.multi_reduction <maximumf>, %188, %cst_127 [2] : vector<2x16x16xf32> to vector<2x16xf32>
    %190 = vector.shape_cast %189 : vector<2x16xf32> to vector<2x16x1xf32>
    %191 = vector.broadcast %190 : vector<2x16x1xf32> to vector<2x16x16xf32>
    %192 = arith.subf %188, %191 : vector<2x16x16xf32>
    %193 = math.exp %192 : vector<2x16x16xf32>
    %cst_128 = arith.constant dense<0.000000e+00> : vector<2x16xf32>
    %194 = vector.multi_reduction <add>, %193, %cst_128 [2] : vector<2x16x16xf32> to vector<2x16xf32>
    %195 = vector.shape_cast %194 : vector<2x16xf32> to vector<2x16x1xf32>
    %196 = tpu.reciprocal %195 {approx = true} : vector<2x16x1xf32> -> vector<2x16x1xf32>
    %197 = vector.broadcast %196 : vector<2x16x1xf32> to vector<2x16x16xf32>
    %198 = arith.mulf %193, %197 : vector<2x16x16xf32>
    %199 = arith.truncf %198 : vector<2x16x16xf32> to vector<2x16x16xbf16>
    %cst_129 = arith.constant dense<0.000000e+00> : vector<2x16x128xf32>
    %200 = tpu.matmul %199, %187, %cst_129 {dimension_numbers = #tpu.dot_dimension_numbers<[2], [1], [1], [2], [0, 0, 0, 1, 1, 2], [0], [0]>} : vector<2x16x16xbf16>, vector<2x16x128xbf16>, vector<2x16x128xf32> -> vector<2x16x128xf32>
    %201 = vector.broadcast %9 : vector<2x16x1xf32> to vector<2x16x128xf32>
    %202 = arith.mulf %200, %201 : vector<2x16x128xf32>
    %203 = arith.truncf %202 : vector<2x16x128xf32> to vector<2x16x128xbf16>
    %204 = vector.shape_cast %203 : vector<2x16x128xbf16> to vector<32x128xbf16>
    %cst_130 = arith.constant dense<0.000000e+00> : vector<32x128xf32>
    %205 = tpu.matmul %204, %171, %cst_130 {dimension_numbers = #tpu.dot_dimension_numbers<[1], [0], [0], [1], [0, 0, 1, 1], [], []>} : vector<32x128xbf16>, vector<128x128xbf16>, vector<32x128xf32> -> vector<32x128xf32>
    %206 = vector.broadcast %173 : vector<1x128xf32> to vector<32x128xf32>
    %207 = arith.addf %205, %206 : vector<32x128xf32>
    %cst_131 = arith.constant 0.000000e+00 : f32
    %208 = vector.broadcast %cst_131 : f32 to vector<32x128xf32>
    %209 = arith.maximumf %207, %208 : vector<32x128xf32>
    %210 = arith.truncf %209 : vector<32x128xf32> to vector<32x128xbf16>
    %cst_132 = arith.constant dense<0.000000e+00> : vector<32x128xf32>
    %211 = tpu.matmul %210, %175, %cst_132 {dimension_numbers = #tpu.dot_dimension_numbers<[1], [0], [0], [1], [0, 0, 1, 1], [], []>} : vector<32x128xbf16>, vector<128x128xbf16>, vector<32x128xf32> -> vector<32x128xf32>
    %212 = vector.broadcast %177 : vector<1x128xf32> to vector<32x128xf32>
    %213 = arith.addf %211, %212 : vector<32x128xf32>
    %214 = arith.truncf %213 : vector<32x128xf32> to vector<32x128xbf16>
    %215 = vector.shape_cast %214 : vector<32x128xbf16> to vector<2x16x128xbf16>
    %216 = vector.shape_cast %111 : vector<2x16x128xbf16> to vector<32x128xbf16>
    %217 = vector.shape_cast %215 : vector<2x16x128xbf16> to vector<32x128xbf16>
    %c0_133 = arith.constant 0 : index
    %c0_134 = arith.constant 0 : index
    %218 = vector.load %arg19[%c0_133, %c0_134] : memref<128x128xbf16, #tpu.memory_space<vmem>>, vector<128x128xbf16>
    %cst_135 = arith.constant dense<0.000000e+00> : vector<32x128xf32>
    %219 = tpu.matmul %216, %218, %cst_135 {dimension_numbers = #tpu.dot_dimension_numbers<[1], [0], [0], [1], [0, 0, 1, 1], [], []>} : vector<32x128xbf16>, vector<128x128xbf16>, vector<32x128xf32> -> vector<32x128xf32>
    %c0_136 = arith.constant 0 : index
    %c0_137 = arith.constant 0 : index
    %220 = vector.load %arg20[%c0_136, %c0_137] : memref<128x128xbf16, #tpu.memory_space<vmem>>, vector<128x128xbf16>
    %cst_138 = arith.constant dense<0.000000e+00> : vector<32x128xf32>
    %221 = tpu.matmul %217, %220, %cst_138 {dimension_numbers = #tpu.dot_dimension_numbers<[1], [0], [0], [1], [0, 0, 1, 1], [], []>} : vector<32x128xbf16>, vector<128x128xbf16>, vector<32x128xf32> -> vector<32x128xf32>
    %222 = arith.addf %219, %221 : vector<32x128xf32>
    %c0_139 = arith.constant 0 : index
    %c0_140 = arith.constant 0 : index
    %223 = vector.load %arg21[%c0_139, %c0_140] : memref<1x128xf32, #tpu.memory_space<vmem>>, vector<1x128xf32>
    %224 = vector.broadcast %223 : vector<1x128xf32> to vector<32x128xf32>
    %225 = arith.addf %222, %224 : vector<32x128xf32>
    %226 = arith.truncf %225 : vector<32x128xf32> to vector<32x128xbf16>
    %227 = vector.shape_cast %226 : vector<32x128xbf16> to vector<2x16x128xbf16>
    %c0_141 = arith.constant 0 : index
    %c0_142 = arith.constant 0 : index
    %228 = vector.load %arg23[%c0_141, %c0_142] : memref<128x128xbf16, #tpu.memory_space<vmem>>, vector<128x128xbf16>
    %cst_143 = arith.constant dense<0.000000e+00> : vector<32x128xf32>
    %229 = tpu.matmul %226, %228, %cst_143 {dimension_numbers = #tpu.dot_dimension_numbers<[1], [0], [0], [1], [0, 0, 1, 1], [], []>} : vector<32x128xbf16>, vector<128x128xbf16>, vector<32x128xf32> -> vector<32x128xf32>
    %230 = arith.truncf %229 : vector<32x128xf32> to vector<32x128xbf16>
    %231 = vector.shape_cast %230 : vector<32x128xbf16> to vector<2x16x128xbf16>
    %c0_144 = arith.constant 0 : index
    %c0_145 = arith.constant 0 : index
    %232 = vector.load %arg24[%c0_144, %c0_145] : memref<128x128xbf16, #tpu.memory_space<vmem>>, vector<128x128xbf16>
    %cst_146 = arith.constant dense<0.000000e+00> : vector<32x128xf32>
    %233 = tpu.matmul %226, %232, %cst_146 {dimension_numbers = #tpu.dot_dimension_numbers<[1], [0], [0], [1], [0, 0, 1, 1], [], []>} : vector<32x128xbf16>, vector<128x128xbf16>, vector<32x128xf32> -> vector<32x128xf32>
    %234 = arith.truncf %233 : vector<32x128xf32> to vector<32x128xbf16>
    %235 = vector.shape_cast %234 : vector<32x128xbf16> to vector<2x16x128xbf16>
    %236 = vector.extract_strided_slice %227 {offsets = [0, 0, 0], sizes = [2, 1, 128], strides = [1, 1, 1]} : vector<2x16x128xbf16> to vector<2x1x128xbf16>
    %237 = vector.shape_cast %236 : vector<2x1x128xbf16> to vector<2x128xbf16>
    %c0_147 = arith.constant 0 : index
    %c0_148 = arith.constant 0 : index
    %238 = vector.load %arg22[%c0_147, %c0_148] : memref<128x128xbf16, #tpu.memory_space<vmem>>, vector<128x128xbf16>
    %cst_149 = arith.constant dense<0.000000e+00> : vector<2x128xf32>
    %239 = tpu.matmul %237, %238, %cst_149 {dimension_numbers = #tpu.dot_dimension_numbers<[1], [0], [0], [1], [0, 0, 1, 1], [], []>} : vector<2x128xbf16>, vector<128x128xbf16>, vector<2x128xf32> -> vector<2x128xf32>
    %240 = arith.truncf %239 : vector<2x128xf32> to vector<2x128xbf16>
    %241 = vector.shape_cast %240 : vector<2x128xbf16> to vector<2x1x128xbf16>
    %cst_150 = arith.constant dense<0.000000e+00> : vector<2x1x16xf32>
    %242 = tpu.matmul %241, %231, %cst_150 {dimension_numbers = #tpu.dot_dimension_numbers<[2], [2], [1], [1], [0, 0, 0, 1, 1, 1], [0], [0]>} : vector<2x1x128xbf16>, vector<2x16x128xbf16>, vector<2x1x16xf32> -> vector<2x1x16xf32>
    %cst_151 = arith.constant dense<0xFF800000> : vector<2x1xf32>
    %243 = vector.multi_reduction <maximumf>, %242, %cst_151 [2] : vector<2x1x16xf32> to vector<2x1xf32>
    %244 = vector.shape_cast %243 : vector<2x1xf32> to vector<2x1x1xf32>
    %245 = vector.broadcast %244 : vector<2x1x1xf32> to vector<2x1x16xf32>
    %246 = arith.subf %242, %245 : vector<2x1x16xf32>
    %247 = math.exp %246 : vector<2x1x16xf32>
    %cst_152 = arith.constant dense<0.000000e+00> : vector<2x1xf32>
    %248 = vector.multi_reduction <add>, %247, %cst_152 [2] : vector<2x1x16xf32> to vector<2x1xf32>
    %249 = vector.shape_cast %248 : vector<2x1xf32> to vector<2x1x1xf32>
    %250 = tpu.reciprocal %249 {approx = true} : vector<2x1x1xf32> -> vector<2x1x1xf32>
    %251 = vector.broadcast %250 : vector<2x1x1xf32> to vector<2x1x16xf32>
    %252 = arith.mulf %247, %251 : vector<2x1x16xf32>
    %253 = arith.truncf %252 : vector<2x1x16xf32> to vector<2x1x16xbf16>
    %cst_153 = arith.constant dense<0.000000e+00> : vector<2x1x128xf32>
    %254 = tpu.matmul %253, %235, %cst_153 {dimension_numbers = #tpu.dot_dimension_numbers<[2], [1], [1], [2], [0, 0, 0, 1, 1, 2], [0], [0]>} : vector<2x1x16xbf16>, vector<2x16x128xbf16>, vector<2x1x128xf32> -> vector<2x1x128xf32>
    %255 = vector.shape_cast %254 : vector<2x1x128xf32> to vector<2x128xf32>
    %256 = arith.truncf %255 : vector<2x128xf32> to vector<2x128xbf16>
    %c0_154 = arith.constant 0 : index
    %c0_155 = arith.constant 0 : index
    %257 = vector.load %arg25[%c0_154, %c0_155] : memref<128x128xbf16, #tpu.memory_space<vmem>>, vector<128x128xbf16>
    %cst_156 = arith.constant dense<0.000000e+00> : vector<2x128xf32>
    %258 = tpu.matmul %256, %257, %cst_156 {dimension_numbers = #tpu.dot_dimension_numbers<[1], [0], [0], [1], [0, 0, 1, 1], [], []>} : vector<2x128xbf16>, vector<128x128xbf16>, vector<2x128xf32> -> vector<2x128xf32>
    %c0_157 = arith.constant 0 : index
    %c0_158 = arith.constant 0 : index
    %259 = vector.load %arg26[%c0_157, %c0_158] : memref<1x128xf32, #tpu.memory_space<vmem>>, vector<1x128xf32>
    %260 = vector.broadcast %259 : vector<1x128xf32> to vector<2x128xf32>
    %261 = arith.addf %258, %260 : vector<2x128xf32>
    %262 = math.tanh %261 : vector<2x128xf32>
    %263 = arith.truncf %262 : vector<2x128xf32> to vector<2x128xbf16>
    %c0_159 = arith.constant 0 : index
    %c0_160 = arith.constant 0 : index
    %264 = vector.load %arg27[%c0_159, %c0_160] : memref<128x128xbf16, #tpu.memory_space<vmem>>, vector<128x128xbf16>
    %cst_161 = arith.constant dense<0.000000e+00> : vector<2x128xf32>
    %265 = tpu.matmul %263, %264, %cst_161 {dimension_numbers = #tpu.dot_dimension_numbers<[1], [0], [0], [1], [0, 0, 1, 1], [], []>} : vector<2x128xbf16>, vector<128x128xbf16>, vector<2x128xf32> -> vector<2x128xf32>
    %c0_162 = arith.constant 0 : index
    %c0_163 = arith.constant 0 : index
    %266 = vector.load %arg28[%c0_162, %c0_163] : memref<1x128xf32, #tpu.memory_space<vmem>>, vector<1x128xf32>
    %267 = vector.broadcast %266 : vector<1x128xf32> to vector<2x128xf32>
    %268 = arith.addf %265, %267 : vector<2x128xf32>
    %269 = vector.shape_cast %268 : vector<2x128xf32> to vector<2x1x128xf32>
    %c0_164 = arith.constant 0 : index
    %c0_165 = arith.constant 0 : index
    %c0_166 = arith.constant 0 : index
    %270 = vector.load %arg29[%c0_164, %c0_165, %c0_166] : memref<2x1x128xf32, #tpu.memory_space<vmem>>, vector<2x1x128xf32>
    tpu.vector_store %arg29[%c0_164, %c0_165, %c0_166], %269 {strides = array<i32>} : memref<2x1x128xf32, #tpu.memory_space<vmem>>, vector<2x1x128xf32>,
    return
  }
  func.func @transform_0(%arg0: i32) -> (i32, i32, i32) {
    %c0_i32 = arith.constant 0 : i32
    %c0_i32_0 = arith.constant 0 : i32
    %c0_i32_1 = arith.constant 0 : i32
    return %arg0, %c0_i32, %c0_i32_0 : i32, i32, i32
  }
  func.func @transform_1(%arg0: i32) -> (i32, i32, i32) {
    %c0_i32 = arith.constant 0 : i32
    %c0_i32_0 = arith.constant 0 : i32
    %c0_i32_1 = arith.constant 0 : i32
    return %arg0, %c0_i32, %c0_i32_0 : i32, i32, i32
  }
  func.func @transform_2(%arg0: i32) -> (i32, i32, i32) {
    %c0_i32 = arith.constant 0 : i32
    %c0_i32_0 = arith.constant 0 : i32
    %c0_i32_1 = arith.constant 0 : i32
    return %arg0, %c0_i32, %c0_i32_0 : i32, i32, i32
  }
  func.func @transform_3(%arg0: i32) -> (i32, i32, i32) {
    %c0_i32 = arith.constant 0 : i32
    %c0_i32_0 = arith.constant 0 : i32
    %c0_i32_1 = arith.constant 0 : i32
    return %arg0, %c0_i32, %c0_i32_0 : i32, i32, i32
  }
  func.func @transform_4(%arg0: i32) -> (i32, i32, i32) {
    %c0_i32 = arith.constant 0 : i32
    %c0_i32_0 = arith.constant 0 : i32
    %c0_i32_1 = arith.constant 0 : i32
    %c0_i32_2 = arith.constant 0 : i32
    return %c0_i32, %c0_i32_0, %c0_i32_1 : i32, i32, i32
  }
  func.func @transform_5(%arg0: i32) -> (i32, i32, i32) {
    %c0_i32 = arith.constant 0 : i32
    %c0_i32_0 = arith.constant 0 : i32
    %c0_i32_1 = arith.constant 0 : i32
    %c0_i32_2 = arith.constant 0 : i32
    return %c0_i32, %c0_i32_0, %c0_i32_1 : i32, i32, i32
  }
  func.func @transform_6(%arg0: i32) -> (i32, i32, i32) {
    %c0_i32 = arith.constant 0 : i32
    %c0_i32_0 = arith.constant 0 : i32
    %c0_i32_1 = arith.constant 0 : i32
    %c0_i32_2 = arith.constant 0 : i32
    return %c0_i32, %c0_i32_0, %c0_i32_1 : i32, i32, i32
  }
  func.func @transform_7(%arg0: i32) -> (i32, i32, i32) {
    %c0_i32 = arith.constant 0 : i32
    %c0_i32_0 = arith.constant 0 : i32
    %c0_i32_1 = arith.constant 0 : i32
    %c0_i32_2 = arith.constant 0 : i32
    return %c0_i32, %c0_i32_0, %c0_i32_1 : i32, i32, i32
  }
  func.func @transform_8(%arg0: i32) -> (i32, i32, i32) {
    %c0_i32 = arith.constant 0 : i32
    %c0_i32_0 = arith.constant 0 : i32
    %c0_i32_1 = arith.constant 0 : i32
    %c0_i32_2 = arith.constant 0 : i32
    return %c0_i32, %c0_i32_0, %c0_i32_1 : i32, i32, i32
  }
  func.func @transform_9(%arg0: i32) -> (i32, i32, i32) {
    %c0_i32 = arith.constant 0 : i32
    %c0_i32_0 = arith.constant 0 : i32
    %c0_i32_1 = arith.constant 0 : i32
    %c0_i32_2 = arith.constant 0 : i32
    return %c0_i32, %c0_i32_0, %c0_i32_1 : i32, i32, i32
  }
  func.func @transform_10(%arg0: i32) -> (i32, i32, i32) {
    %c0_i32 = arith.constant 0 : i32
    %c0_i32_0 = arith.constant 0 : i32
    %c0_i32_1 = arith.constant 0 : i32
    %c0_i32_2 = arith.constant 0 : i32
    return %c0_i32, %c0_i32_0, %c0_i32_1 : i32, i32, i32
  }
  func.func @transform_11(%arg0: i32) -> (i32, i32, i32) {
    %c0_i32 = arith.constant 0 : i32
    %c0_i32_0 = arith.constant 0 : i32
    %c0_i32_1 = arith.constant 0 : i32
    %c0_i32_2 = arith.constant 0 : i32
    return %c0_i32, %c0_i32_0, %c0_i32_1 : i32, i32, i32
  }
  func.func @transform_12(%arg0: i32) -> (i32, i32, i32) {
    %c0_i32 = arith.constant 0 : i32
    %c0_i32_0 = arith.constant 0 : i32
    %c0_i32_1 = arith.constant 0 : i32
    %c0_i32_2 = arith.constant 0 : i32
    return %c0_i32, %c0_i32_0, %c0_i32_1 : i32, i32, i32
  }
  func.func @transform_13(%arg0: i32) -> (i32, i32, i32) {
    %c0_i32 = arith.constant 0 : i32
    %c0_i32_0 = arith.constant 0 : i32
    %c0_i32_1 = arith.constant 0 : i32
    %c0_i32_2 = arith.constant 0 : i32
    return %c0_i32, %c0_i32_0, %c0_i32_1 : i32, i32, i32
  }
  func.func @transform_14(%arg0: i32) -> (i32, i32, i32) {
    %c0_i32 = arith.constant 0 : i32
    %c0_i32_0 = arith.constant 0 : i32
    %c0_i32_1 = arith.constant 0 : i32
    %c0_i32_2 = arith.constant 0 : i32
    return %c0_i32, %c0_i32_0, %c0_i32_1 : i32, i32, i32
  }
  func.func @transform_15(%arg0: i32) -> (i32, i32, i32) {
    %c0_i32 = arith.constant 0 : i32
    %c0_i32_0 = arith.constant 0 : i32
    %c0_i32_1 = arith.constant 0 : i32
    %c0_i32_2 = arith.constant 0 : i32
    return %c0_i32, %c0_i32_0, %c0_i32_1 : i32, i32, i32
  }
  func.func @transform_16(%arg0: i32) -> (i32, i32, i32) {
    %c0_i32 = arith.constant 0 : i32
    %c0_i32_0 = arith.constant 0 : i32
    %c0_i32_1 = arith.constant 0 : i32
    %c0_i32_2 = arith.constant 0 : i32
    return %c0_i32, %c0_i32_0, %c0_i32_1 : i32, i32, i32
  }
  func.func @transform_17(%arg0: i32) -> (i32, i32, i32) {
    %c0_i32 = arith.constant 0 : i32
    %c0_i32_0 = arith.constant 0 : i32
    %c0_i32_1 = arith.constant 0 : i32
    %c0_i32_2 = arith.constant 0 : i32
    return %c0_i32, %c0_i32_0, %c0_i32_1 : i32, i32, i32
  }
  func.func @transform_18(%arg0: i32) -> (i32, i32) {
    %c0_i32 = arith.constant 0 : i32
    %c0_i32_0 = arith.constant 0 : i32
    %c0_i32_1 = arith.constant 0 : i32
    return %c0_i32, %c0_i32_0 : i32, i32
  }
  func.func @transform_19(%arg0: i32) -> (i32, i32) {
    %c0_i32 = arith.constant 0 : i32
    %c0_i32_0 = arith.constant 0 : i32
    %c0_i32_1 = arith.constant 0 : i32
    return %c0_i32, %c0_i32_0 : i32, i32
  }
  func.func @transform_20(%arg0: i32) -> (i32, i32) {
    %c0_i32 = arith.constant 0 : i32
    %c0_i32_0 = arith.constant 0 : i32
    %c0_i32_1 = arith.constant 0 : i32
    return %c0_i32, %c0_i32_0 : i32, i32
  }
  func.func @transform_21(%arg0: i32) -> (i32, i32) {
    %c0_i32 = arith.constant 0 : i32
    %c0_i32_0 = arith.constant 0 : i32
    %c0_i32_1 = arith.constant 0 : i32
    return %c0_i32, %c0_i32_0 : i32, i32
  }
  func.func @transform_22(%arg0: i32) -> (i32, i32) {
    %c0_i32 = arith.constant 0 : i32
    %c0_i32_0 = arith.constant 0 : i32
    %c0_i32_1 = arith.constant 0 : i32
    return %c0_i32, %c0_i32_0 : i32, i32
  }
  func.func @transform_23(%arg0: i32) -> (i32, i32) {
    %c0_i32 = arith.constant 0 : i32
    %c0_i32_0 = arith.constant 0 : i32
    %c0_i32_1 = arith.constant 0 : i32
    return %c0_i32, %c0_i32_0 : i32, i32
  }
  func.func @transform_24(%arg0: i32) -> (i32, i32) {
    %c0_i32 = arith.constant 0 : i32
    %c0_i32_0 = arith.constant 0 : i32
    %c0_i32_1 = arith.constant 0 : i32
    return %c0_i32, %c0_i32_0 : i32, i32
  }
  func.func @transform_25(%arg0: i32) -> (i32, i32) {
    %c0_i32 = arith.constant 0 : i32
    %c0_i32_0 = arith.constant 0 : i32
    %c0_i32_1 = arith.constant 0 : i32
    return %c0_i32, %c0_i32_0 : i32, i32
  }
  func.func @transform_26(%arg0: i32) -> (i32, i32) {
    %c0_i32 = arith.constant 0 : i32
    %c0_i32_0 = arith.constant 0 : i32
    %c0_i32_1 = arith.constant 0 : i32
    return %c0_i32, %c0_i32_0 : i32, i32
  }
  func.func @transform_27(%arg0: i32) -> (i32, i32) {
    %c0_i32 = arith.constant 0 : i32
    %c0_i32_0 = arith.constant 0 : i32
    %c0_i32_1 = arith.constant 0 : i32
    return %c0_i32, %c0_i32_0 : i32, i32
  }
  func.func @transform_28(%arg0: i32) -> (i32, i32, i32) {
    %c0_i32 = arith.constant 0 : i32
    %c0_i32_0 = arith.constant 0 : i32
    %c0_i32_1 = arith.constant 0 : i32
    return %arg0, %c0_i32, %c0_i32_0 : i32, i32, i32
  }
}

</mosaic_0001>

<llo_original>
// kernel: tpu_custom_call.1
$region0: #{tpu_custom_call.1}
  #allocation0 [shape = 'u32[]', space=smem, size = 0x4, offset = 0x4, fixed_abs, tag = 'smem constant byte address 0x4 - core index']
  #allocation1 [shape = 'u32[72,128]{1,0:T(1,128)}', space=vmem, size = 0x9000, scoped, tag = 'internal scratch']
  %s0 = inlined_call_operand.vmem [shape: s32[2,1,1], index: 0, kind: input, shape index: {}]
  %s1 = inlined_call_operand.vmem [shape: s32[2,1,1], index: 1, kind: input, shape index: {}]
  %s2 = inlined_call_operand.hbm [shape: bf16[2,16,128], index: 2, kind: input, shape index: {}]
  %s3 = inlined_call_operand.hbm [shape: bf16[2,16,128], index: 3, kind: input, shape index: {}]
  %s4 = inlined_call_operand.hbm [shape: bf16[2,128,128], index: 4, kind: input, shape index: {}]
  %s5 = inlined_call_operand.hbm [shape: bf16[2,128,128], index: 5, kind: input, shape index: {}]
  %s6 = inlined_call_operand.hbm [shape: bf16[2,128,128], index: 6, kind: input, shape index: {}]
  %s7 = inlined_call_operand.hbm [shape: bf16[2,128,128], index: 7, kind: input, shape index: {}]
  %s8 = inlined_call_operand.vmem [shape: f32[2,1,128], index: 8, kind: input, shape index: {}]
  %s9 = inlined_call_operand.hbm [shape: bf16[2,128,128], index: 9, kind: input, shape index: {}]
  %s10 = inlined_call_operand.vmem [shape: f32[2,1,128], index: 10, kind: input, shape index: {}]
  %s11 = inlined_call_operand.hbm [shape: bf16[2,128,128], index: 11, kind: input, shape index: {}]
  %s12 = inlined_call_operand.hbm [shape: bf16[2,128,128], index: 12, kind: input, shape index: {}]
  %s13 = inlined_call_operand.hbm [shape: bf16[2,128,128], index: 13, kind: input, shape index: {}]
  %s14 = inlined_call_operand.hbm [shape: bf16[2,128,128], index: 14, kind: input, shape index: {}]
  %s15 = inlined_call_operand.vmem [shape: f32[2,1,128], index: 15, kind: input, shape index: {}]
  %s16 = inlined_call_operand.hbm [shape: bf16[2,128,128], index: 16, kind: input, shape index: {}]
  %s17 = inlined_call_operand.vmem [shape: f32[2,1,128], index: 17, kind: input, shape index: {}]
  %s18 = inlined_call_operand.hbm [shape: bf16[128,128], index: 18, kind: input, shape index: {}]
  %s19 = inlined_call_operand.hbm [shape: bf16[128,128], index: 19, kind: input, shape index: {}]
  %s20 = inlined_call_operand.vmem [shape: f32[1,128], index: 20, kind: input, shape index: {}]
  %s21 = inlined_call_operand.hbm [shape: bf16[128,128], index: 21, kind: input, shape index: {}]
  %s22 = inlined_call_operand.hbm [shape: bf16[128,128], index: 22, kind: input, shape index: {}]
  %s23 = inlined_call_operand.hbm [shape: bf16[128,128], index: 23, kind: input, shape index: {}]
  %s24 = inlined_call_operand.hbm [shape: bf16[128,128], index: 24, kind: input, shape index: {}]
  %s25 = inlined_call_operand.vmem [shape: f32[1,128], index: 25, kind: input, shape index: {}]
  %s26 = inlined_call_operand.hbm [shape: bf16[128,128], index: 26, kind: input, shape index: {}]
  %s27 = inlined_call_operand.vmem [shape: f32[1,128], index: 27, kind: input, shape index: {}]
  %s28 = inlined_call_operand.hbm [shape: f32[2,1,128], index: 28, kind: output, shape index: {}]
  %s29 = sld [smem:[#allocation0]]
  $region198: #{tpu_custom_call.1} parent=0
    _
  %s31 = ssub.s32 1, %s29
  %s32 = scalar_select 0, %s31, %s29
  $region1: #{tpu_custom_call.1} parent=0
    #allocation2 [shape = 'u8[8192]{0}', space=vmem, size = 0x2000, scoped, tag = 'input window, operand 2, single buffered']
    #allocation3 [shape = 's32[1]{0}', space=sflag, size = 0x4, scoped, tag = 'scoped memory for tpu_custom_call.1']
    #allocation4 [shape = 's32[1]{0}', space=sflag, size = 0x4, scoped, tag = 'scoped memory for tpu_custom_call.1']
    #allocation5 [shape = 'u8[8192]{0}', space=vmem, size = 0x2000, scoped, tag = 'input window, operand 3, single buffered']
    #allocation6 [shape = 's32[1]{0}', space=sflag, size = 0x4, scoped, tag = 'scoped memory for tpu_custom_call.1']
    #allocation7 [shape = 'u8[65536]{0}', space=vmem, size = 0x10000, scoped, tag = 'input window, operand 4, single buffered']
    #allocation8 [shape = 'u8[65536]{0}', space=vmem, size = 0x10000, scoped, tag = 'input window, operand 5, single buffered']
    #allocation9 [shape = 's32[1]{0}', space=sflag, size = 0x4, scoped, tag = 'scoped memory for tpu_custom_call.1']
    #allocation10 [shape = 'u8[65536]{0}', space=vmem, size = 0x10000, scoped, tag = 'input window, operand 6, single buffered']
    #allocation11 [shape = 'u8[65536]{0}', space=vmem, size = 0x10000, scoped, tag = 'input window, operand 7, single buffered']
    #allocation12 [shape = 's32[1]{0}', space=sflag, size = 0x4, scoped, tag = 'scoped memory for tpu_custom_call.1']
    #allocation13 [shape = 'u8[65536]{0}', space=vmem, size = 0x10000, scoped, tag = 'input window, operand 9, single buffered']
    #allocation14 [shape = 'u8[65536]{0}', space=vmem, size = 0x10000, scoped, tag = 'input window, operand 11, single buffered']
    #allocation15 [shape = 's32[1]{0}', space=sflag, size = 0x4, scoped, tag = 'scoped memory for tpu_custom_call.1']
    #allocation16 [shape = 'u8[65536]{0}', space=vmem, size = 0x10000, scoped, tag = 'input window, operand 12, single buffered']
    #allocation17 [shape = 'u8[65536]{0}', space=vmem, size = 0x10000, scoped, tag = 'input window, operand 13, single buffered']
    #allocation18 [shape = 's32[1]{0}', space=sflag, size = 0x4, scoped, tag = 'scoped memory for tpu_custom_call.1']
    #allocation19 [shape = 'u8[65536]{0}', space=vmem, size = 0x10000, scoped, tag = 'input window, operand 14, single buffered']
    #allocation20 [shape = 'u8[65536]{0}', space=vmem, size = 0x10000, scoped, tag = 'input window, operand 16, single buffered']
    #allocation21 [shape = 's32[1]{0}', space=sflag, size = 0x4, scoped, tag = 'scoped memory for tpu_custom_call.1']
    #allocation22 [shape = 'u8[32768]{0}', space=vmem, size = 0x8000, scoped, tag = 'input window, operand 18, single buffered']
    #allocation23 [shape = 'u8[32768]{0}', space=vmem, size = 0x8000, scoped, tag = 'input window, operand 19, single buffered']
    #allocation24 [shape = 's32[1]{0}', space=sflag, size = 0x4, scoped, tag = 'scoped memory for tpu_custom_call.1']
    #allocation25 [shape = 'u8[32768]{0}', space=vmem, size = 0x8000, scoped, tag = 'input window, operand 21, single buffered']
    #allocation26 [shape = 'u8[32768]{0}', space=vmem, size = 0x8000, scoped, tag = 'input window, operand 22, single buffered']
    #allocation27 [shape = 's32[1]{0}', space=sflag, size = 0x4, scoped, tag = 'scoped memory for tpu_custom_call.1']
    #allocation28 [shape = 'u8[32768]{0}', space=vmem, size = 0x8000, scoped, tag = 'input window, operand 23, single buffered']
    #allocation29 [shape = 'u8[32768]{0}', space=vmem, size = 0x8000, scoped, tag = 'input window, operand 24, single buffered']
    #allocation30 [shape = 's32[1]{0}', space=sflag, size = 0x4, scoped, tag = 'scoped memory for tpu_custom_call.1']
    #allocation31 [shape = 'u8[32768]{0}', space=vmem, size = 0x8000, scoped, tag = 'input window, operand 26, single buffered']
    #allocation32 [shape = 'u8[1024]{0}', space=vmem, size = 0x400, scoped, tag = 'output window, operand 0, single buffered']
    %33 = vsyncpa [#allocation3], 0
    %34 = vsyncpa [#allocation6], 0
    %35 = vsyncpa [#allocation9], 0
    %36 = vsyncpa [#allocation12], 0
    %37 = vsyncpa [#allocation15], 0
    %38 = vsyncpa [#allocation18], 0
    %39 = vsyncpa [#allocation21], 0
    %40 = vsyncpa [#allocation24], 0
    %41 = vsyncpa [#allocation27], 0
    %42 = vsyncpa [#allocation30], 0
    %43 = vsyncpa [#allocation4], 0
    // Predicated region
    $region2: #{tpu_custom_call.1} parent=1 // pred_check
      _
    $region3: #{tpu_custom_call.1} parent=1 // pred_check_branch
      %45 = sbr.rel (0) target = $region5
    $region4: #{tpu_custom_call.1} parent=1 // pred_region
      _
    $region5: #{tpu_custom_call.1} parent=1 // pred_fallthru
      _
    // Predicated region
    $region6: #{tpu_custom_call.1} parent=1 // pred_check
      _
    $region7: #{tpu_custom_call.1} parent=1 // pred_check_branch
      %47 = sbr.rel (0) target = $region9
    $region8: #{tpu_custom_call.1} parent=1 // pred_region
      _
    $region9: #{tpu_custom_call.1} parent=1 // pred_fallthru
      _
    // Predicated region
    $region10: #{tpu_custom_call.1} parent=1 // pred_check
      _
    $region11: #{tpu_custom_call.1} parent=1 // pred_check_branch
      %49 = sbr.rel (0) target = $region13
    $region12: #{tpu_custom_call.1} parent=1 // pred_region
      %51 = vsyncadd [#allocation3], 0
      %s52 = sshll.u32 %s2, 4
      %s53 = int_to_ptr.hbm [resolvable:$true] %s52
      %s54 = sshll.u32 [#allocation2], 4
      %s55 = int_to_ptr.vmem [resolvable:$true] %s54
      %60 = dma.hbm_to_vmem [thread:$0]  %s53, 256, %s55, [#allocation3], 64, 64, 4
    $region13: #{tpu_custom_call.1} parent=1 // pred_fallthru
      _
    // Predicated region
    $region14: #{tpu_custom_call.1} parent=1 // pred_check
      _
    $region15: #{tpu_custom_call.1} parent=1 // pred_check_branch
      %62 = sbr.rel (0) target = $region17
    $region16: #{tpu_custom_call.1} parent=1 // pred_region
      %64 = vsyncadd [#allocation6], 0
      %s65 = sshll.u32 %s3, 4
      %s66 = int_to_ptr.hbm [resolvable:$true] %s65
      %s67 = sshll.u32 [#allocation5], 4
      %s68 = int_to_ptr.vmem [resolvable:$true] %s67
      %73 = dma.hbm_to_vmem [thread:$0]  %s66, 256, %s68, [#allocation6], 64, 64, 4
    $region17: #{tpu_custom_call.1} parent=1 // pred_fallthru
      _
    // Predicated region
    $region18: #{tpu_custom_call.1} parent=1 // pred_check
      _
    $region19: #{tpu_custom_call.1} parent=1 // pred_check_branch
      %75 = sbr.rel (0) target = $region21
    $region20: #{tpu_custom_call.1} parent=1 // pred_region
      %77 = vsyncadd [#allocation6], 0
      %s78 = sshll.u32 %s4, 4
      %s79 = int_to_ptr.hbm [resolvable:$true] %s78
      %s80 = sshll.u32 [#allocation7], 4
      %s81 = int_to_ptr.vmem [resolvable:$true] %s80
      %86 = dma.hbm_to_vmem [thread:$0]  %s79, 2048, %s81, [#allocation6], 64, 64, 4
    $region21: #{tpu_custom_call.1} parent=1 // pred_fallthru
      _
    // Predicated region
    $region22: #{tpu_custom_call.1} parent=1 // pred_check
      _
    $region23: #{tpu_custom_call.1} parent=1 // pred_check_branch
      %88 = sbr.rel (0) target = $region25
    $region24: #{tpu_custom_call.1} parent=1 // pred_region
      %90 = vsyncadd [#allocation9], 0
      %s91 = sshll.u32 %s5, 4
      %s92 = int_to_ptr.hbm [resolvable:$true] %s91
      %s93 = sshll.u32 [#allocation8], 4
      %s94 = int_to_ptr.vmem [resolvable:$true] %s93
      %99 = dma.hbm_to_vmem [thread:$0]  %s92, 2048, %s94, [#allocation9], 64, 64, 4
    $region25: #{tpu_custom_call.1} parent=1 // pred_fallthru
      _
    // Predicated region
    $region26: #{tpu_custom_call.1} parent=1 // pred_check
      _
    $region27: #{tpu_custom_call.1} parent=1 // pred_check_branch
      %101 = sbr.rel (0) target = $region29
    $region28: #{tpu_custom_call.1} parent=1 // pred_region
      %103 = vsyncadd [#allocation9], 0
      %s104 = sshll.u32 %s6, 4
      %s105 = int_to_ptr.hbm [resolvable:$true] %s104
      %s106 = sshll.u32 [#allocation10], 4
      %s107 = int_to_ptr.vmem [resolvable:$true] %s106
      %112 = dma.hbm_to_vmem [thread:$0]  %s105, 2048, %s107, [#allocation9], 64, 64, 4
    $region29: #{tpu_custom_call.1} parent=1 // pred_fallthru
      _
    // Predicated region
    $region30: #{tpu_custom_call.1} parent=1 // pred_check
      _
    $region31: #{tpu_custom_call.1} parent=1 // pred_check_branch
      %114 = sbr.rel (0) target = $region33
    $region32: #{tpu_custom_call.1} parent=1 // pred_region
      %116 = vsyncadd [#allocation12], 0
      %s117 = sshll.u32 %s7, 4
      %s118 = int_to_ptr.hbm [resolvable:$true] %s117
      %s119 = sshll.u32 [#allocation11], 4
      %s120 = int_to_ptr.vmem [resolvable:$true] %s119
      %125 = dma.hbm_to_vmem [thread:$0]  %s118, 2048, %s120, [#allocation12], 64, 64, 4
    $region33: #{tpu_custom_call.1} parent=1 // pred_fallthru
      _
    // Predicated region
    $region34: #{tpu_custom_call.1} parent=1 // pred_check
      _
    $region35: #{tpu_custom_call.1} parent=1 // pred_check_branch
      %127 = sbr.rel (0) target = $region37
    $region36: #{tpu_custom_call.1} parent=1 // pred_region
      _
    $region37: #{tpu_custom_call.1} parent=1 // pred_fallthru
      _
    // Predicated region
    $region38: #{tpu_custom_call.1} parent=1 // pred_check
      _
    $region39: #{tpu_custom_call.1} parent=1 // pred_check_branch
      %129 = sbr.rel (0) target = $region41
    $region40: #{tpu_custom_call.1} parent=1 // pred_region
      %131 = vsyncadd [#allocation12], 0
      %s132 = sshll.u32 %s9, 4
      %s133 = int_to_ptr.hbm [resolvable:$true] %s132
      %s134 = sshll.u32 [#allocation13], 4
      %s135 = int_to_ptr.vmem [resolvable:$true] %s134
      %140 = dma.hbm_to_vmem [thread:$0]  %s133, 2048, %s135, [#allocation12], 64, 64, 4
    $region41: #{tpu_custom_call.1} parent=1 // pred_fallthru
      _
    // Predicated region
    $region42: #{tpu_custom_call.1} parent=1 // pred_check
      _
    $region43: #{tpu_custom_call.1} parent=1 // pred_check_branch
      %142 = sbr.rel (0) target = $region45
    $region44: #{tpu_custom_call.1} parent=1 // pred_region
      _
    $region45: #{tpu_custom_call.1} parent=1 // pred_fallthru
      _
    // Predicated region
    $region46: #{tpu_custom_call.1} parent=1 // pred_check
      _
    $region47: #{tpu_custom_call.1} parent=1 // pred_check_branch
      %144 = sbr.rel (0) target = $region49
    $region48: #{tpu_custom_call.1} parent=1 // pred_region
      %146 = vsyncadd [#allocation15], 0
      %s147 = sshll.u32 %s11, 4
      %s148 = int_to_ptr.hbm [resolvable:$true] %s147
      %s149 = sshll.u32 [#allocation14], 4
      %s150 = int_to_ptr.vmem [resolvable:$true] %s149
      %155 = dma.hbm_to_vmem [thread:$0]  %s148, 2048, %s150, [#allocation15], 64, 64, 4
    $region49: #{tpu_custom_call.1} parent=1 // pred_fallthru
      _
    // Predicated region
    $region50: #{tpu_custom_call.1} parent=1 // pred_check
      _
    $region51: #{tpu_custom_call.1} parent=1 // pred_check_branch
      %157 = sbr.rel (0) target = $region53
    $region52: #{tpu_custom_call.1} parent=1 // pred_region
      %159 = vsyncadd [#allocation15], 0
      %s160 = sshll.u32 %s12, 4
      %s161 = int_to_ptr.hbm [resolvable:$true] %s160
      %s162 = sshll.u32 [#allocation16], 4
      %s163 = int_to_ptr.vmem [resolvable:$true] %s162
      %168 = dma.hbm_to_vmem [thread:$0]  %s161, 2048, %s163, [#allocation15], 64, 64, 4
    $region53: #{tpu_custom_call.1} parent=1 // pred_fallthru
      _
    // Predicated region
    $region54: #{tpu_custom_call.1} parent=1 // pred_check
      _
    $region55: #{tpu_custom_call.1} parent=1 // pred_check_branch
      %170 = sbr.rel (0) target = $region57
    $region56: #{tpu_custom_call.1} parent=1 // pred_region
      %172 = vsyncadd [#allocation18], 0
      %s173 = sshll.u32 %s13, 4
      %s174 = int_to_ptr.hbm [resolvable:$true] %s173
      %s175 = sshll.u32 [#allocation17], 4
      %s176 = int_to_ptr.vmem [resolvable:$true] %s175
      %181 = dma.hbm_to_vmem [thread:$0]  %s174, 2048, %s176, [#allocation18], 64, 64, 4
    $region57: #{tpu_custom_call.1} parent=1 // pred_fallthru
      _
    // Predicated region
    $region58: #{tpu_custom_call.1} parent=1 // pred_check
      _
    $region59: #{tpu_custom_call.1} parent=1 // pred_check_branch
      %183 = sbr.rel (0) target = $region61
    $region60: #{tpu_custom_call.1} parent=1 // pred_region
      %185 = vsyncadd [#allocation18], 0
      %s186 = sshll.u32 %s14, 4
      %s187 = int_to_ptr.hbm [resolvable:$true] %s186
      %s188 = sshll.u32 [#allocation19], 4
      %s189 = int_to_ptr.vmem [resolvable:$true] %s188
      %194 = dma.hbm_to_vmem [thread:$0]  %s187, 2048, %s189, [#allocation18], 64, 64, 4
    $region61: #{tpu_custom_call.1} parent=1 // pred_fallthru
      _
    // Predicated region
    $region62: #{tpu_custom_call.1} parent=1 // pred_check
      _
    $region63: #{tpu_custom_call.1} parent=1 // pred_check_branch
      %196 = sbr.rel (0) target = $region65
    $region64: #{tpu_custom_call.1} parent=1 // pred_region
      _
    $region65: #{tpu_custom_call.1} parent=1 // pred_fallthru
      _
    // Predicated region
    $region66: #{tpu_custom_call.1} parent=1 // pred_check
      _
    $region67: #{tpu_custom_call.1} parent=1 // pred_check_branch
      %198 = sbr.rel (0) target = $region69
    $region68: #{tpu_custom_call.1} parent=1 // pred_region
      %200 = vsyncadd [#allocation21], 0
      %s201 = sshll.u32 %s16, 4
      %s202 = int_to_ptr.hbm [resolvable:$true] %s201
      %s203 = sshll.u32 [#allocation20], 4
      %s204 = int_to_ptr.vmem [resolvable:$true] %s203
      %209 = dma.hbm_to_vmem [thread:$0]  %s202, 2048, %s204, [#allocation21], 64, 64, 4
    $region69: #{tpu_custom_call.1} parent=1 // pred_fallthru
      _
    // Predicated region
    $region70: #{tpu_custom_call.1} parent=1 // pred_check
      _
    $region71: #{tpu_custom_call.1} parent=1 // pred_check_branch
      %211 = sbr.rel (0) target = $region73
    $region72: #{tpu_custom_call.1} parent=1 // pred_region
      _
    $region73: #{tpu_custom_call.1} parent=1 // pred_fallthru
      _
    // Predicated region
    $region74: #{tpu_custom_call.1} parent=1 // pred_check
      _
    $region75: #{tpu_custom_call.1} parent=1 // pred_check_branch
      %213 = sbr.rel (0) target = $region77
    $region76: #{tpu_custom_call.1} parent=1 // pred_region
      %215 = vsyncadd [#allocation21], 0
      %s216 = sshll.u32 %s18, 4
      %s217 = int_to_ptr.hbm [resolvable:$true] %s216
      %s218 = sshll.u32 [#allocation22], 4
      %s219 = int_to_ptr.vmem [resolvable:$true] %s218
      %224 = dma.hbm_to_vmem [thread:$0]  %s217, 1024, %s219, [#allocation21], 64, 64, 4
    $region77: #{tpu_custom_call.1} parent=1 // pred_fallthru
      _
    // Predicated region
    $region78: #{tpu_custom_call.1} parent=1 // pred_check
      _
    $region79: #{tpu_custom_call.1} parent=1 // pred_check_branch
      %226 = sbr.rel (0) target = $region81
    $region80: #{tpu_custom_call.1} parent=1 // pred_region
      %228 = vsyncadd [#allocation24], 0
      %s229 = sshll.u32 %s19, 4
      %s230 = int_to_ptr.hbm [resolvable:$true] %s229
      %s231 = sshll.u32 [#allocation23], 4
      %s232 = int_to_ptr.vmem [resolvable:$true] %s231
      %237 = dma.hbm_to_vmem [thread:$0]  %s230, 1024, %s232, [#allocation24], 64, 64, 4
    $region81: #{tpu_custom_call.1} parent=1 // pred_fallthru
      _
    // Predicated region
    $region82: #{tpu_custom_call.1} parent=1 // pred_check
      _
    $region83: #{tpu_custom_call.1} parent=1 // pred_check_branch
      %239 = sbr.rel (0) target = $region85
    $region84: #{tpu_custom_call.1} parent=1 // pred_region
      _
    $region85: #{tpu_custom_call.1} parent=1 // pred_fallthru
      _
    // Predicated region
    $region86: #{tpu_custom_call.1} parent=1 // pred_check
      _
    $region87: #{tpu_custom_call.1} parent=1 // pred_check_branch
      %241 = sbr.rel (0) target = $region89
    $region88: #{tpu_custom_call.1} parent=1 // pred_region
      %243 = vsyncadd [#allocation24], 0
      %s244 = sshll.u32 %s21, 4
      %s245 = int_to_ptr.hbm [resolvable:$true] %s244
      %s246 = sshll.u32 [#allocation25], 4
      %s247 = int_to_ptr.vmem [resolvable:$true] %s246
      %252 = dma.hbm_to_vmem [thread:$0]  %s245, 1024, %s247, [#allocation24], 64, 64, 4
    $region89: #{tpu_custom_call.1} parent=1 // pred_fallthru
      _
    // Predicated region
    $region90: #{tpu_custom_call.1} parent=1 // pred_check
      _
    $region91: #{tpu_custom_call.1} parent=1 // pred_check_branch
      %254 = sbr.rel (0) target = $region93
    $region92: #{tpu_custom_call.1} parent=1 // pred_region
      %256 = vsyncadd [#allocation27], 0
      %s257 = sshll.u32 %s22, 4
      %s258 = int_to_ptr.hbm [resolvable:$true] %s257
      %s259 = sshll.u32 [#allocation26], 4
      %s260 = int_to_ptr.vmem [resolvable:$true] %s259
      %265 = dma.hbm_to_vmem [thread:$0]  %s258, 1024, %s260, [#allocation27], 64, 64, 4
    $region93: #{tpu_custom_call.1} parent=1 // pred_fallthru
      _
    // Predicated region
    $region94: #{tpu_custom_call.1} parent=1 // pred_check
      _
    $region95: #{tpu_custom_call.1} parent=1 // pred_check_branch
      %267 = sbr.rel (0) target = $region97
    $region96: #{tpu_custom_call.1} parent=1 // pred_region
      %269 = vsyncadd [#allocation27], 0
      %s270 = sshll.u32 %s23, 4
      %s271 = int_to_ptr.hbm [resolvable:$true] %s270
      %s272 = sshll.u32 [#allocation28], 4
      %s273 = int_to_ptr.vmem [resolvable:$true] %s272
      %278 = dma.hbm_to_vmem [thread:$0]  %s271, 1024, %s273, [#allocation27], 64, 64, 4
    $region97: #{tpu_custom_call.1} parent=1 // pred_fallthru
      _
    // Predicated region
    $region98: #{tpu_custom_call.1} parent=1 // pred_check
      _
    $region99: #{tpu_custom_call.1} parent=1 // pred_check_branch
      %280 = sbr.rel (0) target = $region101
    $region100: #{tpu_custom_call.1} parent=1 // pred_region
      %282 = vsyncadd [#allocation30], 0
      %s283 = sshll.u32 %s24, 4
      %s284 = int_to_ptr.hbm [resolvable:$true] %s283
      %s285 = sshll.u32 [#allocation29], 4
      %s286 = int_to_ptr.vmem [resolvable:$true] %s285
      %291 = dma.hbm_to_vmem [thread:$0]  %s284, 1024, %s286, [#allocation30], 64, 64, 4
    $region101: #{tpu_custom_call.1} parent=1 // pred_fallthru
      _
    // Predicated region
    $region102: #{tpu_custom_call.1} parent=1 // pred_check
      _
    $region103: #{tpu_custom_call.1} parent=1 // pred_check_branch
      %293 = sbr.rel (0) target = $region105
    $region104: #{tpu_custom_call.1} parent=1 // pred_region
      _
    $region105: #{tpu_custom_call.1} parent=1 // pred_fallthru
      _
    // Predicated region
    $region106: #{tpu_custom_call.1} parent=1 // pred_check
      _
    $region107: #{tpu_custom_call.1} parent=1 // pred_check_branch
      %295 = sbr.rel (0) target = $region109
    $region108: #{tpu_custom_call.1} parent=1 // pred_region
      %297 = vsyncadd [#allocation30], 0
      %s298 = sshll.u32 %s26, 4
      %s299 = int_to_ptr.hbm [resolvable:$true] %s298
      %s300 = sshll.u32 [#allocation31], 4
      %s301 = int_to_ptr.vmem [resolvable:$true] %s300
      %306 = dma.hbm_to_vmem [thread:$0]  %s299, 1024, %s301, [#allocation30], 64, 64, 4
    $region109: #{tpu_custom_call.1} parent=1 // pred_fallthru
      _
    // Predicated region
    $region110: #{tpu_custom_call.1} parent=1 // pred_check
      _
    $region111: #{tpu_custom_call.1} parent=1 // pred_check_branch
      %308 = sbr.rel (0) target = $region113
    $region112: #{tpu_custom_call.1} parent=1 // pred_region
      _
    $region113: #{tpu_custom_call.1} parent=1 // pred_fallthru
      _
    // Predicated region
    $region114: #{tpu_custom_call.1} parent=1 // pred_check
      _
    $region115: #{tpu_custom_call.1} parent=1 // pred_check_branch
      %310 = sbr.rel (0) target = $region117
    $region116: #{tpu_custom_call.1} parent=1 // pred_region
      %312 = dma.done [#allocation3], 256
    $region117: #{tpu_custom_call.1} parent=1 // pred_fallthru
      _
    // Predicated region
    $region118: #{tpu_custom_call.1} parent=1 // pred_check
      _
    $region119: #{tpu_custom_call.1} parent=1 // pred_check_branch
      %314 = sbr.rel (0) target = $region121
    $region120: #{tpu_custom_call.1} parent=1 // pred_region
      %316 = dma.done [#allocation6], 256
    $region121: #{tpu_custom_call.1} parent=1 // pred_fallthru
      _
    // Predicated region
    $region122: #{tpu_custom_call.1} parent=1 // pred_check
      _
    $region123: #{tpu_custom_call.1} parent=1 // pred_check_branch
      %318 = sbr.rel (0) target = $region125
    $region124: #{tpu_custom_call.1} parent=1 // pred_region
      %320 = dma.done [#allocation6], 2048
    $region125: #{tpu_custom_call.1} parent=1 // pred_fallthru
      _
    // Predicated region
    $region126: #{tpu_custom_call.1} parent=1 // pred_check
      _
    $region127: #{tpu_custom_call.1} parent=1 // pred_check_branch
      %322 = sbr.rel (0) target = $region129
    $region128: #{tpu_custom_call.1} parent=1 // pred_region
      %324 = dma.done [#allocation9], 2048
    $region129: #{tpu_custom_call.1} parent=1 // pred_fallthru
      _
    // Predicated region
    $region130: #{tpu_custom_call.1} parent=1 // pred_check
      _
    $region131: #{tpu_custom_call.1} parent=1 // pred_check_branch
      %326 = sbr.rel (0) target = $region133
    $region132: #{tpu_custom_call.1} parent=1 // pred_region
      %328 = dma.done [#allocation9], 2048
    $region133: #{tpu_custom_call.1} parent=1 // pred_fallthru
      _
    // Predicated region
    $region134: #{tpu_custom_call.1} parent=1 // pred_check
      _
    $region135: #{tpu_custom_call.1} parent=1 // pred_check_branch
      %330 = sbr.rel (0) target = $region137
    $region136: #{tpu_custom_call.1} parent=1 // pred_region
      %332 = dma.done [#allocation12], 2048
    $region137: #{tpu_custom_call.1} parent=1 // pred_fallthru
      _
    // Predicated region
    $region138: #{tpu_custom_call.1} parent=1 // pred_check
      _
    $region139: #{tpu_custom_call.1} parent=1 // pred_check_branch
      %334 = sbr.rel (0) target = $region141
    $region140: #{tpu_custom_call.1} parent=1 // pred_region
      %336 = dma.done [#allocation12], 2048
    $region141: #{tpu_custom_call.1} parent=1 // pred_fallthru
      _
    // Predicated region
    $region142: #{tpu_custom_call.1} parent=1 // pred_check
      _
    $region143: #{tpu_custom_call.1} parent=1 // pred_check_branch
      %338 = sbr.rel (0) target = $region145
    $region144: #{tpu_custom_call.1} parent=1 // pred_region
      %340 = dma.done [#allocation15], 2048
    $region145: #{tpu_custom_call.1} parent=1 // pred_fallthru
      _
    // Predicated region
    $region146: #{tpu_custom_call.1} parent=1 // pred_check
      _
    $region147: #{tpu_custom_call.1} parent=1 // pred_check_branch
      %342 = sbr.rel (0) target = $region149
    $region148: #{tpu_custom_call.1} parent=1 // pred_region
      %344 = dma.done [#allocation15], 2048
    $region149: #{tpu_custom_call.1} parent=1 // pred_fallthru
      _
    // Predicated region
    $region150: #{tpu_custom_call.1} parent=1 // pred_check
      _
    $region151: #{tpu_custom_call.1} parent=1 // pred_check_branch
      %346 = sbr.rel (0) target = $region153
    $region152: #{tpu_custom_call.1} parent=1 // pred_region
      %348 = dma.done [#allocation18], 2048
    $region153: #{tpu_custom_call.1} parent=1 // pred_fallthru
      _
    // Predicated region
    $region154: #{tpu_custom_call.1} parent=1 // pred_check
      _
    $region155: #{tpu_custom_call.1} parent=1 // pred_check_branch
      %350 = sbr.rel (0) target = $region157
    $region156: #{tpu_custom_call.1} parent=1 // pred_region
      %352 = dma.done [#allocation18], 2048
    $region157: #{tpu_custom_call.1} parent=1 // pred_fallthru
      _
    // Predicated region
    $region158: #{tpu_custom_call.1} parent=1 // pred_check
      _
    $region159: #{tpu_custom_call.1} parent=1 // pred_check_branch
      %354 = sbr.rel (0) target = $region161
    $region160: #{tpu_custom_call.1} parent=1 // pred_region
      %356 = dma.done [#allocation21], 2048
    $region161: #{tpu_custom_call.1} parent=1 // pred_fallthru
      _
    // Predicated region
    $region162: #{tpu_custom_call.1} parent=1 // pred_check
      _
    $region163: #{tpu_custom_call.1} parent=1 // pred_check_branch
      %358 = sbr.rel (0) target = $region165
    $region164: #{tpu_custom_call.1} parent=1 // pred_region
      %360 = dma.done [#allocation21], 1024
    $region165: #{tpu_custom_call.1} parent=1 // pred_fallthru
      _
    // Predicated region
    $region166: #{tpu_custom_call.1} parent=1 // pred_check
      _
    $region167: #{tpu_custom_call.1} parent=1 // pred_check_branch
      %362 = sbr.rel (0) target = $region169
    $region168: #{tpu_custom_call.1} parent=1 // pred_region
      %364 = dma.done [#allocation24], 1024
    $region169: #{tpu_custom_call.1} parent=1 // pred_fallthru
      _
    // Predicated region
    $region170: #{tpu_custom_call.1} parent=1 // pred_check
      _
    $region171: #{tpu_custom_call.1} parent=1 // pred_check_branch
      %366 = sbr.rel (0) target = $region173
    $region172: #{tpu_custom_call.1} parent=1 // pred_region
      %368 = dma.done [#allocation24], 1024
    $region173: #{tpu_custom_call.1} parent=1 // pred_fallthru
      _
    // Predicated region
    $region174: #{tpu_custom_call.1} parent=1 // pred_check
      _
    $region175: #{tpu_custom_call.1} parent=1 // pred_check_branch
      %370 = sbr.rel (0) target = $region177
    $region176: #{tpu_custom_call.1} parent=1 // pred_region
      %372 = dma.done [#allocation27], 1024
    $region177: #{tpu_custom_call.1} parent=1 // pred_fallthru
      _
    // Predicated region
    $region178: #{tpu_custom_call.1} parent=1 // pred_check
      _
    $region179: #{tpu_custom_call.1} parent=1 // pred_check_branch
      %374 = sbr.rel (0) target = $region181
    $region180: #{tpu_custom_call.1} parent=1 // pred_region
      %376 = dma.done [#allocation27], 1024
    $region181: #{tpu_custom_call.1} parent=1 // pred_fallthru
      _
    // Predicated region
    $region182: #{tpu_custom_call.1} parent=1 // pred_check
      _
    $region183: #{tpu_custom_call.1} parent=1 // pred_check_branch
      %378 = sbr.rel (0) target = $region185
    $region184: #{tpu_custom_call.1} parent=1 // pred_region
      %380 = dma.done [#allocation30], 1024
    $region185: #{tpu_custom_call.1} parent=1 // pred_fallthru
      _
    // Predicated region
    $region186: #{tpu_custom_call.1} parent=1 // pred_check
      _
    $region187: #{tpu_custom_call.1} parent=1 // pred_check_branch
      %382 = sbr.rel (0) target = $region189
    $region188: #{tpu_custom_call.1} parent=1 // pred_region
      %384 = dma.done [#allocation30], 1024
    $region189: #{tpu_custom_call.1} parent=1 // pred_fallthru
      _
    %v386 = vlaneseq
    %v387 = vshrl.u32 %v386, 7
    %v388 = vadd.s32 %v387, 8
    %v389 = vld [vmem:[%s0] sm:$0x1]
    %v390 = vld [vmem:[%s0 + $0x1] sm:$0x1]
    %v391 = vperm.slane %v389, 0
    %v392 = vperm.slane %v390, 0
    %vm393 = vcmp.ge.s32.totalorder %v387, %v391
    %vm394 = vcmp.ge.s32.totalorder %v388, %v391
    %vm395 = vcmp.ge.s32.totalorder %v387, %v392
    %vm396 = vcmp.ge.s32.totalorder %v388, %v392
    %v397 = vld [vmem:[%s1] sm:$0x1]
    %v398 = vld [vmem:[%s1 + $0x1] sm:$0x1]
    %v399 = vperm.slane %v397, 0
    %v400 = vperm.slane %v398, 0
    %vm401 = vcmp.lt.s32.totalorder %v387, %v399
    %vm402 = vcmp.lt.s32.totalorder %v388, %v399
    %vm403 = vcmp.lt.s32.totalorder %v387, %v400
    %vm404 = vcmp.lt.s32.totalorder %v388, %v400
    %vm405 = vmand %vm393, %vm401
    %vm406 = vmand %vm394, %vm402
    %vm407 = vmand %vm395, %vm403
    %vm408 = vmand %vm396, %vm404
    %v409 = vsel %vm405, 1, 0
    %v410 = vsel %vm406, 1, 0
    %v411 = vsel %vm407, 1, 0
    %v412 = vsel %vm408, 1, 0
    %v413 = vcvt.s32.f32 %v409
    %v414 = vcvt.s32.f32 %v410
    %v415 = vcvt.s32.f32 %v411
    %v416 = vcvt.s32.f32 %v412
    %v417 = vld [vmem:[#allocation2] sm:$0xf]
    %v418 = vld [vmem:[#allocation2 + $0x4] sm:$0xf]
    %v419 = vld [vmem:[#allocation2 + $0x8] sm:$0xf]
    %v420 = vld [vmem:[#allocation2 + $0xc] sm:$0xf]
    %v421 = vld [vmem:[#allocation5] sm:$0xf]
    %v422 = vld [vmem:[#allocation5 + $0x4] sm:$0xf]
    %v423 = vld [vmem:[#allocation5 + $0x8] sm:$0xf]
    %v424 = vld [vmem:[#allocation5 + $0xc] sm:$0xf]
    %v425 = vld [vmem:[#allocation7] sm:$0xf]
    %v426 = vld [vmem:[#allocation7 + $0x4] sm:$0xf]
    %v427 = vld [vmem:[#allocation7 + $0x8] sm:$0xf]
    %v428 = vld [vmem:[#allocation7 + $0xc] sm:$0xf]
    %v429 = vld [vmem:[#allocation7 + $0x10] sm:$0xf]
    %v430 = vld [vmem:[#allocation7 + $0x14] sm:$0xf]
    %v431 = vld [vmem:[#allocation7 + $0x18] sm:$0xf]
    %v432 = vld [vmem:[#allocation7 + $0x1c] sm:$0xf]
    %v433 = vld [vmem:[#allocation7 + $0x20] sm:$0xf]
    %v434 = vld [vmem:[#allocation7 + $0x24] sm:$0xf]
    %v435 = vld [vmem:[#allocation7 + $0x28] sm:$0xf]
    %v436 = vld [vmem:[#allocation7 + $0x2c] sm:$0xf]
    %v437 = vld [vmem:[#allocation7 + $0x30] sm:$0xf]
    %v438 = vld [vmem:[#allocation7 + $0x34] sm:$0xf]
    %v439 = vld [vmem:[#allocation7 + $0x38] sm:$0xf]
    %v440 = vld [vmem:[#allocation7 + $0x3c] sm:$0xf]
    %v441 = vld [vmem:[#allocation8] sm:$0xf]
    %v442 = vld [vmem:[#allocation8 + $0x4] sm:$0xf]
    %v443 = vld [vmem:[#allocation8 + $0x8] sm:$0xf]
    %v444 = vld [vmem:[#allocation8 + $0xc] sm:$0xf]
    %v445 = vld [vmem:[#allocation8 + $0x10] sm:$0xf]
    %v446 = vld [vmem:[#allocation8 + $0x14] sm:$0xf]
    %v447 = vld [vmem:[#allocation8 + $0x18] sm:$0xf]
    %v448 = vld [vmem:[#allocation8 + $0x1c] sm:$0xf]
    %v449 = vld [vmem:[#allocation8 + $0x20] sm:$0xf]
    %v450 = vld [vmem:[#allocation8 + $0x24] sm:$0xf]
    %v451 = vld [vmem:[#allocation8 + $0x28] sm:$0xf]
    %v452 = vld [vmem:[#allocation8 + $0x2c] sm:$0xf]
    %v453 = vld [vmem:[#allocation8 + $0x30] sm:$0xf]
    %v454 = vld [vmem:[#allocation8 + $0x34] sm:$0xf]
    %v455 = vld [vmem:[#allocation8 + $0x38] sm:$0xf]
    %v456 = vld [vmem:[#allocation8 + $0x3c] sm:$0xf]
    %v457 = vld [vmem:[#allocation10] sm:$0xf]
    %v458 = vld [vmem:[#allocation10 + $0x4] sm:$0xf]
    %v459 = vld [vmem:[#allocation10 + $0x8] sm:$0xf]
    %v460 = vld [vmem:[#allocation10 + $0xc] sm:$0xf]
    %v461 = vld [vmem:[#allocation10 + $0x10] sm:$0xf]
    %v462 = vld [vmem:[#allocation10 + $0x14] sm:$0xf]
    %v463 = vld [vmem:[#allocation10 + $0x18] sm:$0xf]
    %v464 = vld [vmem:[#allocation10 + $0x1c] sm:$0xf]
    %v465 = vld [vmem:[#allocation10 + $0x20] sm:$0xf]
    %v466 = vld [vmem:[#allocation10 + $0x24] sm:$0xf]
    %v467 = vld [vmem:[#allocation10 + $0x28] sm:$0xf]
    %v468 = vld [vmem:[#allocation10 + $0x2c] sm:$0xf]
    %v469 = vld [vmem:[#allocation10 + $0x30] sm:$0xf]
    %v470 = vld [vmem:[#allocation10 + $0x34] sm:$0xf]
    %v471 = vld [vmem:[#allocation10 + $0x38] sm:$0xf]
    %v472 = vld [vmem:[#allocation10 + $0x3c] sm:$0xf]
    %v473 = vld [vmem:[#allocation11] sm:$0xf]
    %v474 = vld [vmem:[#allocation11 + $0x4] sm:$0xf]
    %v475 = vld [vmem:[#allocation11 + $0x8] sm:$0xf]
    %v476 = vld [vmem:[#allocation11 + $0xc] sm:$0xf]
    %v477 = vld [vmem:[#allocation11 + $0x10] sm:$0xf]
    %v478 = vld [vmem:[#allocation11 + $0x14] sm:$0xf]
    %v479 = vld [vmem:[#allocation11 + $0x18] sm:$0xf]
    %v480 = vld [vmem:[#allocation11 + $0x1c] sm:$0xf]
    %v481 = vld [vmem:[#allocation11 + $0x20] sm:$0xf]
    %v482 = vld [vmem:[#allocation11 + $0x24] sm:$0xf]
    %v483 = vld [vmem:[#allocation11 + $0x28] sm:$0xf]
    %v484 = vld [vmem:[#allocation11 + $0x2c] sm:$0xf]
    %v485 = vld [vmem:[#allocation11 + $0x30] sm:$0xf]
    %v486 = vld [vmem:[#allocation11 + $0x34] sm:$0xf]
    %v487 = vld [vmem:[#allocation11 + $0x38] sm:$0xf]
    %v488 = vld [vmem:[#allocation11 + $0x3c] sm:$0xf]
    %v489 = vld [vmem:[%s8] sm:$0x1]
    %v490 = vld [vmem:[#allocation13] sm:$0xf]
    %v491 = vld [vmem:[#allocation13 + $0x4] sm:$0xf]
    %v492 = vld [vmem:[#allocation13 + $0x8] sm:$0xf]
    %v493 = vld [vmem:[#allocation13 + $0xc] sm:$0xf]
    %v494 = vld [vmem:[#allocation13 + $0x10] sm:$0xf]
    %v495 = vld [vmem:[#allocation13 + $0x14] sm:$0xf]
    %v496 = vld [vmem:[#allocation13 + $0x18] sm:$0xf]
    %v497 = vld [vmem:[#allocation13 + $0x1c] sm:$0xf]
    %v498 = vld [vmem:[#allocation13 + $0x20] sm:$0xf]
    %v499 = vld [vmem:[#allocation13 + $0x24] sm:$0xf]
    %v500 = vld [vmem:[#allocation13 + $0x28] sm:$0xf]
    %v501 = vld [vmem:[#allocation13 + $0x2c] sm:$0xf]
    %v502 = vld [vmem:[#allocation13 + $0x30] sm:$0xf]
    %v503 = vld [vmem:[#allocation13 + $0x34] sm:$0xf]
    %v504 = vld [vmem:[#allocation13 + $0x38] sm:$0xf]
    %v505 = vld [vmem:[#allocation13 + $0x3c] sm:$0xf]
    %v506 = vld [vmem:[%s10] sm:$0x1]
    %v511 = vunpack.c.l.b16 %v417
    %v512 = vunpack.c.l.b16 %v418
    %v513 = vunpack.c.l.b16 %v419
    %v514 = vunpack.c.l.b16 %v420
    %v515 = vpack.c.b16 %v512, %v511
    %v516 = vpack.c.b16 %v514, %v513
    %v535 = vunpack.c.l.b16 %v425
    %v536 = vunpack.c.l.b16 %v426
    %v537 = vunpack.c.l.b16 %v427
    %v538 = vunpack.c.l.b16 %v428
    %v539 = vunpack.c.l.b16 %v429
    %v540 = vunpack.c.l.b16 %v430
    %v541 = vunpack.c.l.b16 %v431
    %v542 = vunpack.c.l.b16 %v432
    %v543 = vunpack.c.l.b16 %v433
    %v544 = vunpack.c.l.b16 %v434
    %v545 = vunpack.c.l.b16 %v435
    %v546 = vunpack.c.l.b16 %v436
    %v547 = vunpack.c.l.b16 %v437
    %v548 = vunpack.c.l.b16 %v438
    %v549 = vunpack.c.l.b16 %v439
    %v550 = vunpack.c.l.b16 %v440
    %v551 = vpack.c.b16 %v536, %v535
    %v552 = vpack.c.b16 %v538, %v537
    %v553 = vpack.c.b16 %v540, %v539
    %v554 = vpack.c.b16 %v542, %v541
    %v555 = vpack.c.b16 %v544, %v543
    %v556 = vpack.c.b16 %v546, %v545
    %v557 = vpack.c.b16 %v548, %v547
    %v558 = vpack.c.b16 %v550, %v549
    %567 = vmatpush.bf16.msra.mxu0 %v558
    %568 = vmatpush.bf16.msra.mxu0 %v557
    %569 = vmatpush.bf16.msra.mxu0 %v556
    %570 = vmatpush.bf16.msra.mxu0 %v555
    %571 = vmatpush.bf16.msra.mxu0 %v554
    %572 = vmatpush.bf16.msra.mxu0 %v553
    %573 = vmatpush.bf16.msra.mxu0 %v552
    %574 = vmatpush.bf16.msra.mxu0 %v551
    %575 = vmatmul.bf16.gmra.mxu0 %v515
    %v576 = vpop.f32.mrf.mxu0
    %v577 = vadd.f32 0.0, %v576
    %v578 = vpop.f32.mrf.mxu0
    %v579 = vadd.f32 0.0, %v578
    %580 = vmatmul.bf16.gmra.mxu0 %v516
    %v581 = vpop.f32.mrf.mxu0
    %v582 = vadd.f32 0.0, %v581
    %v583 = vpop.f32.mrf.mxu0
    %v584 = vadd.f32 0.0, %v583
    %585 = vdwg.mxu0
    %v586 = vpack.c.bf16 %v577, %v577
    %v587 = vpack.c.bf16 %v579, %v579
    %v588 = vpack.c.bf16 %v582, %v582
    %v589 = vpack.c.bf16 %v584, %v584
    %v606 = vunpack.c.l.b16 %v441
    %v607 = vunpack.c.l.b16 %v442
    %v608 = vunpack.c.l.b16 %v443
    %v609 = vunpack.c.l.b16 %v444
    %v610 = vunpack.c.l.b16 %v445
    %v611 = vunpack.c.l.b16 %v446
    %v612 = vunpack.c.l.b16 %v447
    %v613 = vunpack.c.l.b16 %v448
    %v614 = vunpack.c.l.b16 %v449
    %v615 = vunpack.c.l.b16 %v450
    %v616 = vunpack.c.l.b16 %v451
    %v617 = vunpack.c.l.b16 %v452
    %v618 = vunpack.c.l.b16 %v453
    %v619 = vunpack.c.l.b16 %v454
    %v620 = vunpack.c.l.b16 %v455
    %v621 = vunpack.c.l.b16 %v456
    %v622 = vpack.c.b16 %v607, %v606
    %v623 = vpack.c.b16 %v609, %v608
    %v624 = vpack.c.b16 %v611, %v610
    %v625 = vpack.c.b16 %v613, %v612
    %v626 = vpack.c.b16 %v615, %v614
    %v627 = vpack.c.b16 %v617, %v616
    %v628 = vpack.c.b16 %v619, %v618
    %v629 = vpack.c.b16 %v621, %v620
    %638 = vmatpush.bf16.msra.mxu0 %v629
    %639 = vmatpush.bf16.msra.mxu0 %v628
    %640 = vmatpush.bf16.msra.mxu0 %v627
    %641 = vmatpush.bf16.msra.mxu0 %v626
    %642 = vmatpush.bf16.msra.mxu0 %v625
    %643 = vmatpush.bf16.msra.mxu0 %v624
    %644 = vmatpush.bf16.msra.mxu0 %v623
    %645 = vmatpush.bf16.msra.mxu0 %v622
    %646 = vmatmul.bf16.gmra.mxu0 %v515
    %v647 = vpop.f32.mrf.mxu0
    %v648 = vadd.f32 0.0, %v647
    %v649 = vpop.f32.mrf.mxu0
    %v650 = vadd.f32 0.0, %v649
    %651 = vmatmul.bf16.gmra.mxu0 %v516
    %v652 = vpop.f32.mrf.mxu0
    %v653 = vadd.f32 0.0, %v652
    %v654 = vpop.f32.mrf.mxu0
    %v655 = vadd.f32 0.0, %v654
    %656 = vdwg.mxu0
    %v657 = vpack.c.bf16 %v648, %v648
    %v658 = vpack.c.bf16 %v650, %v650
    %v659 = vpack.c.bf16 %v653, %v653
    %v660 = vpack.c.bf16 %v655, %v655
    %v677 = vunpack.c.l.b16 %v457
    %v678 = vunpack.c.l.b16 %v458
    %v679 = vunpack.c.l.b16 %v459
    %v680 = vunpack.c.l.b16 %v460
    %v681 = vunpack.c.l.b16 %v461
    %v682 = vunpack.c.l.b16 %v462
    %v683 = vunpack.c.l.b16 %v463
    %v684 = vunpack.c.l.b16 %v464
    %v685 = vunpack.c.l.b16 %v465
    %v686 = vunpack.c.l.b16 %v466
    %v687 = vunpack.c.l.b16 %v467
    %v688 = vunpack.c.l.b16 %v468
    %v689 = vunpack.c.l.b16 %v469
    %v690 = vunpack.c.l.b16 %v470
    %v691 = vunpack.c.l.b16 %v471
    %v692 = vunpack.c.l.b16 %v472
    %v693 = vpack.c.b16 %v678, %v677
    %v694 = vpack.c.b16 %v680, %v679
    %v695 = vpack.c.b16 %v682, %v681
    %v696 = vpack.c.b16 %v684, %v683
    %v697 = vpack.c.b16 %v686, %v685
    %v698 = vpack.c.b16 %v688, %v687
    %v699 = vpack.c.b16 %v690, %v689
    %v700 = vpack.c.b16 %v692, %v691
    %709 = vmatpush.bf16.msra.mxu0 %v700
    %710 = vmatpush.bf16.msra.mxu0 %v699
    %711 = vmatpush.bf16.msra.mxu0 %v698
    %712 = vmatpush.bf16.msra.mxu0 %v697
    %713 = vmatpush.bf16.msra.mxu0 %v696
    %714 = vmatpush.bf16.msra.mxu0 %v695
    %715 = vmatpush.bf16.msra.mxu0 %v694
    %716 = vmatpush.bf16.msra.mxu0 %v693
    %717 = vmatmul.bf16.gmra.mxu0 %v515
    %v718 = vpop.f32.mrf.mxu0
    %v719 = vadd.f32 0.0, %v718
    %v720 = vpop.f32.mrf.mxu0
    %v721 = vadd.f32 0.0, %v720
    %722 = vmatmul.bf16.gmra.mxu0 %v516
    %v723 = vpop.f32.mrf.mxu0
    %v724 = vadd.f32 0.0, %v723
    %v725 = vpop.f32.mrf.mxu0
    %v726 = vadd.f32 0.0, %v725
    %727 = vdwg.mxu0
    %v728 = vpack.c.bf16 %v719, %v719
    %v729 = vpack.c.bf16 %v721, %v721
    %v730 = vpack.c.bf16 %v724, %v724
    %v731 = vpack.c.bf16 %v726, %v726
    %v734 = vunpack.c.l.b16 %v586
    %v735 = vunpack.c.l.b16 %v587
    %v736 = vpack.c.b16 %v735, %v734
    %v740 = vunpack.c.l.b16 %v657
    %v741 = vunpack.c.l.b16 %v658
    %v742 = vpack.c.b16 %v741, %v740
    %744 = vmatpush.bf16.xpose.msra.mxu0 0
    %745 = vmatpush.bf16.xpose.msra.mxu0 0
    %746 = vmatpush.bf16.xpose.msra.mxu0 0
    %747 = vmatpush.bf16.xpose.msra.mxu0 0
    %748 = vmatpush.bf16.xpose.msra.mxu0 0
    %749 = vmatpush.bf16.xpose.msra.mxu0 0
    %750 = vmatpush.bf16.xpose.msra.mxu0 0
    %751 = vmatpush.bf16.xpose.msra.mxu0 %v742
    %752 = vmatmul.bf16.gmra.mxu0 %v736
    %v753 = vpop.f32.mrf.mxu0
    %v754 = vadd.f32 0.0, %v753
    %v755 = vpop.f32.mrf.mxu0
    %v756 = vadd.f32 0.0, %v755
    %757 = vdwg.mxu0
    %v760 = vunpack.c.l.b16 %v588
    %v761 = vunpack.c.l.b16 %v589
    %v762 = vpack.c.b16 %v761, %v760
    %v766 = vunpack.c.l.b16 %v659
    %v767 = vunpack.c.l.b16 %v660
    %v768 = vpack.c.b16 %v767, %v766
    %770 = vmatpush.bf16.xpose.msra.mxu0 0
    %771 = vmatpush.bf16.xpose.msra.mxu0 0
    %772 = vmatpush.bf16.xpose.msra.mxu0 0
    %773 = vmatpush.bf16.xpose.msra.mxu0 0
    %774 = vmatpush.bf16.xpose.msra.mxu0 0
    %775 = vmatpush.bf16.xpose.msra.mxu0 0
    %776 = vmatpush.bf16.xpose.msra.mxu0 0
    %777 = vmatpush.bf16.xpose.msra.mxu0 %v768
    %778 = vmatmul.bf16.gmra.mxu0 %v762
    %v779 = vpop.f32.mrf.mxu0
    %v780 = vadd.f32 0.0, %v779
    %v781 = vpop.f32.mrf.mxu0
    %v782 = vadd.f32 0.0, %v781
    %783 = vdwg.mxu0
    %vm784 = vcmask 130048
    %v785 = vsel %vm784, %v754, -inf
    %786 = vmax.xlane.f32.xlu0 %v785
    %v787 = vpop.xlane.xlu0 %786
    %v788 = vsel %vm784, %v756, -inf
    %789 = vmax.xlane.f32.xlu0 %v788
    %v790 = vpop.xlane.xlu0 %789
    %v791 = vsel %vm784, %v780, -inf
    %792 = vmax.xlane.f32.xlu0 %v791
    %v793 = vpop.xlane.xlu0 %792
    %v794 = vsel %vm784, %v782, -inf
    %795 = vmax.xlane.f32.xlu0 %v794
    %v796 = vpop.xlane.xlu0 %795
    %v797 = vsub.f32 %v754, %v787
    %v798 = vsub.f32 %v756, %v790
    %v799 = vsub.f32 %v780, %v793
    %v800 = vsub.f32 %v782, %v796
    %v801 = vmul.f32 %v797, 1.442695
    %v802 = vpow.pop %v801
    %v803 = vmul.f32 %v798, 1.442695
    %v804 = vpow.pop %v803
    %v805 = vmul.f32 %v799, 1.442695
    %v806 = vpow.pop %v805
    %v807 = vmul.f32 %v800, 1.442695
    %v808 = vpow.pop %v807
    %v809 = vsel %vm784, %v802, 0.0
    %810 = vadd.xlane.f32.xlu0 %v809
    %v811 = vpop.xlane.xlu0 %810
    %v812 = vsel %vm784, %v804, 0.0
    %813 = vadd.xlane.f32.xlu0 %v812
    %v814 = vpop.xlane.xlu0 %813
    %v815 = vsel %vm784, %v806, 0.0
    %816 = vadd.xlane.f32.xlu0 %v815
    %v817 = vpop.xlane.xlu0 %816
    %v818 = vsel %vm784, %v808, 0.0
    %819 = vadd.xlane.f32.xlu0 %v818
    %v820 = vpop.xlane.xlu0 %819
    %v821 = vrcp.pop %v811
    %v822 = vrcp.pop %v814
    %v823 = vrcp.pop %v817
    %v824 = vrcp.pop %v820
    %v825 = vmul.f32 %v802, %v821
    %v826 = vmul.f32 %v804, %v822
    %v827 = vmul.f32 %v806, %v823
    %v828 = vmul.f32 %v808, %v824
    %v829 = vpack.c.bf16 %v825, %v825
    %v830 = vpack.c.bf16 %v826, %v826
    %v831 = vpack.c.bf16 %v827, %v827
    %v832 = vpack.c.bf16 %v828, %v828
    %v835 = vunpack.c.l.b16 %v829
    %v836 = vunpack.c.l.b16 %v830
    %v837 = vpack.c.b16 %v836, %v835
    %v840 = vunpack.c.l.b16 %v728
    %v841 = vunpack.c.l.b16 %v729
    %v842 = vpack.c.b16 %v841, %v840
    %v845 = vsel %vm784, %v837, 0
    %847 = vmatpush.bf16.msra.mxu0 0
    %848 = vmatpush.bf16.msra.mxu0 0
    %849 = vmatpush.bf16.msra.mxu0 0
    %850 = vmatpush.bf16.msra.mxu0 0
    %851 = vmatpush.bf16.msra.mxu0 0
    %852 = vmatpush.bf16.msra.mxu0 0
    %853 = vmatpush.bf16.msra.mxu0 0
    %854 = vmatpush.bf16.msra.mxu0 %v842
    %855 = vmatmul.bf16.gmra.mxu0 %v845
    %v856 = vpop.f32.mrf.mxu0
    %v857 = vadd.f32 0.0, %v856
    %v858 = vpop.f32.mrf.mxu0
    %v859 = vadd.f32 0.0, %v858
    %860 = vdwg.mxu0
    %v863 = vunpack.c.l.b16 %v831
    %v864 = vunpack.c.l.b16 %v832
    %v865 = vpack.c.b16 %v864, %v863
    %v868 = vunpack.c.l.b16 %v730
    %v869 = vunpack.c.l.b16 %v731
    %v870 = vpack.c.b16 %v869, %v868
    %v873 = vsel %vm784, %v865, 0
    %875 = vmatpush.bf16.msra.mxu0 0
    %876 = vmatpush.bf16.msra.mxu0 0
    %877 = vmatpush.bf16.msra.mxu0 0
    %878 = vmatpush.bf16.msra.mxu0 0
    %879 = vmatpush.bf16.msra.mxu0 0
    %880 = vmatpush.bf16.msra.mxu0 0
    %881 = vmatpush.bf16.msra.mxu0 0
    %882 = vmatpush.bf16.msra.mxu0 %v870
    %883 = vmatmul.bf16.gmra.mxu0 %v873
    %v884 = vpop.f32.mrf.mxu0
    %v885 = vadd.f32 0.0, %v884
    %v886 = vpop.f32.mrf.mxu0
    %v887 = vadd.f32 0.0, %v886
    %888 = vdwg.mxu0
    %v889 = vpack.c.bf16 %v857, %v857
    %v890 = vpack.c.bf16 %v859, %v859
    %v891 = vpack.c.bf16 %v885, %v885
    %v892 = vpack.c.bf16 %v887, %v887
    %v894 = vperm.slane %v489, 0
    %v900 = vunpack.c.l.b16 %v889
    %v901 = vunpack.c.l.b16 %v890
    %v902 = vunpack.c.l.b16 %v891
    %v903 = vunpack.c.l.b16 %v892
    %v904 = vpack.c.b16 %v901, %v900
    %v905 = vpack.c.b16 %v903, %v902
    %v924 = vunpack.c.l.b16 %v473
    %v925 = vunpack.c.l.b16 %v474
    %v926 = vunpack.c.l.b16 %v475
    %v927 = vunpack.c.l.b16 %v476
    %v928 = vunpack.c.l.b16 %v477
    %v929 = vunpack.c.l.b16 %v478
    %v930 = vunpack.c.l.b16 %v479
    %v931 = vunpack.c.l.b16 %v480
    %v932 = vunpack.c.l.b16 %v481
    %v933 = vunpack.c.l.b16 %v482
    %v934 = vunpack.c.l.b16 %v483
    %v935 = vunpack.c.l.b16 %v484
    %v936 = vunpack.c.l.b16 %v485
    %v937 = vunpack.c.l.b16 %v486
    %v938 = vunpack.c.l.b16 %v487
    %v939 = vunpack.c.l.b16 %v488
    %v940 = vpack.c.b16 %v925, %v924
    %v941 = vpack.c.b16 %v927, %v926
    %v942 = vpack.c.b16 %v929, %v928
    %v943 = vpack.c.b16 %v931, %v930
    %v944 = vpack.c.b16 %v933, %v932
    %v945 = vpack.c.b16 %v935, %v934
    %v946 = vpack.c.b16 %v937, %v936
    %v947 = vpack.c.b16 %v939, %v938
    %956 = vmatpush.bf16.msra.mxu0 %v947
    %957 = vmatpush.bf16.msra.mxu0 %v946
    %958 = vmatpush.bf16.msra.mxu0 %v945
    %959 = vmatpush.bf16.msra.mxu0 %v944
    %960 = vmatpush.bf16.msra.mxu0 %v943
    %961 = vmatpush.bf16.msra.mxu0 %v942
    %962 = vmatpush.bf16.msra.mxu0 %v941
    %963 = vmatpush.bf16.msra.mxu0 %v940
    %964 = vmatmul.bf16.gmra.mxu0 %v904
    %v965 = vpop.f32.mrf.mxu0
    %v966 = vadd.f32 %v894, %v965
    %v967 = vpop.f32.mrf.mxu0
    %v968 = vadd.f32 %v894, %v967
    %969 = vmatmul.bf16.gmra.mxu0 %v905
    %v970 = vpop.f32.mrf.mxu0
    %v971 = vadd.f32 %v894, %v970
    %v972 = vpop.f32.mrf.mxu0
    %v973 = vadd.f32 %v894, %v972
    %974 = vdwg.mxu0
    %v975 = vmax.f32 %v966, 0.0
    %v976 = vmax.f32 %v968, 0.0
    %v977 = vmax.f32 %v971, 0.0
    %v978 = vmax.f32 %v973, 0.0
    %v979 = vpack.c.bf16 %v976, %v975
    %v980 = vpack.c.bf16 %v978, %v977
    %v982 = vperm.slane %v506, 0
    %v1000 = vunpack.c.l.b16 %v490
    %v1001 = vunpack.c.l.b16 %v491
    %v1002 = vunpack.c.l.b16 %v492
    %v1003 = vunpack.c.l.b16 %v493
    %v1004 = vunpack.c.l.b16 %v494
    %v1005 = vunpack.c.l.b16 %v495
    %v1006 = vunpack.c.l.b16 %v496
    %v1007 = vunpack.c.l.b16 %v497
    %v1008 = vunpack.c.l.b16 %v498
    %v1009 = vunpack.c.l.b16 %v499
    %v1010 = vunpack.c.l.b16 %v500
    %v1011 = vunpack.c.l.b16 %v501
    %v1012 = vunpack.c.l.b16 %v502
    %v1013 = vunpack.c.l.b16 %v503
    %v1014 = vunpack.c.l.b16 %v504
    %v1015 = vunpack.c.l.b16 %v505
    %v1016 = vpack.c.b16 %v1001, %v1000
    %v1017 = vpack.c.b16 %v1003, %v1002
    %v1018 = vpack.c.b16 %v1005, %v1004
    %v1019 = vpack.c.b16 %v1007, %v1006
    %v1020 = vpack.c.b16 %v1009, %v1008
    %v1021 = vpack.c.b16 %v1011, %v1010
    %v1022 = vpack.c.b16 %v1013, %v1012
    %v1023 = vpack.c.b16 %v1015, %v1014
    %1032 = vmatpush.bf16.msra.mxu0 %v1023
    %1033 = vmatpush.bf16.msra.mxu0 %v1022
    %1034 = vmatpush.bf16.msra.mxu0 %v1021
    %1035 = vmatpush.bf16.msra.mxu0 %v1020
    %1036 = vmatpush.bf16.msra.mxu0 %v1019
    %1037 = vmatpush.bf16.msra.mxu0 %v1018
    %1038 = vmatpush.bf16.msra.mxu0 %v1017
    %1039 = vmatpush.bf16.msra.mxu0 %v1016
    %1040 = vmatmul.bf16.gmra.mxu0 %v979
    %v1041 = vpop.f32.mrf.mxu0
    %v1042 = vadd.f32 %v982, %v1041
    %v1043 = vpop.f32.mrf.mxu0
    %v1044 = vadd.f32 %v982, %v1043
    %1045 = vmatmul.bf16.gmra.mxu0 %v980
    %v1046 = vpop.f32.mrf.mxu0
    %v1047 = vadd.f32 %v982, %v1046
    %v1048 = vpop.f32.mrf.mxu0
    %v1049 = vadd.f32 %v982, %v1048
    %1050 = vdwg.mxu0
    %v1051 = vpack.c.bf16 %v1044, %v1042
    %v1052 = vpack.c.bf16 %v1049, %v1047
    %s1053 = scalar_lea.vmem [#allocation7], 64
    %v1054 = vld [vmem:[%s1053] sm:$0xf]
    %v1055 = vld [vmem:[%s1053 + $0x4] sm:$0xf]
    %v1056 = vld [vmem:[%s1053 + $0x8] sm:$0xf]
    %v1057 = vld [vmem:[%s1053 + $0xc] sm:$0xf]
    %v1058 = vld [vmem:[%s1053 + $0x10] sm:$0xf]
    %v1059 = vld [vmem:[%s1053 + $0x14] sm:$0xf]
    %v1060 = vld [vmem:[%s1053 + $0x18] sm:$0xf]
    %v1061 = vld [vmem:[%s1053 + $0x1c] sm:$0xf]
    %v1062 = vld [vmem:[%s1053 + $0x20] sm:$0xf]
    %v1063 = vld [vmem:[%s1053 + $0x24] sm:$0xf]
    %v1064 = vld [vmem:[%s1053 + $0x28] sm:$0xf]
    %v1065 = vld [vmem:[%s1053 + $0x2c] sm:$0xf]
    %v1066 = vld [vmem:[%s1053 + $0x30] sm:$0xf]
    %v1067 = vld [vmem:[%s1053 + $0x34] sm:$0xf]
    %v1068 = vld [vmem:[%s1053 + $0x38] sm:$0xf]
    %v1069 = vld [vmem:[%s1053 + $0x3c] sm:$0xf]
    %s1070 = scalar_lea.vmem [#allocation8], 64
    %v1071 = vld [vmem:[%s1070] sm:$0xf]
    %v1072 = vld [vmem:[%s1070 + $0x4] sm:$0xf]
    %v1073 = vld [vmem:[%s1070 + $0x8] sm:$0xf]
    %v1074 = vld [vmem:[%s1070 + $0xc] sm:$0xf]
    %v1075 = vld [vmem:[%s1070 + $0x10] sm:$0xf]
    %v1076 = vld [vmem:[%s1070 + $0x14] sm:$0xf]
    %v1077 = vld [vmem:[%s1070 + $0x18] sm:$0xf]
    %v1078 = vld [vmem:[%s1070 + $0x1c] sm:$0xf]
    %v1079 = vld [vmem:[%s1070 + $0x20] sm:$0xf]
    %v1080 = vld [vmem:[%s1070 + $0x24] sm:$0xf]
    %v1081 = vld [vmem:[%s1070 + $0x28] sm:$0xf]
    %v1082 = vld [vmem:[%s1070 + $0x2c] sm:$0xf]
    %v1083 = vld [vmem:[%s1070 + $0x30] sm:$0xf]
    %v1084 = vld [vmem:[%s1070 + $0x34] sm:$0xf]
    %v1085 = vld [vmem:[%s1070 + $0x38] sm:$0xf]
    %v1086 = vld [vmem:[%s1070 + $0x3c] sm:$0xf]
    %s1087 = scalar_lea.vmem [#allocation10], 64
    %v1088 = vld [vmem:[%s1087] sm:$0xf]
    %v1089 = vld [vmem:[%s1087 + $0x4] sm:$0xf]
    %v1090 = vld [vmem:[%s1087 + $0x8] sm:$0xf]
    %v1091 = vld [vmem:[%s1087 + $0xc] sm:$0xf]
    %v1092 = vld [vmem:[%s1087 + $0x10] sm:$0xf]
    %v1093 = vld [vmem:[%s1087 + $0x14] sm:$0xf]
    %v1094 = vld [vmem:[%s1087 + $0x18] sm:$0xf]
    %v1095 = vld [vmem:[%s1087 + $0x1c] sm:$0xf]
    %v1096 = vld [vmem:[%s1087 + $0x20] sm:$0xf]
    %v1097 = vld [vmem:[%s1087 + $0x24] sm:$0xf]
    %v1098 = vld [vmem:[%s1087 + $0x28] sm:$0xf]
    %v1099 = vld [vmem:[%s1087 + $0x2c] sm:$0xf]
    %v1100 = vld [vmem:[%s1087 + $0x30] sm:$0xf]
    %v1101 = vld [vmem:[%s1087 + $0x34] sm:$0xf]
    %v1102 = vld [vmem:[%s1087 + $0x38] sm:$0xf]
    %v1103 = vld [vmem:[%s1087 + $0x3c] sm:$0xf]
    %s1104 = scalar_lea.vmem [#allocation11], 64
    %v1105 = vld [vmem:[%s1104] sm:$0xf]
    %v1106 = vld [vmem:[%s1104 + $0x4] sm:$0xf]
    %v1107 = vld [vmem:[%s1104 + $0x8] sm:$0xf]
    %v1108 = vld [vmem:[%s1104 + $0xc] sm:$0xf]
    %v1109 = vld [vmem:[%s1104 + $0x10] sm:$0xf]
    %v1110 = vld [vmem:[%s1104 + $0x14] sm:$0xf]
    %v1111 = vld [vmem:[%s1104 + $0x18] sm:$0xf]
    %v1112 = vld [vmem:[%s1104 + $0x1c] sm:$0xf]
    %v1113 = vld [vmem:[%s1104 + $0x20] sm:$0xf]
    %v1114 = vld [vmem:[%s1104 + $0x24] sm:$0xf]
    %v1115 = vld [vmem:[%s1104 + $0x28] sm:$0xf]
    %v1116 = vld [vmem:[%s1104 + $0x2c] sm:$0xf]
    %v1117 = vld [vmem:[%s1104 + $0x30] sm:$0xf]
    %v1118 = vld [vmem:[%s1104 + $0x34] sm:$0xf]
    %v1119 = vld [vmem:[%s1104 + $0x38] sm:$0xf]
    %v1120 = vld [vmem:[%s1104 + $0x3c] sm:$0xf]
    %s1121 = scalar_lea.vmem %s8, 1
    %v1122 = vld [vmem:[%s1121] sm:$0x1]
    %s1123 = scalar_lea.vmem [#allocation13], 64
    %v1124 = vld [vmem:[%s1123] sm:$0xf]
    %v1125 = vld [vmem:[%s1123 + $0x4] sm:$0xf]
    %v1126 = vld [vmem:[%s1123 + $0x8] sm:$0xf]
    %v1127 = vld [vmem:[%s1123 + $0xc] sm:$0xf]
    %v1128 = vld [vmem:[%s1123 + $0x10] sm:$0xf]
    %v1129 = vld [vmem:[%s1123 + $0x14] sm:$0xf]
    %v1130 = vld [vmem:[%s1123 + $0x18] sm:$0xf]
    %v1131 = vld [vmem:[%s1123 + $0x1c] sm:$0xf]
    %v1132 = vld [vmem:[%s1123 + $0x20] sm:$0xf]
    %v1133 = vld [vmem:[%s1123 + $0x24] sm:$0xf]
    %v1134 = vld [vmem:[%s1123 + $0x28] sm:$0xf]
    %v1135 = vld [vmem:[%s1123 + $0x2c] sm:$0xf]
    %v1136 = vld [vmem:[%s1123 + $0x30] sm:$0xf]
    %v1137 = vld [vmem:[%s1123 + $0x34] sm:$0xf]
    %v1138 = vld [vmem:[%s1123 + $0x38] sm:$0xf]
    %v1139 = vld [vmem:[%s1123 + $0x3c] sm:$0xf]
    %s1140 = scalar_lea.vmem %s10, 1
    %v1141 = vld [vmem:[%s1140] sm:$0x1]
    %v1158 = vunpack.c.l.b16 %v1054
    %v1159 = vunpack.c.l.b16 %v1055
    %v1160 = vunpack.c.l.b16 %v1056
    %v1161 = vunpack.c.l.b16 %v1057
    %v1162 = vunpack.c.l.b16 %v1058
    %v1163 = vunpack.c.l.b16 %v1059
    %v1164 = vunpack.c.l.b16 %v1060
    %v1165 = vunpack.c.l.b16 %v1061
    %v1166 = vunpack.c.l.b16 %v1062
    %v1167 = vunpack.c.l.b16 %v1063
    %v1168 = vunpack.c.l.b16 %v1064
    %v1169 = vunpack.c.l.b16 %v1065
    %v1170 = vunpack.c.l.b16 %v1066
    %v1171 = vunpack.c.l.b16 %v1067
    %v1172 = vunpack.c.l.b16 %v1068
    %v1173 = vunpack.c.l.b16 %v1069
    %v1174 = vpack.c.b16 %v1159, %v1158
    %v1175 = vpack.c.b16 %v1161, %v1160
    %v1176 = vpack.c.b16 %v1163, %v1162
    %v1177 = vpack.c.b16 %v1165, %v1164
    %v1178 = vpack.c.b16 %v1167, %v1166
    %v1179 = vpack.c.b16 %v1169, %v1168
    %v1180 = vpack.c.b16 %v1171, %v1170
    %v1181 = vpack.c.b16 %v1173, %v1172
    %1190 = vmatpush.bf16.msra.mxu0 %v1181
    %1191 = vmatpush.bf16.msra.mxu0 %v1180
    %1192 = vmatpush.bf16.msra.mxu0 %v1179
    %1193 = vmatpush.bf16.msra.mxu0 %v1178
    %1194 = vmatpush.bf16.msra.mxu0 %v1177
    %1195 = vmatpush.bf16.msra.mxu0 %v1176
    %1196 = vmatpush.bf16.msra.mxu0 %v1175
    %1197 = vmatpush.bf16.msra.mxu0 %v1174
    %1198 = vmatmul.bf16.gmra.mxu0 %v1051
    %v1199 = vpop.f32.mrf.mxu0
    %v1200 = vadd.f32 0.0, %v1199
    %v1201 = vpop.f32.mrf.mxu0
    %v1202 = vadd.f32 0.0, %v1201
    %1203 = vmatmul.bf16.gmra.mxu0 %v1052
    %v1204 = vpop.f32.mrf.mxu0
    %v1205 = vadd.f32 0.0, %v1204
    %v1206 = vpop.f32.mrf.mxu0
    %v1207 = vadd.f32 0.0, %v1206
    %1208 = vdwg.mxu0
    %v1209 = vpack.c.bf16 %v1200, %v1200
    %v1210 = vpack.c.bf16 %v1202, %v1202
    %v1211 = vpack.c.bf16 %v1205, %v1205
    %v1212 = vpack.c.bf16 %v1207, %v1207
    %v1229 = vunpack.c.l.b16 %v1071
    %v1230 = vunpack.c.l.b16 %v1072
    %v1231 = vunpack.c.l.b16 %v1073
    %v1232 = vunpack.c.l.b16 %v1074
    %v1233 = vunpack.c.l.b16 %v1075
    %v1234 = vunpack.c.l.b16 %v1076
    %v1235 = vunpack.c.l.b16 %v1077
    %v1236 = vunpack.c.l.b16 %v1078
    %v1237 = vunpack.c.l.b16 %v1079
    %v1238 = vunpack.c.l.b16 %v1080
    %v1239 = vunpack.c.l.b16 %v1081
    %v1240 = vunpack.c.l.b16 %v1082
    %v1241 = vunpack.c.l.b16 %v1083
    %v1242 = vunpack.c.l.b16 %v1084
    %v1243 = vunpack.c.l.b16 %v1085
    %v1244 = vunpack.c.l.b16 %v1086
    %v1245 = vpack.c.b16 %v1230, %v1229
    %v1246 = vpack.c.b16 %v1232, %v1231
    %v1247 = vpack.c.b16 %v1234, %v1233
    %v1248 = vpack.c.b16 %v1236, %v1235
    %v1249 = vpack.c.b16 %v1238, %v1237
    %v1250 = vpack.c.b16 %v1240, %v1239
    %v1251 = vpack.c.b16 %v1242, %v1241
    %v1252 = vpack.c.b16 %v1244, %v1243
    %1261 = vmatpush.bf16.msra.mxu0 %v1252
    %1262 = vmatpush.bf16.msra.mxu0 %v1251
    %1263 = vmatpush.bf16.msra.mxu0 %v1250
    %1264 = vmatpush.bf16.msra.mxu0 %v1249
    %1265 = vmatpush.bf16.msra.mxu0 %v1248
    %1266 = vmatpush.bf16.msra.mxu0 %v1247
    %1267 = vmatpush.bf16.msra.mxu0 %v1246
    %1268 = vmatpush.bf16.msra.mxu0 %v1245
    %1269 = vmatmul.bf16.gmra.mxu0 %v1051
    %v1270 = vpop.f32.mrf.mxu0
    %v1271 = vadd.f32 0.0, %v1270
    %v1272 = vpop.f32.mrf.mxu0
    %v1273 = vadd.f32 0.0, %v1272
    %1274 = vmatmul.bf16.gmra.mxu0 %v1052
    %v1275 = vpop.f32.mrf.mxu0
    %v1276 = vadd.f32 0.0, %v1275
    %v1277 = vpop.f32.mrf.mxu0
    %v1278 = vadd.f32 0.0, %v1277
    %1279 = vdwg.mxu0
    %v1280 = vpack.c.bf16 %v1271, %v1271
    %v1281 = vpack.c.bf16 %v1273, %v1273
    %v1282 = vpack.c.bf16 %v1276, %v1276
    %v1283 = vpack.c.bf16 %v1278, %v1278
    %v1300 = vunpack.c.l.b16 %v1088
    %v1301 = vunpack.c.l.b16 %v1089
    %v1302 = vunpack.c.l.b16 %v1090
    %v1303 = vunpack.c.l.b16 %v1091
    %v1304 = vunpack.c.l.b16 %v1092
    %v1305 = vunpack.c.l.b16 %v1093
    %v1306 = vunpack.c.l.b16 %v1094
    %v1307 = vunpack.c.l.b16 %v1095
    %v1308 = vunpack.c.l.b16 %v1096
    %v1309 = vunpack.c.l.b16 %v1097
    %v1310 = vunpack.c.l.b16 %v1098
    %v1311 = vunpack.c.l.b16 %v1099
    %v1312 = vunpack.c.l.b16 %v1100
    %v1313 = vunpack.c.l.b16 %v1101
    %v1314 = vunpack.c.l.b16 %v1102
    %v1315 = vunpack.c.l.b16 %v1103
    %v1316 = vpack.c.b16 %v1301, %v1300
    %v1317 = vpack.c.b16 %v1303, %v1302
    %v1318 = vpack.c.b16 %v1305, %v1304
    %v1319 = vpack.c.b16 %v1307, %v1306
    %v1320 = vpack.c.b16 %v1309, %v1308
    %v1321 = vpack.c.b16 %v1311, %v1310
    %v1322 = vpack.c.b16 %v1313, %v1312
    %v1323 = vpack.c.b16 %v1315, %v1314
    %1332 = vmatpush.bf16.msra.mxu0 %v1323
    %1333 = vmatpush.bf16.msra.mxu0 %v1322
    %1334 = vmatpush.bf16.msra.mxu0 %v1321
    %1335 = vmatpush.bf16.msra.mxu0 %v1320
    %1336 = vmatpush.bf16.msra.mxu0 %v1319
    %1337 = vmatpush.bf16.msra.mxu0 %v1318
    %1338 = vmatpush.bf16.msra.mxu0 %v1317
    %1339 = vmatpush.bf16.msra.mxu0 %v1316
    %1340 = vmatmul.bf16.gmra.mxu0 %v1051
    %v1341 = vpop.f32.mrf.mxu0
    %v1342 = vadd.f32 0.0, %v1341
    %v1343 = vpop.f32.mrf.mxu0
    %v1344 = vadd.f32 0.0, %v1343
    %1345 = vmatmul.bf16.gmra.mxu0 %v1052
    %v1346 = vpop.f32.mrf.mxu0
    %v1347 = vadd.f32 0.0, %v1346
    %v1348 = vpop.f32.mrf.mxu0
    %v1349 = vadd.f32 0.0, %v1348
    %1350 = vdwg.mxu0
    %v1351 = vpack.c.bf16 %v1342, %v1342
    %v1352 = vpack.c.bf16 %v1344, %v1344
    %v1353 = vpack.c.bf16 %v1347, %v1347
    %v1354 = vpack.c.bf16 %v1349, %v1349
    %v1357 = vunpack.c.l.b16 %v1209
    %v1358 = vunpack.c.l.b16 %v1210
    %v1359 = vpack.c.b16 %v1358, %v1357
    %v1363 = vunpack.c.l.b16 %v1280
    %v1364 = vunpack.c.l.b16 %v1281
    %v1365 = vpack.c.b16 %v1364, %v1363
    %1367 = vmatpush.bf16.xpose.msra.mxu0 0
    %1368 = vmatpush.bf16.xpose.msra.mxu0 0
    %1369 = vmatpush.bf16.xpose.msra.mxu0 0
    %1370 = vmatpush.bf16.xpose.msra.mxu0 0
    %1371 = vmatpush.bf16.xpose.msra.mxu0 0
    %1372 = vmatpush.bf16.xpose.msra.mxu0 0
    %1373 = vmatpush.bf16.xpose.msra.mxu0 0
    %1374 = vmatpush.bf16.xpose.msra.mxu0 %v1365
    %1375 = vmatmul.bf16.gmra.mxu0 %v1359
    %v1376 = vpop.f32.mrf.mxu0
    %v1377 = vadd.f32 0.0, %v1376
    %v1378 = vpop.f32.mrf.mxu0
    %v1379 = vadd.f32 0.0, %v1378
    %1380 = vdwg.mxu0
    %v1383 = vunpack.c.l.b16 %v1211
    %v1384 = vunpack.c.l.b16 %v1212
    %v1385 = vpack.c.b16 %v1384, %v1383
    %v1389 = vunpack.c.l.b16 %v1282
    %v1390 = vunpack.c.l.b16 %v1283
    %v1391 = vpack.c.b16 %v1390, %v1389
    %1393 = vmatpush.bf16.xpose.msra.mxu0 0
    %1394 = vmatpush.bf16.xpose.msra.mxu0 0
    %1395 = vmatpush.bf16.xpose.msra.mxu0 0
    %1396 = vmatpush.bf16.xpose.msra.mxu0 0
    %1397 = vmatpush.bf16.xpose.msra.mxu0 0
    %1398 = vmatpush.bf16.xpose.msra.mxu0 0
    %1399 = vmatpush.bf16.xpose.msra.mxu0 0
    %1400 = vmatpush.bf16.xpose.msra.mxu0 %v1391
    %1401 = vmatmul.bf16.gmra.mxu0 %v1385
    %v1402 = vpop.f32.mrf.mxu0
    %v1403 = vadd.f32 0.0, %v1402
    %v1404 = vpop.f32.mrf.mxu0
    %v1405 = vadd.f32 0.0, %v1404
    %1406 = vdwg.mxu0
    %v1407 = vsel %vm784, %v1377, -inf
    %1408 = vmax.xlane.f32.xlu0 %v1407
    %v1409 = vpop.xlane.xlu0 %1408
    %v1410 = vsel %vm784, %v1379, -inf
    %1411 = vmax.xlane.f32.xlu0 %v1410
    %v1412 = vpop.xlane.xlu0 %1411
    %v1413 = vsel %vm784, %v1403, -inf
    %1414 = vmax.xlane.f32.xlu0 %v1413
    %v1415 = vpop.xlane.xlu0 %1414
    %v1416 = vsel %vm784, %v1405, -inf
    %1417 = vmax.xlane.f32.xlu0 %v1416
    %v1418 = vpop.xlane.xlu0 %1417
    %v1419 = vsub.f32 %v1377, %v1409
    %v1420 = vsub.f32 %v1379, %v1412
    %v1421 = vsub.f32 %v1403, %v1415
    %v1422 = vsub.f32 %v1405, %v1418
    %v1423 = vmul.f32 %v1419, 1.442695
    %v1424 = vpow.pop %v1423
    %v1425 = vmul.f32 %v1420, 1.442695
    %v1426 = vpow.pop %v1425
    %v1427 = vmul.f32 %v1421, 1.442695
    %v1428 = vpow.pop %v1427
    %v1429 = vmul.f32 %v1422, 1.442695
    %v1430 = vpow.pop %v1429
    %v1431 = vsel %vm784, %v1424, 0.0
    %1432 = vadd.xlane.f32.xlu0 %v1431
    %v1433 = vpop.xlane.xlu0 %1432
    %v1434 = vsel %vm784, %v1426, 0.0
    %1435 = vadd.xlane.f32.xlu0 %v1434
    %v1436 = vpop.xlane.xlu0 %1435
    %v1437 = vsel %vm784, %v1428, 0.0
    %1438 = vadd.xlane.f32.xlu0 %v1437
    %v1439 = vpop.xlane.xlu0 %1438
    %v1440 = vsel %vm784, %v1430, 0.0
    %1441 = vadd.xlane.f32.xlu0 %v1440
    %v1442 = vpop.xlane.xlu0 %1441
    %v1443 = vrcp.pop %v1433
    %v1444 = vrcp.pop %v1436
    %v1445 = vrcp.pop %v1439
    %v1446 = vrcp.pop %v1442
    %v1447 = vmul.f32 %v1424, %v1443
    %v1448 = vmul.f32 %v1426, %v1444
    %v1449 = vmul.f32 %v1428, %v1445
    %v1450 = vmul.f32 %v1430, %v1446
    %v1451 = vpack.c.bf16 %v1447, %v1447
    %v1452 = vpack.c.bf16 %v1448, %v1448
    %v1453 = vpack.c.bf16 %v1449, %v1449
    %v1454 = vpack.c.bf16 %v1450, %v1450
    %v1457 = vunpack.c.l.b16 %v1451
    %v1458 = vunpack.c.l.b16 %v1452
    %v1459 = vpack.c.b16 %v1458, %v1457
    %v1462 = vunpack.c.l.b16 %v1351
    %v1463 = vunpack.c.l.b16 %v1352
    %v1464 = vpack.c.b16 %v1463, %v1462
    %v1467 = vsel %vm784, %v1459, 0
    %1469 = vmatpush.bf16.msra.mxu0 0
    %1470 = vmatpush.bf16.msra.mxu0 0
    %1471 = vmatpush.bf16.msra.mxu0 0
    %1472 = vmatpush.bf16.msra.mxu0 0
    %1473 = vmatpush.bf16.msra.mxu0 0
    %1474 = vmatpush.bf16.msra.mxu0 0
    %1475 = vmatpush.bf16.msra.mxu0 0
    %1476 = vmatpush.bf16.msra.mxu0 %v1464
    %1477 = vmatmul.bf16.gmra.mxu0 %v1467
    %v1478 = vpop.f32.mrf.mxu0
    %v1479 = vadd.f32 0.0, %v1478
    %v1480 = vpop.f32.mrf.mxu0
    %v1481 = vadd.f32 0.0, %v1480
    %1482 = vdwg.mxu0
    %v1485 = vunpack.c.l.b16 %v1453
    %v1486 = vunpack.c.l.b16 %v1454
    %v1487 = vpack.c.b16 %v1486, %v1485
    %v1490 = vunpack.c.l.b16 %v1353
    %v1491 = vunpack.c.l.b16 %v1354
    %v1492 = vpack.c.b16 %v1491, %v1490
    %v1495 = vsel %vm784, %v1487, 0
    %1497 = vmatpush.bf16.msra.mxu0 0
    %1498 = vmatpush.bf16.msra.mxu0 0
    %1499 = vmatpush.bf16.msra.mxu0 0
    %1500 = vmatpush.bf16.msra.mxu0 0
    %1501 = vmatpush.bf16.msra.mxu0 0
    %1502 = vmatpush.bf16.msra.mxu0 0
    %1503 = vmatpush.bf16.msra.mxu0 0
    %1504 = vmatpush.bf16.msra.mxu0 %v1492
    %1505 = vmatmul.bf16.gmra.mxu0 %v1495
    %v1506 = vpop.f32.mrf.mxu0
    %v1507 = vadd.f32 0.0, %v1506
    %v1508 = vpop.f32.mrf.mxu0
    %v1509 = vadd.f32 0.0, %v1508
    %1510 = vdwg.mxu0
    %v1511 = vpack.c.bf16 %v1479, %v1479
    %v1512 = vpack.c.bf16 %v1481, %v1481
    %v1513 = vpack.c.bf16 %v1507, %v1507
    %v1514 = vpack.c.bf16 %v1509, %v1509
    %v1516 = vperm.slane %v1122, 0
    %v1522 = vunpack.c.l.b16 %v1511
    %v1523 = vunpack.c.l.b16 %v1512
    %v1524 = vunpack.c.l.b16 %v1513
    %v1525 = vunpack.c.l.b16 %v1514
    %v1526 = vpack.c.b16 %v1523, %v1522
    %v1527 = vpack.c.b16 %v1525, %v1524
    %v1546 = vunpack.c.l.b16 %v1105
    %v1547 = vunpack.c.l.b16 %v1106
    %v1548 = vunpack.c.l.b16 %v1107
    %v1549 = vunpack.c.l.b16 %v1108
    %v1550 = vunpack.c.l.b16 %v1109
    %v1551 = vunpack.c.l.b16 %v1110
    %v1552 = vunpack.c.l.b16 %v1111
    %v1553 = vunpack.c.l.b16 %v1112
    %v1554 = vunpack.c.l.b16 %v1113
    %v1555 = vunpack.c.l.b16 %v1114
    %v1556 = vunpack.c.l.b16 %v1115
    %v1557 = vunpack.c.l.b16 %v1116
    %v1558 = vunpack.c.l.b16 %v1117
    %v1559 = vunpack.c.l.b16 %v1118
    %v1560 = vunpack.c.l.b16 %v1119
    %v1561 = vunpack.c.l.b16 %v1120
    %v1562 = vpack.c.b16 %v1547, %v1546
    %v1563 = vpack.c.b16 %v1549, %v1548
    %v1564 = vpack.c.b16 %v1551, %v1550
    %v1565 = vpack.c.b16 %v1553, %v1552
    %v1566 = vpack.c.b16 %v1555, %v1554
    %v1567 = vpack.c.b16 %v1557, %v1556
    %v1568 = vpack.c.b16 %v1559, %v1558
    %v1569 = vpack.c.b16 %v1561, %v1560
    %1578 = vmatpush.bf16.msra.mxu0 %v1569
    %1579 = vmatpush.bf16.msra.mxu0 %v1568
    %1580 = vmatpush.bf16.msra.mxu0 %v1567
    %1581 = vmatpush.bf16.msra.mxu0 %v1566
    %1582 = vmatpush.bf16.msra.mxu0 %v1565
    %1583 = vmatpush.bf16.msra.mxu0 %v1564
    %1584 = vmatpush.bf16.msra.mxu0 %v1563
    %1585 = vmatpush.bf16.msra.mxu0 %v1562
    %1586 = vmatmul.bf16.gmra.mxu0 %v1526
    %v1587 = vpop.f32.mrf.mxu0
    %v1588 = vadd.f32 %v1516, %v1587
    %v1589 = vpop.f32.mrf.mxu0
    %v1590 = vadd.f32 %v1516, %v1589
    %1591 = vmatmul.bf16.gmra.mxu0 %v1527
    %v1592 = vpop.f32.mrf.mxu0
    %v1593 = vadd.f32 %v1516, %v1592
    %v1594 = vpop.f32.mrf.mxu0
    %v1595 = vadd.f32 %v1516, %v1594
    %1596 = vdwg.mxu0
    %v1597 = vmax.f32 %v1588, 0.0
    %v1598 = vmax.f32 %v1590, 0.0
    %v1599 = vmax.f32 %v1593, 0.0
    %v1600 = vmax.f32 %v1595, 0.0
    %v1601 = vpack.c.bf16 %v1598, %v1597
    %v1602 = vpack.c.bf16 %v1600, %v1599
    %v1604 = vperm.slane %v1141, 0
    %v1622 = vunpack.c.l.b16 %v1124
    %v1623 = vunpack.c.l.b16 %v1125
    %v1624 = vunpack.c.l.b16 %v1126
    %v1625 = vunpack.c.l.b16 %v1127
    %v1626 = vunpack.c.l.b16 %v1128
    %v1627 = vunpack.c.l.b16 %v1129
    %v1628 = vunpack.c.l.b16 %v1130
    %v1629 = vunpack.c.l.b16 %v1131
    %v1630 = vunpack.c.l.b16 %v1132
    %v1631 = vunpack.c.l.b16 %v1133
    %v1632 = vunpack.c.l.b16 %v1134
    %v1633 = vunpack.c.l.b16 %v1135
    %v1634 = vunpack.c.l.b16 %v1136
    %v1635 = vunpack.c.l.b16 %v1137
    %v1636 = vunpack.c.l.b16 %v1138
    %v1637 = vunpack.c.l.b16 %v1139
    %v1638 = vpack.c.b16 %v1623, %v1622
    %v1639 = vpack.c.b16 %v1625, %v1624
    %v1640 = vpack.c.b16 %v1627, %v1626
    %v1641 = vpack.c.b16 %v1629, %v1628
    %v1642 = vpack.c.b16 %v1631, %v1630
    %v1643 = vpack.c.b16 %v1633, %v1632
    %v1644 = vpack.c.b16 %v1635, %v1634
    %v1645 = vpack.c.b16 %v1637, %v1636
    %1654 = vmatpush.bf16.msra.mxu0 %v1645
    %1655 = vmatpush.bf16.msra.mxu0 %v1644
    %1656 = vmatpush.bf16.msra.mxu0 %v1643
    %1657 = vmatpush.bf16.msra.mxu0 %v1642
    %1658 = vmatpush.bf16.msra.mxu0 %v1641
    %1659 = vmatpush.bf16.msra.mxu0 %v1640
    %1660 = vmatpush.bf16.msra.mxu0 %v1639
    %1661 = vmatpush.bf16.msra.mxu0 %v1638
    %1662 = vmatmul.bf16.gmra.mxu0 %v1601
    %v1663 = vpop.f32.mrf.mxu0
    %v1664 = vadd.f32 %v1604, %v1663
    %v1665 = vpop.f32.mrf.mxu0
    %v1666 = vadd.f32 %v1604, %v1665
    %1667 = vmatmul.bf16.gmra.mxu0 %v1602
    %v1668 = vpop.f32.mrf.mxu0
    %v1669 = vadd.f32 %v1604, %v1668
    %v1670 = vpop.f32.mrf.mxu0
    %v1671 = vadd.f32 %v1604, %v1670
    %1672 = vdwg.mxu0
    %v1673 = vpack.c.bf16 %v1666, %v1664
    %v1674 = vpack.c.bf16 %v1671, %v1669
    %v1675 = vld [vmem:[#allocation14] sm:$0xf]
    %v1676 = vld [vmem:[#allocation14 + $0x4] sm:$0xf]
    %v1677 = vld [vmem:[#allocation14 + $0x8] sm:$0xf]
    %v1678 = vld [vmem:[#allocation14 + $0xc] sm:$0xf]
    %v1679 = vld [vmem:[#allocation14 + $0x10] sm:$0xf]
    %v1680 = vld [vmem:[#allocation14 + $0x14] sm:$0xf]
    %v1681 = vld [vmem:[#allocation14 + $0x18] sm:$0xf]
    %v1682 = vld [vmem:[#allocation14 + $0x1c] sm:$0xf]
    %v1683 = vld [vmem:[#allocation14 + $0x20] sm:$0xf]
    %v1684 = vld [vmem:[#allocation14 + $0x24] sm:$0xf]
    %v1685 = vld [vmem:[#allocation14 + $0x28] sm:$0xf]
    %v1686 = vld [vmem:[#allocation14 + $0x2c] sm:$0xf]
    %v1687 = vld [vmem:[#allocation14 + $0x30] sm:$0xf]
    %v1688 = vld [vmem:[#allocation14 + $0x34] sm:$0xf]
    %v1689 = vld [vmem:[#allocation14 + $0x38] sm:$0xf]
    %v1690 = vld [vmem:[#allocation14 + $0x3c] sm:$0xf]
    %v1691 = vld [vmem:[#allocation16] sm:$0xf]
    %v1692 = vld [vmem:[#allocation16 + $0x4] sm:$0xf]
    %v1693 = vld [vmem:[#allocation16 + $0x8] sm:$0xf]
    %v1694 = vld [vmem:[#allocation16 + $0xc] sm:$0xf]
    %v1695 = vld [vmem:[#allocation16 + $0x10] sm:$0xf]
    %v1696 = vld [vmem:[#allocation16 + $0x14] sm:$0xf]
    %v1697 = vld [vmem:[#allocation16 + $0x18] sm:$0xf]
    %v1698 = vld [vmem:[#allocation16 + $0x1c] sm:$0xf]
    %v1699 = vld [vmem:[#allocation16 + $0x20] sm:$0xf]
    %v1700 = vld [vmem:[#allocation16 + $0x24] sm:$0xf]
    %v1701 = vld [vmem:[#allocation16 + $0x28] sm:$0xf]
    %v1702 = vld [vmem:[#allocation16 + $0x2c] sm:$0xf]
    %v1703 = vld [vmem:[#allocation16 + $0x30] sm:$0xf]
    %v1704 = vld [vmem:[#allocation16 + $0x34] sm:$0xf]
    %v1705 = vld [vmem:[#allocation16 + $0x38] sm:$0xf]
    %v1706 = vld [vmem:[#allocation16 + $0x3c] sm:$0xf]
    %v1707 = vld [vmem:[#allocation17] sm:$0xf]
    %v1708 = vld [vmem:[#allocation17 + $0x4] sm:$0xf]
    %v1709 = vld [vmem:[#allocation17 + $0x8] sm:$0xf]
    %v1710 = vld [vmem:[#allocation17 + $0xc] sm:$0xf]
    %v1711 = vld [vmem:[#allocation17 + $0x10] sm:$0xf]
    %v1712 = vld [vmem:[#allocation17 + $0x14] sm:$0xf]
    %v1713 = vld [vmem:[#allocation17 + $0x18] sm:$0xf]
    %v1714 = vld [vmem:[#allocation17 + $0x1c] sm:$0xf]
    %v1715 = vld [vmem:[#allocation17 + $0x20] sm:$0xf]
    %v1716 = vld [vmem:[#allocation17 + $0x24] sm:$0xf]
    %v1717 = vld [vmem:[#allocation17 + $0x28] sm:$0xf]
    %v1718 = vld [vmem:[#allocation17 + $0x2c] sm:$0xf]
    %v1719 = vld [vmem:[#allocation17 + $0x30] sm:$0xf]
    %v1720 = vld [vmem:[#allocation17 + $0x34] sm:$0xf]
    %v1721 = vld [vmem:[#allocation17 + $0x38] sm:$0xf]
    %v1722 = vld [vmem:[#allocation17 + $0x3c] sm:$0xf]
    %v1723 = vld [vmem:[#allocation19] sm:$0xf]
    %v1724 = vld [vmem:[#allocation19 + $0x4] sm:$0xf]
    %v1725 = vld [vmem:[#allocation19 + $0x8] sm:$0xf]
    %v1726 = vld [vmem:[#allocation19 + $0xc] sm:$0xf]
    %v1727 = vld [vmem:[#allocation19 + $0x10] sm:$0xf]
    %v1728 = vld [vmem:[#allocation19 + $0x14] sm:$0xf]
    %v1729 = vld [vmem:[#allocation19 + $0x18] sm:$0xf]
    %v1730 = vld [vmem:[#allocation19 + $0x1c] sm:$0xf]
    %v1731 = vld [vmem:[#allocation19 + $0x20] sm:$0xf]
    %v1732 = vld [vmem:[#allocation19 + $0x24] sm:$0xf]
    %v1733 = vld [vmem:[#allocation19 + $0x28] sm:$0xf]
    %v1734 = vld [vmem:[#allocation19 + $0x2c] sm:$0xf]
    %v1735 = vld [vmem:[#allocation19 + $0x30] sm:$0xf]
    %v1736 = vld [vmem:[#allocation19 + $0x34] sm:$0xf]
    %v1737 = vld [vmem:[#allocation19 + $0x38] sm:$0xf]
    %v1738 = vld [vmem:[#allocation19 + $0x3c] sm:$0xf]
    %v1739 = vld [vmem:[%s15] sm:$0x1]
    %v1740 = vld [vmem:[#allocation20] sm:$0xf]
    %v1741 = vld [vmem:[#allocation20 + $0x4] sm:$0xf]
    %v1742 = vld [vmem:[#allocation20 + $0x8] sm:$0xf]
    %v1743 = vld [vmem:[#allocation20 + $0xc] sm:$0xf]
    %v1744 = vld [vmem:[#allocation20 + $0x10] sm:$0xf]
    %v1745 = vld [vmem:[#allocation20 + $0x14] sm:$0xf]
    %v1746 = vld [vmem:[#allocation20 + $0x18] sm:$0xf]
    %v1747 = vld [vmem:[#allocation20 + $0x1c] sm:$0xf]
    %v1748 = vld [vmem:[#allocation20 + $0x20] sm:$0xf]
    %v1749 = vld [vmem:[#allocation20 + $0x24] sm:$0xf]
    %v1750 = vld [vmem:[#allocation20 + $0x28] sm:$0xf]
    %v1751 = vld [vmem:[#allocation20 + $0x2c] sm:$0xf]
    %v1752 = vld [vmem:[#allocation20 + $0x30] sm:$0xf]
    %v1753 = vld [vmem:[#allocation20 + $0x34] sm:$0xf]
    %v1754 = vld [vmem:[#allocation20 + $0x38] sm:$0xf]
    %v1755 = vld [vmem:[#allocation20 + $0x3c] sm:$0xf]
    %v1756 = vld [vmem:[%s17] sm:$0x1]
    %v1761 = vunpack.c.l.b16 %v421
    %v1762 = vunpack.c.l.b16 %v422
    %v1763 = vunpack.c.l.b16 %v423
    %v1764 = vunpack.c.l.b16 %v424
    %v1765 = vpack.c.b16 %v1762, %v1761
    %v1766 = vpack.c.b16 %v1764, %v1763
    %v1785 = vunpack.c.l.b16 %v1675
    %v1786 = vunpack.c.l.b16 %v1676
    %v1787 = vunpack.c.l.b16 %v1677
    %v1788 = vunpack.c.l.b16 %v1678
    %v1789 = vunpack.c.l.b16 %v1679
    %v1790 = vunpack.c.l.b16 %v1680
    %v1791 = vunpack.c.l.b16 %v1681
    %v1792 = vunpack.c.l.b16 %v1682
    %v1793 = vunpack.c.l.b16 %v1683
    %v1794 = vunpack.c.l.b16 %v1684
    %v1795 = vunpack.c.l.b16 %v1685
    %v1796 = vunpack.c.l.b16 %v1686
    %v1797 = vunpack.c.l.b16 %v1687
    %v1798 = vunpack.c.l.b16 %v1688
    %v1799 = vunpack.c.l.b16 %v1689
    %v1800 = vunpack.c.l.b16 %v1690
    %v1801 = vpack.c.b16 %v1786, %v1785
    %v1802 = vpack.c.b16 %v1788, %v1787
    %v1803 = vpack.c.b16 %v1790, %v1789
    %v1804 = vpack.c.b16 %v1792, %v1791
    %v1805 = vpack.c.b16 %v1794, %v1793
    %v1806 = vpack.c.b16 %v1796, %v1795
    %v1807 = vpack.c.b16 %v1798, %v1797
    %v1808 = vpack.c.b16 %v1800, %v1799
    %1817 = vmatpush.bf16.msra.mxu0 %v1808
    %1818 = vmatpush.bf16.msra.mxu0 %v1807
    %1819 = vmatpush.bf16.msra.mxu0 %v1806
    %1820 = vmatpush.bf16.msra.mxu0 %v1805
    %1821 = vmatpush.bf16.msra.mxu0 %v1804
    %1822 = vmatpush.bf16.msra.mxu0 %v1803
    %1823 = vmatpush.bf16.msra.mxu0 %v1802
    %1824 = vmatpush.bf16.msra.mxu0 %v1801
    %1825 = vmatmul.bf16.gmra.mxu0 %v1765
    %v1826 = vpop.f32.mrf.mxu0
    %v1827 = vadd.f32 0.0, %v1826
    %v1828 = vpop.f32.mrf.mxu0
    %v1829 = vadd.f32 0.0, %v1828
    %1830 = vmatmul.bf16.gmra.mxu0 %v1766
    %v1831 = vpop.f32.mrf.mxu0
    %v1832 = vadd.f32 0.0, %v1831
    %v1833 = vpop.f32.mrf.mxu0
    %v1834 = vadd.f32 0.0, %v1833
    %1835 = vdwg.mxu0
    %v1836 = vpack.c.bf16 %v1827, %v1827
    %v1837 = vpack.c.bf16 %v1829, %v1829
    %v1838 = vpack.c.bf16 %v1832, %v1832
    %v1839 = vpack.c.bf16 %v1834, %v1834
    %v1856 = vunpack.c.l.b16 %v1691
    %v1857 = vunpack.c.l.b16 %v1692
    %v1858 = vunpack.c.l.b16 %v1693
    %v1859 = vunpack.c.l.b16 %v1694
    %v1860 = vunpack.c.l.b16 %v1695
    %v1861 = vunpack.c.l.b16 %v1696
    %v1862 = vunpack.c.l.b16 %v1697
    %v1863 = vunpack.c.l.b16 %v1698
    %v1864 = vunpack.c.l.b16 %v1699
    %v1865 = vunpack.c.l.b16 %v1700
    %v1866 = vunpack.c.l.b16 %v1701
    %v1867 = vunpack.c.l.b16 %v1702
    %v1868 = vunpack.c.l.b16 %v1703
    %v1869 = vunpack.c.l.b16 %v1704
    %v1870 = vunpack.c.l.b16 %v1705
    %v1871 = vunpack.c.l.b16 %v1706
    %v1872 = vpack.c.b16 %v1857, %v1856
    %v1873 = vpack.c.b16 %v1859, %v1858
    %v1874 = vpack.c.b16 %v1861, %v1860
    %v1875 = vpack.c.b16 %v1863, %v1862
    %v1876 = vpack.c.b16 %v1865, %v1864
    %v1877 = vpack.c.b16 %v1867, %v1866
    %v1878 = vpack.c.b16 %v1869, %v1868
    %v1879 = vpack.c.b16 %v1871, %v1870
    %1888 = vmatpush.bf16.msra.mxu0 %v1879
    %1889 = vmatpush.bf16.msra.mxu0 %v1878
    %1890 = vmatpush.bf16.msra.mxu0 %v1877
    %1891 = vmatpush.bf16.msra.mxu0 %v1876
    %1892 = vmatpush.bf16.msra.mxu0 %v1875
    %1893 = vmatpush.bf16.msra.mxu0 %v1874
    %1894 = vmatpush.bf16.msra.mxu0 %v1873
    %1895 = vmatpush.bf16.msra.mxu0 %v1872
    %1896 = vmatmul.bf16.gmra.mxu0 %v1765
    %v1897 = vpop.f32.mrf.mxu0
    %v1898 = vadd.f32 0.0, %v1897
    %v1899 = vpop.f32.mrf.mxu0
    %v1900 = vadd.f32 0.0, %v1899
    %1901 = vmatmul.bf16.gmra.mxu0 %v1766
    %v1902 = vpop.f32.mrf.mxu0
    %v1903 = vadd.f32 0.0, %v1902
    %v1904 = vpop.f32.mrf.mxu0
    %v1905 = vadd.f32 0.0, %v1904
    %1906 = vdwg.mxu0
    %v1907 = vpack.c.bf16 %v1898, %v1898
    %v1908 = vpack.c.bf16 %v1900, %v1900
    %v1909 = vpack.c.bf16 %v1903, %v1903
    %v1910 = vpack.c.bf16 %v1905, %v1905
    %v1927 = vunpack.c.l.b16 %v1707
    %v1928 = vunpack.c.l.b16 %v1708
    %v1929 = vunpack.c.l.b16 %v1709
    %v1930 = vunpack.c.l.b16 %v1710
    %v1931 = vunpack.c.l.b16 %v1711
    %v1932 = vunpack.c.l.b16 %v1712
    %v1933 = vunpack.c.l.b16 %v1713
    %v1934 = vunpack.c.l.b16 %v1714
    %v1935 = vunpack.c.l.b16 %v1715
    %v1936 = vunpack.c.l.b16 %v1716
    %v1937 = vunpack.c.l.b16 %v1717
    %v1938 = vunpack.c.l.b16 %v1718
    %v1939 = vunpack.c.l.b16 %v1719
    %v1940 = vunpack.c.l.b16 %v1720
    %v1941 = vunpack.c.l.b16 %v1721
    %v1942 = vunpack.c.l.b16 %v1722
    %v1943 = vpack.c.b16 %v1928, %v1927
    %v1944 = vpack.c.b16 %v1930, %v1929
    %v1945 = vpack.c.b16 %v1932, %v1931
    %v1946 = vpack.c.b16 %v1934, %v1933
    %v1947 = vpack.c.b16 %v1936, %v1935
    %v1948 = vpack.c.b16 %v1938, %v1937
    %v1949 = vpack.c.b16 %v1940, %v1939
    %v1950 = vpack.c.b16 %v1942, %v1941
    %1959 = vmatpush.bf16.msra.mxu0 %v1950
    %1960 = vmatpush.bf16.msra.mxu0 %v1949
    %1961 = vmatpush.bf16.msra.mxu0 %v1948
    %1962 = vmatpush.bf16.msra.mxu0 %v1947
    %1963 = vmatpush.bf16.msra.mxu0 %v1946
    %1964 = vmatpush.bf16.msra.mxu0 %v1945
    %1965 = vmatpush.bf16.msra.mxu0 %v1944
    %1966 = vmatpush.bf16.msra.mxu0 %v1943
    %1967 = vmatmul.bf16.gmra.mxu0 %v1765
    %v1968 = vpop.f32.mrf.mxu0
    %v1969 = vadd.f32 0.0, %v1968
    %v1970 = vpop.f32.mrf.mxu0
    %v1971 = vadd.f32 0.0, %v1970
    %1972 = vmatmul.bf16.gmra.mxu0 %v1766
    %v1973 = vpop.f32.mrf.mxu0
    %v1974 = vadd.f32 0.0, %v1973
    %v1975 = vpop.f32.mrf.mxu0
    %v1976 = vadd.f32 0.0, %v1975
    %1977 = vdwg.mxu0
    %v1978 = vpack.c.bf16 %v1969, %v1969
    %v1979 = vpack.c.bf16 %v1971, %v1971
    %v1980 = vpack.c.bf16 %v1974, %v1974
    %v1981 = vpack.c.bf16 %v1976, %v1976
    %v1984 = vunpack.c.l.b16 %v1836
    %v1985 = vunpack.c.l.b16 %v1837
    %v1986 = vpack.c.b16 %v1985, %v1984
    %v1990 = vunpack.c.l.b16 %v1907
    %v1991 = vunpack.c.l.b16 %v1908
    %v1992 = vpack.c.b16 %v1991, %v1990
    %1994 = vmatpush.bf16.xpose.msra.mxu0 0
    %1995 = vmatpush.bf16.xpose.msra.mxu0 0
    %1996 = vmatpush.bf16.xpose.msra.mxu0 0
    %1997 = vmatpush.bf16.xpose.msra.mxu0 0
    %1998 = vmatpush.bf16.xpose.msra.mxu0 0
    %1999 = vmatpush.bf16.xpose.msra.mxu0 0
    %2000 = vmatpush.bf16.xpose.msra.mxu0 0
    %2001 = vmatpush.bf16.xpose.msra.mxu0 %v1992
    %2002 = vmatmul.bf16.gmra.mxu0 %v1986
    %v2003 = vpop.f32.mrf.mxu0
    %v2004 = vadd.f32 0.0, %v2003
    %v2005 = vpop.f32.mrf.mxu0
    %v2006 = vadd.f32 0.0, %v2005
    %2007 = vdwg.mxu0
    %v2010 = vunpack.c.l.b16 %v1838
    %v2011 = vunpack.c.l.b16 %v1839
    %v2012 = vpack.c.b16 %v2011, %v2010
    %v2016 = vunpack.c.l.b16 %v1909
    %v2017 = vunpack.c.l.b16 %v1910
    %v2018 = vpack.c.b16 %v2017, %v2016
    %2020 = vmatpush.bf16.xpose.msra.mxu0 0
    %2021 = vmatpush.bf16.xpose.msra.mxu0 0
    %2022 = vmatpush.bf16.xpose.msra.mxu0 0
    %2023 = vmatpush.bf16.xpose.msra.mxu0 0
    %2024 = vmatpush.bf16.xpose.msra.mxu0 0
    %2025 = vmatpush.bf16.xpose.msra.mxu0 0
    %2026 = vmatpush.bf16.xpose.msra.mxu0 0
    %2027 = vmatpush.bf16.xpose.msra.mxu0 %v2018
    %2028 = vmatmul.bf16.gmra.mxu0 %v2012
    %v2029 = vpop.f32.mrf.mxu0
    %v2030 = vadd.f32 0.0, %v2029
    %v2031 = vpop.f32.mrf.mxu0
    %v2032 = vadd.f32 0.0, %v2031
    %2033 = vdwg.mxu0
    %v2034 = vsel %vm784, %v2004, -inf
    %2035 = vmax.xlane.f32.xlu0 %v2034
    %v2036 = vpop.xlane.xlu0 %2035
    %v2037 = vsel %vm784, %v2006, -inf
    %2038 = vmax.xlane.f32.xlu0 %v2037
    %v2039 = vpop.xlane.xlu0 %2038
    %v2040 = vsel %vm784, %v2030, -inf
    %2041 = vmax.xlane.f32.xlu0 %v2040
    %v2042 = vpop.xlane.xlu0 %2041
    %v2043 = vsel %vm784, %v2032, -inf
    %2044 = vmax.xlane.f32.xlu0 %v2043
    %v2045 = vpop.xlane.xlu0 %2044
    %v2046 = vsub.f32 %v2004, %v2036
    %v2047 = vsub.f32 %v2006, %v2039
    %v2048 = vsub.f32 %v2030, %v2042
    %v2049 = vsub.f32 %v2032, %v2045
    %v2050 = vmul.f32 %v2046, 1.442695
    %v2051 = vpow.pop %v2050
    %v2052 = vmul.f32 %v2047, 1.442695
    %v2053 = vpow.pop %v2052
    %v2054 = vmul.f32 %v2048, 1.442695
    %v2055 = vpow.pop %v2054
    %v2056 = vmul.f32 %v2049, 1.442695
    %v2057 = vpow.pop %v2056
    %v2058 = vsel %vm784, %v2051, 0.0
    %2059 = vadd.xlane.f32.xlu0 %v2058
    %v2060 = vpop.xlane.xlu0 %2059
    %v2061 = vsel %vm784, %v2053, 0.0
    %2062 = vadd.xlane.f32.xlu0 %v2061
    %v2063 = vpop.xlane.xlu0 %2062
    %v2064 = vsel %vm784, %v2055, 0.0
    %2065 = vadd.xlane.f32.xlu0 %v2064
    %v2066 = vpop.xlane.xlu0 %2065
    %v2067 = vsel %vm784, %v2057, 0.0
    %2068 = vadd.xlane.f32.xlu0 %v2067
    %v2069 = vpop.xlane.xlu0 %2068
    %v2070 = vrcp.pop %v2060
    %v2071 = vrcp.pop %v2063
    %v2072 = vrcp.pop %v2066
    %v2073 = vrcp.pop %v2069
    %v2074 = vmul.f32 %v2051, %v2070
    %v2075 = vmul.f32 %v2053, %v2071
    %v2076 = vmul.f32 %v2055, %v2072
    %v2077 = vmul.f32 %v2057, %v2073
    %v2078 = vpack.c.bf16 %v2074, %v2074
    %v2079 = vpack.c.bf16 %v2075, %v2075
    %v2080 = vpack.c.bf16 %v2076, %v2076
    %v2081 = vpack.c.bf16 %v2077, %v2077
    %v2084 = vunpack.c.l.b16 %v2078
    %v2085 = vunpack.c.l.b16 %v2079
    %v2086 = vpack.c.b16 %v2085, %v2084
    %v2089 = vunpack.c.l.b16 %v1978
    %v2090 = vunpack.c.l.b16 %v1979
    %v2091 = vpack.c.b16 %v2090, %v2089
    %v2094 = vsel %vm784, %v2086, 0
    %2096 = vmatpush.bf16.msra.mxu0 0
    %2097 = vmatpush.bf16.msra.mxu0 0
    %2098 = vmatpush.bf16.msra.mxu0 0
    %2099 = vmatpush.bf16.msra.mxu0 0
    %2100 = vmatpush.bf16.msra.mxu0 0
    %2101 = vmatpush.bf16.msra.mxu0 0
    %2102 = vmatpush.bf16.msra.mxu0 0
    %2103 = vmatpush.bf16.msra.mxu0 %v2091
    %2104 = vmatmul.bf16.gmra.mxu0 %v2094
    %v2105 = vpop.f32.mrf.mxu0
    %v2106 = vadd.f32 0.0, %v2105
    %v2107 = vpop.f32.mrf.mxu0
    %v2108 = vadd.f32 0.0, %v2107
    %2109 = vdwg.mxu0
    %v2112 = vunpack.c.l.b16 %v2080
    %v2113 = vunpack.c.l.b16 %v2081
    %v2114 = vpack.c.b16 %v2113, %v2112
    %v2117 = vunpack.c.l.b16 %v1980
    %v2118 = vunpack.c.l.b16 %v1981
    %v2119 = vpack.c.b16 %v2118, %v2117
    %v2122 = vsel %vm784, %v2114, 0
    %2124 = vmatpush.bf16.msra.mxu0 0
    %2125 = vmatpush.bf16.msra.mxu0 0
    %2126 = vmatpush.bf16.msra.mxu0 0
    %2127 = vmatpush.bf16.msra.mxu0 0
    %2128 = vmatpush.bf16.msra.mxu0 0
    %2129 = vmatpush.bf16.msra.mxu0 0
    %2130 = vmatpush.bf16.msra.mxu0 0
    %2131 = vmatpush.bf16.msra.mxu0 %v2119
    %2132 = vmatmul.bf16.gmra.mxu0 %v2122
    %v2133 = vpop.f32.mrf.mxu0
    %v2134 = vadd.f32 0.0, %v2133
    %v2135 = vpop.f32.mrf.mxu0
    %v2136 = vadd.f32 0.0, %v2135
    %2137 = vdwg.mxu0
    %2139 = vset.pattern.permute.xlu0 0
    %2140 = vperm.xlu0 %2139, %v413
    %v2141 = vpop.permute.xlu0 %2140
    %2144 = vset.pattern.permute.xlu0 0
    %2145 = vperm.xlu0 %2144, %v414
    %v2146 = vpop.permute.xlu0 %2145
    %2149 = vset.pattern.permute.xlu0 0
    %2150 = vperm.xlu0 %2149, %v415
    %v2151 = vpop.permute.xlu0 %2150
    %2154 = vset.pattern.permute.xlu0 0
    %2155 = vperm.xlu0 %2154, %v416
    %v2156 = vpop.permute.xlu0 %2155
    %v2158 = vmul.f32 %v2106, %v2141
    %v2159 = vmul.f32 %v2108, %v2146
    %v2160 = vmul.f32 %v2134, %v2151
    %v2161 = vmul.f32 %v2136, %v2156
    %v2162 = vpack.c.bf16 %v2158, %v2158
    %v2163 = vpack.c.bf16 %v2159, %v2159
    %v2164 = vpack.c.bf16 %v2160, %v2160
    %v2165 = vpack.c.bf16 %v2161, %v2161
    %v2167 = vperm.slane %v1739, 0
    %v2173 = vunpack.c.l.b16 %v2162
    %v2174 = vunpack.c.l.b16 %v2163
    %v2175 = vunpack.c.l.b16 %v2164
    %v2176 = vunpack.c.l.b16 %v2165
    %v2177 = vpack.c.b16 %v2174, %v2173
    %v2178 = vpack.c.b16 %v2176, %v2175
    %v2197 = vunpack.c.l.b16 %v1723
    %v2198 = vunpack.c.l.b16 %v1724
    %v2199 = vunpack.c.l.b16 %v1725
    %v2200 = vunpack.c.l.b16 %v1726
    %v2201 = vunpack.c.l.b16 %v1727
    %v2202 = vunpack.c.l.b16 %v1728
    %v2203 = vunpack.c.l.b16 %v1729
    %v2204 = vunpack.c.l.b16 %v1730
    %v2205 = vunpack.c.l.b16 %v1731
    %v2206 = vunpack.c.l.b16 %v1732
    %v2207 = vunpack.c.l.b16 %v1733
    %v2208 = vunpack.c.l.b16 %v1734
    %v2209 = vunpack.c.l.b16 %v1735
    %v2210 = vunpack.c.l.b16 %v1736
    %v2211 = vunpack.c.l.b16 %v1737
    %v2212 = vunpack.c.l.b16 %v1738
    %v2213 = vpack.c.b16 %v2198, %v2197
    %v2214 = vpack.c.b16 %v2200, %v2199
    %v2215 = vpack.c.b16 %v2202, %v2201
    %v2216 = vpack.c.b16 %v2204, %v2203
    %v2217 = vpack.c.b16 %v2206, %v2205
    %v2218 = vpack.c.b16 %v2208, %v2207
    %v2219 = vpack.c.b16 %v2210, %v2209
    %v2220 = vpack.c.b16 %v2212, %v2211
    %2229 = vmatpush.bf16.msra.mxu0 %v2220
    %2230 = vmatpush.bf16.msra.mxu0 %v2219
    %2231 = vmatpush.bf16.msra.mxu0 %v2218
    %2232 = vmatpush.bf16.msra.mxu0 %v2217
    %2233 = vmatpush.bf16.msra.mxu0 %v2216
    %2234 = vmatpush.bf16.msra.mxu0 %v2215
    %2235 = vmatpush.bf16.msra.mxu0 %v2214
    %2236 = vmatpush.bf16.msra.mxu0 %v2213
    %2237 = vmatmul.bf16.gmra.mxu0 %v2177
    %v2238 = vpop.f32.mrf.mxu0
    %v2239 = vadd.f32 %v2167, %v2238
    %v2240 = vpop.f32.mrf.mxu0
    %v2241 = vadd.f32 %v2167, %v2240
    %2242 = vmatmul.bf16.gmra.mxu0 %v2178
    %v2243 = vpop.f32.mrf.mxu0
    %v2244 = vadd.f32 %v2167, %v2243
    %v2245 = vpop.f32.mrf.mxu0
    %v2246 = vadd.f32 %v2167, %v2245
    %2247 = vdwg.mxu0
    %v2248 = vmax.f32 %v2239, 0.0
    %v2249 = vmax.f32 %v2241, 0.0
    %v2250 = vmax.f32 %v2244, 0.0
    %v2251 = vmax.f32 %v2246, 0.0
    %v2252 = vpack.c.bf16 %v2249, %v2248
    %v2253 = vpack.c.bf16 %v2251, %v2250
    %v2255 = vperm.slane %v1756, 0
    %v2273 = vunpack.c.l.b16 %v1740
    %v2274 = vunpack.c.l.b16 %v1741
    %v2275 = vunpack.c.l.b16 %v1742
    %v2276 = vunpack.c.l.b16 %v1743
    %v2277 = vunpack.c.l.b16 %v1744
    %v2278 = vunpack.c.l.b16 %v1745
    %v2279 = vunpack.c.l.b16 %v1746
    %v2280 = vunpack.c.l.b16 %v1747
    %v2281 = vunpack.c.l.b16 %v1748
    %v2282 = vunpack.c.l.b16 %v1749
    %v2283 = vunpack.c.l.b16 %v1750
    %v2284 = vunpack.c.l.b16 %v1751
    %v2285 = vunpack.c.l.b16 %v1752
    %v2286 = vunpack.c.l.b16 %v1753
    %v2287 = vunpack.c.l.b16 %v1754
    %v2288 = vunpack.c.l.b16 %v1755
    %v2289 = vpack.c.b16 %v2274, %v2273
    %v2290 = vpack.c.b16 %v2276, %v2275
    %v2291 = vpack.c.b16 %v2278, %v2277
    %v2292 = vpack.c.b16 %v2280, %v2279
    %v2293 = vpack.c.b16 %v2282, %v2281
    %v2294 = vpack.c.b16 %v2284, %v2283
    %v2295 = vpack.c.b16 %v2286, %v2285
    %v2296 = vpack.c.b16 %v2288, %v2287
    %2305 = vmatpush.bf16.msra.mxu0 %v2296
    %2306 = vmatpush.bf16.msra.mxu0 %v2295
    %2307 = vmatpush.bf16.msra.mxu0 %v2294
    %2308 = vmatpush.bf16.msra.mxu0 %v2293
    %2309 = vmatpush.bf16.msra.mxu0 %v2292
    %2310 = vmatpush.bf16.msra.mxu0 %v2291
    %2311 = vmatpush.bf16.msra.mxu0 %v2290
    %2312 = vmatpush.bf16.msra.mxu0 %v2289
    %2313 = vmatmul.bf16.gmra.mxu0 %v2252
    %v2314 = vpop.f32.mrf.mxu0
    %v2315 = vadd.f32 %v2255, %v2314
    %v2316 = vpop.f32.mrf.mxu0
    %v2317 = vadd.f32 %v2255, %v2316
    %2318 = vmatmul.bf16.gmra.mxu0 %v2253
    %v2319 = vpop.f32.mrf.mxu0
    %v2320 = vadd.f32 %v2255, %v2319
    %v2321 = vpop.f32.mrf.mxu0
    %v2322 = vadd.f32 %v2255, %v2321
    %2323 = vdwg.mxu0
    %v2324 = vpack.c.bf16 %v2317, %v2315
    %v2325 = vpack.c.bf16 %v2322, %v2320
    %s2326 = scalar_lea.vmem [#allocation14], 64
    %v2327 = vld [vmem:[%s2326] sm:$0xf]
    %v2328 = vld [vmem:[%s2326 + $0x4] sm:$0xf]
    %v2329 = vld [vmem:[%s2326 + $0x8] sm:$0xf]
    %v2330 = vld [vmem:[%s2326 + $0xc] sm:$0xf]
    %v2331 = vld [vmem:[%s2326 + $0x10] sm:$0xf]
    %v2332 = vld [vmem:[%s2326 + $0x14] sm:$0xf]
    %v2333 = vld [vmem:[%s2326 + $0x18] sm:$0xf]
    %v2334 = vld [vmem:[%s2326 + $0x1c] sm:$0xf]
    %v2335 = vld [vmem:[%s2326 + $0x20] sm:$0xf]
    %v2336 = vld [vmem:[%s2326 + $0x24] sm:$0xf]
    %v2337 = vld [vmem:[%s2326 + $0x28] sm:$0xf]
    %v2338 = vld [vmem:[%s2326 + $0x2c] sm:$0xf]
    %v2339 = vld [vmem:[%s2326 + $0x30] sm:$0xf]
    %v2340 = vld [vmem:[%s2326 + $0x34] sm:$0xf]
    %v2341 = vld [vmem:[%s2326 + $0x38] sm:$0xf]
    %v2342 = vld [vmem:[%s2326 + $0x3c] sm:$0xf]
    %s2343 = scalar_lea.vmem [#allocation16], 64
    %v2344 = vld [vmem:[%s2343] sm:$0xf]
    %v2345 = vld [vmem:[%s2343 + $0x4] sm:$0xf]
    %v2346 = vld [vmem:[%s2343 + $0x8] sm:$0xf]
    %v2347 = vld [vmem:[%s2343 + $0xc] sm:$0xf]
    %v2348 = vld [vmem:[%s2343 + $0x10] sm:$0xf]
    %v2349 = vld [vmem:[%s2343 + $0x14] sm:$0xf]
    %v2350 = vld [vmem:[%s2343 + $0x18] sm:$0xf]
    %v2351 = vld [vmem:[%s2343 + $0x1c] sm:$0xf]
    %v2352 = vld [vmem:[%s2343 + $0x20] sm:$0xf]
    %v2353 = vld [vmem:[%s2343 + $0x24] sm:$0xf]
    %v2354 = vld [vmem:[%s2343 + $0x28] sm:$0xf]
    %v2355 = vld [vmem:[%s2343 + $0x2c] sm:$0xf]
    %v2356 = vld [vmem:[%s2343 + $0x30] sm:$0xf]
    %v2357 = vld [vmem:[%s2343 + $0x34] sm:$0xf]
    %v2358 = vld [vmem:[%s2343 + $0x38] sm:$0xf]
    %v2359 = vld [vmem:[%s2343 + $0x3c] sm:$0xf]
    %s2360 = scalar_lea.vmem [#allocation17], 64
    %v2361 = vld [vmem:[%s2360] sm:$0xf]
    %v2362 = vld [vmem:[%s2360 + $0x4] sm:$0xf]
    %v2363 = vld [vmem:[%s2360 + $0x8] sm:$0xf]
    %v2364 = vld [vmem:[%s2360 + $0xc] sm:$0xf]
    %v2365 = vld [vmem:[%s2360 + $0x10] sm:$0xf]
    %v2366 = vld [vmem:[%s2360 + $0x14] sm:$0xf]
    %v2367 = vld [vmem:[%s2360 + $0x18] sm:$0xf]
    %v2368 = vld [vmem:[%s2360 + $0x1c] sm:$0xf]
    %v2369 = vld [vmem:[%s2360 + $0x20] sm:$0xf]
    %v2370 = vld [vmem:[%s2360 + $0x24] sm:$0xf]
    %v2371 = vld [vmem:[%s2360 + $0x28] sm:$0xf]
    %v2372 = vld [vmem:[%s2360 + $0x2c] sm:$0xf]
    %v2373 = vld [vmem:[%s2360 + $0x30] sm:$0xf]
    %v2374 = vld [vmem:[%s2360 + $0x34] sm:$0xf]
    %v2375 = vld [vmem:[%s2360 + $0x38] sm:$0xf]
    %v2376 = vld [vmem:[%s2360 + $0x3c] sm:$0xf]
    %s2377 = scalar_lea.vmem [#allocation19], 64
    %v2378 = vld [vmem:[%s2377] sm:$0xf]
    %v2379 = vld [vmem:[%s2377 + $0x4] sm:$0xf]
    %v2380 = vld [vmem:[%s2377 + $0x8] sm:$0xf]
    %v2381 = vld [vmem:[%s2377 + $0xc] sm:$0xf]
    %v2382 = vld [vmem:[%s2377 + $0x10] sm:$0xf]
    %v2383 = vld [vmem:[%s2377 + $0x14] sm:$0xf]
    %v2384 = vld [vmem:[%s2377 + $0x18] sm:$0xf]
    %v2385 = vld [vmem:[%s2377 + $0x1c] sm:$0xf]
    %v2386 = vld [vmem:[%s2377 + $0x20] sm:$0xf]
    %v2387 = vld [vmem:[%s2377 + $0x24] sm:$0xf]
    %v2388 = vld [vmem:[%s2377 + $0x28] sm:$0xf]
    %v2389 = vld [vmem:[%s2377 + $0x2c] sm:$0xf]
    %v2390 = vld [vmem:[%s2377 + $0x30] sm:$0xf]
    %v2391 = vld [vmem:[%s2377 + $0x34] sm:$0xf]
    %v2392 = vld [vmem:[%s2377 + $0x38] sm:$0xf]
    %v2393 = vld [vmem:[%s2377 + $0x3c] sm:$0xf]
    %s2394 = scalar_lea.vmem %s15, 1
    %v2395 = vld [vmem:[%s2394] sm:$0x1]
    %s2396 = scalar_lea.vmem [#allocation20], 64
    %v2397 = vld [vmem:[%s2396] sm:$0xf]
    %v2398 = vld [vmem:[%s2396 + $0x4] sm:$0xf]
    %v2399 = vld [vmem:[%s2396 + $0x8] sm:$0xf]
    %v2400 = vld [vmem:[%s2396 + $0xc] sm:$0xf]
    %v2401 = vld [vmem:[%s2396 + $0x10] sm:$0xf]
    %v2402 = vld [vmem:[%s2396 + $0x14] sm:$0xf]
    %v2403 = vld [vmem:[%s2396 + $0x18] sm:$0xf]
    %v2404 = vld [vmem:[%s2396 + $0x1c] sm:$0xf]
    %v2405 = vld [vmem:[%s2396 + $0x20] sm:$0xf]
    %v2406 = vld [vmem:[%s2396 + $0x24] sm:$0xf]
    %v2407 = vld [vmem:[%s2396 + $0x28] sm:$0xf]
    %v2408 = vld [vmem:[%s2396 + $0x2c] sm:$0xf]
    %v2409 = vld [vmem:[%s2396 + $0x30] sm:$0xf]
    %v2410 = vld [vmem:[%s2396 + $0x34] sm:$0xf]
    %v2411 = vld [vmem:[%s2396 + $0x38] sm:$0xf]
    %v2412 = vld [vmem:[%s2396 + $0x3c] sm:$0xf]
    %s2413 = scalar_lea.vmem %s17, 1
    %v2414 = vld [vmem:[%s2413] sm:$0x1]
    %v2431 = vunpack.c.l.b16 %v2327
    %v2432 = vunpack.c.l.b16 %v2328
    %v2433 = vunpack.c.l.b16 %v2329
    %v2434 = vunpack.c.l.b16 %v2330
    %v2435 = vunpack.c.l.b16 %v2331
    %v2436 = vunpack.c.l.b16 %v2332
    %v2437 = vunpack.c.l.b16 %v2333
    %v2438 = vunpack.c.l.b16 %v2334
    %v2439 = vunpack.c.l.b16 %v2335
    %v2440 = vunpack.c.l.b16 %v2336
    %v2441 = vunpack.c.l.b16 %v2337
    %v2442 = vunpack.c.l.b16 %v2338
    %v2443 = vunpack.c.l.b16 %v2339
    %v2444 = vunpack.c.l.b16 %v2340
    %v2445 = vunpack.c.l.b16 %v2341
    %v2446 = vunpack.c.l.b16 %v2342
    %v2447 = vpack.c.b16 %v2432, %v2431
    %v2448 = vpack.c.b16 %v2434, %v2433
    %v2449 = vpack.c.b16 %v2436, %v2435
    %v2450 = vpack.c.b16 %v2438, %v2437
    %v2451 = vpack.c.b16 %v2440, %v2439
    %v2452 = vpack.c.b16 %v2442, %v2441
    %v2453 = vpack.c.b16 %v2444, %v2443
    %v2454 = vpack.c.b16 %v2446, %v2445
    %2463 = vmatpush.bf16.msra.mxu0 %v2454
    %2464 = vmatpush.bf16.msra.mxu0 %v2453
    %2465 = vmatpush.bf16.msra.mxu0 %v2452
    %2466 = vmatpush.bf16.msra.mxu0 %v2451
    %2467 = vmatpush.bf16.msra.mxu0 %v2450
    %2468 = vmatpush.bf16.msra.mxu0 %v2449
    %2469 = vmatpush.bf16.msra.mxu0 %v2448
    %2470 = vmatpush.bf16.msra.mxu0 %v2447
    %2471 = vmatmul.bf16.gmra.mxu0 %v2324
    %v2472 = vpop.f32.mrf.mxu0
    %v2473 = vadd.f32 0.0, %v2472
    %v2474 = vpop.f32.mrf.mxu0
    %v2475 = vadd.f32 0.0, %v2474
    %2476 = vmatmul.bf16.gmra.mxu0 %v2325
    %v2477 = vpop.f32.mrf.mxu0
    %v2478 = vadd.f32 0.0, %v2477
    %v2479 = vpop.f32.mrf.mxu0
    %v2480 = vadd.f32 0.0, %v2479
    %2481 = vdwg.mxu0
    %v2482 = vpack.c.bf16 %v2473, %v2473
    %v2483 = vpack.c.bf16 %v2475, %v2475
    %v2484 = vpack.c.bf16 %v2478, %v2478
    %v2485 = vpack.c.bf16 %v2480, %v2480
    %v2502 = vunpack.c.l.b16 %v2344
    %v2503 = vunpack.c.l.b16 %v2345
    %v2504 = vunpack.c.l.b16 %v2346
    %v2505 = vunpack.c.l.b16 %v2347
    %v2506 = vunpack.c.l.b16 %v2348
    %v2507 = vunpack.c.l.b16 %v2349
    %v2508 = vunpack.c.l.b16 %v2350
    %v2509 = vunpack.c.l.b16 %v2351
    %v2510 = vunpack.c.l.b16 %v2352
    %v2511 = vunpack.c.l.b16 %v2353
    %v2512 = vunpack.c.l.b16 %v2354
    %v2513 = vunpack.c.l.b16 %v2355
    %v2514 = vunpack.c.l.b16 %v2356
    %v2515 = vunpack.c.l.b16 %v2357
    %v2516 = vunpack.c.l.b16 %v2358
    %v2517 = vunpack.c.l.b16 %v2359
    %v2518 = vpack.c.b16 %v2503, %v2502
    %v2519 = vpack.c.b16 %v2505, %v2504
    %v2520 = vpack.c.b16 %v2507, %v2506
    %v2521 = vpack.c.b16 %v2509, %v2508
    %v2522 = vpack.c.b16 %v2511, %v2510
    %v2523 = vpack.c.b16 %v2513, %v2512
    %v2524 = vpack.c.b16 %v2515, %v2514
    %v2525 = vpack.c.b16 %v2517, %v2516
    %2534 = vmatpush.bf16.msra.mxu0 %v2525
    %2535 = vmatpush.bf16.msra.mxu0 %v2524
    %2536 = vmatpush.bf16.msra.mxu0 %v2523
    %2537 = vmatpush.bf16.msra.mxu0 %v2522
    %2538 = vmatpush.bf16.msra.mxu0 %v2521
    %2539 = vmatpush.bf16.msra.mxu0 %v2520
    %2540 = vmatpush.bf16.msra.mxu0 %v2519
    %2541 = vmatpush.bf16.msra.mxu0 %v2518
    %2542 = vmatmul.bf16.gmra.mxu0 %v2324
    %v2543 = vpop.f32.mrf.mxu0
    %v2544 = vadd.f32 0.0, %v2543
    %v2545 = vpop.f32.mrf.mxu0
    %v2546 = vadd.f32 0.0, %v2545
    %2547 = vmatmul.bf16.gmra.mxu0 %v2325
    %v2548 = vpop.f32.mrf.mxu0
    %v2549 = vadd.f32 0.0, %v2548
    %v2550 = vpop.f32.mrf.mxu0
    %v2551 = vadd.f32 0.0, %v2550
    %2552 = vdwg.mxu0
    %v2553 = vpack.c.bf16 %v2544, %v2544
    %v2554 = vpack.c.bf16 %v2546, %v2546
    %v2555 = vpack.c.bf16 %v2549, %v2549
    %v2556 = vpack.c.bf16 %v2551, %v2551
    %v2573 = vunpack.c.l.b16 %v2361
    %v2574 = vunpack.c.l.b16 %v2362
    %v2575 = vunpack.c.l.b16 %v2363
    %v2576 = vunpack.c.l.b16 %v2364
    %v2577 = vunpack.c.l.b16 %v2365
    %v2578 = vunpack.c.l.b16 %v2366
    %v2579 = vunpack.c.l.b16 %v2367
    %v2580 = vunpack.c.l.b16 %v2368
    %v2581 = vunpack.c.l.b16 %v2369
    %v2582 = vunpack.c.l.b16 %v2370
    %v2583 = vunpack.c.l.b16 %v2371
    %v2584 = vunpack.c.l.b16 %v2372
    %v2585 = vunpack.c.l.b16 %v2373
    %v2586 = vunpack.c.l.b16 %v2374
    %v2587 = vunpack.c.l.b16 %v2375
    %v2588 = vunpack.c.l.b16 %v2376
    %v2589 = vpack.c.b16 %v2574, %v2573
    %v2590 = vpack.c.b16 %v2576, %v2575
    %v2591 = vpack.c.b16 %v2578, %v2577
    %v2592 = vpack.c.b16 %v2580, %v2579
    %v2593 = vpack.c.b16 %v2582, %v2581
    %v2594 = vpack.c.b16 %v2584, %v2583
    %v2595 = vpack.c.b16 %v2586, %v2585
    %v2596 = vpack.c.b16 %v2588, %v2587
    %2605 = vmatpush.bf16.msra.mxu0 %v2596
    %2606 = vmatpush.bf16.msra.mxu0 %v2595
    %2607 = vmatpush.bf16.msra.mxu0 %v2594
    %2608 = vmatpush.bf16.msra.mxu0 %v2593
    %2609 = vmatpush.bf16.msra.mxu0 %v2592
    %2610 = vmatpush.bf16.msra.mxu0 %v2591
    %2611 = vmatpush.bf16.msra.mxu0 %v2590
    %2612 = vmatpush.bf16.msra.mxu0 %v2589
    %2613 = vmatmul.bf16.gmra.mxu0 %v2324
    %v2614 = vpop.f32.mrf.mxu0
    %v2615 = vadd.f32 0.0, %v2614
    %v2616 = vpop.f32.mrf.mxu0
    %v2617 = vadd.f32 0.0, %v2616
    %2618 = vmatmul.bf16.gmra.mxu0 %v2325
    %v2619 = vpop.f32.mrf.mxu0
    %v2620 = vadd.f32 0.0, %v2619
    %v2621 = vpop.f32.mrf.mxu0
    %v2622 = vadd.f32 0.0, %v2621
    %2623 = vdwg.mxu0
    %v2624 = vpack.c.bf16 %v2615, %v2615
    %v2625 = vpack.c.bf16 %v2617, %v2617
    %v2626 = vpack.c.bf16 %v2620, %v2620
    %v2627 = vpack.c.bf16 %v2622, %v2622
    %v2630 = vunpack.c.l.b16 %v2482
    %v2631 = vunpack.c.l.b16 %v2483
    %v2632 = vpack.c.b16 %v2631, %v2630
    %v2636 = vunpack.c.l.b16 %v2553
    %v2637 = vunpack.c.l.b16 %v2554
    %v2638 = vpack.c.b16 %v2637, %v2636
    %2640 = vmatpush.bf16.xpose.msra.mxu0 0
    %2641 = vmatpush.bf16.xpose.msra.mxu0 0
    %2642 = vmatpush.bf16.xpose.msra.mxu0 0
    %2643 = vmatpush.bf16.xpose.msra.mxu0 0
    %2644 = vmatpush.bf16.xpose.msra.mxu0 0
    %2645 = vmatpush.bf16.xpose.msra.mxu0 0
    %2646 = vmatpush.bf16.xpose.msra.mxu0 0
    %2647 = vmatpush.bf16.xpose.msra.mxu0 %v2638
    %2648 = vmatmul.bf16.gmra.mxu0 %v2632
    %v2649 = vpop.f32.mrf.mxu0
    %v2650 = vadd.f32 0.0, %v2649
    %v2651 = vpop.f32.mrf.mxu0
    %v2652 = vadd.f32 0.0, %v2651
    %2653 = vdwg.mxu0
    %v2656 = vunpack.c.l.b16 %v2484
    %v2657 = vunpack.c.l.b16 %v2485
    %v2658 = vpack.c.b16 %v2657, %v2656
    %v2662 = vunpack.c.l.b16 %v2555
    %v2663 = vunpack.c.l.b16 %v2556
    %v2664 = vpack.c.b16 %v2663, %v2662
    %2666 = vmatpush.bf16.xpose.msra.mxu0 0
    %2667 = vmatpush.bf16.xpose.msra.mxu0 0
    %2668 = vmatpush.bf16.xpose.msra.mxu0 0
    %2669 = vmatpush.bf16.xpose.msra.mxu0 0
    %2670 = vmatpush.bf16.xpose.msra.mxu0 0
    %2671 = vmatpush.bf16.xpose.msra.mxu0 0
    %2672 = vmatpush.bf16.xpose.msra.mxu0 0
    %2673 = vmatpush.bf16.xpose.msra.mxu0 %v2664
    %2674 = vmatmul.bf16.gmra.mxu0 %v2658
    %v2675 = vpop.f32.mrf.mxu0
    %v2676 = vadd.f32 0.0, %v2675
    %v2677 = vpop.f32.mrf.mxu0
    %v2678 = vadd.f32 0.0, %v2677
    %2679 = vdwg.mxu0
    %v2680 = vsel %vm784, %v2650, -inf
    %2681 = vmax.xlane.f32.xlu0 %v2680
    %v2682 = vpop.xlane.xlu0 %2681
    %v2683 = vsel %vm784, %v2652, -inf
    %2684 = vmax.xlane.f32.xlu0 %v2683
    %v2685 = vpop.xlane.xlu0 %2684
    %v2686 = vsel %vm784, %v2676, -inf
    %2687 = vmax.xlane.f32.xlu0 %v2686
    %v2688 = vpop.xlane.xlu0 %2687
    %v2689 = vsel %vm784, %v2678, -inf
    %2690 = vmax.xlane.f32.xlu0 %v2689
    %v2691 = vpop.xlane.xlu0 %2690
    %v2692 = vsub.f32 %v2650, %v2682
    %v2693 = vsub.f32 %v2652, %v2685
    %v2694 = vsub.f32 %v2676, %v2688
    %v2695 = vsub.f32 %v2678, %v2691
    %v2696 = vmul.f32 %v2692, 1.442695
    %v2697 = vpow.pop %v2696
    %v2698 = vmul.f32 %v2693, 1.442695
    %v2699 = vpow.pop %v2698
    %v2700 = vmul.f32 %v2694, 1.442695
    %v2701 = vpow.pop %v2700
    %v2702 = vmul.f32 %v2695, 1.442695
    %v2703 = vpow.pop %v2702
    %v2704 = vsel %vm784, %v2697, 0.0
    %2705 = vadd.xlane.f32.xlu0 %v2704
    %v2706 = vpop.xlane.xlu0 %2705
    %v2707 = vsel %vm784, %v2699, 0.0
    %2708 = vadd.xlane.f32.xlu0 %v2707
    %v2709 = vpop.xlane.xlu0 %2708
    %v2710 = vsel %vm784, %v2701, 0.0
    %2711 = vadd.xlane.f32.xlu0 %v2710
    %v2712 = vpop.xlane.xlu0 %2711
    %v2713 = vsel %vm784, %v2703, 0.0
    %2714 = vadd.xlane.f32.xlu0 %v2713
    %v2715 = vpop.xlane.xlu0 %2714
    %v2716 = vrcp.pop %v2706
    %v2717 = vrcp.pop %v2709
    %v2718 = vrcp.pop %v2712
    %v2719 = vrcp.pop %v2715
    %v2720 = vmul.f32 %v2697, %v2716
    %v2721 = vmul.f32 %v2699, %v2717
    %v2722 = vmul.f32 %v2701, %v2718
    %v2723 = vmul.f32 %v2703, %v2719
    %v2724 = vpack.c.bf16 %v2720, %v2720
    %v2725 = vpack.c.bf16 %v2721, %v2721
    %v2726 = vpack.c.bf16 %v2722, %v2722
    %v2727 = vpack.c.bf16 %v2723, %v2723
    %v2730 = vunpack.c.l.b16 %v2724
    %v2731 = vunpack.c.l.b16 %v2725
    %v2732 = vpack.c.b16 %v2731, %v2730
    %v2735 = vunpack.c.l.b16 %v2624
    %v2736 = vunpack.c.l.b16 %v2625
    %v2737 = vpack.c.b16 %v2736, %v2735
    %v2740 = vsel %vm784, %v2732, 0
    %2742 = vmatpush.bf16.msra.mxu0 0
    %2743 = vmatpush.bf16.msra.mxu0 0
    %2744 = vmatpush.bf16.msra.mxu0 0
    %2745 = vmatpush.bf16.msra.mxu0 0
    %2746 = vmatpush.bf16.msra.mxu0 0
    %2747 = vmatpush.bf16.msra.mxu0 0
    %2748 = vmatpush.bf16.msra.mxu0 0
    %2749 = vmatpush.bf16.msra.mxu0 %v2737
    %2750 = vmatmul.bf16.gmra.mxu0 %v2740
    %v2751 = vpop.f32.mrf.mxu0
    %v2752 = vadd.f32 0.0, %v2751
    %v2753 = vpop.f32.mrf.mxu0
    %v2754 = vadd.f32 0.0, %v2753
    %2755 = vdwg.mxu0
    %v2758 = vunpack.c.l.b16 %v2726
    %v2759 = vunpack.c.l.b16 %v2727
    %v2760 = vpack.c.b16 %v2759, %v2758
    %v2763 = vunpack.c.l.b16 %v2626
    %v2764 = vunpack.c.l.b16 %v2627
    %v2765 = vpack.c.b16 %v2764, %v2763
    %v2768 = vsel %vm784, %v2760, 0
    %2770 = vmatpush.bf16.msra.mxu0 0
    %2771 = vmatpush.bf16.msra.mxu0 0
    %2772 = vmatpush.bf16.msra.mxu0 0
    %2773 = vmatpush.bf16.msra.mxu0 0
    %2774 = vmatpush.bf16.msra.mxu0 0
    %2775 = vmatpush.bf16.msra.mxu0 0
    %2776 = vmatpush.bf16.msra.mxu0 0
    %2777 = vmatpush.bf16.msra.mxu0 %v2765
    %2778 = vmatmul.bf16.gmra.mxu0 %v2768
    %v2779 = vpop.f32.mrf.mxu0
    %v2780 = vadd.f32 0.0, %v2779
    %v2781 = vpop.f32.mrf.mxu0
    %v2782 = vadd.f32 0.0, %v2781
    %2783 = vdwg.mxu0
    %v2784 = vmul.f32 %v2752, %v2141
    %v2785 = vmul.f32 %v2754, %v2146
    %v2786 = vmul.f32 %v2780, %v2151
    %v2787 = vmul.f32 %v2782, %v2156
    %v2788 = vpack.c.bf16 %v2784, %v2784
    %v2789 = vpack.c.bf16 %v2785, %v2785
    %v2790 = vpack.c.bf16 %v2786, %v2786
    %v2791 = vpack.c.bf16 %v2787, %v2787
    %v2793 = vperm.slane %v2395, 0
    %v2799 = vunpack.c.l.b16 %v2788
    %v2800 = vunpack.c.l.b16 %v2789
    %v2801 = vunpack.c.l.b16 %v2790
    %v2802 = vunpack.c.l.b16 %v2791
    %v2803 = vpack.c.b16 %v2800, %v2799
    %v2804 = vpack.c.b16 %v2802, %v2801
    %v2823 = vunpack.c.l.b16 %v2378
    %v2824 = vunpack.c.l.b16 %v2379
    %v2825 = vunpack.c.l.b16 %v2380
    %v2826 = vunpack.c.l.b16 %v2381
    %v2827 = vunpack.c.l.b16 %v2382
    %v2828 = vunpack.c.l.b16 %v2383
    %v2829 = vunpack.c.l.b16 %v2384
    %v2830 = vunpack.c.l.b16 %v2385
    %v2831 = vunpack.c.l.b16 %v2386
    %v2832 = vunpack.c.l.b16 %v2387
    %v2833 = vunpack.c.l.b16 %v2388
    %v2834 = vunpack.c.l.b16 %v2389
    %v2835 = vunpack.c.l.b16 %v2390
    %v2836 = vunpack.c.l.b16 %v2391
    %v2837 = vunpack.c.l.b16 %v2392
    %v2838 = vunpack.c.l.b16 %v2393
    %v2839 = vpack.c.b16 %v2824, %v2823
    %v2840 = vpack.c.b16 %v2826, %v2825
    %v2841 = vpack.c.b16 %v2828, %v2827
    %v2842 = vpack.c.b16 %v2830, %v2829
    %v2843 = vpack.c.b16 %v2832, %v2831
    %v2844 = vpack.c.b16 %v2834, %v2833
    %v2845 = vpack.c.b16 %v2836, %v2835
    %v2846 = vpack.c.b16 %v2838, %v2837
    %2855 = vmatpush.bf16.msra.mxu0 %v2846
    %2856 = vmatpush.bf16.msra.mxu0 %v2845
    %2857 = vmatpush.bf16.msra.mxu0 %v2844
    %2858 = vmatpush.bf16.msra.mxu0 %v2843
    %2859 = vmatpush.bf16.msra.mxu0 %v2842
    %2860 = vmatpush.bf16.msra.mxu0 %v2841
    %2861 = vmatpush.bf16.msra.mxu0 %v2840
    %2862 = vmatpush.bf16.msra.mxu0 %v2839
    %2863 = vmatmul.bf16.gmra.mxu0 %v2803
    %v2864 = vpop.f32.mrf.mxu0
    %v2865 = vadd.f32 %v2793, %v2864
    %v2866 = vpop.f32.mrf.mxu0
    %v2867 = vadd.f32 %v2793, %v2866
    %2868 = vmatmul.bf16.gmra.mxu0 %v2804
    %v2869 = vpop.f32.mrf.mxu0
    %v2870 = vadd.f32 %v2793, %v2869
    %v2871 = vpop.f32.mrf.mxu0
    %v2872 = vadd.f32 %v2793, %v2871
    %2873 = vdwg.mxu0
    %v2874 = vmax.f32 %v2865, 0.0
    %v2875 = vmax.f32 %v2867, 0.0
    %v2876 = vmax.f32 %v2870, 0.0
    %v2877 = vmax.f32 %v2872, 0.0
    %v2878 = vpack.c.bf16 %v2875, %v2874
    %v2879 = vpack.c.bf16 %v2877, %v2876
    %v2881 = vperm.slane %v2414, 0
    %v2899 = vunpack.c.l.b16 %v2397
    %v2900 = vunpack.c.l.b16 %v2398
    %v2901 = vunpack.c.l.b16 %v2399
    %v2902 = vunpack.c.l.b16 %v2400
    %v2903 = vunpack.c.l.b16 %v2401
    %v2904 = vunpack.c.l.b16 %v2402
    %v2905 = vunpack.c.l.b16 %v2403
    %v2906 = vunpack.c.l.b16 %v2404
    %v2907 = vunpack.c.l.b16 %v2405
    %v2908 = vunpack.c.l.b16 %v2406
    %v2909 = vunpack.c.l.b16 %v2407
    %v2910 = vunpack.c.l.b16 %v2408
    %v2911 = vunpack.c.l.b16 %v2409
    %v2912 = vunpack.c.l.b16 %v2410
    %v2913 = vunpack.c.l.b16 %v2411
    %v2914 = vunpack.c.l.b16 %v2412
    %v2915 = vpack.c.b16 %v2900, %v2899
    %v2916 = vpack.c.b16 %v2902, %v2901
    %v2917 = vpack.c.b16 %v2904, %v2903
    %v2918 = vpack.c.b16 %v2906, %v2905
    %v2919 = vpack.c.b16 %v2908, %v2907
    %v2920 = vpack.c.b16 %v2910, %v2909
    %v2921 = vpack.c.b16 %v2912, %v2911
    %v2922 = vpack.c.b16 %v2914, %v2913
    %2931 = vmatpush.bf16.msra.mxu0 %v2922
    %2932 = vmatpush.bf16.msra.mxu0 %v2921
    %2933 = vmatpush.bf16.msra.mxu0 %v2920
    %2934 = vmatpush.bf16.msra.mxu0 %v2919
    %2935 = vmatpush.bf16.msra.mxu0 %v2918
    %2936 = vmatpush.bf16.msra.mxu0 %v2917
    %2937 = vmatpush.bf16.msra.mxu0 %v2916
    %2938 = vmatpush.bf16.msra.mxu0 %v2915
    %2939 = vmatmul.bf16.gmra.mxu0 %v2878
    %v2940 = vpop.f32.mrf.mxu0
    %v2941 = vadd.f32 %v2881, %v2940
    %v2942 = vpop.f32.mrf.mxu0
    %v2943 = vadd.f32 %v2881, %v2942
    %2944 = vmatmul.bf16.gmra.mxu0 %v2879
    %v2945 = vpop.f32.mrf.mxu0
    %v2946 = vadd.f32 %v2881, %v2945
    %v2947 = vpop.f32.mrf.mxu0
    %v2948 = vadd.f32 %v2881, %v2947
    %2949 = vdwg.mxu0
    %v2950 = vpack.c.bf16 %v2943, %v2941
    %v2951 = vpack.c.bf16 %v2948, %v2946
    %v2952 = vld [vmem:[#allocation22] sm:$0xf]
    %v2953 = vld [vmem:[#allocation22 + $0x4] sm:$0xf]
    %v2954 = vld [vmem:[#allocation22 + $0x8] sm:$0xf]
    %v2955 = vld [vmem:[#allocation22 + $0xc] sm:$0xf]
    %v2956 = vld [vmem:[#allocation22 + $0x10] sm:$0xf]
    %v2957 = vld [vmem:[#allocation22 + $0x14] sm:$0xf]
    %v2958 = vld [vmem:[#allocation22 + $0x18] sm:$0xf]
    %v2959 = vld [vmem:[#allocation22 + $0x1c] sm:$0xf]
    %v2960 = vld [vmem:[#allocation22 + $0x20] sm:$0xf]
    %v2961 = vld [vmem:[#allocation22 + $0x24] sm:$0xf]
    %v2962 = vld [vmem:[#allocation22 + $0x28] sm:$0xf]
    %v2963 = vld [vmem:[#allocation22 + $0x2c] sm:$0xf]
    %v2964 = vld [vmem:[#allocation22 + $0x30] sm:$0xf]
    %v2965 = vld [vmem:[#allocation22 + $0x34] sm:$0xf]
    %v2966 = vld [vmem:[#allocation22 + $0x38] sm:$0xf]
    %v2967 = vld [vmem:[#allocation22 + $0x3c] sm:$0xf]
    %v2968 = vld [vmem:[#allocation23] sm:$0xf]
    %v2969 = vld [vmem:[#allocation23 + $0x4] sm:$0xf]
    %v2970 = vld [vmem:[#allocation23 + $0x8] sm:$0xf]
    %v2971 = vld [vmem:[#allocation23 + $0xc] sm:$0xf]
    %v2972 = vld [vmem:[#allocation23 + $0x10] sm:$0xf]
    %v2973 = vld [vmem:[#allocation23 + $0x14] sm:$0xf]
    %v2974 = vld [vmem:[#allocation23 + $0x18] sm:$0xf]
    %v2975 = vld [vmem:[#allocation23 + $0x1c] sm:$0xf]
    %v2976 = vld [vmem:[#allocation23 + $0x20] sm:$0xf]
    %v2977 = vld [vmem:[#allocation23 + $0x24] sm:$0xf]
    %v2978 = vld [vmem:[#allocation23 + $0x28] sm:$0xf]
    %v2979 = vld [vmem:[#allocation23 + $0x2c] sm:$0xf]
    %v2980 = vld [vmem:[#allocation23 + $0x30] sm:$0xf]
    %v2981 = vld [vmem:[#allocation23 + $0x34] sm:$0xf]
    %v2982 = vld [vmem:[#allocation23 + $0x38] sm:$0xf]
    %v2983 = vld [vmem:[#allocation23 + $0x3c] sm:$0xf]
    %v3000 = vunpack.c.l.b16 %v2968
    %v3001 = vunpack.c.l.b16 %v2969
    %v3002 = vunpack.c.l.b16 %v2970
    %v3003 = vunpack.c.l.b16 %v2971
    %v3004 = vunpack.c.l.b16 %v2972
    %v3005 = vunpack.c.l.b16 %v2973
    %v3006 = vunpack.c.l.b16 %v2974
    %v3007 = vunpack.c.l.b16 %v2975
    %v3008 = vunpack.c.l.b16 %v2976
    %v3009 = vunpack.c.l.b16 %v2977
    %v3010 = vunpack.c.l.b16 %v2978
    %v3011 = vunpack.c.l.b16 %v2979
    %v3012 = vunpack.c.l.b16 %v2980
    %v3013 = vunpack.c.l.b16 %v2981
    %v3014 = vunpack.c.l.b16 %v2982
    %v3015 = vunpack.c.l.b16 %v2983
    %v3016 = vpack.c.b16 %v3001, %v3000
    %v3017 = vpack.c.b16 %v3003, %v3002
    %v3018 = vpack.c.b16 %v3005, %v3004
    %v3019 = vpack.c.b16 %v3007, %v3006
    %v3020 = vpack.c.b16 %v3009, %v3008
    %v3021 = vpack.c.b16 %v3011, %v3010
    %v3022 = vpack.c.b16 %v3013, %v3012
    %v3023 = vpack.c.b16 %v3015, %v3014
    %3032 = vmatpush.bf16.msra.mxu0 %v3023
    %3033 = vmatpush.bf16.msra.mxu0 %v3022
    %3034 = vmatpush.bf16.msra.mxu0 %v3021
    %3035 = vmatpush.bf16.msra.mxu0 %v3020
    %3036 = vmatpush.bf16.msra.mxu0 %v3019
    %3037 = vmatpush.bf16.msra.mxu0 %v3018
    %3038 = vmatpush.bf16.msra.mxu0 %v3017
    %3039 = vmatpush.bf16.msra.mxu0 %v3016
    %3040 = vmatmul.bf16.gmra.mxu0 %v2950
    %v3041 = vpop.f32.mrf.mxu0
    %v3042 = vadd.f32 0.0, %v3041
    %v3043 = vpop.f32.mrf.mxu0
    %v3044 = vadd.f32 0.0, %v3043
    %3045 = vmatmul.bf16.gmra.mxu0 %v2951
    %v3046 = vpop.f32.mrf.mxu0
    %v3047 = vadd.f32 0.0, %v3046
    %v3048 = vpop.f32.mrf.mxu0
    %v3049 = vadd.f32 0.0, %v3048
    %3050 = vdwg.mxu0
    %v3067 = vunpack.c.l.b16 %v2952
    %v3068 = vunpack.c.l.b16 %v2953
    %v3069 = vunpack.c.l.b16 %v2954
    %v3070 = vunpack.c.l.b16 %v2955
    %v3071 = vunpack.c.l.b16 %v2956
    %v3072 = vunpack.c.l.b16 %v2957
    %v3073 = vunpack.c.l.b16 %v2958
    %v3074 = vunpack.c.l.b16 %v2959
    %v3075 = vunpack.c.l.b16 %v2960
    %v3076 = vunpack.c.l.b16 %v2961
    %v3077 = vunpack.c.l.b16 %v2962
    %v3078 = vunpack.c.l.b16 %v2963
    %v3079 = vunpack.c.l.b16 %v2964
    %v3080 = vunpack.c.l.b16 %v2965
    %v3081 = vunpack.c.l.b16 %v2966
    %v3082 = vunpack.c.l.b16 %v2967
    %v3083 = vpack.c.b16 %v3068, %v3067
    %v3084 = vpack.c.b16 %v3070, %v3069
    %v3085 = vpack.c.b16 %v3072, %v3071
    %v3086 = vpack.c.b16 %v3074, %v3073
    %v3087 = vpack.c.b16 %v3076, %v3075
    %v3088 = vpack.c.b16 %v3078, %v3077
    %v3089 = vpack.c.b16 %v3080, %v3079
    %v3090 = vpack.c.b16 %v3082, %v3081
    %3099 = vmatpush.bf16.msra.mxu0 %v3090
    %3100 = vmatpush.bf16.msra.mxu0 %v3089
    %3101 = vmatpush.bf16.msra.mxu0 %v3088
    %3102 = vmatpush.bf16.msra.mxu0 %v3087
    %3103 = vmatpush.bf16.msra.mxu0 %v3086
    %3104 = vmatpush.bf16.msra.mxu0 %v3085
    %3105 = vmatpush.bf16.msra.mxu0 %v3084
    %3106 = vmatpush.bf16.msra.mxu0 %v3083
    %3107 = vmatmul.bf16.gmra.mxu0 %v1673
    %v3108 = vpop.f32.mrf.mxu0
    %v3109 = vadd.f32 %v3042, %v3108
    %v3110 = vpop.f32.mrf.mxu0
    %v3111 = vadd.f32 %v3044, %v3110
    %3112 = vmatmul.bf16.gmra.mxu0 %v1674
    %v3113 = vpop.f32.mrf.mxu0
    %v3114 = vadd.f32 %v3047, %v3113
    %v3115 = vpop.f32.mrf.mxu0
    %v3116 = vadd.f32 %v3049, %v3115
    %3117 = vdwg.mxu0
    %v3118 = vld [vmem:[%s20] sm:$0x1]
    %v3120 = vperm.slane %v3118, 0
    %v3122 = vadd.f32 %v3109, %v3120
    %v3123 = vadd.f32 %v3111, %v3120
    %v3124 = vadd.f32 %v3114, %v3120
    %v3125 = vadd.f32 %v3116, %v3120
    %v3126 = vpack.c.bf16 %v3122, %v3122
    %v3127 = vpack.c.bf16 %v3123, %v3123
    %v3128 = vpack.c.bf16 %v3124, %v3124
    %v3129 = vpack.c.bf16 %v3125, %v3125
    %v3130 = vld [vmem:[#allocation26] sm:$0xf]
    %v3131 = vld [vmem:[#allocation26 + $0x4] sm:$0xf]
    %v3132 = vld [vmem:[#allocation26 + $0x8] sm:$0xf]
    %v3133 = vld [vmem:[#allocation26 + $0xc] sm:$0xf]
    %v3134 = vld [vmem:[#allocation26 + $0x10] sm:$0xf]
    %v3135 = vld [vmem:[#allocation26 + $0x14] sm:$0xf]
    %v3136 = vld [vmem:[#allocation26 + $0x18] sm:$0xf]
    %v3137 = vld [vmem:[#allocation26 + $0x1c] sm:$0xf]
    %v3138 = vld [vmem:[#allocation26 + $0x20] sm:$0xf]
    %v3139 = vld [vmem:[#allocation26 + $0x24] sm:$0xf]
    %v3140 = vld [vmem:[#allocation26 + $0x28] sm:$0xf]
    %v3141 = vld [vmem:[#allocation26 + $0x2c] sm:$0xf]
    %v3142 = vld [vmem:[#allocation26 + $0x30] sm:$0xf]
    %v3143 = vld [vmem:[#allocation26 + $0x34] sm:$0xf]
    %v3144 = vld [vmem:[#allocation26 + $0x38] sm:$0xf]
    %v3145 = vld [vmem:[#allocation26 + $0x3c] sm:$0xf]
    %v3150 = vunpack.c.l.b16 %v3126
    %v3151 = vunpack.c.l.b16 %v3127
    %v3152 = vunpack.c.l.b16 %v3128
    %v3153 = vunpack.c.l.b16 %v3129
    %v3154 = vpack.c.b16 %v3151, %v3150
    %v3155 = vpack.c.b16 %v3153, %v3152
    %v3174 = vunpack.c.l.b16 %v3130
    %v3175 = vunpack.c.l.b16 %v3131
    %v3176 = vunpack.c.l.b16 %v3132
    %v3177 = vunpack.c.l.b16 %v3133
    %v3178 = vunpack.c.l.b16 %v3134
    %v3179 = vunpack.c.l.b16 %v3135
    %v3180 = vunpack.c.l.b16 %v3136
    %v3181 = vunpack.c.l.b16 %v3137
    %v3182 = vunpack.c.l.b16 %v3138
    %v3183 = vunpack.c.l.b16 %v3139
    %v3184 = vunpack.c.l.b16 %v3140
    %v3185 = vunpack.c.l.b16 %v3141
    %v3186 = vunpack.c.l.b16 %v3142
    %v3187 = vunpack.c.l.b16 %v3143
    %v3188 = vunpack.c.l.b16 %v3144
    %v3189 = vunpack.c.l.b16 %v3145
    %v3190 = vpack.c.b16 %v3175, %v3174
    %v3191 = vpack.c.b16 %v3177, %v3176
    %v3192 = vpack.c.b16 %v3179, %v3178
    %v3193 = vpack.c.b16 %v3181, %v3180
    %v3194 = vpack.c.b16 %v3183, %v3182
    %v3195 = vpack.c.b16 %v3185, %v3184
    %v3196 = vpack.c.b16 %v3187, %v3186
    %v3197 = vpack.c.b16 %v3189, %v3188
    %3206 = vmatpush.bf16.msra.mxu0 %v3197
    %3207 = vmatpush.bf16.msra.mxu0 %v3196
    %3208 = vmatpush.bf16.msra.mxu0 %v3195
    %3209 = vmatpush.bf16.msra.mxu0 %v3194
    %3210 = vmatpush.bf16.msra.mxu0 %v3193
    %3211 = vmatpush.bf16.msra.mxu0 %v3192
    %3212 = vmatpush.bf16.msra.mxu0 %v3191
    %3213 = vmatpush.bf16.msra.mxu0 %v3190
    %3214 = vmatmul.bf16.gmra.mxu0 %v3154
    %v3215 = vpop.f32.mrf.mxu0
    %v3216 = vadd.f32 0.0, %v3215
    %v3217 = vpop.f32.mrf.mxu0
    %v3218 = vadd.f32 0.0, %v3217
    %3219 = vmatmul.bf16.gmra.mxu0 %v3155
    %v3220 = vpop.f32.mrf.mxu0
    %v3221 = vadd.f32 0.0, %v3220
    %v3222 = vpop.f32.mrf.mxu0
    %v3223 = vadd.f32 0.0, %v3222
    %3224 = vdwg.mxu0
    %v3225 = vpack.c.bf16 %v3216, %v3216
    %v3226 = vpack.c.bf16 %v3218, %v3218
    %v3227 = vpack.c.bf16 %v3221, %v3221
    %v3228 = vpack.c.bf16 %v3223, %v3223
    %v3229 = vld [vmem:[#allocation28] sm:$0xf]
    %v3230 = vld [vmem:[#allocation28 + $0x4] sm:$0xf]
    %v3231 = vld [vmem:[#allocation28 + $0x8] sm:$0xf]
    %v3232 = vld [vmem:[#allocation28 + $0xc] sm:$0xf]
    %v3233 = vld [vmem:[#allocation28 + $0x10] sm:$0xf]
    %v3234 = vld [vmem:[#allocation28 + $0x14] sm:$0xf]
    %v3235 = vld [vmem:[#allocation28 + $0x18] sm:$0xf]
    %v3236 = vld [vmem:[#allocation28 + $0x1c] sm:$0xf]
    %v3237 = vld [vmem:[#allocation28 + $0x20] sm:$0xf]
    %v3238 = vld [vmem:[#allocation28 + $0x24] sm:$0xf]
    %v3239 = vld [vmem:[#allocation28 + $0x28] sm:$0xf]
    %v3240 = vld [vmem:[#allocation28 + $0x2c] sm:$0xf]
    %v3241 = vld [vmem:[#allocation28 + $0x30] sm:$0xf]
    %v3242 = vld [vmem:[#allocation28 + $0x34] sm:$0xf]
    %v3243 = vld [vmem:[#allocation28 + $0x38] sm:$0xf]
    %v3244 = vld [vmem:[#allocation28 + $0x3c] sm:$0xf]
    %v3261 = vunpack.c.l.b16 %v3229
    %v3262 = vunpack.c.l.b16 %v3230
    %v3263 = vunpack.c.l.b16 %v3231
    %v3264 = vunpack.c.l.b16 %v3232
    %v3265 = vunpack.c.l.b16 %v3233
    %v3266 = vunpack.c.l.b16 %v3234
    %v3267 = vunpack.c.l.b16 %v3235
    %v3268 = vunpack.c.l.b16 %v3236
    %v3269 = vunpack.c.l.b16 %v3237
    %v3270 = vunpack.c.l.b16 %v3238
    %v3271 = vunpack.c.l.b16 %v3239
    %v3272 = vunpack.c.l.b16 %v3240
    %v3273 = vunpack.c.l.b16 %v3241
    %v3274 = vunpack.c.l.b16 %v3242
    %v3275 = vunpack.c.l.b16 %v3243
    %v3276 = vunpack.c.l.b16 %v3244
    %v3277 = vpack.c.b16 %v3262, %v3261
    %v3278 = vpack.c.b16 %v3264, %v3263
    %v3279 = vpack.c.b16 %v3266, %v3265
    %v3280 = vpack.c.b16 %v3268, %v3267
    %v3281 = vpack.c.b16 %v3270, %v3269
    %v3282 = vpack.c.b16 %v3272, %v3271
    %v3283 = vpack.c.b16 %v3274, %v3273
    %v3284 = vpack.c.b16 %v3276, %v3275
    %3293 = vmatpush.bf16.msra.mxu0 %v3284
    %3294 = vmatpush.bf16.msra.mxu0 %v3283
    %3295 = vmatpush.bf16.msra.mxu0 %v3282
    %3296 = vmatpush.bf16.msra.mxu0 %v3281
    %3297 = vmatpush.bf16.msra.mxu0 %v3280
    %3298 = vmatpush.bf16.msra.mxu0 %v3279
    %3299 = vmatpush.bf16.msra.mxu0 %v3278
    %3300 = vmatpush.bf16.msra.mxu0 %v3277
    %3301 = vmatmul.bf16.gmra.mxu0 %v3154
    %v3302 = vpop.f32.mrf.mxu0
    %v3303 = vadd.f32 0.0, %v3302
    %v3304 = vpop.f32.mrf.mxu0
    %v3305 = vadd.f32 0.0, %v3304
    %3306 = vmatmul.bf16.gmra.mxu0 %v3155
    %v3307 = vpop.f32.mrf.mxu0
    %v3308 = vadd.f32 0.0, %v3307
    %v3309 = vpop.f32.mrf.mxu0
    %v3310 = vadd.f32 0.0, %v3309
    %3311 = vdwg.mxu0
    %v3312 = vpack.c.bf16 %v3303, %v3303
    %v3313 = vpack.c.bf16 %v3305, %v3305
    %v3314 = vpack.c.bf16 %v3308, %v3308
    %v3315 = vpack.c.bf16 %v3310, %v3310
    %v3316 = vld [vmem:[#allocation25] sm:$0xf]
    %v3317 = vld [vmem:[#allocation25 + $0x4] sm:$0xf]
    %v3318 = vld [vmem:[#allocation25 + $0x8] sm:$0xf]
    %v3319 = vld [vmem:[#allocation25 + $0xc] sm:$0xf]
    %v3320 = vld [vmem:[#allocation25 + $0x10] sm:$0xf]
    %v3321 = vld [vmem:[#allocation25 + $0x14] sm:$0xf]
    %v3322 = vld [vmem:[#allocation25 + $0x18] sm:$0xf]
    %v3323 = vld [vmem:[#allocation25 + $0x1c] sm:$0xf]
    %v3324 = vld [vmem:[#allocation25 + $0x20] sm:$0xf]
    %v3325 = vld [vmem:[#allocation25 + $0x24] sm:$0xf]
    %v3326 = vld [vmem:[#allocation25 + $0x28] sm:$0xf]
    %v3327 = vld [vmem:[#allocation25 + $0x2c] sm:$0xf]
    %v3328 = vld [vmem:[#allocation25 + $0x30] sm:$0xf]
    %v3329 = vld [vmem:[#allocation25 + $0x34] sm:$0xf]
    %v3330 = vld [vmem:[#allocation25 + $0x38] sm:$0xf]
    %v3331 = vld [vmem:[#allocation25 + $0x3c] sm:$0xf]
    %v3332 = vpack.c.b16 %v3150, %v3150
    %v3333 = vpack.c.b16 %v3152, %v3152
    %v3334 = vunpack.c.l.b16 %v3332
    %v3335 = vunpack.c.l.b16 %v3333
    %v3336 = vrot.slane %v3335, 7
    %vm3337 = vcmask 1041409
    %v3338 = vsel %vm3337, %v3336, %v3334
    %v3339 = vpack.c.b16 %v3338, %v3338
    %v3357 = vunpack.c.l.b16 %v3316
    %v3358 = vunpack.c.l.b16 %v3317
    %v3359 = vunpack.c.l.b16 %v3318
    %v3360 = vunpack.c.l.b16 %v3319
    %v3361 = vunpack.c.l.b16 %v3320
    %v3362 = vunpack.c.l.b16 %v3321
    %v3363 = vunpack.c.l.b16 %v3322
    %v3364 = vunpack.c.l.b16 %v3323
    %v3365 = vunpack.c.l.b16 %v3324
    %v3366 = vunpack.c.l.b16 %v3325
    %v3367 = vunpack.c.l.b16 %v3326
    %v3368 = vunpack.c.l.b16 %v3327
    %v3369 = vunpack.c.l.b16 %v3328
    %v3370 = vunpack.c.l.b16 %v3329
    %v3371 = vunpack.c.l.b16 %v3330
    %v3372 = vunpack.c.l.b16 %v3331
    %v3373 = vpack.c.b16 %v3358, %v3357
    %v3374 = vpack.c.b16 %v3360, %v3359
    %v3375 = vpack.c.b16 %v3362, %v3361
    %v3376 = vpack.c.b16 %v3364, %v3363
    %v3377 = vpack.c.b16 %v3366, %v3365
    %v3378 = vpack.c.b16 %v3368, %v3367
    %v3379 = vpack.c.b16 %v3370, %v3369
    %v3380 = vpack.c.b16 %v3372, %v3371
    %3389 = vmatpush.bf16.msra.mxu0 %v3380
    %3390 = vmatpush.bf16.msra.mxu0 %v3379
    %3391 = vmatpush.bf16.msra.mxu0 %v3378
    %3392 = vmatpush.bf16.msra.mxu0 %v3377
    %3393 = vmatpush.bf16.msra.mxu0 %v3376
    %3394 = vmatpush.bf16.msra.mxu0 %v3375
    %3395 = vmatpush.bf16.msra.mxu0 %v3374
    %3396 = vmatpush.bf16.msra.mxu0 %v3373
    %3397 = vmatmul.bf16.gmra.mxu0 %v3339
    %v3398 = vpop.f32.mrf.mxu0
    %v3399 = vadd.f32 0.0, %v3398
    %v3400 = vpop.f32.mrf.mxu0
    %3401 = vdwg.mxu0
    %v3402 = vpack.c.bf16 %v3399, %v3399
    %v3404 = vrot.slane %v3402, 3
    %vm3405 = vcmask 1040384
    %v3408 = vsel %vm3405, %v3402, %v3404
    %v3410 = vunpack.i.l.s16 %v3408
    %v3411 = vunpack.i.h.s16 %v3408
    %v3412 = vpack.i.b16 %v3410, %v3410
    %v3413 = vperm.slane %v3412, 0
    %v3417 = vunpack.c.l.b16 %v3225
    %v3418 = vunpack.c.l.b16 %v3226
    %v3419 = vpack.c.b16 %v3418, %v3417
    %3421 = vmatpush.bf16.xpose.msra.mxu0 0
    %3422 = vmatpush.bf16.xpose.msra.mxu0 0
    %3423 = vmatpush.bf16.xpose.msra.mxu0 0
    %3424 = vmatpush.bf16.xpose.msra.mxu0 0
    %3425 = vmatpush.bf16.xpose.msra.mxu0 0
    %3426 = vmatpush.bf16.xpose.msra.mxu0 0
    %3427 = vmatpush.bf16.xpose.msra.mxu0 0
    %3428 = vmatpush.bf16.xpose.msra.mxu0 %v3419
    %3429 = vmatmul.bf16.gmra.mxu0 %v3413
    %v3430 = vpop.f32.mrf.mxu0
    %v3431 = vadd.f32 0.0, %v3430
    %v3432 = vpop.f32.mrf.mxu0
    %3433 = vdwg.mxu0
    %v3434 = vpack.i.b16 %v3411, %v3411
    %v3435 = vperm.slane %v3434, 0
    %v3439 = vunpack.c.l.b16 %v3227
    %v3440 = vunpack.c.l.b16 %v3228
    %v3441 = vpack.c.b16 %v3440, %v3439
    %3443 = vmatpush.bf16.xpose.msra.mxu0 0
    %3444 = vmatpush.bf16.xpose.msra.mxu0 0
    %3445 = vmatpush.bf16.xpose.msra.mxu0 0
    %3446 = vmatpush.bf16.xpose.msra.mxu0 0
    %3447 = vmatpush.bf16.xpose.msra.mxu0 0
    %3448 = vmatpush.bf16.xpose.msra.mxu0 0
    %3449 = vmatpush.bf16.xpose.msra.mxu0 0
    %3450 = vmatpush.bf16.xpose.msra.mxu0 %v3441
    %3451 = vmatmul.bf16.gmra.mxu0 %v3435
    %v3452 = vpop.f32.mrf.mxu0
    %v3453 = vadd.f32 0.0, %v3452
    %v3454 = vpop.f32.mrf.mxu0
    %3455 = vdwg.mxu0
    %vm3456 = vcmask 122880
    %v3457 = vsel %vm3456, %v3431, -inf
    %3458 = vmax.xlane.f32.xlu0 %v3457
    %v3459 = vpop.xlane.xlu0 %3458
    %v3460 = vsel %vm3456, %v3453, -inf
    %3461 = vmax.xlane.f32.xlu0 %v3460
    %v3462 = vpop.xlane.xlu0 %3461
    %v3463 = vsub.f32 %v3431, %v3459
    %v3464 = vsub.f32 %v3453, %v3462
    %v3465 = vmul.f32 %v3463, 1.442695
    %v3466 = vpow.pop %v3465
    %v3467 = vmul.f32 %v3464, 1.442695
    %v3468 = vpow.pop %v3467
    %v3469 = vsel %vm3456, %v3466, 0.0
    %3470 = vadd.xlane.f32.xlu0 %v3469
    %v3471 = vpop.xlane.xlu0 %3470
    %v3472 = vsel %vm3456, %v3468, 0.0
    %3473 = vadd.xlane.f32.xlu0 %v3472
    %v3474 = vpop.xlane.xlu0 %3473
    %v3475 = vrcp.pop %v3471
    %v3476 = vrcp.pop %v3474
    %v3477 = vmul.f32 %v3466, %v3475
    %v3478 = vmul.f32 %v3468, %v3476
    %v3479 = vpack.c.bf16 %v3477, %v3477
    %v3480 = vpack.c.bf16 %v3478, %v3478
    %v3483 = vunpack.c.l.b16 %v3312
    %v3484 = vunpack.c.l.b16 %v3313
    %v3485 = vpack.c.b16 %v3484, %v3483
    %v3488 = vsel %vm784, %v3479, 0
    %3490 = vmatpush.bf16.msra.mxu0 0
    %3491 = vmatpush.bf16.msra.mxu0 0
    %3492 = vmatpush.bf16.msra.mxu0 0
    %3493 = vmatpush.bf16.msra.mxu0 0
    %3494 = vmatpush.bf16.msra.mxu0 0
    %3495 = vmatpush.bf16.msra.mxu0 0
    %3496 = vmatpush.bf16.msra.mxu0 0
    %3497 = vmatpush.bf16.msra.mxu0 %v3485
    %3498 = vmatmul.bf16.gmra.mxu0 %v3488
    %v3499 = vpop.f32.mrf.mxu0
    %v3500 = vadd.f32 0.0, %v3499
    %v3501 = vpop.f32.mrf.mxu0
    %3502 = vdwg.mxu0
    %v3505 = vunpack.c.l.b16 %v3314
    %v3506 = vunpack.c.l.b16 %v3315
    %v3507 = vpack.c.b16 %v3506, %v3505
    %v3510 = vsel %vm784, %v3480, 0
    %3512 = vmatpush.bf16.msra.mxu0 0
    %3513 = vmatpush.bf16.msra.mxu0 0
    %3514 = vmatpush.bf16.msra.mxu0 0
    %3515 = vmatpush.bf16.msra.mxu0 0
    %3516 = vmatpush.bf16.msra.mxu0 0
    %3517 = vmatpush.bf16.msra.mxu0 0
    %3518 = vmatpush.bf16.msra.mxu0 0
    %3519 = vmatpush.bf16.msra.mxu0 %v3507
    %3520 = vmatmul.bf16.gmra.mxu0 %v3510
    %v3521 = vpop.f32.mrf.mxu0
    %v3522 = vadd.f32 0.0, %v3521
    %v3523 = vpop.f32.mrf.mxu0
    %3524 = vdwg.mxu0
    %v3525 = vpack.c.bf16 %v3500, %v3500
    %v3526 = vpack.c.bf16 %v3522, %v3522
    %v3527 = vld [vmem:[#allocation29] sm:$0xf]
    %v3528 = vld [vmem:[#allocation29 + $0x4] sm:$0xf]
    %v3529 = vld [vmem:[#allocation29 + $0x8] sm:$0xf]
    %v3530 = vld [vmem:[#allocation29 + $0xc] sm:$0xf]
    %v3531 = vld [vmem:[#allocation29 + $0x10] sm:$0xf]
    %v3532 = vld [vmem:[#allocation29 + $0x14] sm:$0xf]
    %v3533 = vld [vmem:[#allocation29 + $0x18] sm:$0xf]
    %v3534 = vld [vmem:[#allocation29 + $0x1c] sm:$0xf]
    %v3535 = vld [vmem:[#allocation29 + $0x20] sm:$0xf]
    %v3536 = vld [vmem:[#allocation29 + $0x24] sm:$0xf]
    %v3537 = vld [vmem:[#allocation29 + $0x28] sm:$0xf]
    %v3538 = vld [vmem:[#allocation29 + $0x2c] sm:$0xf]
    %v3539 = vld [vmem:[#allocation29 + $0x30] sm:$0xf]
    %v3540 = vld [vmem:[#allocation29 + $0x34] sm:$0xf]
    %v3541 = vld [vmem:[#allocation29 + $0x38] sm:$0xf]
    %v3542 = vld [vmem:[#allocation29 + $0x3c] sm:$0xf]
    %v3543 = vld [vmem:[%s25] sm:$0x1]
    %v3545 = vperm.slane %v3543, 0
    %v3549 = vunpack.c.l.b16 %v3525
    %v3550 = vunpack.c.l.b16 %v3526
    %v3551 = vrot.slane %v3550, 7
    %v3552 = vsel %vm3337, %v3551, %v3549
    %v3553 = vpack.c.b16 %v3552, %v3552
    %v3571 = vunpack.c.l.b16 %v3527
    %v3572 = vunpack.c.l.b16 %v3528
    %v3573 = vunpack.c.l.b16 %v3529
    %v3574 = vunpack.c.l.b16 %v3530
    %v3575 = vunpack.c.l.b16 %v3531
    %v3576 = vunpack.c.l.b16 %v3532
    %v3577 = vunpack.c.l.b16 %v3533
    %v3578 = vunpack.c.l.b16 %v3534
    %v3579 = vunpack.c.l.b16 %v3535
    %v3580 = vunpack.c.l.b16 %v3536
    %v3581 = vunpack.c.l.b16 %v3537
    %v3582 = vunpack.c.l.b16 %v3538
    %v3583 = vunpack.c.l.b16 %v3539
    %v3584 = vunpack.c.l.b16 %v3540
    %v3585 = vunpack.c.l.b16 %v3541
    %v3586 = vunpack.c.l.b16 %v3542
    %v3587 = vpack.c.b16 %v3572, %v3571
    %v3588 = vpack.c.b16 %v3574, %v3573
    %v3589 = vpack.c.b16 %v3576, %v3575
    %v3590 = vpack.c.b16 %v3578, %v3577
    %v3591 = vpack.c.b16 %v3580, %v3579
    %v3592 = vpack.c.b16 %v3582, %v3581
    %v3593 = vpack.c.b16 %v3584, %v3583
    %v3594 = vpack.c.b16 %v3586, %v3585
    %3603 = vmatpush.bf16.msra.mxu0 %v3594
    %3604 = vmatpush.bf16.msra.mxu0 %v3593
    %3605 = vmatpush.bf16.msra.mxu0 %v3592
    %3606 = vmatpush.bf16.msra.mxu0 %v3591
    %3607 = vmatpush.bf16.msra.mxu0 %v3590
    %3608 = vmatpush.bf16.msra.mxu0 %v3589
    %3609 = vmatpush.bf16.msra.mxu0 %v3588
    %3610 = vmatpush.bf16.msra.mxu0 %v3587
    %3611 = vmatmul.bf16.gmra.mxu0 %v3553
    %v3612 = vpop.f32.mrf.mxu0
    %v3613 = vadd.f32 %v3545, %v3612
    %v3614 = vpop.f32.mrf.mxu0
    %3615 = vdwg.mxu0
    %v3616 = vtanh.pop %v3613
    %v3617 = vpack.c.bf16 %v3616, %v3616
    %v3618 = vld [vmem:[#allocation31] sm:$0xf]
    %v3619 = vld [vmem:[#allocation31 + $0x4] sm:$0xf]
    %v3620 = vld [vmem:[#allocation31 + $0x8] sm:$0xf]
    %v3621 = vld [vmem:[#allocation31 + $0xc] sm:$0xf]
    %v3622 = vld [vmem:[#allocation31 + $0x10] sm:$0xf]
    %v3623 = vld [vmem:[#allocation31 + $0x14] sm:$0xf]
    %v3624 = vld [vmem:[#allocation31 + $0x18] sm:$0xf]
    %v3625 = vld [vmem:[#allocation31 + $0x1c] sm:$0xf]
    %v3626 = vld [vmem:[#allocation31 + $0x20] sm:$0xf]
    %v3627 = vld [vmem:[#allocation31 + $0x24] sm:$0xf]
    %v3628 = vld [vmem:[#allocation31 + $0x28] sm:$0xf]
    %v3629 = vld [vmem:[#allocation31 + $0x2c] sm:$0xf]
    %v3630 = vld [vmem:[#allocation31 + $0x30] sm:$0xf]
    %v3631 = vld [vmem:[#allocation31 + $0x34] sm:$0xf]
    %v3632 = vld [vmem:[#allocation31 + $0x38] sm:$0xf]
    %v3633 = vld [vmem:[#allocation31 + $0x3c] sm:$0xf]
    %v3634 = vld [vmem:[%s27] sm:$0x1]
    %v3636 = vperm.slane %v3634, 0
    %v3654 = vunpack.c.l.b16 %v3618
    %v3655 = vunpack.c.l.b16 %v3619
    %v3656 = vunpack.c.l.b16 %v3620
    %v3657 = vunpack.c.l.b16 %v3621
    %v3658 = vunpack.c.l.b16 %v3622
    %v3659 = vunpack.c.l.b16 %v3623
    %v3660 = vunpack.c.l.b16 %v3624
    %v3661 = vunpack.c.l.b16 %v3625
    %v3662 = vunpack.c.l.b16 %v3626
    %v3663 = vunpack.c.l.b16 %v3627
    %v3664 = vunpack.c.l.b16 %v3628
    %v3665 = vunpack.c.l.b16 %v3629
    %v3666 = vunpack.c.l.b16 %v3630
    %v3667 = vunpack.c.l.b16 %v3631
    %v3668 = vunpack.c.l.b16 %v3632
    %v3669 = vunpack.c.l.b16 %v3633
    %v3670 = vpack.c.b16 %v3655, %v3654
    %v3671 = vpack.c.b16 %v3657, %v3656
    %v3672 = vpack.c.b16 %v3659, %v3658
    %v3673 = vpack.c.b16 %v3661, %v3660
    %v3674 = vpack.c.b16 %v3663, %v3662
    %v3675 = vpack.c.b16 %v3665, %v3664
    %v3676 = vpack.c.b16 %v3667, %v3666
    %v3677 = vpack.c.b16 %v3669, %v3668
    %3686 = vmatpush.bf16.msra.mxu0 %v3677
    %3687 = vmatpush.bf16.msra.mxu0 %v3676
    %3688 = vmatpush.bf16.msra.mxu0 %v3675
    %3689 = vmatpush.bf16.msra.mxu0 %v3674
    %3690 = vmatpush.bf16.msra.mxu0 %v3673
    %3691 = vmatpush.bf16.msra.mxu0 %v3672
    %3692 = vmatpush.bf16.msra.mxu0 %v3671
    %3693 = vmatpush.bf16.msra.mxu0 %v3670
    %3694 = vmatmul.bf16.gmra.mxu0 %v3617
    %v3695 = vpop.f32.mrf.mxu0
    %v3696 = vadd.f32 %v3636, %v3695
    %v3697 = vpop.f32.mrf.mxu0
    %3698 = vdwg.mxu0
    %v3700 = vrot.slane %v3696, 1
    %3702 = vst [vmem:[#allocation32] sm:$0x1] %v3696
    %3703 = vst [vmem:[#allocation32 + $0x1] sm:$0x1] %v3700
    // Predicated region
    $region190: #{tpu_custom_call.1} parent=1 // pred_check
      _
    $region191: #{tpu_custom_call.1} parent=1 // pred_check_branch
      %3705 = sbr.rel (0) target = $region193
    $region192: #{tpu_custom_call.1} parent=1 // pred_region
      %3707 = vsyncadd [#allocation4], 0
      %s3708 = sshll.u32 [#allocation32], 4
      %s3709 = int_to_ptr.vmem [resolvable:$true] %s3708
      %s3710 = sshll.u32 %s28, 4
      %s3711 = int_to_ptr.hbm [resolvable:$true] %s3710
      %3716 = dma.vmem_to_hbm [thread:$0]  %s3709, 32, %s3711, [#allocation4], 16, 16, 1
    $region193: #{tpu_custom_call.1} parent=1 // pred_fallthru
      _
    // Predicated region
    $region194: #{tpu_custom_call.1} parent=1 // pred_check
      _
    $region195: #{tpu_custom_call.1} parent=1 // pred_check_branch
      %3718 = sbr.rel (0) target = $region197
    $region196: #{tpu_custom_call.1} parent=1 // pred_region
      %3720 = dma.done [#allocation4], 32
    $region197: #{tpu_custom_call.1} parent=1 // pred_fallthru
      _
    %3721 = vsyncpa [#allocation3], 1
    %3722 = vsyncpa [#allocation6], 1
    %3723 = vsyncpa [#allocation9], 1
    %3724 = vsyncpa [#allocation12], 1
    %3725 = vsyncpa [#allocation15], 1
    %3726 = vsyncpa [#allocation18], 1
    %3727 = vsyncpa [#allocation21], 1
    %3728 = vsyncpa [#allocation24], 1
    %3729 = vsyncpa [#allocation27], 1
    %3730 = vsyncpa [#allocation30], 1
    %3731 = vsyncpa [#allocation4], 1

// kernel: tpu_custom_call.1
$region0: #{tpu_custom_call.1}
  #allocation0 [shape = 'u32[]', space=smem, size = 0x4, offset = 0x4, fixed_abs, tag = 'smem constant byte address 0x4 - core index']
  #allocation1 [shape = 'u32[72,128]{1,0:T(1,128)}', space=vmem, size = 0x9000, scoped, tag = 'internal scratch']
  %s0 = inlined_call_operand.vmem [shape: s32[2,1,1], index: 0, kind: input, shape index: {}]
  %s1 = inlined_call_operand.vmem [shape: s32[2,1,1], index: 1, kind: input, shape index: {}]
  %s2 = inlined_call_operand.hbm [shape: bf16[2,16,128], index: 2, kind: input, shape index: {}]
  %s3 = inlined_call_operand.hbm [shape: bf16[2,16,128], index: 3, kind: input, shape index: {}]
  %s4 = inlined_call_operand.hbm [shape: bf16[2,128,128], index: 4, kind: input, shape index: {}]
  %s5 = inlined_call_operand.hbm [shape: bf16[2,128,128], index: 5, kind: input, shape index: {}]
  %s6 = inlined_call_operand.hbm [shape: bf16[2,128,128], index: 6, kind: input, shape index: {}]
  %s7 = inlined_call_operand.hbm [shape: bf16[2,128,128], index: 7, kind: input, shape index: {}]
  %s8 = inlined_call_operand.vmem [shape: f32[2,1,128], index: 8, kind: input, shape index: {}]
  %s9 = inlined_call_operand.hbm [shape: bf16[2,128,128], index: 9, kind: input, shape index: {}]
  %s10 = inlined_call_operand.vmem [shape: f32[2,1,128], index: 10, kind: input, shape index: {}]
  %s11 = inlined_call_operand.hbm [shape: bf16[2,128,128], index: 11, kind: input, shape index: {}]
  %s12 = inlined_call_operand.hbm [shape: bf16[2,128,128], index: 12, kind: input, shape index: {}]
  %s13 = inlined_call_operand.hbm [shape: bf16[2,128,128], index: 13, kind: input, shape index: {}]
  %s14 = inlined_call_operand.hbm [shape: bf16[2,128,128], index: 14, kind: input, shape index: {}]
  %s15 = inlined_call_operand.vmem [shape: f32[2,1,128], index: 15, kind: input, shape index: {}]
  %s16 = inlined_call_operand.hbm [shape: bf16[2,128,128], index: 16, kind: input, shape index: {}]
  %s17 = inlined_call_operand.vmem [shape: f32[2,1,128], index: 17, kind: input, shape index: {}]
  %s18 = inlined_call_operand.hbm [shape: bf16[128,128], index: 18, kind: input, shape index: {}]
  %s19 = inlined_call_operand.hbm [shape: bf16[128,128], index: 19, kind: input, shape index: {}]
  %s20 = inlined_call_operand.vmem [shape: f32[1,128], index: 20, kind: input, shape index: {}]
  %s21 = inlined_call_operand.hbm [shape: bf16[128,128], index: 21, kind: input, shape index: {}]
  %s22 = inlined_call_operand.hbm [shape: bf16[128,128], index: 22, kind: input, shape index: {}]
  %s23 = inlined_call_operand.hbm [shape: bf16[128,128], index: 23, kind: input, shape index: {}]
  %s24 = inlined_call_operand.hbm [shape: bf16[128,128], index: 24, kind: input, shape index: {}]
  %s25 = inlined_call_operand.vmem [shape: f32[1,128], index: 25, kind: input, shape index: {}]
  %s26 = inlined_call_operand.hbm [shape: bf16[128,128], index: 26, kind: input, shape index: {}]
  %s27 = inlined_call_operand.vmem [shape: f32[1,128], index: 27, kind: input, shape index: {}]
  %s28 = inlined_call_operand.hbm [shape: f32[2,1,128], index: 28, kind: output, shape index: {}]
  %s29 = sld [smem:[#allocation0]]
  $region198: #{tpu_custom_call.1} parent=0
    _
  %s31 = ssub.s32 1, %s29
  %s32 = scalar_select 0, %s31, %s29
  $region1: #{tpu_custom_call.1} parent=0
    #allocation2 [shape = 'u8[8192]{0}', space=vmem, size = 0x2000, scoped, tag = 'input window, operand 2, single buffered']
    #allocation3 [shape = 's32[1]{0}', space=sflag, size = 0x4, scoped, tag = 'scoped memory for tpu_custom_call.1']
    #allocation4 [shape = 's32[1]{0}', space=sflag, size = 0x4, scoped, tag = 'scoped memory for tpu_custom_call.1']
    #allocation5 [shape = 'u8[8192]{0}', space=vmem, size = 0x2000, scoped, tag = 'input window, operand 3, single buffered']
    #allocation6 [shape = 's32[1]{0}', space=sflag, size = 0x4, scoped, tag = 'scoped memory for tpu_custom_call.1']
    #allocation7 [shape = 'u8[65536]{0}', space=vmem, size = 0x10000, scoped, tag = 'input window, operand 4, single buffered']
    #allocation8 [shape = 'u8[65536]{0}', space=vmem, size = 0x10000, scoped, tag = 'input window, operand 5, single buffered']
    #allocation9 [shape = 's32[1]{0}', space=sflag, size = 0x4, scoped, tag = 'scoped memory for tpu_custom_call.1']
    #allocation10 [shape = 'u8[65536]{0}', space=vmem, size = 0x10000, scoped, tag = 'input window, operand 6, single buffered']
    #allocation11 [shape = 'u8[65536]{0}', space=vmem, size = 0x10000, scoped, tag = 'input window, operand 7, single buffered']
    #allocation12 [shape = 's32[1]{0}', space=sflag, size = 0x4, scoped, tag = 'scoped memory for tpu_custom_call.1']
    #allocation13 [shape = 'u8[65536]{0}', space=vmem, size = 0x10000, scoped, tag = 'input window, operand 9, single buffered']
    #allocation14 [shape = 'u8[65536]{0}', space=vmem, size = 0x10000, scoped, tag = 'input window, operand 11, single buffered']
    #allocation15 [shape = 's32[1]{0}', space=sflag, size = 0x4, scoped, tag = 'scoped memory for tpu_custom_call.1']
    #allocation16 [shape = 'u8[65536]{0}', space=vmem, size = 0x10000, scoped, tag = 'input window, operand 12, single buffered']
    #allocation17 [shape = 'u8[65536]{0}', space=vmem, size = 0x10000, scoped, tag = 'input window, operand 13, single buffered']
    #allocation18 [shape = 's32[1]{0}', space=sflag, size = 0x4, scoped, tag = 'scoped memory for tpu_custom_call.1']
    #allocation19 [shape = 'u8[65536]{0}', space=vmem, size = 0x10000, scoped, tag = 'input window, operand 14, single buffered']
    #allocation20 [shape = 'u8[65536]{0}', space=vmem, size = 0x10000, scoped, tag = 'input window, operand 16, single buffered']
    #allocation21 [shape = 's32[1]{0}', space=sflag, size = 0x4, scoped, tag = 'scoped memory for tpu_custom_call.1']
    #allocation22 [shape = 'u8[32768]{0}', space=vmem, size = 0x8000, scoped, tag = 'input window, operand 18, single buffered']
    #allocation23 [shape = 'u8[32768]{0}', space=vmem, size = 0x8000, scoped, tag = 'input window, operand 19, single buffered']
    #allocation24 [shape = 's32[1]{0}', space=sflag, size = 0x4, scoped, tag = 'scoped memory for tpu_custom_call.1']
    #allocation25 [shape = 'u8[32768]{0}', space=vmem, size = 0x8000, scoped, tag = 'input window, operand 21, single buffered']
    #allocation26 [shape = 'u8[32768]{0}', space=vmem, size = 0x8000, scoped, tag = 'input window, operand 22, single buffered']
    #allocation27 [shape = 's32[1]{0}', space=sflag, size = 0x4, scoped, tag = 'scoped memory for tpu_custom_call.1']
    #allocation28 [shape = 'u8[32768]{0}', space=vmem, size = 0x8000, scoped, tag = 'input window, operand 23, single buffered']
    #allocation29 [shape = 'u8[32768]{0}', space=vmem, size = 0x8000, scoped, tag = 'input window, operand 24, single buffered']
    #allocation30 [shape = 's32[1]{0}', space=sflag, size = 0x4, scoped, tag = 'scoped memory for tpu_custom_call.1']
    #allocation31 [shape = 'u8[32768]{0}', space=vmem, size = 0x8000, scoped, tag = 'input window, operand 26, single buffered']
    #allocation32 [shape = 'u8[1024]{0}', space=vmem, size = 0x400, scoped, tag = 'output window, operand 0, single buffered']
    %33 = vsyncpa [#allocation3], 0
    %34 = vsyncpa [#allocation6], 0
    %35 = vsyncpa [#allocation9], 0
    %36 = vsyncpa [#allocation12], 0
    %37 = vsyncpa [#allocation15], 0
    %38 = vsyncpa [#allocation18], 0
    %39 = vsyncpa [#allocation21], 0
    %40 = vsyncpa [#allocation24], 0
    %41 = vsyncpa [#allocation27], 0
    %42 = vsyncpa [#allocation30], 0
    %43 = vsyncpa [#allocation4], 0
    // Predicated region
    $region2: #{tpu_custom_call.1} parent=1 // pred_check
      _
    $region3: #{tpu_custom_call.1} parent=1 // pred_check_branch
      %45 = sbr.rel (0) target = $region5
    $region4: #{tpu_custom_call.1} parent=1 // pred_region
      _
    $region5: #{tpu_custom_call.1} parent=1 // pred_fallthru
      _
    // Predicated region
    $region6: #{tpu_custom_call.1} parent=1 // pred_check
      _
    $region7: #{tpu_custom_call.1} parent=1 // pred_check_branch
      %47 = sbr.rel (0) target = $region9
    $region8: #{tpu_custom_call.1} parent=1 // pred_region
      _
    $region9: #{tpu_custom_call.1} parent=1 // pred_fallthru
      _
    // Predicated region
    $region10: #{tpu_custom_call.1} parent=1 // pred_check
      _
    $region11: #{tpu_custom_call.1} parent=1 // pred_check_branch
      %49 = sbr.rel (0) target = $region13
    $region12: #{tpu_custom_call.1} parent=1 // pred_region
      %51 = vsyncadd [#allocation3], 0
      %s52 = sshll.u32 %s2, 4
      %s53 = int_to_ptr.hbm [resolvable:$true] %s52
      %s54 = sshll.u32 [#allocation2], 4
      %s55 = int_to_ptr.vmem [resolvable:$true] %s54
      %60 = dma.hbm_to_vmem [thread:$0]  %s53, 256, %s55, [#allocation3], 64, 64, 4
    $region13: #{tpu_custom_call.1} parent=1 // pred_fallthru
      _
    // Predicated region
    $region14: #{tpu_custom_call.1} parent=1 // pred_check
      _
    $region15: #{tpu_custom_call.1} parent=1 // pred_check_branch
      %62 = sbr.rel (0) target = $region17
    $region16: #{tpu_custom_call.1} parent=1 // pred_region
      %64 = vsyncadd [#allocation6], 0
      %s65 = sshll.u32 %s3, 4
      %s66 = int_to_ptr.hbm [resolvable:$true] %s65
      %s67 = sshll.u32 [#allocation5], 4
      %s68 = int_to_ptr.vmem [resolvable:$true] %s67
      %73 = dma.hbm_to_vmem [thread:$0]  %s66, 256, %s68, [#allocation6], 64, 64, 4
    $region17: #{tpu_custom_call.1} parent=1 // pred_fallthru
      _
    // Predicated region
    $region18: #{tpu_custom_call.1} parent=1 // pred_check
      _
    $region19: #{tpu_custom_call.1} parent=1 // pred_check_branch
      %75 = sbr.rel (0) target = $region21
    $region20: #{tpu_custom_call.1} parent=1 // pred_region
      %77 = vsyncadd [#allocation6], 0
      %s78 = sshll.u32 %s4, 4
      %s79 = int_to_ptr.hbm [resolvable:$true] %s78
      %s80 = sshll.u32 [#allocation7], 4
      %s81 = int_to_ptr.vmem [resolvable:$true] %s80
      %86 = dma.hbm_to_vmem [thread:$0]  %s79, 2048, %s81, [#allocation6], 64, 64, 4
    $region21: #{tpu_custom_call.1} parent=1 // pred_fallthru
      _
    // Predicated region
    $region22: #{tpu_custom_call.1} parent=1 // pred_check
      _
    $region23: #{tpu_custom_call.1} parent=1 // pred_check_branch
      %88 = sbr.rel (0) target = $region25
    $region24: #{tpu_custom_call.1} parent=1 // pred_region
      %90 = vsyncadd [#allocation9], 0
      %s91 = sshll.u32 %s5, 4
      %s92 = int_to_ptr.hbm [resolvable:$true] %s91
      %s93 = sshll.u32 [#allocation8], 4
      %s94 = int_to_ptr.vmem [resolvable:$true] %s93
      %99 = dma.hbm_to_vmem [thread:$0]  %s92, 2048, %s94, [#allocation9], 64, 64, 4
    $region25: #{tpu_custom_call.1} parent=1 // pred_fallthru
      _
    // Predicated region
    $region26: #{tpu_custom_call.1} parent=1 // pred_check
      _
    $region27: #{tpu_custom_call.1} parent=1 // pred_check_branch
      %101 = sbr.rel (0) target = $region29
    $region28: #{tpu_custom_call.1} parent=1 // pred_region
      %103 = vsyncadd [#allocation9], 0
      %s104 = sshll.u32 %s6, 4
      %s105 = int_to_ptr.hbm [resolvable:$true] %s104
      %s106 = sshll.u32 [#allocation10], 4
      %s107 = int_to_ptr.vmem [resolvable:$true] %s106
      %112 = dma.hbm_to_vmem [thread:$0]  %s105, 2048, %s107, [#allocation9], 64, 64, 4
    $region29: #{tpu_custom_call.1} parent=1 // pred_fallthru
      _
    // Predicated region
    $region30: #{tpu_custom_call.1} parent=1 // pred_check
      _
    $region31: #{tpu_custom_call.1} parent=1 // pred_check_branch
      %114 = sbr.rel (0) target = $region33
    $region32: #{tpu_custom_call.1} parent=1 // pred_region
      %116 = vsyncadd [#allocation12], 0
      %s117 = sshll.u32 %s7, 4
      %s118 = int_to_ptr.hbm [resolvable:$true] %s117
      %s119 = sshll.u32 [#allocation11], 4
      %s120 = int_to_ptr.vmem [resolvable:$true] %s119
      %125 = dma.hbm_to_vmem [thread:$0]  %s118, 2048, %s120, [#allocation12], 64, 64, 4
    $region33: #{tpu_custom_call.1} parent=1 // pred_fallthru
      _
    // Predicated region
    $region34: #{tpu_custom_call.1} parent=1 // pred_check
      _
    $region35: #{tpu_custom_call.1} parent=1 // pred_check_branch
      %127 = sbr.rel (0) target = $region37
    $region36: #{tpu_custom_call.1} parent=1 // pred_region
      _
    $region37: #{tpu_custom_call.1} parent=1 // pred_fallthru
      _
    // Predicated region
    $region38: #{tpu_custom_call.1} parent=1 // pred_check
      _
    $region39: #{tpu_custom_call.1} parent=1 // pred_check_branch
      %129 = sbr.rel (0) target = $region41
    $region40: #{tpu_custom_call.1} parent=1 // pred_region
      %131 = vsyncadd [#allocation12], 0
      %s132 = sshll.u32 %s9, 4
      %s133 = int_to_ptr.hbm [resolvable:$true] %s132
      %s134 = sshll.u32 [#allocation13], 4
      %s135 = int_to_ptr.vmem [resolvable:$true] %s134
      %140 = dma.hbm_to_vmem [thread:$0]  %s133, 2048, %s135, [#allocation12], 64, 64, 4
    $region41: #{tpu_custom_call.1} parent=1 // pred_fallthru
      _
    // Predicated region
    $region42: #{tpu_custom_call.1} parent=1 // pred_check
      _
    $region43: #{tpu_custom_call.1} parent=1 // pred_check_branch
      %142 = sbr.rel (0) target = $region45
    $region44: #{tpu_custom_call.1} parent=1 // pred_region
      _
    $region45: #{tpu_custom_call.1} parent=1 // pred_fallthru
      _
    // Predicated region
    $region46: #{tpu_custom_call.1} parent=1 // pred_check
      _
    $region47: #{tpu_custom_call.1} parent=1 // pred_check_branch
      %144 = sbr.rel (0) target = $region49
    $region48: #{tpu_custom_call.1} parent=1 // pred_region
      %146 = vsyncadd [#allocation15], 0
      %s147 = sshll.u32 %s11, 4
      %s148 = int_to_ptr.hbm [resolvable:$true] %s147
      %s149 = sshll.u32 [#allocation14], 4
      %s150 = int_to_ptr.vmem [resolvable:$true] %s149
      %155 = dma.hbm_to_vmem [thread:$0]  %s148, 2048, %s150, [#allocation15], 64, 64, 4
    $region49: #{tpu_custom_call.1} parent=1 // pred_fallthru
      _
    // Predicated region
    $region50: #{tpu_custom_call.1} parent=1 // pred_check
      _
    $region51: #{tpu_custom_call.1} parent=1 // pred_check_branch
      %157 = sbr.rel (0) target = $region53
    $region52: #{tpu_custom_call.1} parent=1 // pred_region
      %159 = vsyncadd [#allocation15], 0
      %s160 = sshll.u32 %s12, 4
      %s161 = int_to_ptr.hbm [resolvable:$true] %s160
      %s162 = sshll.u32 [#allocation16], 4
      %s163 = int_to_ptr.vmem [resolvable:$true] %s162
      %168 = dma.hbm_to_vmem [thread:$0]  %s161, 2048, %s163, [#allocation15], 64, 64, 4
    $region53: #{tpu_custom_call.1} parent=1 // pred_fallthru
      _
    // Predicated region
    $region54: #{tpu_custom_call.1} parent=1 // pred_check
      _
    $region55: #{tpu_custom_call.1} parent=1 // pred_check_branch
      %170 = sbr.rel (0) target = $region57
    $region56: #{tpu_custom_call.1} parent=1 // pred_region
      %172 = vsyncadd [#allocation18], 0
      %s173 = sshll.u32 %s13, 4
      %s174 = int_to_ptr.hbm [resolvable:$true] %s173
      %s175 = sshll.u32 [#allocation17], 4
      %s176 = int_to_ptr.vmem [resolvable:$true] %s175
      %181 = dma.hbm_to_vmem [thread:$0]  %s174, 2048, %s176, [#allocation18], 64, 64, 4
    $region57: #{tpu_custom_call.1} parent=1 // pred_fallthru
      _
    // Predicated region
    $region58: #{tpu_custom_call.1} parent=1 // pred_check
      _
    $region59: #{tpu_custom_call.1} parent=1 // pred_check_branch
      %183 = sbr.rel (0) target = $region61
    $region60: #{tpu_custom_call.1} parent=1 // pred_region
      %185 = vsyncadd [#allocation18], 0
      %s186 = sshll.u32 %s14, 4
      %s187 = int_to_ptr.hbm [resolvable:$true] %s186
      %s188 = sshll.u32 [#allocation19], 4
      %s189 = int_to_ptr.vmem [resolvable:$true] %s188
      %194 = dma.hbm_to_vmem [thread:$0]  %s187, 2048, %s189, [#allocation18], 64, 64, 4
    $region61: #{tpu_custom_call.1} parent=1 // pred_fallthru
      _
    // Predicated region
    $region62: #{tpu_custom_call.1} parent=1 // pred_check
      _
    $region63: #{tpu_custom_call.1} parent=1 // pred_check_branch
      %196 = sbr.rel (0) target = $region65
    $region64: #{tpu_custom_call.1} parent=1 // pred_region
      _
    $region65: #{tpu_custom_call.1} parent=1 // pred_fallthru
      _
    // Predicated region
    $region66: #{tpu_custom_call.1} parent=1 // pred_check
      _
    $region67: #{tpu_custom_call.1} parent=1 // pred_check_branch
      %198 = sbr.rel (0) target = $region69
    $region68: #{tpu_custom_call.1} parent=1 // pred_region
      %200 = vsyncadd [#allocation21], 0
      %s201 = sshll.u32 %s16, 4
      %s202 = int_to_ptr.hbm [resolvable:$true] %s201
      %s203 = sshll.u32 [#allocation20], 4
      %s204 = int_to_ptr.vmem [resolvable:$true] %s203
      %209 = dma.hbm_to_vmem [thread:$0]  %s202, 2048, %s204, [#allocation21], 64, 64, 4
    $region69: #{tpu_custom_call.1} parent=1 // pred_fallthru
      _
    // Predicated region
    $region70: #{tpu_custom_call.1} parent=1 // pred_check
      _
    $region71: #{tpu_custom_call.1} parent=1 // pred_check_branch
      %211 = sbr.rel (0) target = $region73
    $region72: #{tpu_custom_call.1} parent=1 // pred_region
      _
    $region73: #{tpu_custom_call.1} parent=1 // pred_fallthru
      _
    // Predicated region
    $region74: #{tpu_custom_call.1} parent=1 // pred_check
      _
    $region75: #{tpu_custom_call.1} parent=1 // pred_check_branch
      %213 = sbr.rel (0) target = $region77
    $region76: #{tpu_custom_call.1} parent=1 // pred_region
      %215 = vsyncadd [#allocation21], 0
      %s216 = sshll.u32 %s18, 4
      %s217 = int_to_ptr.hbm [resolvable:$true] %s216
      %s218 = sshll.u32 [#allocation22], 4
      %s219 = int_to_ptr.vmem [resolvable:$true] %s218
      %224 = dma.hbm_to_vmem [thread:$0]  %s217, 1024, %s219, [#allocation21], 64, 64, 4
    $region77: #{tpu_custom_call.1} parent=1 // pred_fallthru
      _
    // Predicated region
    $region78: #{tpu_custom_call.1} parent=1 // pred_check
      _
    $region79: #{tpu_custom_call.1} parent=1 // pred_check_branch
      %226 = sbr.rel (0) target = $region81
    $region80: #{tpu_custom_call.1} parent=1 // pred_region
      %228 = vsyncadd [#allocation24], 0
      %s229 = sshll.u32 %s19, 4
      %s230 = int_to_ptr.hbm [resolvable:$true] %s229
      %s231 = sshll.u32 [#allocation23], 4
      %s232 = int_to_ptr.vmem [resolvable:$true] %s231
      %237 = dma.hbm_to_vmem [thread:$0]  %s230, 1024, %s232, [#allocation24], 64, 64, 4
    $region81: #{tpu_custom_call.1} parent=1 // pred_fallthru
      _
    // Predicated region
    $region82: #{tpu_custom_call.1} parent=1 // pred_check
      _
    $region83: #{tpu_custom_call.1} parent=1 // pred_check_branch
      %239 = sbr.rel (0) target = $region85
    $region84: #{tpu_custom_call.1} parent=1 // pred_region
      _
    $region85: #{tpu_custom_call.1} parent=1 // pred_fallthru
      _
    // Predicated region
    $region86: #{tpu_custom_call.1} parent=1 // pred_check
      _
    $region87: #{tpu_custom_call.1} parent=1 // pred_check_branch
      %241 = sbr.rel (0) target = $region89
    $region88: #{tpu_custom_call.1} parent=1 // pred_region
      %243 = vsyncadd [#allocation24], 0
      %s244 = sshll.u32 %s21, 4
      %s245 = int_to_ptr.hbm [resolvable:$true] %s244
      %s246 = sshll.u32 [#allocation25], 4
      %s247 = int_to_ptr.vmem [resolvable:$true] %s246
      %252 = dma.hbm_to_vmem [thread:$0]  %s245, 1024, %s247, [#allocation24], 64, 64, 4
    $region89: #{tpu_custom_call.1} parent=1 // pred_fallthru
      _
    // Predicated region
    $region90: #{tpu_custom_call.1} parent=1 // pred_check
      _
    $region91: #{tpu_custom_call.1} parent=1 // pred_check_branch
      %254 = sbr.rel (0) target = $region93
    $region92: #{tpu_custom_call.1} parent=1 // pred_region
      %256 = vsyncadd [#allocation27], 0
      %s257 = sshll.u32 %s22, 4
      %s258 = int_to_ptr.hbm [resolvable:$true] %s257
      %s259 = sshll.u32 [#allocation26], 4
      %s260 = int_to_ptr.vmem [resolvable:$true] %s259
      %265 = dma.hbm_to_vmem [thread:$0]  %s258, 1024, %s260, [#allocation27], 64, 64, 4
    $region93: #{tpu_custom_call.1} parent=1 // pred_fallthru
      _
    // Predicated region
    $region94: #{tpu_custom_call.1} parent=1 // pred_check
      _
    $region95: #{tpu_custom_call.1} parent=1 // pred_check_branch
      %267 = sbr.rel (0) target = $region97
    $region96: #{tpu_custom_call.1} parent=1 // pred_region
      %269 = vsyncadd [#allocation27], 0
      %s270 = sshll.u32 %s23, 4
      %s271 = int_to_ptr.hbm [resolvable:$true] %s270
      %s272 = sshll.u32 [#allocation28], 4
      %s273 = int_to_ptr.vmem [resolvable:$true] %s272
      %278 = dma.hbm_to_vmem [thread:$0]  %s271, 1024, %s273, [#allocation27], 64, 64, 4
    $region97: #{tpu_custom_call.1} parent=1 // pred_fallthru
      _
    // Predicated region
    $region98: #{tpu_custom_call.1} parent=1 // pred_check
      _
    $region99: #{tpu_custom_call.1} parent=1 // pred_check_branch
      %280 = sbr.rel (0) target = $region101
    $region100: #{tpu_custom_call.1} parent=1 // pred_region
      %282 = vsyncadd [#allocation30], 0
      %s283 = sshll.u32 %s24, 4
      %s284 = int_to_ptr.hbm [resolvable:$true] %s283
      %s285 = sshll.u32 [#allocation29], 4
      %s286 = int_to_ptr.vmem [resolvable:$true] %s285
      %291 = dma.hbm_to_vmem [thread:$0]  %s284, 1024, %s286, [#allocation30], 64, 64, 4
    $region101: #{tpu_custom_call.1} parent=1 // pred_fallthru
      _
    // Predicated region
    $region102: #{tpu_custom_call.1} parent=1 // pred_check
      _
    $region103: #{tpu_custom_call.1} parent=1 // pred_check_branch
      %293 = sbr.rel (0) target = $region105
    $region104: #{tpu_custom_call.1} parent=1 // pred_region
      _
    $region105: #{tpu_custom_call.1} parent=1 // pred_fallthru
      _
    // Predicated region
    $region106: #{tpu_custom_call.1} parent=1 // pred_check
      _
    $region107: #{tpu_custom_call.1} parent=1 // pred_check_branch
      %295 = sbr.rel (0) target = $region109
    $region108: #{tpu_custom_call.1} parent=1 // pred_region
      %297 = vsyncadd [#allocation30], 0
      %s298 = sshll.u32 %s26, 4
      %s299 = int_to_ptr.hbm [resolvable:$true] %s298
      %s300 = sshll.u32 [#allocation31], 4
      %s301 = int_to_ptr.vmem [resolvable:$true] %s300
      %306 = dma.hbm_to_vmem [thread:$0]  %s299, 1024, %s301, [#allocation30], 64, 64, 4
    $region109: #{tpu_custom_call.1} parent=1 // pred_fallthru
      _
    // Predicated region
    $region110: #{tpu_custom_call.1} parent=1 // pred_check
      _
    $region111: #{tpu_custom_call.1} parent=1 // pred_check_branch
      %308 = sbr.rel (0) target = $region113
    $region112: #{tpu_custom_call.1} parent=1 // pred_region
      _
    $region113: #{tpu_custom_call.1} parent=1 // pred_fallthru
      _
    // Predicated region
    $region114: #{tpu_custom_call.1} parent=1 // pred_check
      _
    $region115: #{tpu_custom_call.1} parent=1 // pred_check_branch
      %310 = sbr.rel (0) target = $region117
    $region116: #{tpu_custom_call.1} parent=1 // pred_region
      %312 = dma.done [#allocation3], 256
    $region117: #{tpu_custom_call.1} parent=1 // pred_fallthru
      _
    // Predicated region
    $region118: #{tpu_custom_call.1} parent=1 // pred_check
      _
    $region119: #{tpu_custom_call.1} parent=1 // pred_check_branch
      %314 = sbr.rel (0) target = $region121
    $region120: #{tpu_custom_call.1} parent=1 // pred_region
      %316 = dma.done [#allocation6], 256
    $region121: #{tpu_custom_call.1} parent=1 // pred_fallthru
      _
    // Predicated region
    $region122: #{tpu_custom_call.1} parent=1 // pred_check
      _
    $region123: #{tpu_custom_call.1} parent=1 // pred_check_branch
      %318 = sbr.rel (0) target = $region125
    $region124: #{tpu_custom_call.1} parent=1 // pred_region
      %320 = dma.done [#allocation6], 2048
    $region125: #{tpu_custom_call.1} parent=1 // pred_fallthru
      _
    // Predicated region
    $region126: #{tpu_custom_call.1} parent=1 // pred_check
      _
    $region127: #{tpu_custom_call.1} parent=1 // pred_check_branch
      %322 = sbr.rel (0) target = $region129
    $region128: #{tpu_custom_call.1} parent=1 // pred_region
      %324 = dma.done [#allocation9], 2048
    $region129: #{tpu_custom_call.1} parent=1 // pred_fallthru
      _
    // Predicated region
    $region130: #{tpu_custom_call.1} parent=1 // pred_check
      _
    $region131: #{tpu_custom_call.1} parent=1 // pred_check_branch
      %326 = sbr.rel (0) target = $region133
    $region132: #{tpu_custom_call.1} parent=1 // pred_region
      %328 = dma.done [#allocation9], 2048
    $region133: #{tpu_custom_call.1} parent=1 // pred_fallthru
      _
    // Predicated region
    $region134: #{tpu_custom_call.1} parent=1 // pred_check
      _
    $region135: #{tpu_custom_call.1} parent=1 // pred_check_branch
      %330 = sbr.rel (0) target = $region137
    $region136: #{tpu_custom_call.1} parent=1 // pred_region
      %332 = dma.done [#allocation12], 2048
    $region137: #{tpu_custom_call.1} parent=1 // pred_fallthru
      _
    // Predicated region
    $region138: #{tpu_custom_call.1} parent=1 // pred_check
      _
    $region139: #{tpu_custom_call.1} parent=1 // pred_check_branch
      %334 = sbr.rel (0) target = $region141
    $region140: #{tpu_custom_call.1} parent=1 // pred_region
      %336 = dma.done [#allocation12], 2048
    $region141: #{tpu_custom_call.1} parent=1 // pred_fallthru
      _
    // Predicated region
    $region142: #{tpu_custom_call.1} parent=1 // pred_check
      _
    $region143: #{tpu_custom_call.1} parent=1 // pred_check_branch
      %338 = sbr.rel (0) target = $region145
    $region144: #{tpu_custom_call.1} parent=1 // pred_region
      %340 = dma.done [#allocation15], 2048
    $region145: #{tpu_custom_call.1} parent=1 // pred_fallthru
      _
    // Predicated region
    $region146: #{tpu_custom_call.1} parent=1 // pred_check
      _
    $region147: #{tpu_custom_call.1} parent=1 // pred_check_branch
      %342 = sbr.rel (0) target = $region149
    $region148: #{tpu_custom_call.1} parent=1 // pred_region
      %344 = dma.done [#allocation15], 2048
    $region149: #{tpu_custom_call.1} parent=1 // pred_fallthru
      _
    // Predicated region
    $region150: #{tpu_custom_call.1} parent=1 // pred_check
      _
    $region151: #{tpu_custom_call.1} parent=1 // pred_check_branch
      %346 = sbr.rel (0) target = $region153
    $region152: #{tpu_custom_call.1} parent=1 // pred_region
      %348 = dma.done [#allocation18], 2048
    $region153: #{tpu_custom_call.1} parent=1 // pred_fallthru
      _
    // Predicated region
    $region154: #{tpu_custom_call.1} parent=1 // pred_check
      _
    $region155: #{tpu_custom_call.1} parent=1 // pred_check_branch
      %350 = sbr.rel (0) target = $region157
    $region156: #{tpu_custom_call.1} parent=1 // pred_region
      %352 = dma.done [#allocation18], 2048
    $region157: #{tpu_custom_call.1} parent=1 // pred_fallthru
      _
    // Predicated region
    $region158: #{tpu_custom_call.1} parent=1 // pred_check
      _
    $region159: #{tpu_custom_call.1} parent=1 // pred_check_branch
      %354 = sbr.rel (0) target = $region161
    $region160: #{tpu_custom_call.1} parent=1 // pred_region
      %356 = dma.done [#allocation21], 2048
    $region161: #{tpu_custom_call.1} parent=1 // pred_fallthru
      _
    // Predicated region
    $region162: #{tpu_custom_call.1} parent=1 // pred_check
      _
    $region163: #{tpu_custom_call.1} parent=1 // pred_check_branch
      %358 = sbr.rel (0) target = $region165
    $region164: #{tpu_custom_call.1} parent=1 // pred_region
      %360 = dma.done [#allocation21], 1024
    $region165: #{tpu_custom_call.1} parent=1 // pred_fallthru
      _
    // Predicated region
    $region166: #{tpu_custom_call.1} parent=1 // pred_check
      _
    $region167: #{tpu_custom_call.1} parent=1 // pred_check_branch
      %362 = sbr.rel (0) target = $region169
    $region168: #{tpu_custom_call.1} parent=1 // pred_region
      %364 = dma.done [#allocation24], 1024
    $region169: #{tpu_custom_call.1} parent=1 // pred_fallthru
      _
    // Predicated region
    $region170: #{tpu_custom_call.1} parent=1 // pred_check
      _
    $region171: #{tpu_custom_call.1} parent=1 // pred_check_branch
      %366 = sbr.rel (0) target = $region173
    $region172: #{tpu_custom_call.1} parent=1 // pred_region
      %368 = dma.done [#allocation24], 1024
    $region173: #{tpu_custom_call.1} parent=1 // pred_fallthru
      _
    // Predicated region
    $region174: #{tpu_custom_call.1} parent=1 // pred_check
      _
    $region175: #{tpu_custom_call.1} parent=1 // pred_check_branch
      %370 = sbr.rel (0) target = $region177
    $region176: #{tpu_custom_call.1} parent=1 // pred_region
      %372 = dma.done [#allocation27], 1024
    $region177: #{tpu_custom_call.1} parent=1 // pred_fallthru
      _
    // Predicated region
    $region178: #{tpu_custom_call.1} parent=1 // pred_check
      _
    $region179: #{tpu_custom_call.1} parent=1 // pred_check_branch
      %374 = sbr.rel (0) target = $region181
    $region180: #{tpu_custom_call.1} parent=1 // pred_region
      %376 = dma.done [#allocation27], 1024
    $region181: #{tpu_custom_call.1} parent=1 // pred_fallthru
      _
    // Predicated region
    $region182: #{tpu_custom_call.1} parent=1 // pred_check
      _
    $region183: #{tpu_custom_call.1} parent=1 // pred_check_branch
      %378 = sbr.rel (0) target = $region185
    $region184: #{tpu_custom_call.1} parent=1 // pred_region
      %380 = dma.done [#allocation30], 1024
    $region185: #{tpu_custom_call.1} parent=1 // pred_fallthru
      _
    // Predicated region
    $region186: #{tpu_custom_call.1} parent=1 // pred_check
      _
    $region187: #{tpu_custom_call.1} parent=1 // pred_check_branch
      %382 = sbr.rel (0) target = $region189
    $region188: #{tpu_custom_call.1} parent=1 // pred_region
      %384 = dma.done [#allocation30], 1024
    $region189: #{tpu_custom_call.1} parent=1 // pred_fallthru
      _
    %v386 = vlaneseq
    %v387 = vshrl.u32 %v386, 7
    %v388 = vadd.s32 %v387, 8
    %v389 = vld [vmem:[%s0] sm:$0x1]
    %v390 = vld [vmem:[%s0 + $0x1] sm:$0x1]
    %v391 = vperm.slane %v389, 0
    %v392 = vperm.slane %v390, 0
    %vm393 = vcmp.ge.s32.totalorder %v387, %v391
    %vm394 = vcmp.ge.s32.totalorder %v388, %v391
    %vm395 = vcmp.ge.s32.totalorder %v387, %v392
    %vm396 = vcmp.ge.s32.totalorder %v388, %v392
    %v397 = vld [vmem:[%s1] sm:$0x1]
    %v398 = vld [vmem:[%s1 + $0x1] sm:$0x1]
    %v399 = vperm.slane %v397, 0
    %v400 = vperm.slane %v398, 0
    %vm401 = vcmp.lt.s32.totalorder %v387, %v399
    %vm402 = vcmp.lt.s32.totalorder %v388, %v399
    %vm403 = vcmp.lt.s32.totalorder %v387, %v400
    %vm404 = vcmp.lt.s32.totalorder %v388, %v400
    %vm405 = vmand %vm393, %vm401
    %vm406 = vmand %vm394, %vm402
    %vm407 = vmand %vm395, %vm403
    %vm408 = vmand %vm396, %vm404
    %v409 = vsel %vm405, 1, 0
    %v410 = vsel %vm406, 1, 0
    %v411 = vsel %vm407, 1, 0
    %v412 = vsel %vm408, 1, 0
    %v413 = vcvt.s32.f32 %v409
    %v414 = vcvt.s32.f32 %v410
    %v415 = vcvt.s32.f32 %v411
    %v416 = vcvt.s32.f32 %v412
    %v417 = vld [vmem:[#allocation2] sm:$0xf]
    %v418 = vld [vmem:[#allocation2 + $0x4] sm:$0xf]
    %v419 = vld [vmem:[#allocation2 + $0x8] sm:$0xf]
    %v420 = vld [vmem:[#allocation2 + $0xc] sm:$0xf]
    %v421 = vld [vmem:[#allocation5] sm:$0xf]
    %v422 = vld [vmem:[#allocation5 + $0x4] sm:$0xf]
    %v423 = vld [vmem:[#allocation5 + $0x8] sm:$0xf]
    %v424 = vld [vmem:[#allocation5 + $0xc] sm:$0xf]
    %v425 = vld [vmem:[#allocation7] sm:$0xf]
    %v426 = vld [vmem:[#allocation7 + $0x4] sm:$0xf]
    %v427 = vld [vmem:[#allocation7 + $0x8] sm:$0xf]
    %v428 = vld [vmem:[#allocation7 + $0xc] sm:$0xf]
    %v429 = vld [vmem:[#allocation7 + $0x10] sm:$0xf]
    %v430 = vld [vmem:[#allocation7 + $0x14] sm:$0xf]
    %v431 = vld [vmem:[#allocation7 + $0x18] sm:$0xf]
    %v432 = vld [vmem:[#allocation7 + $0x1c] sm:$0xf]
    %v433 = vld [vmem:[#allocation7 + $0x20] sm:$0xf]
    %v434 = vld [vmem:[#allocation7 + $0x24] sm:$0xf]
    %v435 = vld [vmem:[#allocation7 + $0x28] sm:$0xf]
    %v436 = vld [vmem:[#allocation7 + $0x2c] sm:$0xf]
    %v437 = vld [vmem:[#allocation7 + $0x30] sm:$0xf]
    %v438 = vld [vmem:[#allocation7 + $0x34] sm:$0xf]
    %v439 = vld [vmem:[#allocation7 + $0x38] sm:$0xf]
    %v440 = vld [vmem:[#allocation7 + $0x3c] sm:$0xf]
    %v441 = vld [vmem:[#allocation8] sm:$0xf]
    %v442 = vld [vmem:[#allocation8 + $0x4] sm:$0xf]
    %v443 = vld [vmem:[#allocation8 + $0x8] sm:$0xf]
    %v444 = vld [vmem:[#allocation8 + $0xc] sm:$0xf]
    %v445 = vld [vmem:[#allocation8 + $0x10] sm:$0xf]
    %v446 = vld [vmem:[#allocation8 + $0x14] sm:$0xf]
    %v447 = vld [vmem:[#allocation8 + $0x18] sm:$0xf]
    %v448 = vld [vmem:[#allocation8 + $0x1c] sm:$0xf]
    %v449 = vld [vmem:[#allocation8 + $0x20] sm:$0xf]
    %v450 = vld [vmem:[#allocation8 + $0x24] sm:$0xf]
    %v451 = vld [vmem:[#allocation8 + $0x28] sm:$0xf]
    %v452 = vld [vmem:[#allocation8 + $0x2c] sm:$0xf]
    %v453 = vld [vmem:[#allocation8 + $0x30] sm:$0xf]
    %v454 = vld [vmem:[#allocation8 + $0x34] sm:$0xf]
    %v455 = vld [vmem:[#allocation8 + $0x38] sm:$0xf]
    %v456 = vld [vmem:[#allocation8 + $0x3c] sm:$0xf]
    %v457 = vld [vmem:[#allocation10] sm:$0xf]
    %v458 = vld [vmem:[#allocation10 + $0x4] sm:$0xf]
    %v459 = vld [vmem:[#allocation10 + $0x8] sm:$0xf]
    %v460 = vld [vmem:[#allocation10 + $0xc] sm:$0xf]
    %v461 = vld [vmem:[#allocation10 + $0x10] sm:$0xf]
    %v462 = vld [vmem:[#allocation10 + $0x14] sm:$0xf]
    %v463 = vld [vmem:[#allocation10 + $0x18] sm:$0xf]
    %v464 = vld [vmem:[#allocation10 + $0x1c] sm:$0xf]
    %v465 = vld [vmem:[#allocation10 + $0x20] sm:$0xf]
    %v466 = vld [vmem:[#allocation10 + $0x24] sm:$0xf]
    %v467 = vld [vmem:[#allocation10 + $0x28] sm:$0xf]
    %v468 = vld [vmem:[#allocation10 + $0x2c] sm:$0xf]
    %v469 = vld [vmem:[#allocation10 + $0x30] sm:$0xf]
    %v470 = vld [vmem:[#allocation10 + $0x34] sm:$0xf]
    %v471 = vld [vmem:[#allocation10 + $0x38] sm:$0xf]
    %v472 = vld [vmem:[#allocation10 + $0x3c] sm:$0xf]
    %v473 = vld [vmem:[#allocation11] sm:$0xf]
    %v474 = vld [vmem:[#allocation11 + $0x4] sm:$0xf]
    %v475 = vld [vmem:[#allocation11 + $0x8] sm:$0xf]
    %v476 = vld [vmem:[#allocation11 + $0xc] sm:$0xf]
    %v477 = vld [vmem:[#allocation11 + $0x10] sm:$0xf]
    %v478 = vld [vmem:[#allocation11 + $0x14] sm:$0xf]
    %v479 = vld [vmem:[#allocation11 + $0x18] sm:$0xf]
    %v480 = vld [vmem:[#allocation11 + $0x1c] sm:$0xf]
    %v481 = vld [vmem:[#allocation11 + $0x20] sm:$0xf]
    %v482 = vld [vmem:[#allocation11 + $0x24] sm:$0xf]
    %v483 = vld [vmem:[#allocation11 + $0x28] sm:$0xf]
    %v484 = vld [vmem:[#allocation11 + $0x2c] sm:$0xf]
    %v485 = vld [vmem:[#allocation11 + $0x30] sm:$0xf]
    %v486 = vld [vmem:[#allocation11 + $0x34] sm:$0xf]
    %v487 = vld [vmem:[#allocation11 + $0x38] sm:$0xf]
    %v488 = vld [vmem:[#allocation11 + $0x3c] sm:$0xf]
    %v489 = vld [vmem:[%s8] sm:$0x1]
    %v490 = vld [vmem:[#allocation13] sm:$0xf]
    %v491 = vld [vmem:[#allocation13 + $0x4] sm:$0xf]
    %v492 = vld [vmem:[#allocation13 + $0x8] sm:$0xf]
    %v493 = vld [vmem:[#allocation13 + $0xc] sm:$0xf]
    %v494 = vld [vmem:[#allocation13 + $0x10] sm:$0xf]
    %v495 = vld [vmem:[#allocation13 + $0x14] sm:$0xf]
    %v496 = vld [vmem:[#allocation13 + $0x18] sm:$0xf]
    %v497 = vld [vmem:[#allocation13 + $0x1c] sm:$0xf]
    %v498 = vld [vmem:[#allocation13 + $0x20] sm:$0xf]
    %v499 = vld [vmem:[#allocation13 + $0x24] sm:$0xf]
    %v500 = vld [vmem:[#allocation13 + $0x28] sm:$0xf]
    %v501 = vld [vmem:[#allocation13 + $0x2c] sm:$0xf]
    %v502 = vld [vmem:[#allocation13 + $0x30] sm:$0xf]
    %v503 = vld [vmem:[#allocation13 + $0x34] sm:$0xf]
    %v504 = vld [vmem:[#allocation13 + $0x38] sm:$0xf]
    %v505 = vld [vmem:[#allocation13 + $0x3c] sm:$0xf]
    %v506 = vld [vmem:[%s10] sm:$0x1]
    %v511 = vunpack.c.l.b16 %v417
    %v512 = vunpack.c.l.b16 %v418
    %v513 = vunpack.c.l.b16 %v419
    %v514 = vunpack.c.l.b16 %v420
    %v515 = vpack.c.b16 %v512, %v511
    %v516 = vpack.c.b16 %v514, %v513
    %v535 = vunpack.c.l.b16 %v425
    %v536 = vunpack.c.l.b16 %v426
    %v537 = vunpack.c.l.b16 %v427
    %v538 = vunpack.c.l.b16 %v428
    %v539 = vunpack.c.l.b16 %v429
    %v540 = vunpack.c.l.b16 %v430
    %v541 = vunpack.c.l.b16 %v431
    %v542 = vunpack.c.l.b16 %v432
    %v543 = vunpack.c.l.b16 %v433
    %v544 = vunpack.c.l.b16 %v434
    %v545 = vunpack.c.l.b16 %v435
    %v546 = vunpack.c.l.b16 %v436
    %v547 = vunpack.c.l.b16 %v437
    %v548 = vunpack.c.l.b16 %v438
    %v549 = vunpack.c.l.b16 %v439
    %v550 = vunpack.c.l.b16 %v440
    %v551 = vpack.c.b16 %v536, %v535
    %v552 = vpack.c.b16 %v538, %v537
    %v553 = vpack.c.b16 %v540, %v539
    %v554 = vpack.c.b16 %v542, %v541
    %v555 = vpack.c.b16 %v544, %v543
    %v556 = vpack.c.b16 %v546, %v545
    %v557 = vpack.c.b16 %v548, %v547
    %v558 = vpack.c.b16 %v550, %v549
    %567 = vmatpush.bf16.msra.mxu0 %v558
    %568 = vmatpush.bf16.msra.mxu0 %v557
    %569 = vmatpush.bf16.msra.mxu0 %v556
    %570 = vmatpush.bf16.msra.mxu0 %v555
    %571 = vmatpush.bf16.msra.mxu0 %v554
    %572 = vmatpush.bf16.msra.mxu0 %v553
    %573 = vmatpush.bf16.msra.mxu0 %v552
    %574 = vmatpush.bf16.msra.mxu0 %v551
    %575 = vmatmul.bf16.gmra.mxu0 %v515
    %v576 = vpop.f32.mrf.mxu0
    %v577 = vadd.f32 0.0, %v576
    %v578 = vpop.f32.mrf.mxu0
    %v579 = vadd.f32 0.0, %v578
    %580 = vmatmul.bf16.gmra.mxu0 %v516
    %v581 = vpop.f32.mrf.mxu0
    %v582 = vadd.f32 0.0, %v581
    %v583 = vpop.f32.mrf.mxu0
    %v584 = vadd.f32 0.0, %v583
    %585 = vdwg.mxu0
    %v586 = vpack.c.bf16 %v577, %v577
    %v587 = vpack.c.bf16 %v579, %v579
    %v588 = vpack.c.bf16 %v582, %v582
    %v589 = vpack.c.bf16 %v584, %v584
    %v606 = vunpack.c.l.b16 %v441
    %v607 = vunpack.c.l.b16 %v442
    %v608 = vunpack.c.l.b16 %v443
    %v609 = vunpack.c.l.b16 %v444
    %v610 = vunpack.c.l.b16 %v445
    %v611 = vunpack.c.l.b16 %v446
    %v612 = vunpack.c.l.b16 %v447
    %v613 = vunpack.c.l.b16 %v448
    %v614 = vunpack.c.l.b16 %v449
    %v615 = vunpack.c.l.b16 %v450
    %v616 = vunpack.c.l.b16 %v451
    %v617 = vunpack.c.l.b16 %v452
    %v618 = vunpack.c.l.b16 %v453
    %v619 = vunpack.c.l.b16 %v454
    %v620 = vunpack.c.l.b16 %v455
    %v621 = vunpack.c.l.b16 %v456
    %v622 = vpack.c.b16 %v607, %v606
    %v623 = vpack.c.b16 %v609, %v608
    %v624 = vpack.c.b16 %v611, %v610
    %v625 = vpack.c.b16 %v613, %v612
    %v626 = vpack.c.b16 %v615, %v614
    %v627 = vpack.c.b16 %v617, %v616
    %v628 = vpack.c.b16 %v619, %v618
    %v629 = vpack.c.b16 %v621, %v620
    %638 = vmatpush.bf16.msra.mxu0 %v629
    %639 = vmatpush.bf16.msra.mxu0 %v628
    %640 = vmatpush.bf16.msra.mxu0 %v627
    %641 = vmatpush.bf16.msra.mxu0 %v626
    %642 = vmatpush.bf16.msra.mxu0 %v625
    %643 = vmatpush.bf16.msra.mxu0 %v624
    %644 = vmatpush.bf16.msra.mxu0 %v623
    %645 = vmatpush.bf16.msra.mxu0 %v622
    %646 = vmatmul.bf16.gmra.mxu0 %v515
    %v647 = vpop.f32.mrf.mxu0
    %v648 = vadd.f32 0.0, %v647
    %v649 = vpop.f32.mrf.mxu0
    %v650 = vadd.f32 0.0, %v649
    %651 = vmatmul.bf16.gmra.mxu0 %v516
    %v652 = vpop.f32.mrf.mxu0
    %v653 = vadd.f32 0.0, %v652
    %v654 = vpop.f32.mrf.mxu0
    %v655 = vadd.f32 0.0, %v654
    %656 = vdwg.mxu0
    %v657 = vpack.c.bf16 %v648, %v648
    %v658 = vpack.c.bf16 %v650, %v650
    %v659 = vpack.c.bf16 %v653, %v653
    %v660 = vpack.c.bf16 %v655, %v655
    %v677 = vunpack.c.l.b16 %v457
    %v678 = vunpack.c.l.b16 %v458
    %v679 = vunpack.c.l.b16 %v459
    %v680 = vunpack.c.l.b16 %v460
    %v681 = vunpack.c.l.b16 %v461
    %v682 = vunpack.c.l.b16 %v462
    %v683 = vunpack.c.l.b16 %v463
    %v684 = vunpack.c.l.b16 %v464
    %v685 = vunpack.c.l.b16 %v465
    %v686 = vunpack.c.l.b16 %v466
    %v687 = vunpack.c.l.b16 %v467
    %v688 = vunpack.c.l.b16 %v468
    %v689 = vunpack.c.l.b16 %v469
    %v690 = vunpack.c.l.b16 %v470
    %v691 = vunpack.c.l.b16 %v471
    %v692 = vunpack.c.l.b16 %v472
    %v693 = vpack.c.b16 %v678, %v677
    %v694 = vpack.c.b16 %v680, %v679
    %v695 = vpack.c.b16 %v682, %v681
    %v696 = vpack.c.b16 %v684, %v683
    %v697 = vpack.c.b16 %v686, %v685
    %v698 = vpack.c.b16 %v688, %v687
    %v699 = vpack.c.b16 %v690, %v689
    %v700 = vpack.c.b16 %v692, %v691
    %709 = vmatpush.bf16.msra.mxu0 %v700
    %710 = vmatpush.bf16.msra.mxu0 %v699
    %711 = vmatpush.bf16.msra.mxu0 %v698
    %712 = vmatpush.bf16.msra.mxu0 %v697
    %713 = vmatpush.bf16.msra.mxu0 %v696
    %714 = vmatpush.bf16.msra.mxu0 %v695
    %715 = vmatpush.bf16.msra.mxu0 %v694
    %716 = vmatpush.bf16.msra.mxu0 %v693
    %717 = vmatmul.bf16.gmra.mxu0 %v515
    %v718 = vpop.f32.mrf.mxu0
    %v719 = vadd.f32 0.0, %v718
    %v720 = vpop.f32.mrf.mxu0
    %v721 = vadd.f32 0.0, %v720
    %722 = vmatmul.bf16.gmra.mxu0 %v516
    %v723 = vpop.f32.mrf.mxu0
    %v724 = vadd.f32 0.0, %v723
    %v725 = vpop.f32.mrf.mxu0
    %v726 = vadd.f32 0.0, %v725
    %727 = vdwg.mxu0
    %v728 = vpack.c.bf16 %v719, %v719
    %v729 = vpack.c.bf16 %v721, %v721
    %v730 = vpack.c.bf16 %v724, %v724
    %v731 = vpack.c.bf16 %v726, %v726
    %v734 = vunpack.c.l.b16 %v586
    %v735 = vunpack.c.l.b16 %v587
    %v736 = vpack.c.b16 %v735, %v734
    %v740 = vunpack.c.l.b16 %v657
    %v741 = vunpack.c.l.b16 %v658
    %v742 = vpack.c.b16 %v741, %v740
    %744 = vmatpush.bf16.xpose.msra.mxu0 0
    %745 = vmatpush.bf16.xpose.msra.mxu0 0
    %746 = vmatpush.bf16.xpose.msra.mxu0 0
    %747 = vmatpush.bf16.xpose.msra.mxu0 0
    %748 = vmatpush.bf16.xpose.msra.mxu0 0
    %749 = vmatpush.bf16.xpose.msra.mxu0 0
    %750 = vmatpush.bf16.xpose.msra.mxu0 0
    %751 = vmatpush.bf16.xpose.msra.mxu0 %v742
    %752 = vmatmul.bf16.gmra.mxu0 %v736
    %v753 = vpop.f32.mrf.mxu0
    %v754 = vadd.f32 0.0, %v753
    %v755 = vpop.f32.mrf.mxu0
    %v756 = vadd.f32 0.0, %v755
    %757 = vdwg.mxu0
    %v760 = vunpack.c.l.b16 %v588
    %v761 = vunpack.c.l.b16 %v589
    %v762 = vpack.c.b16 %v761, %v760
    %v766 = vunpack.c.l.b16 %v659
    %v767 = vunpack.c.l.b16 %v660
    %v768 = vpack.c.b16 %v767, %v766
    %770 = vmatpush.bf16.xpose.msra.mxu0 0
    %771 = vmatpush.bf16.xpose.msra.mxu0 0
    %772 = vmatpush.bf16.xpose.msra.mxu0 0
    %773 = vmatpush.bf16.xpose.msra.mxu0 0
    %774 = vmatpush.bf16.xpose.msra.mxu0 0
    %775 = vmatpush.bf16.xpose.msra.mxu0 0
    %776 = vmatpush.bf16.xpose.msra.mxu0 0
    %777 = vmatpush.bf16.xpose.msra.mxu0 %v768
    %778 = vmatmul.bf16.gmra.mxu0 %v762
    %v779 = vpop.f32.mrf.mxu0
    %v780 = vadd.f32 0.0, %v779
    %v781 = vpop.f32.mrf.mxu0
    %v782 = vadd.f32 0.0, %v781
    %783 = vdwg.mxu0
    %vm784 = vcmask 130048
    %v785 = vsel %vm784, %v754, -inf
    %786 = vmax.xlane.f32.xlu0 %v785
    %v787 = vpop.xlane.xlu0 %786
    %v788 = vsel %vm784, %v756, -inf
    %789 = vmax.xlane.f32.xlu0 %v788
    %v790 = vpop.xlane.xlu0 %789
    %v791 = vsel %vm784, %v780, -inf
    %792 = vmax.xlane.f32.xlu0 %v791
    %v793 = vpop.xlane.xlu0 %792
    %v794 = vsel %vm784, %v782, -inf
    %795 = vmax.xlane.f32.xlu0 %v794
    %v796 = vpop.xlane.xlu0 %795
    %v797 = vsub.f32 %v754, %v787
    %v798 = vsub.f32 %v756, %v790
    %v799 = vsub.f32 %v780, %v793
    %v800 = vsub.f32 %v782, %v796
    %v801 = vmul.f32 %v797, 1.442695
    %v802 = vpow.pop %v801
    %v803 = vmul.f32 %v798, 1.442695
    %v804 = vpow.pop %v803
    %v805 = vmul.f32 %v799, 1.442695
    %v806 = vpow.pop %v805
    %v807 = vmul.f32 %v800, 1.442695
    %v808 = vpow.pop %v807
    %v809 = vsel %vm784, %v802, 0.0
    %810 = vadd.xlane.f32.xlu0 %v809
    %v811 = vpop.xlane.xlu0 %810
    %v812 = vsel %vm784, %v804, 0.0
    %813 = vadd.xlane.f32.xlu0 %v812
    %v814 = vpop.xlane.xlu0 %813
    %v815 = vsel %vm784, %v806, 0.0
    %816 = vadd.xlane.f32.xlu0 %v815
    %v817 = vpop.xlane.xlu0 %816
    %v818 = vsel %vm784, %v808, 0.0
    %819 = vadd.xlane.f32.xlu0 %v818
    %v820 = vpop.xlane.xlu0 %819
    %v821 = vrcp.pop %v811
    %v822 = vrcp.pop %v814
    %v823 = vrcp.pop %v817
    %v824 = vrcp.pop %v820
    %v825 = vmul.f32 %v802, %v821
    %v826 = vmul.f32 %v804, %v822
    %v827 = vmul.f32 %v806, %v823
    %v828 = vmul.f32 %v808, %v824
    %v829 = vpack.c.bf16 %v825, %v825
    %v830 = vpack.c.bf16 %v826, %v826
    %v831 = vpack.c.bf16 %v827, %v827
    %v832 = vpack.c.bf16 %v828, %v828
    %v835 = vunpack.c.l.b16 %v829
    %v836 = vunpack.c.l.b16 %v830
    %v837 = vpack.c.b16 %v836, %v835
    %v840 = vunpack.c.l.b16 %v728
    %v841 = vunpack.c.l.b16 %v729
    %v842 = vpack.c.b16 %v841, %v840
    %v845 = vsel %vm784, %v837, 0
    %847 = vmatpush.bf16.msra.mxu0 0
    %848 = vmatpush.bf16.msra.mxu0 0
    %849 = vmatpush.bf16.msra.mxu0 0
    %850 = vmatpush.bf16.msra.mxu0 0
    %851 = vmatpush.bf16.msra.mxu0 0
    %852 = vmatpush.bf16.msra.mxu0 0
    %853 = vmatpush.bf16.msra.mxu0 0
    %854 = vmatpush.bf16.msra.mxu0 %v842
    %855 = vmatmul.bf16.gmra.mxu0 %v845
    %v856 = vpop.f32.mrf.mxu0
    %v857 = vadd.f32 0.0, %v856
    %v858 = vpop.f32.mrf.mxu0
    %v859 = vadd.f32 0.0, %v858
    %860 = vdwg.mxu0
    %v863 = vunpack.c.l.b16 %v831
    %v864 = vunpack.c.l.b16 %v832
    %v865 = vpack.c.b16 %v864, %v863
    %v868 = vunpack.c.l.b16 %v730
    %v869 = vunpack.c.l.b16 %v731
    %v870 = vpack.c.b16 %v869, %v868
    %v873 = vsel %vm784, %v865, 0
    %875 = vmatpush.bf16.msra.mxu0 0
    %876 = vmatpush.bf16.msra.mxu0 0
    %877 = vmatpush.bf16.msra.mxu0 0
    %878 = vmatpush.bf16.msra.mxu0 0
    %879 = vmatpush.bf16.msra.mxu0 0
    %880 = vmatpush.bf16.msra.mxu0 0
    %881 = vmatpush.bf16.msra.mxu0 0
    %882 = vmatpush.bf16.msra.mxu0 %v870
    %883 = vmatmul.bf16.gmra.mxu0 %v873
    %v884 = vpop.f32.mrf.mxu0
    %v885 = vadd.f32 0.0, %v884
    %v886 = vpop.f32.mrf.mxu0
    %v887 = vadd.f32 0.0, %v886
    %888 = vdwg.mxu0
    %v889 = vpack.c.bf16 %v857, %v857
    %v890 = vpack.c.bf16 %v859, %v859
    %v891 = vpack.c.bf16 %v885, %v885
    %v892 = vpack.c.bf16 %v887, %v887
    %v894 = vperm.slane %v489, 0
    %v900 = vunpack.c.l.b16 %v889
    %v901 = vunpack.c.l.b16 %v890
    %v902 = vunpack.c.l.b16 %v891
    %v903 = vunpack.c.l.b16 %v892
    %v904 = vpack.c.b16 %v901, %v900
    %v905 = vpack.c.b16 %v903, %v902
    %v924 = vunpack.c.l.b16 %v473
    %v925 = vunpack.c.l.b16 %v474
    %v926 = vunpack.c.l.b16 %v475
    %v927 = vunpack.c.l.b16 %v476
    %v928 = vunpack.c.l.b16 %v477
    %v929 = vunpack.c.l.b16 %v478
    %v930 = vunpack.c.l.b16 %v479
    %v931 = vunpack.c.l.b16 %v480
    %v932 = vunpack.c.l.b16 %v481
    %v933 = vunpack.c.l.b16 %v482
    %v934 = vunpack.c.l.b16 %v483
    %v935 = vunpack.c.l.b16 %v484
    %v936 = vunpack.c.l.b16 %v485
    %v937 = vunpack.c.l.b16 %v486
    %v938 = vunpack.c.l.b16 %v487
    %v939 = vunpack.c.l.b16 %v488
    %v940 = vpack.c.b16 %v925, %v924
    %v941 = vpack.c.b16 %v927, %v926
    %v942 = vpack.c.b16 %v929, %v928
    %v943 = vpack.c.b16 %v931, %v930
    %v944 = vpack.c.b16 %v933, %v932
    %v945 = vpack.c.b16 %v935, %v934
    %v946 = vpack.c.b16 %v937, %v936
    %v947 = vpack.c.b16 %v939, %v938
    %956 = vmatpush.bf16.msra.mxu0 %v947
    %957 = vmatpush.bf16.msra.mxu0 %v946
    %958 = vmatpush.bf16.msra.mxu0 %v945
    %959 = vmatpush.bf16.msra.mxu0 %v944
    %960 = vmatpush.bf16.msra.mxu0 %v943
    %961 = vmatpush.bf16.msra.mxu0 %v942
    %962 = vmatpush.bf16.msra.mxu0 %v941
    %963 = vmatpush.bf16.msra.mxu0 %v940
    %964 = vmatmul.bf16.gmra.mxu0 %v904
    %v965 = vpop.f32.mrf.mxu0
    %v966 = vadd.f32 %v894, %v965
    %v967 = vpop.f32.mrf.mxu0
    %v968 = vadd.f32 %v894, %v967
    %969 = vmatmul.bf16.gmra.mxu0 %v905
    %v970 = vpop.f32.mrf.mxu0
    %v971 = vadd.f32 %v894, %v970
    %v972 = vpop.f32.mrf.mxu0
    %v973 = vadd.f32 %v894, %v972
    %974 = vdwg.mxu0
    %v975 = vmax.f32 %v966, 0.0
    %v976 = vmax.f32 %v968, 0.0
    %v977 = vmax.f32 %v971, 0.0
    %v978 = vmax.f32 %v973, 0.0
    %v979 = vpack.c.bf16 %v976, %v975
    %v980 = vpack.c.bf16 %v978, %v977
    %v982 = vperm.slane %v506, 0
    %v1000 = vunpack.c.l.b16 %v490
    %v1001 = vunpack.c.l.b16 %v491
    %v1002 = vunpack.c.l.b16 %v492
    %v1003 = vunpack.c.l.b16 %v493
    %v1004 = vunpack.c.l.b16 %v494
    %v1005 = vunpack.c.l.b16 %v495
    %v1006 = vunpack.c.l.b16 %v496
    %v1007 = vunpack.c.l.b16 %v497
    %v1008 = vunpack.c.l.b16 %v498
    %v1009 = vunpack.c.l.b16 %v499
    %v1010 = vunpack.c.l.b16 %v500
    %v1011 = vunpack.c.l.b16 %v501
    %v1012 = vunpack.c.l.b16 %v502
    %v1013 = vunpack.c.l.b16 %v503
    %v1014 = vunpack.c.l.b16 %v504
    %v1015 = vunpack.c.l.b16 %v505
    %v1016 = vpack.c.b16 %v1001, %v1000
    %v1017 = vpack.c.b16 %v1003, %v1002
    %v1018 = vpack.c.b16 %v1005, %v1004
    %v1019 = vpack.c.b16 %v1007, %v1006
    %v1020 = vpack.c.b16 %v1009, %v1008
    %v1021 = vpack.c.b16 %v1011, %v1010
    %v1022 = vpack.c.b16 %v1013, %v1012
    %v1023 = vpack.c.b16 %v1015, %v1014
    %1032 = vmatpush.bf16.msra.mxu0 %v1023
    %1033 = vmatpush.bf16.msra.mxu0 %v1022
    %1034 = vmatpush.bf16.msra.mxu0 %v1021
    %1035 = vmatpush.bf16.msra.mxu0 %v1020
    %1036 = vmatpush.bf16.msra.mxu0 %v1019
    %1037 = vmatpush.bf16.msra.mxu0 %v1018
    %1038 = vmatpush.bf16.msra.mxu0 %v1017
    %1039 = vmatpush.bf16.msra.mxu0 %v1016
    %1040 = vmatmul.bf16.gmra.mxu0 %v979
    %v1041 = vpop.f32.mrf.mxu0
    %v1042 = vadd.f32 %v982, %v1041
    %v1043 = vpop.f32.mrf.mxu0
    %v1044 = vadd.f32 %v982, %v1043
    %1045 = vmatmul.bf16.gmra.mxu0 %v980
    %v1046 = vpop.f32.mrf.mxu0
    %v1047 = vadd.f32 %v982, %v1046
    %v1048 = vpop.f32.mrf.mxu0
    %v1049 = vadd.f32 %v982, %v1048
    %1050 = vdwg.mxu0
    %v1051 = vpack.c.bf16 %v1044, %v1042
    %v1052 = vpack.c.bf16 %v1049, %v1047
    %s1053 = scalar_lea.vmem [#allocation7], 64
    %v1054 = vld [vmem:[%s1053] sm:$0xf]
    %v1055 = vld [vmem:[%s1053 + $0x4] sm:$0xf]
    %v1056 = vld [vmem:[%s1053 + $0x8] sm:$0xf]
    %v1057 = vld [vmem:[%s1053 + $0xc] sm:$0xf]
    %v1058 = vld [vmem:[%s1053 + $0x10] sm:$0xf]
    %v1059 = vld [vmem:[%s1053 + $0x14] sm:$0xf]
    %v1060 = vld [vmem:[%s1053 + $0x18] sm:$0xf]
    %v1061 = vld [vmem:[%s1053 + $0x1c] sm:$0xf]
    %v1062 = vld [vmem:[%s1053 + $0x20] sm:$0xf]
    %v1063 = vld [vmem:[%s1053 + $0x24] sm:$0xf]
    %v1064 = vld [vmem:[%s1053 + $0x28] sm:$0xf]
    %v1065 = vld [vmem:[%s1053 + $0x2c] sm:$0xf]
    %v1066 = vld [vmem:[%s1053 + $0x30] sm:$0xf]
    %v1067 = vld [vmem:[%s1053 + $0x34] sm:$0xf]
    %v1068 = vld [vmem:[%s1053 + $0x38] sm:$0xf]
    %v1069 = vld [vmem:[%s1053 + $0x3c] sm:$0xf]
    %s1070 = scalar_lea.vmem [#allocation8], 64
    %v1071 = vld [vmem:[%s1070] sm:$0xf]
    %v1072 = vld [vmem:[%s1070 + $0x4] sm:$0xf]
    %v1073 = vld [vmem:[%s1070 + $0x8] sm:$0xf]
    %v1074 = vld [vmem:[%s1070 + $0xc] sm:$0xf]
    %v1075 = vld [vmem:[%s1070 + $0x10] sm:$0xf]
    %v1076 = vld [vmem:[%s1070 + $0x14] sm:$0xf]
    %v1077 = vld [vmem:[%s1070 + $0x18] sm:$0xf]
    %v1078 = vld [vmem:[%s1070 + $0x1c] sm:$0xf]
    %v1079 = vld [vmem:[%s1070 + $0x20] sm:$0xf]
    %v1080 = vld [vmem:[%s1070 + $0x24] sm:$0xf]
    %v1081 = vld [vmem:[%s1070 + $0x28] sm:$0xf]
    %v1082 = vld [vmem:[%s1070 + $0x2c] sm:$0xf]
    %v1083 = vld [vmem:[%s1070 + $0x30] sm:$0xf]
    %v1084 = vld [vmem:[%s1070 + $0x34] sm:$0xf]
    %v1085 = vld [vmem:[%s1070 + $0x38] sm:$0xf]
    %v1086 = vld [vmem:[%s1070 + $0x3c] sm:$0xf]
    %s1087 = scalar_lea.vmem [#allocation10], 64
    %v1088 = vld [vmem:[%s1087] sm:$0xf]
    %v1089 = vld [vmem:[%s1087 + $0x4] sm:$0xf]
    %v1090 = vld [vmem:[%s1087 + $0x8] sm:$0xf]
    %v1091 = vld [vmem:[%s1087 + $0xc] sm:$0xf]
    %v1092 = vld [vmem:[%s1087 + $0x10] sm:$0xf]
    %v1093 = vld [vmem:[%s1087 + $0x14] sm:$0xf]
    %v1094 = vld [vmem:[%s1087 + $0x18] sm:$0xf]
    %v1095 = vld [vmem:[%s1087 + $0x1c] sm:$0xf]
    %v1096 = vld [vmem:[%s1087 + $0x20] sm:$0xf]
    %v1097 = vld [vmem:[%s1087 + $0x24] sm:$0xf]
    %v1098 = vld [vmem:[%s1087 + $0x28] sm:$0xf]
    %v1099 = vld [vmem:[%s1087 + $0x2c] sm:$0xf]
    %v1100 = vld [vmem:[%s1087 + $0x30] sm:$0xf]
    %v1101 = vld [vmem:[%s1087 + $0x34] sm:$0xf]
    %v1102 = vld [vmem:[%s1087 + $0x38] sm:$0xf]
    %v1103 = vld [vmem:[%s1087 + $0x3c] sm:$0xf]
    %s1104 = scalar_lea.vmem [#allocation11], 64
    %v1105 = vld [vmem:[%s1104] sm:$0xf]
    %v1106 = vld [vmem:[%s1104 + $0x4] sm:$0xf]
    %v1107 = vld [vmem:[%s1104 + $0x8] sm:$0xf]
    %v1108 = vld [vmem:[%s1104 + $0xc] sm:$0xf]
    %v1109 = vld [vmem:[%s1104 + $0x10] sm:$0xf]
    %v1110 = vld [vmem:[%s1104 + $0x14] sm:$0xf]
    %v1111 = vld [vmem:[%s1104 + $0x18] sm:$0xf]
    %v1112 = vld [vmem:[%s1104 + $0x1c] sm:$0xf]
    %v1113 = vld [vmem:[%s1104 + $0x20] sm:$0xf]
    %v1114 = vld [vmem:[%s1104 + $0x24] sm:$0xf]
    %v1115 = vld [vmem:[%s1104 + $0x28] sm:$0xf]
    %v1116 = vld [vmem:[%s1104 + $0x2c] sm:$0xf]
    %v1117 = vld [vmem:[%s1104 + $0x30] sm:$0xf]
    %v1118 = vld [vmem:[%s1104 + $0x34] sm:$0xf]
    %v1119 = vld [vmem:[%s1104 + $0x38] sm:$0xf]
    %v1120 = vld [vmem:[%s1104 + $0x3c] sm:$0xf]
    %s1121 = scalar_lea.vmem %s8, 1
    %v1122 = vld [vmem:[%s1121] sm:$0x1]
    %s1123 = scalar_lea.vmem [#allocation13], 64
    %v1124 = vld [vmem:[%s1123] sm:$0xf]
    %v1125 = vld [vmem:[%s1123 + $0x4] sm:$0xf]
    %v1126 = vld [vmem:[%s1123 + $0x8] sm:$0xf]
    %v1127 = vld [vmem:[%s1123 + $0xc] sm:$0xf]
    %v1128 = vld [vmem:[%s1123 + $0x10] sm:$0xf]
    %v1129 = vld [vmem:[%s1123 + $0x14] sm:$0xf]
    %v1130 = vld [vmem:[%s1123 + $0x18] sm:$0xf]
    %v1131 = vld [vmem:[%s1123 + $0x1c] sm:$0xf]
    %v1132 = vld [vmem:[%s1123 + $0x20] sm:$0xf]
    %v1133 = vld [vmem:[%s1123 + $0x24] sm:$0xf]
    %v1134 = vld [vmem:[%s1123 + $0x28] sm:$0xf]
    %v1135 = vld [vmem:[%s1123 + $0x2c] sm:$0xf]
    %v1136 = vld [vmem:[%s1123 + $0x30] sm:$0xf]
    %v1137 = vld [vmem:[%s1123 + $0x34] sm:$0xf]
    %v1138 = vld [vmem:[%s1123 + $0x38] sm:$0xf]
    %v1139 = vld [vmem:[%s1123 + $0x3c] sm:$0xf]
    %s1140 = scalar_lea.vmem %s10, 1
    %v1141 = vld [vmem:[%s1140] sm:$0x1]
    %v1158 = vunpack.c.l.b16 %v1054
    %v1159 = vunpack.c.l.b16 %v1055
    %v1160 = vunpack.c.l.b16 %v1056
    %v1161 = vunpack.c.l.b16 %v1057
    %v1162 = vunpack.c.l.b16 %v1058
    %v1163 = vunpack.c.l.b16 %v1059
    %v1164 = vunpack.c.l.b16 %v1060
    %v1165 = vunpack.c.l.b16 %v1061
    %v1166 = vunpack.c.l.b16 %v1062
    %v1167 = vunpack.c.l.b16 %v1063
    %v1168 = vunpack.c.l.b16 %v1064
    %v1169 = vunpack.c.l.b16 %v1065
    %v1170 = vunpack.c.l.b16 %v1066
    %v1171 = vunpack.c.l.b16 %v1067
    %v1172 = vunpack.c.l.b16 %v1068
    %v1173 = vunpack.c.l.b16 %v1069
    %v1174 = vpack.c.b16 %v1159, %v1158
    %v1175 = vpack.c.b16 %v1161, %v1160
    %v1176 = vpack.c.b16 %v1163, %v1162
    %v1177 = vpack.c.b16 %v1165, %v1164
    %v1178 = vpack.c.b16 %v1167, %v1166
    %v1179 = vpack.c.b16 %v1169, %v1168
    %v1180 = vpack.c.b16 %v1171, %v1170
    %v1181 = vpack.c.b16 %v1173, %v1172
    %1190 = vmatpush.bf16.msra.mxu0 %v1181
    %1191 = vmatpush.bf16.msra.mxu0 %v1180
    %1192 = vmatpush.bf16.msra.mxu0 %v1179
    %1193 = vmatpush.bf16.msra.mxu0 %v1178
    %1194 = vmatpush.bf16.msra.mxu0 %v1177
    %1195 = vmatpush.bf16.msra.mxu0 %v1176
    %1196 = vmatpush.bf16.msra.mxu0 %v1175
    %1197 = vmatpush.bf16.msra.mxu0 %v1174
    %1198 = vmatmul.bf16.gmra.mxu0 %v1051
    %v1199 = vpop.f32.mrf.mxu0
    %v1200 = vadd.f32 0.0, %v1199
    %v1201 = vpop.f32.mrf.mxu0
    %v1202 = vadd.f32 0.0, %v1201
    %1203 = vmatmul.bf16.gmra.mxu0 %v1052
    %v1204 = vpop.f32.mrf.mxu0
    %v1205 = vadd.f32 0.0, %v1204
    %v1206 = vpop.f32.mrf.mxu0
    %v1207 = vadd.f32 0.0, %v1206
    %1208 = vdwg.mxu0
    %v1209 = vpack.c.bf16 %v1200, %v1200
    %v1210 = vpack.c.bf16 %v1202, %v1202
    %v1211 = vpack.c.bf16 %v1205, %v1205
    %v1212 = vpack.c.bf16 %v1207, %v1207
    %v1229 = vunpack.c.l.b16 %v1071
    %v1230 = vunpack.c.l.b16 %v1072
    %v1231 = vunpack.c.l.b16 %v1073
    %v1232 = vunpack.c.l.b16 %v1074
    %v1233 = vunpack.c.l.b16 %v1075
    %v1234 = vunpack.c.l.b16 %v1076
    %v1235 = vunpack.c.l.b16 %v1077
    %v1236 = vunpack.c.l.b16 %v1078
    %v1237 = vunpack.c.l.b16 %v1079
    %v1238 = vunpack.c.l.b16 %v1080
    %v1239 = vunpack.c.l.b16 %v1081
    %v1240 = vunpack.c.l.b16 %v1082
    %v1241 = vunpack.c.l.b16 %v1083
    %v1242 = vunpack.c.l.b16 %v1084
    %v1243 = vunpack.c.l.b16 %v1085
    %v1244 = vunpack.c.l.b16 %v1086
    %v1245 = vpack.c.b16 %v1230, %v1229
    %v1246 = vpack.c.b16 %v1232, %v1231
    %v1247 = vpack.c.b16 %v1234, %v1233
    %v1248 = vpack.c.b16 %v1236, %v1235
    %v1249 = vpack.c.b16 %v1238, %v1237
    %v1250 = vpack.c.b16 %v1240, %v1239
    %v1251 = vpack.c.b16 %v1242, %v1241
    %v1252 = vpack.c.b16 %v1244, %v1243
    %1261 = vmatpush.bf16.msra.mxu0 %v1252
    %1262 = vmatpush.bf16.msra.mxu0 %v1251
    %1263 = vmatpush.bf16.msra.mxu0 %v1250
    %1264 = vmatpush.bf16.msra.mxu0 %v1249
    %1265 = vmatpush.bf16.msra.mxu0 %v1248
    %1266 = vmatpush.bf16.msra.mxu0 %v1247
    %1267 = vmatpush.bf16.msra.mxu0 %v1246
    %1268 = vmatpush.bf16.msra.mxu0 %v1245
    %1269 = vmatmul.bf16.gmra.mxu0 %v1051
    %v1270 = vpop.f32.mrf.mxu0
    %v1271 = vadd.f32 0.0, %v1270
    %v1272 = vpop.f32.mrf.mxu0
    %v1273 = vadd.f32 0.0, %v1272
    %1274 = vmatmul.bf16.gmra.mxu0 %v1052
    %v1275 = vpop.f32.mrf.mxu0
    %v1276 = vadd.f32 0.0, %v1275
    %v1277 = vpop.f32.mrf.mxu0
    %v1278 = vadd.f32 0.0, %v1277
    %1279 = vdwg.mxu0
    %v1280 = vpack.c.bf16 %v1271, %v1271
    %v1281 = vpack.c.bf16 %v1273, %v1273
    %v1282 = vpack.c.bf16 %v1276, %v1276
    %v1283 = vpack.c.bf16 %v1278, %v1278
    %v1300 = vunpack.c.l.b16 %v1088
    %v1301 = vunpack.c.l.b16 %v1089
    %v1302 = vunpack.c.l.b16 %v1090
    %v1303 = vunpack.c.l.b16 %v1091
    %v1304 = vunpack.c.l.b16 %v1092
    %v1305 = vunpack.c.l.b16 %v1093
    %v1306 = vunpack.c.l.b16 %v1094
    %v1307 = vunpack.c.l.b16 %v1095
    %v1308 = vunpack.c.l.b16 %v1096
    %v1309 = vunpack.c.l.b16 %v1097
    %v1310 = vunpack.c.l.b16 %v1098
    %v1311 = vunpack.c.l.b16 %v1099
    %v1312 = vunpack.c.l.b16 %v1100
    %v1313 = vunpack.c.l.b16 %v1101
    %v1314 = vunpack.c.l.b16 %v1102
    %v1315 = vunpack.c.l.b16 %v1103
    %v1316 = vpack.c.b16 %v1301, %v1300
    %v1317 = vpack.c.b16 %v1303, %v1302
    %v1318 = vpack.c.b16 %v1305, %v1304
    %v1319 = vpack.c.b16 %v1307, %v1306
    %v1320 = vpack.c.b16 %v1309, %v1308
    %v1321 = vpack.c.b16 %v1311, %v1310
    %v1322 = vpack.c.b16 %v1313, %v1312
    %v1323 = vpack.c.b16 %v1315, %v1314
    %1332 = vmatpush.bf16.msra.mxu0 %v1323
    %1333 = vmatpush.bf16.msra.mxu0 %v1322
    %1334 = vmatpush.bf16.msra.mxu0 %v1321
    %1335 = vmatpush.bf16.msra.mxu0 %v1320
    %1336 = vmatpush.bf16.msra.mxu0 %v1319
    %1337 = vmatpush.bf16.msra.mxu0 %v1318
    %1338 = vmatpush.bf16.msra.mxu0 %v1317
    %1339 = vmatpush.bf16.msra.mxu0 %v1316
    %1340 = vmatmul.bf16.gmra.mxu0 %v1051
    %v1341 = vpop.f32.mrf.mxu0
    %v1342 = vadd.f32 0.0, %v1341
    %v1343 = vpop.f32.mrf.mxu0
    %v1344 = vadd.f32 0.0, %v1343
    %1345 = vmatmul.bf16.gmra.mxu0 %v1052
    %v1346 = vpop.f32.mrf.mxu0
    %v1347 = vadd.f32 0.0, %v1346
    %v1348 = vpop.f32.mrf.mxu0
    %v1349 = vadd.f32 0.0, %v1348
    %1350 = vdwg.mxu0
    %v1351 = vpack.c.bf16 %v1342, %v1342
    %v1352 = vpack.c.bf16 %v1344, %v1344
    %v1353 = vpack.c.bf16 %v1347, %v1347
    %v1354 = vpack.c.bf16 %v1349, %v1349
    %v1357 = vunpack.c.l.b16 %v1209
    %v1358 = vunpack.c.l.b16 %v1210
    %v1359 = vpack.c.b16 %v1358, %v1357
    %v1363 = vunpack.c.l.b16 %v1280
    %v1364 = vunpack.c.l.b16 %v1281
    %v1365 = vpack.c.b16 %v1364, %v1363
    %1367 = vmatpush.bf16.xpose.msra.mxu0 0
    %1368 = vmatpush.bf16.xpose.msra.mxu0 0
    %1369 = vmatpush.bf16.xpose.msra.mxu0 0
    %1370 = vmatpush.bf16.xpose.msra.mxu0 0
    %1371 = vmatpush.bf16.xpose.msra.mxu0 0
    %1372 = vmatpush.bf16.xpose.msra.mxu0 0
    %1373 = vmatpush.bf16.xpose.msra.mxu0 0
    %1374 = vmatpush.bf16.xpose.msra.mxu0 %v1365
    %1375 = vmatmul.bf16.gmra.mxu0 %v1359
    %v1376 = vpop.f32.mrf.mxu0
    %v1377 = vadd.f32 0.0, %v1376
    %v1378 = vpop.f32.mrf.mxu0
    %v1379 = vadd.f32 0.0, %v1378
    %1380 = vdwg.mxu0
    %v1383 = vunpack.c.l.b16 %v1211
    %v1384 = vunpack.c.l.b16 %v1212
    %v1385 = vpack.c.b16 %v1384, %v1383
    %v1389 = vunpack.c.l.b16 %v1282
    %v1390 = vunpack.c.l.b16 %v1283
    %v1391 = vpack.c.b16 %v1390, %v1389
    %1393 = vmatpush.bf16.xpose.msra.mxu0 0
    %1394 = vmatpush.bf16.xpose.msra.mxu0 0
    %1395 = vmatpush.bf16.xpose.msra.mxu0 0
    %1396 = vmatpush.bf16.xpose.msra.mxu0 0
    %1397 = vmatpush.bf16.xpose.msra.mxu0 0
    %1398 = vmatpush.bf16.xpose.msra.mxu0 0
    %1399 = vmatpush.bf16.xpose.msra.mxu0 0
    %1400 = vmatpush.bf16.xpose.msra.mxu0 %v1391
    %1401 = vmatmul.bf16.gmra.mxu0 %v1385
    %v1402 = vpop.f32.mrf.mxu0
    %v1403 = vadd.f32 0.0, %v1402
    %v1404 = vpop.f32.mrf.mxu0
    %v1405 = vadd.f32 0.0, %v1404
    %1406 = vdwg.mxu0
    %v1407 = vsel %vm784, %v1377, -inf
    %1408 = vmax.xlane.f32.xlu0 %v1407
    %v1409 = vpop.xlane.xlu0 %1408
    %v1410 = vsel %vm784, %v1379, -inf
    %1411 = vmax.xlane.f32.xlu0 %v1410
    %v1412 = vpop.xlane.xlu0 %1411
    %v1413 = vsel %vm784, %v1403, -inf
    %1414 = vmax.xlane.f32.xlu0 %v1413
    %v1415 = vpop.xlane.xlu0 %1414
    %v1416 = vsel %vm784, %v1405, -inf
    %1417 = vmax.xlane.f32.xlu0 %v1416
    %v1418 = vpop.xlane.xlu0 %1417
    %v1419 = vsub.f32 %v1377, %v1409
    %v1420 = vsub.f32 %v1379, %v1412
    %v1421 = vsub.f32 %v1403, %v1415
    %v1422 = vsub.f32 %v1405, %v1418
    %v1423 = vmul.f32 %v1419, 1.442695
    %v1424 = vpow.pop %v1423
    %v1425 = vmul.f32 %v1420, 1.442695
    %v1426 = vpow.pop %v1425
    %v1427 = vmul.f32 %v1421, 1.442695
    %v1428 = vpow.pop %v1427
    %v1429 = vmul.f32 %v1422, 1.442695
    %v1430 = vpow.pop %v1429
    %v1431 = vsel %vm784, %v1424, 0.0
    %1432 = vadd.xlane.f32.xlu0 %v1431
    %v1433 = vpop.xlane.xlu0 %1432
    %v1434 = vsel %vm784, %v1426, 0.0
    %1435 = vadd.xlane.f32.xlu0 %v1434
    %v1436 = vpop.xlane.xlu0 %1435
    %v1437 = vsel %vm784, %v1428, 0.0
    %1438 = vadd.xlane.f32.xlu0 %v1437
    %v1439 = vpop.xlane.xlu0 %1438
    %v1440 = vsel %vm784, %v1430, 0.0
    %1441 = vadd.xlane.f32.xlu0 %v1440
    %v1442 = vpop.xlane.xlu0 %1441
    %v1443 = vrcp.pop %v1433
    %v1444 = vrcp.pop %v1436
    %v1445 = vrcp.pop %v1439
    %v1446 = vrcp.pop %v1442
    %v1447 = vmul.f32 %v1424, %v1443
    %v1448 = vmul.f32 %v1426, %v1444
    %v1449 = vmul.f32 %v1428, %v1445
    %v1450 = vmul.f32 %v1430, %v1446
    %v1451 = vpack.c.bf16 %v1447, %v1447
    %v1452 = vpack.c.bf16 %v1448, %v1448
    %v1453 = vpack.c.bf16 %v1449, %v1449
    %v1454 = vpack.c.bf16 %v1450, %v1450
    %v1457 = vunpack.c.l.b16 %v1451
    %v1458 = vunpack.c.l.b16 %v1452
    %v1459 = vpack.c.b16 %v1458, %v1457
    %v1462 = vunpack.c.l.b16 %v1351
    %v1463 = vunpack.c.l.b16 %v1352
    %v1464 = vpack.c.b16 %v1463, %v1462
    %v1467 = vsel %vm784, %v1459, 0
    %1469 = vmatpush.bf16.msra.mxu0 0
    %1470 = vmatpush.bf16.msra.mxu0 0
    %1471 = vmatpush.bf16.msra.mxu0 0
    %1472 = vmatpush.bf16.msra.mxu0 0
    %1473 = vmatpush.bf16.msra.mxu0 0
    %1474 = vmatpush.bf16.msra.mxu0 0
    %1475 = vmatpush.bf16.msra.mxu0 0
    %1476 = vmatpush.bf16.msra.mxu0 %v1464
    %1477 = vmatmul.bf16.gmra.mxu0 %v1467
    %v1478 = vpop.f32.mrf.mxu0
    %v1479 = vadd.f32 0.0, %v1478
    %v1480 = vpop.f32.mrf.mxu0
    %v1481 = vadd.f32 0.0, %v1480
    %1482 = vdwg.mxu0
    %v1485 = vunpack.c.l.b16 %v1453
    %v1486 = vunpack.c.l.b16 %v1454
    %v1487 = vpack.c.b16 %v1486, %v1485
    %v1490 = vunpack.c.l.b16 %v1353
    %v1491 = vunpack.c.l.b16 %v1354
    %v1492 = vpack.c.b16 %v1491, %v1490
    %v1495 = vsel %vm784, %v1487, 0
    %1497 = vmatpush.bf16.msra.mxu0 0
    %1498 = vmatpush.bf16.msra.mxu0 0
    %1499 = vmatpush.bf16.msra.mxu0 0
    %1500 = vmatpush.bf16.msra.mxu0 0
    %1501 = vmatpush.bf16.msra.mxu0 0
    %1502 = vmatpush.bf16.msra.mxu0 0
    %1503 = vmatpush.bf16.msra.mxu0 0
    %1504 = vmatpush.bf16.msra.mxu0 %v1492
    %1505 = vmatmul.bf16.gmra.mxu0 %v1495
    %v1506 = vpop.f32.mrf.mxu0
    %v1507 = vadd.f32 0.0, %v1506
    %v1508 = vpop.f32.mrf.mxu0
    %v1509 = vadd.f32 0.0, %v1508
    %1510 = vdwg.mxu0
    %v1511 = vpack.c.bf16 %v1479, %v1479
    %v1512 = vpack.c.bf16 %v1481, %v1481
    %v1513 = vpack.c.bf16 %v1507, %v1507
    %v1514 = vpack.c.bf16 %v1509, %v1509
    %v1516 = vperm.slane %v1122, 0
    %v1522 = vunpack.c.l.b16 %v1511
    %v1523 = vunpack.c.l.b16 %v1512
    %v1524 = vunpack.c.l.b16 %v1513
    %v1525 = vunpack.c.l.b16 %v1514
    %v1526 = vpack.c.b16 %v1523, %v1522
    %v1527 = vpack.c.b16 %v1525, %v1524
    %v1546 = vunpack.c.l.b16 %v1105
    %v1547 = vunpack.c.l.b16 %v1106
    %v1548 = vunpack.c.l.b16 %v1107
    %v1549 = vunpack.c.l.b16 %v1108
    %v1550 = vunpack.c.l.b16 %v1109
    %v1551 = vunpack.c.l.b16 %v1110
    %v1552 = vunpack.c.l.b16 %v1111
    %v1553 = vunpack.c.l.b16 %v1112
    %v1554 = vunpack.c.l.b16 %v1113
    %v1555 = vunpack.c.l.b16 %v1114
    %v1556 = vunpack.c.l.b16 %v1115
    %v1557 = vunpack.c.l.b16 %v1116
    %v1558 = vunpack.c.l.b16 %v1117
    %v1559 = vunpack.c.l.b16 %v1118
    %v1560 = vunpack.c.l.b16 %v1119
    %v1561 = vunpack.c.l.b16 %v1120
    %v1562 = vpack.c.b16 %v1547, %v1546
    %v1563 = vpack.c.b16 %v1549, %v1548
    %v1564 = vpack.c.b16 %v1551, %v1550
    %v1565 = vpack.c.b16 %v1553, %v1552
    %v1566 = vpack.c.b16 %v1555, %v1554
    %v1567 = vpack.c.b16 %v1557, %v1556
    %v1568 = vpack.c.b16 %v1559, %v1558
    %v1569 = vpack.c.b16 %v1561, %v1560
    %1578 = vmatpush.bf16.msra.mxu0 %v1569
    %1579 = vmatpush.bf16.msra.mxu0 %v1568
    %1580 = vmatpush.bf16.msra.mxu0 %v1567
    %1581 = vmatpush.bf16.msra.mxu0 %v1566
    %1582 = vmatpush.bf16.msra.mxu0 %v1565
    %1583 = vmatpush.bf16.msra.mxu0 %v1564
    %1584 = vmatpush.bf16.msra.mxu0 %v1563
    %1585 = vmatpush.bf16.msra.mxu0 %v1562
    %1586 = vmatmul.bf16.gmra.mxu0 %v1526
    %v1587 = vpop.f32.mrf.mxu0
    %v1588 = vadd.f32 %v1516, %v1587
    %v1589 = vpop.f32.mrf.mxu0
    %v1590 = vadd.f32 %v1516, %v1589
    %1591 = vmatmul.bf16.gmra.mxu0 %v1527
    %v1592 = vpop.f32.mrf.mxu0
    %v1593 = vadd.f32 %v1516, %v1592
    %v1594 = vpop.f32.mrf.mxu0
    %v1595 = vadd.f32 %v1516, %v1594
    %1596 = vdwg.mxu0
    %v1597 = vmax.f32 %v1588, 0.0
    %v1598 = vmax.f32 %v1590, 0.0
    %v1599 = vmax.f32 %v1593, 0.0
    %v1600 = vmax.f32 %v1595, 0.0
    %v1601 = vpack.c.bf16 %v1598, %v1597
    %v1602 = vpack.c.bf16 %v1600, %v1599
    %v1604 = vperm.slane %v1141, 0
    %v1622 = vunpack.c.l.b16 %v1124
    %v1623 = vunpack.c.l.b16 %v1125
    %v1624 = vunpack.c.l.b16 %v1126
    %v1625 = vunpack.c.l.b16 %v1127
    %v1626 = vunpack.c.l.b16 %v1128
    %v1627 = vunpack.c.l.b16 %v1129
    %v1628 = vunpack.c.l.b16 %v1130
    %v1629 = vunpack.c.l.b16 %v1131
    %v1630 = vunpack.c.l.b16 %v1132
    %v1631 = vunpack.c.l.b16 %v1133
    %v1632 = vunpack.c.l.b16 %v1134
    %v1633 = vunpack.c.l.b16 %v1135
    %v1634 = vunpack.c.l.b16 %v1136
    %v1635 = vunpack.c.l.b16 %v1137
    %v1636 = vunpack.c.l.b16 %v1138
    %v1637 = vunpack.c.l.b16 %v1139
    %v1638 = vpack.c.b16 %v1623, %v1622
    %v1639 = vpack.c.b16 %v1625, %v1624
    %v1640 = vpack.c.b16 %v1627, %v1626
    %v1641 = vpack.c.b16 %v1629, %v1628
    %v1642 = vpack.c.b16 %v1631, %v1630
    %v1643 = vpack.c.b16 %v1633, %v1632
    %v1644 = vpack.c.b16 %v1635, %v1634
    %v1645 = vpack.c.b16 %v1637, %v1636
    %1654 = vmatpush.bf16.msra.mxu0 %v1645
    %1655 = vmatpush.bf16.msra.mxu0 %v1644
    %1656 = vmatpush.bf16.msra.mxu0 %v1643
    %1657 = vmatpush.bf16.msra.mxu0 %v1642
    %1658 = vmatpush.bf16.msra.mxu0 %v1641
    %1659 = vmatpush.bf16.msra.mxu0 %v1640
    %1660 = vmatpush.bf16.msra.mxu0 %v1639
    %1661 = vmatpush.bf16.msra.mxu0 %v1638
    %1662 = vmatmul.bf16.gmra.mxu0 %v1601
    %v1663 = vpop.f32.mrf.mxu0
    %v1664 = vadd.f32 %v1604, %v1663
    %v1665 = vpop.f32.mrf.mxu0
    %v1666 = vadd.f32 %v1604, %v1665
    %1667 = vmatmul.bf16.gmra.mxu0 %v1602
    %v1668 = vpop.f32.mrf.mxu0
    %v1669 = vadd.f32 %v1604, %v1668
    %v1670 = vpop.f32.mrf.mxu0
    %v1671 = vadd.f32 %v1604, %v1670
    %1672 = vdwg.mxu0
    %v1673 = vpack.c.bf16 %v1666, %v1664
    %v1674 = vpack.c.bf16 %v1671, %v1669
    %v1675 = vld [vmem:[#allocation14] sm:$0xf]
    %v1676 = vld [vmem:[#allocation14 + $0x4] sm:$0xf]
    %v1677 = vld [vmem:[#allocation14 + $0x8] sm:$0xf]
    %v1678 = vld [vmem:[#allocation14 + $0xc] sm:$0xf]
    %v1679 = vld [vmem:[#allocation14 + $0x10] sm:$0xf]
    %v1680 = vld [vmem:[#allocation14 + $0x14] sm:$0xf]
    %v1681 = vld [vmem:[#allocation14 + $0x18] sm:$0xf]
    %v1682 = vld [vmem:[#allocation14 + $0x1c] sm:$0xf]
    %v1683 = vld [vmem:[#allocation14 + $0x20] sm:$0xf]
    %v1684 = vld [vmem:[#allocation14 + $0x24] sm:$0xf]
    %v1685 = vld [vmem:[#allocation14 + $0x28] sm:$0xf]
    %v1686 = vld [vmem:[#allocation14 + $0x2c] sm:$0xf]
    %v1687 = vld [vmem:[#allocation14 + $0x30] sm:$0xf]
    %v1688 = vld [vmem:[#allocation14 + $0x34] sm:$0xf]
    %v1689 = vld [vmem:[#allocation14 + $0x38] sm:$0xf]
    %v1690 = vld [vmem:[#allocation14 + $0x3c] sm:$0xf]
    %v1691 = vld [vmem:[#allocation16] sm:$0xf]
    %v1692 = vld [vmem:[#allocation16 + $0x4] sm:$0xf]
    %v1693 = vld [vmem:[#allocation16 + $0x8] sm:$0xf]
    %v1694 = vld [vmem:[#allocation16 + $0xc] sm:$0xf]
    %v1695 = vld [vmem:[#allocation16 + $0x10] sm:$0xf]
    %v1696 = vld [vmem:[#allocation16 + $0x14] sm:$0xf]
    %v1697 = vld [vmem:[#allocation16 + $0x18] sm:$0xf]
    %v1698 = vld [vmem:[#allocation16 + $0x1c] sm:$0xf]
    %v1699 = vld [vmem:[#allocation16 + $0x20] sm:$0xf]
    %v1700 = vld [vmem:[#allocation16 + $0x24] sm:$0xf]
    %v1701 = vld [vmem:[#allocation16 + $0x28] sm:$0xf]
    %v1702 = vld [vmem:[#allocation16 + $0x2c] sm:$0xf]
    %v1703 = vld [vmem:[#allocation16 + $0x30] sm:$0xf]
    %v1704 = vld [vmem:[#allocation16 + $0x34] sm:$0xf]
    %v1705 = vld [vmem:[#allocation16 + $0x38] sm:$0xf]
    %v1706 = vld [vmem:[#allocation16 + $0x3c] sm:$0xf]
    %v1707 = vld [vmem:[#allocation17] sm:$0xf]
    %v1708 = vld [vmem:[#allocation17 + $0x4] sm:$0xf]
    %v1709 = vld [vmem:[#allocation17 + $0x8] sm:$0xf]
    %v1710 = vld [vmem:[#allocation17 + $0xc] sm:$0xf]
    %v1711 = vld [vmem:[#allocation17 + $0x10] sm:$0xf]
    %v1712 = vld [vmem:[#allocation17 + $0x14] sm:$0xf]
    %v1713 = vld [vmem:[#allocation17 + $0x18] sm:$0xf]
    %v1714 = vld [vmem:[#allocation17 + $0x1c] sm:$0xf]
    %v1715 = vld [vmem:[#allocation17 + $0x20] sm:$0xf]
    %v1716 = vld [vmem:[#allocation17 + $0x24] sm:$0xf]
    %v1717 = vld [vmem:[#allocation17 + $0x28] sm:$0xf]
    %v1718 = vld [vmem:[#allocation17 + $0x2c] sm:$0xf]
    %v1719 = vld [vmem:[#allocation17 + $0x30] sm:$0xf]
    %v1720 = vld [vmem:[#allocation17 + $0x34] sm:$0xf]
    %v1721 = vld [vmem:[#allocation17 + $0x38] sm:$0xf]
    %v1722 = vld [vmem:[#allocation17 + $0x3c] sm:$0xf]
    %v1723 = vld [vmem:[#allocation19] sm:$0xf]
    %v1724 = vld [vmem:[#allocation19 + $0x4] sm:$0xf]
    %v1725 = vld [vmem:[#allocation19 + $0x8] sm:$0xf]
    %v1726 = vld [vmem:[#allocation19 + $0xc] sm:$0xf]
    %v1727 = vld [vmem:[#allocation19 + $0x10] sm:$0xf]
    %v1728 = vld [vmem:[#allocation19 + $0x14] sm:$0xf]
    %v1729 = vld [vmem:[#allocation19 + $0x18] sm:$0xf]
    %v1730 = vld [vmem:[#allocation19 + $0x1c] sm:$0xf]
    %v1731 = vld [vmem:[#allocation19 + $0x20] sm:$0xf]
    %v1732 = vld [vmem:[#allocation19 + $0x24] sm:$0xf]
    %v1733 = vld [vmem:[#allocation19 + $0x28] sm:$0xf]
    %v1734 = vld [vmem:[#allocation19 + $0x2c] sm:$0xf]
    %v1735 = vld [vmem:[#allocation19 + $0x30] sm:$0xf]
    %v1736 = vld [vmem:[#allocation19 + $0x34] sm:$0xf]
    %v1737 = vld [vmem:[#allocation19 + $0x38] sm:$0xf]
    %v1738 = vld [vmem:[#allocation19 + $0x3c] sm:$0xf]
    %v1739 = vld [vmem:[%s15] sm:$0x1]
    %v1740 = vld [vmem:[#allocation20] sm:$0xf]
    %v1741 = vld [vmem:[#allocation20 + $0x4] sm:$0xf]
    %v1742 = vld [vmem:[#allocation20 + $0x8] sm:$0xf]
    %v1743 = vld [vmem:[#allocation20 + $0xc] sm:$0xf]
    %v1744 = vld [vmem:[#allocation20 + $0x10] sm:$0xf]
    %v1745 = vld [vmem:[#allocation20 + $0x14] sm:$0xf]
    %v1746 = vld [vmem:[#allocation20 + $0x18] sm:$0xf]
    %v1747 = vld [vmem:[#allocation20 + $0x1c] sm:$0xf]
    %v1748 = vld [vmem:[#allocation20 + $0x20] sm:$0xf]
    %v1749 = vld [vmem:[#allocation20 + $0x24] sm:$0xf]
    %v1750 = vld [vmem:[#allocation20 + $0x28] sm:$0xf]
    %v1751 = vld [vmem:[#allocation20 + $0x2c] sm:$0xf]
    %v1752 = vld [vmem:[#allocation20 + $0x30] sm:$0xf]
    %v1753 = vld [vmem:[#allocation20 + $0x34] sm:$0xf]
    %v1754 = vld [vmem:[#allocation20 + $0x38] sm:$0xf]
    %v1755 = vld [vmem:[#allocation20 + $0x3c] sm:$0xf]
    %v1756 = vld [vmem:[%s17] sm:$0x1]
    %v1761 = vunpack.c.l.b16 %v421
    %v1762 = vunpack.c.l.b16 %v422
    %v1763 = vunpack.c.l.b16 %v423
    %v1764 = vunpack.c.l.b16 %v424
    %v1765 = vpack.c.b16 %v1762, %v1761
    %v1766 = vpack.c.b16 %v1764, %v1763
    %v1785 = vunpack.c.l.b16 %v1675
    %v1786 = vunpack.c.l.b16 %v1676
    %v1787 = vunpack.c.l.b16 %v1677
    %v1788 = vunpack.c.l.b16 %v1678
    %v1789 = vunpack.c.l.b16 %v1679
    %v1790 = vunpack.c.l.b16 %v1680
    %v1791 = vunpack.c.l.b16 %v1681
    %v1792 = vunpack.c.l.b16 %v1682
    %v1793 = vunpack.c.l.b16 %v1683
    %v1794 = vunpack.c.l.b16 %v1684
    %v1795 = vunpack.c.l.b16 %v1685
    %v1796 = vunpack.c.l.b16 %v1686
    %v1797 = vunpack.c.l.b16 %v1687
    %v1798 = vunpack.c.l.b16 %v1688
    %v1799 = vunpack.c.l.b16 %v1689
    %v1800 = vunpack.c.l.b16 %v1690
    %v1801 = vpack.c.b16 %v1786, %v1785
    %v1802 = vpack.c.b16 %v1788, %v1787
    %v1803 = vpack.c.b16 %v1790, %v1789
    %v1804 = vpack.c.b16 %v1792, %v1791
    %v1805 = vpack.c.b16 %v1794, %v1793
    %v1806 = vpack.c.b16 %v1796, %v1795
    %v1807 = vpack.c.b16 %v1798, %v1797
    %v1808 = vpack.c.b16 %v1800, %v1799
    %1817 = vmatpush.bf16.msra.mxu0 %v1808
    %1818 = vmatpush.bf16.msra.mxu0 %v1807
    %1819 = vmatpush.bf16.msra.mxu0 %v1806
    %1820 = vmatpush.bf16.msra.mxu0 %v1805
    %1821 = vmatpush.bf16.msra.mxu0 %v1804
    %1822 = vmatpush.bf16.msra.mxu0 %v1803
    %1823 = vmatpush.bf16.msra.mxu0 %v1802
    %1824 = vmatpush.bf16.msra.mxu0 %v1801
    %1825 = vmatmul.bf16.gmra.mxu0 %v1765
    %v1826 = vpop.f32.mrf.mxu0
    %v1827 = vadd.f32 0.0, %v1826
    %v1828 = vpop.f32.mrf.mxu0
    %v1829 = vadd.f32 0.0, %v1828
    %1830 = vmatmul.bf16.gmra.mxu0 %v1766
    %v1831 = vpop.f32.mrf.mxu0
    %v1832 = vadd.f32 0.0, %v1831
    %v1833 = vpop.f32.mrf.mxu0
    %v1834 = vadd.f32 0.0, %v1833
    %1835 = vdwg.mxu0
    %v1836 = vpack.c.bf16 %v1827, %v1827
    %v1837 = vpack.c.bf16 %v1829, %v1829
    %v1838 = vpack.c.bf16 %v1832, %v1832
    %v1839 = vpack.c.bf16 %v1834, %v1834
    %v1856 = vunpack.c.l.b16 %v1691
    %v1857 = vunpack.c.l.b16 %v1692
    %v1858 = vunpack.c.l.b16 %v1693
    %v1859 = vunpack.c.l.b16 %v1694
    %v1860 = vunpack.c.l.b16 %v1695
    %v1861 = vunpack.c.l.b16 %v1696
    %v1862 = vunpack.c.l.b16 %v1697
    %v1863 = vunpack.c.l.b16 %v1698
    %v1864 = vunpack.c.l.b16 %v1699
    %v1865 = vunpack.c.l.b16 %v1700
    %v1866 = vunpack.c.l.b16 %v1701
    %v1867 = vunpack.c.l.b16 %v1702
    %v1868 = vunpack.c.l.b16 %v1703
    %v1869 = vunpack.c.l.b16 %v1704
    %v1870 = vunpack.c.l.b16 %v1705
    %v1871 = vunpack.c.l.b16 %v1706
    %v1872 = vpack.c.b16 %v1857, %v1856
    %v1873 = vpack.c.b16 %v1859, %v1858
    %v1874 = vpack.c.b16 %v1861, %v1860
    %v1875 = vpack.c.b16 %v1863, %v1862
    %v1876 = vpack.c.b16 %v1865, %v1864
    %v1877 = vpack.c.b16 %v1867, %v1866
    %v1878 = vpack.c.b16 %v1869, %v1868
    %v1879 = vpack.c.b16 %v1871, %v1870
    %1888 = vmatpush.bf16.msra.mxu0 %v1879
    %1889 = vmatpush.bf16.msra.mxu0 %v1878
    %1890 = vmatpush.bf16.msra.mxu0 %v1877
    %1891 = vmatpush.bf16.msra.mxu0 %v1876
    %1892 = vmatpush.bf16.msra.mxu0 %v1875
    %1893 = vmatpush.bf16.msra.mxu0 %v1874
    %1894 = vmatpush.bf16.msra.mxu0 %v1873
    %1895 = vmatpush.bf16.msra.mxu0 %v1872
    %1896 = vmatmul.bf16.gmra.mxu0 %v1765
    %v1897 = vpop.f32.mrf.mxu0
    %v1898 = vadd.f32 0.0, %v1897
    %v1899 = vpop.f32.mrf.mxu0
    %v1900 = vadd.f32 0.0, %v1899
    %1901 = vmatmul.bf16.gmra.mxu0 %v1766
    %v1902 = vpop.f32.mrf.mxu0
    %v1903 = vadd.f32 0.0, %v1902
    %v1904 = vpop.f32.mrf.mxu0
    %v1905 = vadd.f32 0.0, %v1904
    %1906 = vdwg.mxu0
    %v1907 = vpack.c.bf16 %v1898, %v1898
    %v1908 = vpack.c.bf16 %v1900, %v1900
    %v1909 = vpack.c.bf16 %v1903, %v1903
    %v1910 = vpack.c.bf16 %v1905, %v1905
    %v1927 = vunpack.c.l.b16 %v1707
    %v1928 = vunpack.c.l.b16 %v1708
    %v1929 = vunpack.c.l.b16 %v1709
    %v1930 = vunpack.c.l.b16 %v1710
    %v1931 = vunpack.c.l.b16 %v1711
    %v1932 = vunpack.c.l.b16 %v1712
    %v1933 = vunpack.c.l.b16 %v1713
    %v1934 = vunpack.c.l.b16 %v1714
    %v1935 = vunpack.c.l.b16 %v1715
    %v1936 = vunpack.c.l.b16 %v1716
    %v1937 = vunpack.c.l.b16 %v1717
    %v1938 = vunpack.c.l.b16 %v1718
    %v1939 = vunpack.c.l.b16 %v1719
    %v1940 = vunpack.c.l.b16 %v1720
    %v1941 = vunpack.c.l.b16 %v1721
    %v1942 = vunpack.c.l.b16 %v1722
    %v1943 = vpack.c.b16 %v1928, %v1927
    %v1944 = vpack.c.b16 %v1930, %v1929
    %v1945 = vpack.c.b16 %v1932, %v1931
    %v1946 = vpack.c.b16 %v1934, %v1933
    %v1947 = vpack.c.b16 %v1936, %v1935
    %v1948 = vpack.c.b16 %v1938, %v1937
    %v1949 = vpack.c.b16 %v1940, %v1939
    %v1950 = vpack.c.b16 %v1942, %v1941
    %1959 = vmatpush.bf16.msra.mxu0 %v1950
    %1960 = vmatpush.bf16.msra.mxu0 %v1949
    %1961 = vmatpush.bf16.msra.mxu0 %v1948
    %1962 = vmatpush.bf16.msra.mxu0 %v1947
    %1963 = vmatpush.bf16.msra.mxu0 %v1946
    %1964 = vmatpush.bf16.msra.mxu0 %v1945
    %1965 = vmatpush.bf16.msra.mxu0 %v1944
    %1966 = vmatpush.bf16.msra.mxu0 %v1943
    %1967 = vmatmul.bf16.gmra.mxu0 %v1765
    %v1968 = vpop.f32.mrf.mxu0
    %v1969 = vadd.f32 0.0, %v1968
    %v1970 = vpop.f32.mrf.mxu0
    %v1971 = vadd.f32 0.0, %v1970
    %1972 = vmatmul.bf16.gmra.mxu0 %v1766
    %v1973 = vpop.f32.mrf.mxu0
    %v1974 = vadd.f32 0.0, %v1973
    %v1975 = vpop.f32.mrf.mxu0
    %v1976 = vadd.f32 0.0, %v1975
    %1977 = vdwg.mxu0
    %v1978 = vpack.c.bf16 %v1969, %v1969
    %v1979 = vpack.c.bf16 %v1971, %v1971
    %v1980 = vpack.c.bf16 %v1974, %v1974
    %v1981 = vpack.c.bf16 %v1976, %v1976
    %v1984 = vunpack.c.l.b16 %v1836
    %v1985 = vunpack.c.l.b16 %v1837
    %v1986 = vpack.c.b16 %v1985, %v1984
    %v1990 = vunpack.c.l.b16 %v1907
    %v1991 = vunpack.c.l.b16 %v1908
    %v1992 = vpack.c.b16 %v1991, %v1990
    %1994 = vmatpush.bf16.xpose.msra.mxu0 0
    %1995 = vmatpush.bf16.xpose.msra.mxu0 0
    %1996 = vmatpush.bf16.xpose.msra.mxu0 0
    %1997 = vmatpush.bf16.xpose.msra.mxu0 0
    %1998 = vmatpush.bf16.xpose.msra.mxu0 0
    %1999 = vmatpush.bf16.xpose.msra.mxu0 0
    %2000 = vmatpush.bf16.xpose.msra.mxu0 0
    %2001 = vmatpush.bf16.xpose.msra.mxu0 %v1992
    %2002 = vmatmul.bf16.gmra.mxu0 %v1986
    %v2003 = vpop.f32.mrf.mxu0
    %v2004 = vadd.f32 0.0, %v2003
    %v2005 = vpop.f32.mrf.mxu0
    %v2006 = vadd.f32 0.0, %v2005
    %2007 = vdwg.mxu0
    %v2010 = vunpack.c.l.b16 %v1838
    %v2011 = vunpack.c.l.b16 %v1839
    %v2012 = vpack.c.b16 %v2011, %v2010
    %v2016 = vunpack.c.l.b16 %v1909
    %v2017 = vunpack.c.l.b16 %v1910
    %v2018 = vpack.c.b16 %v2017, %v2016
    %2020 = vmatpush.bf16.xpose.msra.mxu0 0
    %2021 = vmatpush.bf16.xpose.msra.mxu0 0
    %2022 = vmatpush.bf16.xpose.msra.mxu0 0
    %2023 = vmatpush.bf16.xpose.msra.mxu0 0
    %2024 = vmatpush.bf16.xpose.msra.mxu0 0
    %2025 = vmatpush.bf16.xpose.msra.mxu0 0
    %2026 = vmatpush.bf16.xpose.msra.mxu0 0
    %2027 = vmatpush.bf16.xpose.msra.mxu0 %v2018
    %2028 = vmatmul.bf16.gmra.mxu0 %v2012
    %v2029 = vpop.f32.mrf.mxu0
    %v2030 = vadd.f32 0.0, %v2029
    %v2031 = vpop.f32.mrf.mxu0
    %v2032 = vadd.f32 0.0, %v2031
    %2033 = vdwg.mxu0
    %v2034 = vsel %vm784, %v2004, -inf
    %2035 = vmax.xlane.f32.xlu0 %v2034
    %v2036 = vpop.xlane.xlu0 %2035
    %v2037 = vsel %vm784, %v2006, -inf
    %2038 = vmax.xlane.f32.xlu0 %v2037
    %v2039 = vpop.xlane.xlu0 %2038
    %v2040 = vsel %vm784, %v2030, -inf
    %2041 = vmax.xlane.f32.xlu0 %v2040
    %v2042 = vpop.xlane.xlu0 %2041
    %v2043 = vsel %vm784, %v2032, -inf
    %2044 = vmax.xlane.f32.xlu0 %v2043
    %v2045 = vpop.xlane.xlu0 %2044
    %v2046 = vsub.f32 %v2004, %v2036
    %v2047 = vsub.f32 %v2006, %v2039
    %v2048 = vsub.f32 %v2030, %v2042
    %v2049 = vsub.f32 %v2032, %v2045
    %v2050 = vmul.f32 %v2046, 1.442695
    %v2051 = vpow.pop %v2050
    %v2052 = vmul.f32 %v2047, 1.442695
    %v2053 = vpow.pop %v2052
    %v2054 = vmul.f32 %v2048, 1.442695
    %v2055 = vpow.pop %v2054
    %v2056 = vmul.f32 %v2049, 1.442695
    %v2057 = vpow.pop %v2056
    %v2058 = vsel %vm784, %v2051, 0.0
    %2059 = vadd.xlane.f32.xlu0 %v2058
    %v2060 = vpop.xlane.xlu0 %2059
    %v2061 = vsel %vm784, %v2053, 0.0
    %2062 = vadd.xlane.f32.xlu0 %v2061
    %v2063 = vpop.xlane.xlu0 %2062
    %v2064 = vsel %vm784, %v2055, 0.0
    %2065 = vadd.xlane.f32.xlu0 %v2064
    %v2066 = vpop.xlane.xlu0 %2065
    %v2067 = vsel %vm784, %v2057, 0.0
    %2068 = vadd.xlane.f32.xlu0 %v2067
    %v2069 = vpop.xlane.xlu0 %2068
    %v2070 = vrcp.pop %v2060
    %v2071 = vrcp.pop %v2063
    %v2072 = vrcp.pop %v2066
    %v2073 = vrcp.pop %v2069
    %v2074 = vmul.f32 %v2051, %v2070
    %v2075 = vmul.f32 %v2053, %v2071
    %v2076 = vmul.f32 %v2055, %v2072
    %v2077 = vmul.f32 %v2057, %v2073
    %v2078 = vpack.c.bf16 %v2074, %v2074
    %v2079 = vpack.c.bf16 %v2075, %v2075
    %v2080 = vpack.c.bf16 %v2076, %v2076
    %v2081 = vpack.c.bf16 %v2077, %v2077
    %v2084 = vunpack.c.l.b16 %v2078
    %v2085 = vunpack.c.l.b16 %v2079
    %v2086 = vpack.c.b16 %v2085, %v2084
    %v2089 = vunpack.c.l.b16 %v1978
    %v2090 = vunpack.c.l.b16 %v1979
    %v2091 = vpack.c.b16 %v2090, %v2089
    %v2094 = vsel %vm784, %v2086, 0
    %2096 = vmatpush.bf16.msra.mxu0 0
    %2097 = vmatpush.bf16.msra.mxu0 0
    %2098 = vmatpush.bf16.msra.mxu0 0
    %2099 = vmatpush.bf16.msra.mxu0 0
    %2100 = vmatpush.bf16.msra.mxu0 0
    %2101 = vmatpush.bf16.msra.mxu0 0
    %2102 = vmatpush.bf16.msra.mxu0 0
    %2103 = vmatpush.bf16.msra.mxu0 %v2091
    %2104 = vmatmul.bf16.gmra.mxu0 %v2094
    %v2105 = vpop.f32.mrf.mxu0
    %v2106 = vadd.f32 0.0, %v2105
    %v2107 = vpop.f32.mrf.mxu0
    %v2108 = vadd.f32 0.0, %v2107
    %2109 = vdwg.mxu0
    %v2112 = vunpack.c.l.b16 %v2080
    %v2113 = vunpack.c.l.b16 %v2081
    %v2114 = vpack.c.b16 %v2113, %v2112
    %v2117 = vunpack.c.l.b16 %v1980
    %v2118 = vunpack.c.l.b16 %v1981
    %v2119 = vpack.c.b16 %v2118, %v2117
    %v2122 = vsel %vm784, %v2114, 0
    %2124 = vmatpush.bf16.msra.mxu0 0
    %2125 = vmatpush.bf16.msra.mxu0 0
    %2126 = vmatpush.bf16.msra.mxu0 0
    %2127 = vmatpush.bf16.msra.mxu0 0
    %2128 = vmatpush.bf16.msra.mxu0 0
    %2129 = vmatpush.bf16.msra.mxu0 0
    %2130 = vmatpush.bf16.msra.mxu0 0
    %2131 = vmatpush.bf16.msra.mxu0 %v2119
    %2132 = vmatmul.bf16.gmra.mxu0 %v2122
    %v2133 = vpop.f32.mrf.mxu0
    %v2134 = vadd.f32 0.0, %v2133
    %v2135 = vpop.f32.mrf.mxu0
    %v2136 = vadd.f32 0.0, %v2135
    %2137 = vdwg.mxu0
    %2139 = vset.pattern.permute.xlu0 0
    %2140 = vperm.xlu0 %2139, %v413
    %v2141 = vpop.permute.xlu0 %2140
    %2144 = vset.pattern.permute.xlu0 0
    %2145 = vperm.xlu0 %2144, %v414
    %v2146 = vpop.permute.xlu0 %2145
    %2149 = vset.pattern.permute.xlu0 0
    %2150 = vperm.xlu0 %2149, %v415
    %v2151 = vpop.permute.xlu0 %2150
    %2154 = vset.pattern.permute.xlu0 0
    %2155 = vperm.xlu0 %2154, %v416
    %v2156 = vpop.permute.xlu0 %2155
    %v2158 = vmul.f32 %v2106, %v2141
    %v2159 = vmul.f32 %v2108, %v2146
    %v2160 = vmul.f32 %v2134, %v2151
    %v2161 = vmul.f32 %v2136, %v2156
    %v2162 = vpack.c.bf16 %v2158, %v2158
    %v2163 = vpack.c.bf16 %v2159, %v2159
    %v2164 = vpack.c.bf16 %v2160, %v2160
    %v2165 = vpack.c.bf16 %v2161, %v2161
    %v2167 = vperm.slane %v1739, 0
    %v2173 = vunpack.c.l.b16 %v2162
    %v2174 = vunpack.c.l.b16 %v2163
    %v2175 = vunpack.c.l.b16 %v2164
    %v2176 = vunpack.c.l.b16 %v2165
    %v2177 = vpack.c.b16 %v2174, %v2173
    %v2178 = vpack.c.b16 %v2176, %v2175
    %v2197 = vunpack.c.l.b16 %v1723
    %v2198 = vunpack.c.l.b16 %v1724
    %v2199 = vunpack.c.l.b16 %v1725
    %v2200 = vunpack.c.l.b16 %v1726
    %v2201 = vunpack.c.l.b16 %v1727
    %v2202 = vunpack.c.l.b16 %v1728
    %v2203 = vunpack.c.l.b16 %v1729
    %v2204 = vunpack.c.l.b16 %v1730
    %v2205 = vunpack.c.l.b16 %v1731
    %v2206 = vunpack.c.l.b16 %v1732
    %v2207 = vunpack.c.l.b16 %v1733
    %v2208 = vunpack.c.l.b16 %v1734
    %v2209 = vunpack.c.l.b16 %v1735
    %v2210 = vunpack.c.l.b16 %v1736
    %v2211 = vunpack.c.l.b16 %v1737
    %v2212 = vunpack.c.l.b16 %v1738
    %v2213 = vpack.c.b16 %v2198, %v2197
    %v2214 = vpack.c.b16 %v2200, %v2199
    %v2215 = vpack.c.b16 %v2202, %v2201
    %v2216 = vpack.c.b16 %v2204, %v2203
    %v2217 = vpack.c.b16 %v2206, %v2205
    %v2218 = vpack.c.b16 %v2208, %v2207
    %v2219 = vpack.c.b16 %v2210, %v2209
    %v2220 = vpack.c.b16 %v2212, %v2211
    %2229 = vmatpush.bf16.msra.mxu0 %v2220
    %2230 = vmatpush.bf16.msra.mxu0 %v2219
    %2231 = vmatpush.bf16.msra.mxu0 %v2218
    %2232 = vmatpush.bf16.msra.mxu0 %v2217
    %2233 = vmatpush.bf16.msra.mxu0 %v2216
    %2234 = vmatpush.bf16.msra.mxu0 %v2215
    %2235 = vmatpush.bf16.msra.mxu0 %v2214
    %2236 = vmatpush.bf16.msra.mxu0 %v2213
    %2237 = vmatmul.bf16.gmra.mxu0 %v2177
    %v2238 = vpop.f32.mrf.mxu0
    %v2239 = vadd.f32 %v2167, %v2238
    %v2240 = vpop.f32.mrf.mxu0
    %v2241 = vadd.f32 %v2167, %v2240
    %2242 = vmatmul.bf16.gmra.mxu0 %v2178
    %v2243 = vpop.f32.mrf.mxu0
    %v2244 = vadd.f32 %v2167, %v2243
    %v2245 = vpop.f32.mrf.mxu0
    %v2246 = vadd.f32 %v2167, %v2245
    %2247 = vdwg.mxu0
    %v2248 = vmax.f32 %v2239, 0.0
    %v2249 = vmax.f32 %v2241, 0.0
    %v2250 = vmax.f32 %v2244, 0.0
    %v2251 = vmax.f32 %v2246, 0.0
    %v2252 = vpack.c.bf16 %v2249, %v2248
    %v2253 = vpack.c.bf16 %v2251, %v2250
    %v2255 = vperm.slane %v1756, 0
    %v2273 = vunpack.c.l.b16 %v1740
    %v2274 = vunpack.c.l.b16 %v1741
    %v2275 = vunpack.c.l.b16 %v1742
    %v2276 = vunpack.c.l.b16 %v1743
    %v2277 = vunpack.c.l.b16 %v1744
    %v2278 = vunpack.c.l.b16 %v1745
    %v2279 = vunpack.c.l.b16 %v1746
    %v2280 = vunpack.c.l.b16 %v1747
    %v2281 = vunpack.c.l.b16 %v1748
    %v2282 = vunpack.c.l.b16 %v1749
    %v2283 = vunpack.c.l.b16 %v1750
    %v2284 = vunpack.c.l.b16 %v1751
    %v2285 = vunpack.c.l.b16 %v1752
    %v2286 = vunpack.c.l.b16 %v1753
    %v2287 = vunpack.c.l.b16 %v1754
    %v2288 = vunpack.c.l.b16 %v1755
    %v2289 = vpack.c.b16 %v2274, %v2273
    %v2290 = vpack.c.b16 %v2276, %v2275
    %v2291 = vpack.c.b16 %v2278, %v2277
    %v2292 = vpack.c.b16 %v2280, %v2279
    %v2293 = vpack.c.b16 %v2282, %v2281
    %v2294 = vpack.c.b16 %v2284, %v2283
    %v2295 = vpack.c.b16 %v2286, %v2285
    %v2296 = vpack.c.b16 %v2288, %v2287
    %2305 = vmatpush.bf16.msra.mxu0 %v2296
    %2306 = vmatpush.bf16.msra.mxu0 %v2295
    %2307 = vmatpush.bf16.msra.mxu0 %v2294
    %2308 = vmatpush.bf16.msra.mxu0 %v2293
    %2309 = vmatpush.bf16.msra.mxu0 %v2292
    %2310 = vmatpush.bf16.msra.mxu0 %v2291
    %2311 = vmatpush.bf16.msra.mxu0 %v2290
    %2312 = vmatpush.bf16.msra.mxu0 %v2289
    %2313 = vmatmul.bf16.gmra.mxu0 %v2252
    %v2314 = vpop.f32.mrf.mxu0
    %v2315 = vadd.f32 %v2255, %v2314
    %v2316 = vpop.f32.mrf.mxu0
    %v2317 = vadd.f32 %v2255, %v2316
    %2318 = vmatmul.bf16.gmra.mxu0 %v2253
    %v2319 = vpop.f32.mrf.mxu0
    %v2320 = vadd.f32 %v2255, %v2319
    %v2321 = vpop.f32.mrf.mxu0
    %v2322 = vadd.f32 %v2255, %v2321
    %2323 = vdwg.mxu0
    %v2324 = vpack.c.bf16 %v2317, %v2315
    %v2325 = vpack.c.bf16 %v2322, %v2320
    %s2326 = scalar_lea.vmem [#allocation14], 64
    %v2327 = vld [vmem:[%s2326] sm:$0xf]
    %v2328 = vld [vmem:[%s2326 + $0x4] sm:$0xf]
    %v2329 = vld [vmem:[%s2326 + $0x8] sm:$0xf]
    %v2330 = vld [vmem:[%s2326 + $0xc] sm:$0xf]
    %v2331 = vld [vmem:[%s2326 + $0x10] sm:$0xf]
    %v2332 = vld [vmem:[%s2326 + $0x14] sm:$0xf]
    %v2333 = vld [vmem:[%s2326 + $0x18] sm:$0xf]
    %v2334 = vld [vmem:[%s2326 + $0x1c] sm:$0xf]
    %v2335 = vld [vmem:[%s2326 + $0x20] sm:$0xf]
    %v2336 = vld [vmem:[%s2326 + $0x24] sm:$0xf]
    %v2337 = vld [vmem:[%s2326 + $0x28] sm:$0xf]
    %v2338 = vld [vmem:[%s2326 + $0x2c] sm:$0xf]
    %v2339 = vld [vmem:[%s2326 + $0x30] sm:$0xf]
    %v2340 = vld [vmem:[%s2326 + $0x34] sm:$0xf]
    %v2341 = vld [vmem:[%s2326 + $0x38] sm:$0xf]
    %v2342 = vld [vmem:[%s2326 + $0x3c] sm:$0xf]
    %s2343 = scalar_lea.vmem [#allocation16], 64
    %v2344 = vld [vmem:[%s2343] sm:$0xf]
    %v2345 = vld [vmem:[%s2343 + $0x4] sm:$0xf]
    %v2346 = vld [vmem:[%s2343 + $0x8] sm:$0xf]
    %v2347 = vld [vmem:[%s2343 + $0xc] sm:$0xf]
    %v2348 = vld [vmem:[%s2343 + $0x10] sm:$0xf]
    %v2349 = vld [vmem:[%s2343 + $0x14] sm:$0xf]
    %v2350 = vld [vmem:[%s2343 + $0x18] sm:$0xf]
    %v2351 = vld [vmem:[%s2343 + $0x1c] sm:$0xf]
    %v2352 = vld [vmem:[%s2343 + $0x20] sm:$0xf]
    %v2353 = vld [vmem:[%s2343 + $0x24] sm:$0xf]
    %v2354 = vld [vmem:[%s2343 + $0x28] sm:$0xf]
    %v2355 = vld [vmem:[%s2343 + $0x2c] sm:$0xf]
    %v2356 = vld [vmem:[%s2343 + $0x30] sm:$0xf]
    %v2357 = vld [vmem:[%s2343 + $0x34] sm:$0xf]
    %v2358 = vld [vmem:[%s2343 + $0x38] sm:$0xf]
    %v2359 = vld [vmem:[%s2343 + $0x3c] sm:$0xf]
    %s2360 = scalar_lea.vmem [#allocation17], 64
    %v2361 = vld [vmem:[%s2360] sm:$0xf]
    %v2362 = vld [vmem:[%s2360 + $0x4] sm:$0xf]
    %v2363 = vld [vmem:[%s2360 + $0x8] sm:$0xf]
    %v2364 = vld [vmem:[%s2360 + $0xc] sm:$0xf]
    %v2365 = vld [vmem:[%s2360 + $0x10] sm:$0xf]
    %v2366 = vld [vmem:[%s2360 + $0x14] sm:$0xf]
    %v2367 = vld [vmem:[%s2360 + $0x18] sm:$0xf]
    %v2368 = vld [vmem:[%s2360 + $0x1c] sm:$0xf]
    %v2369 = vld [vmem:[%s2360 + $0x20] sm:$0xf]
    %v2370 = vld [vmem:[%s2360 + $0x24] sm:$0xf]
    %v2371 = vld [vmem:[%s2360 + $0x28] sm:$0xf]
    %v2372 = vld [vmem:[%s2360 + $0x2c] sm:$0xf]
    %v2373 = vld [vmem:[%s2360 + $0x30] sm:$0xf]
    %v2374 = vld [vmem:[%s2360 + $0x34] sm:$0xf]
    %v2375 = vld [vmem:[%s2360 + $0x38] sm:$0xf]
    %v2376 = vld [vmem:[%s2360 + $0x3c] sm:$0xf]
    %s2377 = scalar_lea.vmem [#allocation19], 64
    %v2378 = vld [vmem:[%s2377] sm:$0xf]
    %v2379 = vld [vmem:[%s2377 + $0x4] sm:$0xf]
    %v2380 = vld [vmem:[%s2377 + $0x8] sm:$0xf]
    %v2381 = vld [vmem:[%s2377 + $0xc] sm:$0xf]
    %v2382 = vld [vmem:[%s2377 + $0x10] sm:$0xf]
    %v2383 = vld [vmem:[%s2377 + $0x14] sm:$0xf]
    %v2384 = vld [vmem:[%s2377 + $0x18] sm:$0xf]
    %v2385 = vld [vmem:[%s2377 + $0x1c] sm:$0xf]
    %v2386 = vld [vmem:[%s2377 + $0x20] sm:$0xf]
    %v2387 = vld [vmem:[%s2377 + $0x24] sm:$0xf]
    %v2388 = vld [vmem:[%s2377 + $0x28] sm:$0xf]
    %v2389 = vld [vmem:[%s2377 + $0x2c] sm:$0xf]
    %v2390 = vld [vmem:[%s2377 + $0x30] sm:$0xf]
    %v2391 = vld [vmem:[%s2377 + $0x34] sm:$0xf]
    %v2392 = vld [vmem:[%s2377 + $0x38] sm:$0xf]
    %v2393 = vld [vmem:[%s2377 + $0x3c] sm:$0xf]
    %s2394 = scalar_lea.vmem %s15, 1
    %v2395 = vld [vmem:[%s2394] sm:$0x1]
    %s2396 = scalar_lea.vmem [#allocation20], 64
    %v2397 = vld [vmem:[%s2396] sm:$0xf]
    %v2398 = vld [vmem:[%s2396 + $0x4] sm:$0xf]
    %v2399 = vld [vmem:[%s2396 + $0x8] sm:$0xf]
    %v2400 = vld [vmem:[%s2396 + $0xc] sm:$0xf]
    %v2401 = vld [vmem:[%s2396 + $0x10] sm:$0xf]
    %v2402 = vld [vmem:[%s2396 + $0x14] sm:$0xf]
    %v2403 = vld [vmem:[%s2396 + $0x18] sm:$0xf]
    %v2404 = vld [vmem:[%s2396 + $0x1c] sm:$0xf]
    %v2405 = vld [vmem:[%s2396 + $0x20] sm:$0xf]
    %v2406 = vld [vmem:[%s2396 + $0x24] sm:$0xf]
    %v2407 = vld [vmem:[%s2396 + $0x28] sm:$0xf]
    %v2408 = vld [vmem:[%s2396 + $0x2c] sm:$0xf]
    %v2409 = vld [vmem:[%s2396 + $0x30] sm:$0xf]
    %v2410 = vld [vmem:[%s2396 + $0x34] sm:$0xf]
    %v2411 = vld [vmem:[%s2396 + $0x38] sm:$0xf]
    %v2412 = vld [vmem:[%s2396 + $0x3c] sm:$0xf]
    %s2413 = scalar_lea.vmem %s17, 1
    %v2414 = vld [vmem:[%s2413] sm:$0x1]
    %v2431 = vunpack.c.l.b16 %v2327
    %v2432 = vunpack.c.l.b16 %v2328
    %v2433 = vunpack.c.l.b16 %v2329
    %v2434 = vunpack.c.l.b16 %v2330
    %v2435 = vunpack.c.l.b16 %v2331
    %v2436 = vunpack.c.l.b16 %v2332
    %v2437 = vunpack.c.l.b16 %v2333
    %v2438 = vunpack.c.l.b16 %v2334
    %v2439 = vunpack.c.l.b16 %v2335
    %v2440 = vunpack.c.l.b16 %v2336
    %v2441 = vunpack.c.l.b16 %v2337
    %v2442 = vunpack.c.l.b16 %v2338
    %v2443 = vunpack.c.l.b16 %v2339
    %v2444 = vunpack.c.l.b16 %v2340
    %v2445 = vunpack.c.l.b16 %v2341
    %v2446 = vunpack.c.l.b16 %v2342
    %v2447 = vpack.c.b16 %v2432, %v2431
    %v2448 = vpack.c.b16 %v2434, %v2433
    %v2449 = vpack.c.b16 %v2436, %v2435
    %v2450 = vpack.c.b16 %v2438, %v2437
    %v2451 = vpack.c.b16 %v2440, %v2439
    %v2452 = vpack.c.b16 %v2442, %v2441
    %v2453 = vpack.c.b16 %v2444, %v2443
    %v2454 = vpack.c.b16 %v2446, %v2445
    %2463 = vmatpush.bf16.msra.mxu0 %v2454
    %2464 = vmatpush.bf16.msra.mxu0 %v2453
    %2465 = vmatpush.bf16.msra.mxu0 %v2452
    %2466 = vmatpush.bf16.msra.mxu0 %v2451
    %2467 = vmatpush.bf16.msra.mxu0 %v2450
    %2468 = vmatpush.bf16.msra.mxu0 %v2449
    %2469 = vmatpush.bf16.msra.mxu0 %v2448
    %2470 = vmatpush.bf16.msra.mxu0 %v2447
    %2471 = vmatmul.bf16.gmra.mxu0 %v2324
    %v2472 = vpop.f32.mrf.mxu0
    %v2473 = vadd.f32 0.0, %v2472
    %v2474 = vpop.f32.mrf.mxu0
    %v2475 = vadd.f32 0.0, %v2474
    %2476 = vmatmul.bf16.gmra.mxu0 %v2325
    %v2477 = vpop.f32.mrf.mxu0
    %v2478 = vadd.f32 0.0, %v2477
    %v2479 = vpop.f32.mrf.mxu0
    %v2480 = vadd.f32 0.0, %v2479
    %2481 = vdwg.mxu0
    %v2482 = vpack.c.bf16 %v2473, %v2473
    %v2483 = vpack.c.bf16 %v2475, %v2475
    %v2484 = vpack.c.bf16 %v2478, %v2478
    %v2485 = vpack.c.bf16 %v2480, %v2480
    %v2502 = vunpack.c.l.b16 %v2344
    %v2503 = vunpack.c.l.b16 %v2345
    %v2504 = vunpack.c.l.b16 %v2346
    %v2505 = vunpack.c.l.b16 %v2347
    %v2506 = vunpack.c.l.b16 %v2348
    %v2507 = vunpack.c.l.b16 %v2349
    %v2508 = vunpack.c.l.b16 %v2350
    %v2509 = vunpack.c.l.b16 %v2351
    %v2510 = vunpack.c.l.b16 %v2352
    %v2511 = vunpack.c.l.b16 %v2353
    %v2512 = vunpack.c.l.b16 %v2354
    %v2513 = vunpack.c.l.b16 %v2355
    %v2514 = vunpack.c.l.b16 %v2356
    %v2515 = vunpack.c.l.b16 %v2357
    %v2516 = vunpack.c.l.b16 %v2358
    %v2517 = vunpack.c.l.b16 %v2359
    %v2518 = vpack.c.b16 %v2503, %v2502
    %v2519 = vpack.c.b16 %v2505, %v2504
    %v2520 = vpack.c.b16 %v2507, %v2506
    %v2521 = vpack.c.b16 %v2509, %v2508
    %v2522 = vpack.c.b16 %v2511, %v2510
    %v2523 = vpack.c.b16 %v2513, %v2512
    %v2524 = vpack.c.b16 %v2515, %v2514
    %v2525 = vpack.c.b16 %v2517, %v2516
    %2534 = vmatpush.bf16.msra.mxu0 %v2525
    %2535 = vmatpush.bf16.msra.mxu0 %v2524
    %2536 = vmatpush.bf16.msra.mxu0 %v2523
    %2537 = vmatpush.bf16.msra.mxu0 %v2522
    %2538 = vmatpush.bf16.msra.mxu0 %v2521
    %2539 = vmatpush.bf16.msra.mxu0 %v2520
    %2540 = vmatpush.bf16.msra.mxu0 %v2519
    %2541 = vmatpush.bf16.msra.mxu0 %v2518
    %2542 = vmatmul.bf16.gmra.mxu0 %v2324
    %v2543 = vpop.f32.mrf.mxu0
    %v2544 = vadd.f32 0.0, %v2543
    %v2545 = vpop.f32.mrf.mxu0
    %v2546 = vadd.f32 0.0, %v2545
    %2547 = vmatmul.bf16.gmra.mxu0 %v2325
    %v2548 = vpop.f32.mrf.mxu0
    %v2549 = vadd.f32 0.0, %v2548
    %v2550 = vpop.f32.mrf.mxu0
    %v2551 = vadd.f32 0.0, %v2550
    %2552 = vdwg.mxu0
    %v2553 = vpack.c.bf16 %v2544, %v2544
    %v2554 = vpack.c.bf16 %v2546, %v2546
    %v2555 = vpack.c.bf16 %v2549, %v2549
    %v2556 = vpack.c.bf16 %v2551, %v2551
    %v2573 = vunpack.c.l.b16 %v2361
    %v2574 = vunpack.c.l.b16 %v2362
    %v2575 = vunpack.c.l.b16 %v2363
    %v2576 = vunpack.c.l.b16 %v2364
    %v2577 = vunpack.c.l.b16 %v2365
    %v2578 = vunpack.c.l.b16 %v2366
    %v2579 = vunpack.c.l.b16 %v2367
    %v2580 = vunpack.c.l.b16 %v2368
    %v2581 = vunpack.c.l.b16 %v2369
    %v2582 = vunpack.c.l.b16 %v2370
    %v2583 = vunpack.c.l.b16 %v2371
    %v2584 = vunpack.c.l.b16 %v2372
    %v2585 = vunpack.c.l.b16 %v2373
    %v2586 = vunpack.c.l.b16 %v2374
    %v2587 = vunpack.c.l.b16 %v2375
    %v2588 = vunpack.c.l.b16 %v2376
    %v2589 = vpack.c.b16 %v2574, %v2573
    %v2590 = vpack.c.b16 %v2576, %v2575
    %v2591 = vpack.c.b16 %v2578, %v2577
    %v2592 = vpack.c.b16 %v2580, %v2579
    %v2593 = vpack.c.b16 %v2582, %v2581
    %v2594 = vpack.c.b16 %v2584, %v2583
    %v2595 = vpack.c.b16 %v2586, %v2585
    %v2596 = vpack.c.b16 %v2588, %v2587
    %2605 = vmatpush.bf16.msra.mxu0 %v2596
    %2606 = vmatpush.bf16.msra.mxu0 %v2595
    %2607 = vmatpush.bf16.msra.mxu0 %v2594
    %2608 = vmatpush.bf16.msra.mxu0 %v2593
    %2609 = vmatpush.bf16.msra.mxu0 %v2592
    %2610 = vmatpush.bf16.msra.mxu0 %v2591
    %2611 = vmatpush.bf16.msra.mxu0 %v2590
    %2612 = vmatpush.bf16.msra.mxu0 %v2589
    %2613 = vmatmul.bf16.gmra.mxu0 %v2324
    %v2614 = vpop.f32.mrf.mxu0
    %v2615 = vadd.f32 0.0, %v2614
    %v2616 = vpop.f32.mrf.mxu0
    %v2617 = vadd.f32 0.0, %v2616
    %2618 = vmatmul.bf16.gmra.mxu0 %v2325
    %v2619 = vpop.f32.mrf.mxu0
    %v2620 = vadd.f32 0.0, %v2619
    %v2621 = vpop.f32.mrf.mxu0
    %v2622 = vadd.f32 0.0, %v2621
    %2623 = vdwg.mxu0
    %v2624 = vpack.c.bf16 %v2615, %v2615
    %v2625 = vpack.c.bf16 %v2617, %v2617
    %v2626 = vpack.c.bf16 %v2620, %v2620
    %v2627 = vpack.c.bf16 %v2622, %v2622
    %v2630 = vunpack.c.l.b16 %v2482
    %v2631 = vunpack.c.l.b16 %v2483
    %v2632 = vpack.c.b16 %v2631, %v2630
    %v2636 = vunpack.c.l.b16 %v2553
    %v2637 = vunpack.c.l.b16 %v2554
    %v2638 = vpack.c.b16 %v2637, %v2636
    %2640 = vmatpush.bf16.xpose.msra.mxu0 0
    %2641 = vmatpush.bf16.xpose.msra.mxu0 0
    %2642 = vmatpush.bf16.xpose.msra.mxu0 0
    %2643 = vmatpush.bf16.xpose.msra.mxu0 0
    %2644 = vmatpush.bf16.xpose.msra.mxu0 0
    %2645 = vmatpush.bf16.xpose.msra.mxu0 0
    %2646 = vmatpush.bf16.xpose.msra.mxu0 0
    %2647 = vmatpush.bf16.xpose.msra.mxu0 %v2638
    %2648 = vmatmul.bf16.gmra.mxu0 %v2632
    %v2649 = vpop.f32.mrf.mxu0
    %v2650 = vadd.f32 0.0, %v2649
    %v2651 = vpop.f32.mrf.mxu0
    %v2652 = vadd.f32 0.0, %v2651
    %2653 = vdwg.mxu0
    %v2656 = vunpack.c.l.b16 %v2484
    %v2657 = vunpack.c.l.b16 %v2485
    %v2658 = vpack.c.b16 %v2657, %v2656
    %v2662 = vunpack.c.l.b16 %v2555
    %v2663 = vunpack.c.l.b16 %v2556
    %v2664 = vpack.c.b16 %v2663, %v2662
    %2666 = vmatpush.bf16.xpose.msra.mxu0 0
    %2667 = vmatpush.bf16.xpose.msra.mxu0 0
    %2668 = vmatpush.bf16.xpose.msra.mxu0 0
    %2669 = vmatpush.bf16.xpose.msra.mxu0 0
    %2670 = vmatpush.bf16.xpose.msra.mxu0 0
    %2671 = vmatpush.bf16.xpose.msra.mxu0 0
    %2672 = vmatpush.bf16.xpose.msra.mxu0 0
    %2673 = vmatpush.bf16.xpose.msra.mxu0 %v2664
    %2674 = vmatmul.bf16.gmra.mxu0 %v2658
    %v2675 = vpop.f32.mrf.mxu0
    %v2676 = vadd.f32 0.0, %v2675
    %v2677 = vpop.f32.mrf.mxu0
    %v2678 = vadd.f32 0.0, %v2677
    %2679 = vdwg.mxu0
    %v2680 = vsel %vm784, %v2650, -inf
    %2681 = vmax.xlane.f32.xlu0 %v2680
    %v2682 = vpop.xlane.xlu0 %2681
    %v2683 = vsel %vm784, %v2652, -inf
    %2684 = vmax.xlane.f32.xlu0 %v2683
    %v2685 = vpop.xlane.xlu0 %2684
    %v2686 = vsel %vm784, %v2676, -inf
    %2687 = vmax.xlane.f32.xlu0 %v2686
    %v2688 = vpop.xlane.xlu0 %2687
    %v2689 = vsel %vm784, %v2678, -inf
    %2690 = vmax.xlane.f32.xlu0 %v2689
    %v2691 = vpop.xlane.xlu0 %2690
    %v2692 = vsub.f32 %v2650, %v2682
    %v2693 = vsub.f32 %v2652, %v2685
    %v2694 = vsub.f32 %v2676, %v2688
    %v2695 = vsub.f32 %v2678, %v2691
    %v2696 = vmul.f32 %v2692, 1.442695
    %v2697 = vpow.pop %v2696
    %v2698 = vmul.f32 %v2693, 1.442695
    %v2699 = vpow.pop %v2698
    %v2700 = vmul.f32 %v2694, 1.442695
    %v2701 = vpow.pop %v2700
    %v2702 = vmul.f32 %v2695, 1.442695
    %v2703 = vpow.pop %v2702
    %v2704 = vsel %vm784, %v2697, 0.0
    %2705 = vadd.xlane.f32.xlu0 %v2704
    %v2706 = vpop.xlane.xlu0 %2705
    %v2707 = vsel %vm784, %v2699, 0.0
    %2708 = vadd.xlane.f32.xlu0 %v2707
    %v2709 = vpop.xlane.xlu0 %2708
    %v2710 = vsel %vm784, %v2701, 0.0
    %2711 = vadd.xlane.f32.xlu0 %v2710
    %v2712 = vpop.xlane.xlu0 %2711
    %v2713 = vsel %vm784, %v2703, 0.0
    %2714 = vadd.xlane.f32.xlu0 %v2713
    %v2715 = vpop.xlane.xlu0 %2714
    %v2716 = vrcp.pop %v2706
    %v2717 = vrcp.pop %v2709
    %v2718 = vrcp.pop %v2712
    %v2719 = vrcp.pop %v2715
    %v2720 = vmul.f32 %v2697, %v2716
    %v2721 = vmul.f32 %v2699, %v2717
    %v2722 = vmul.f32 %v2701, %v2718
    %v2723 = vmul.f32 %v2703, %v2719
    %v2724 = vpack.c.bf16 %v2720, %v2720
    %v2725 = vpack.c.bf16 %v2721, %v2721
    %v2726 = vpack.c.bf16 %v2722, %v2722
    %v2727 = vpack.c.bf16 %v2723, %v2723
    %v2730 = vunpack.c.l.b16 %v2724
    %v2731 = vunpack.c.l.b16 %v2725
    %v2732 = vpack.c.b16 %v2731, %v2730
    %v2735 = vunpack.c.l.b16 %v2624
    %v2736 = vunpack.c.l.b16 %v2625
    %v2737 = vpack.c.b16 %v2736, %v2735
    %v2740 = vsel %vm784, %v2732, 0
    %2742 = vmatpush.bf16.msra.mxu0 0
    %2743 = vmatpush.bf16.msra.mxu0 0
    %2744 = vmatpush.bf16.msra.mxu0 0
    %2745 = vmatpush.bf16.msra.mxu0 0
    %2746 = vmatpush.bf16.msra.mxu0 0
    %2747 = vmatpush.bf16.msra.mxu0 0
    %2748 = vmatpush.bf16.msra.mxu0 0
    %2749 = vmatpush.bf16.msra.mxu0 %v2737
    %2750 = vmatmul.bf16.gmra.mxu0 %v2740
    %v2751 = vpop.f32.mrf.mxu0
    %v2752 = vadd.f32 0.0, %v2751
    %v2753 = vpop.f32.mrf.mxu0
    %v2754 = vadd.f32 0.0, %v2753
    %2755 = vdwg.mxu0
    %v2758 = vunpack.c.l.b16 %v2726
    %v2759 = vunpack.c.l.b16 %v2727
    %v2760 = vpack.c.b16 %v2759, %v2758
    %v2763 = vunpack.c.l.b16 %v2626
    %v2764 = vunpack.c.l.b16 %v2627
    %v2765 = vpack.c.b16 %v2764, %v2763
    %v2768 = vsel %vm784, %v2760, 0
    %2770 = vmatpush.bf16.msra.mxu0 0
    %2771 = vmatpush.bf16.msra.mxu0 0
    %2772 = vmatpush.bf16.msra.mxu0 0
    %2773 = vmatpush.bf16.msra.mxu0 0
    %2774 = vmatpush.bf16.msra.mxu0 0
    %2775 = vmatpush.bf16.msra.mxu0 0
    %2776 = vmatpush.bf16.msra.mxu0 0
    %2777 = vmatpush.bf16.msra.mxu0 %v2765
    %2778 = vmatmul.bf16.gmra.mxu0 %v2768
    %v2779 = vpop.f32.mrf.mxu0
    %v2780 = vadd.f32 0.0, %v2779
    %v2781 = vpop.f32.mrf.mxu0
    %v2782 = vadd.f32 0.0, %v2781
    %2783 = vdwg.mxu0
    %v2784 = vmul.f32 %v2752, %v2141
    %v2785 = vmul.f32 %v2754, %v2146
    %v2786 = vmul.f32 %v2780, %v2151
    %v2787 = vmul.f32 %v2782, %v2156
    %v2788 = vpack.c.bf16 %v2784, %v2784
    %v2789 = vpack.c.bf16 %v2785, %v2785
    %v2790 = vpack.c.bf16 %v2786, %v2786
    %v2791 = vpack.c.bf16 %v2787, %v2787
    %v2793 = vperm.slane %v2395, 0
    %v2799 = vunpack.c.l.b16 %v2788
    %v2800 = vunpack.c.l.b16 %v2789
    %v2801 = vunpack.c.l.b16 %v2790
    %v2802 = vunpack.c.l.b16 %v2791
    %v2803 = vpack.c.b16 %v2800, %v2799
    %v2804 = vpack.c.b16 %v2802, %v2801
    %v2823 = vunpack.c.l.b16 %v2378
    %v2824 = vunpack.c.l.b16 %v2379
    %v2825 = vunpack.c.l.b16 %v2380
    %v2826 = vunpack.c.l.b16 %v2381
    %v2827 = vunpack.c.l.b16 %v2382
    %v2828 = vunpack.c.l.b16 %v2383
    %v2829 = vunpack.c.l.b16 %v2384
    %v2830 = vunpack.c.l.b16 %v2385
    %v2831 = vunpack.c.l.b16 %v2386
    %v2832 = vunpack.c.l.b16 %v2387
    %v2833 = vunpack.c.l.b16 %v2388
    %v2834 = vunpack.c.l.b16 %v2389
    %v2835 = vunpack.c.l.b16 %v2390
    %v2836 = vunpack.c.l.b16 %v2391
    %v2837 = vunpack.c.l.b16 %v2392
    %v2838 = vunpack.c.l.b16 %v2393
    %v2839 = vpack.c.b16 %v2824, %v2823
    %v2840 = vpack.c.b16 %v2826, %v2825
    %v2841 = vpack.c.b16 %v2828, %v2827
    %v2842 = vpack.c.b16 %v2830, %v2829
    %v2843 = vpack.c.b16 %v2832, %v2831
    %v2844 = vpack.c.b16 %v2834, %v2833
    %v2845 = vpack.c.b16 %v2836, %v2835
    %v2846 = vpack.c.b16 %v2838, %v2837
    %2855 = vmatpush.bf16.msra.mxu0 %v2846
    %2856 = vmatpush.bf16.msra.mxu0 %v2845
    %2857 = vmatpush.bf16.msra.mxu0 %v2844
    %2858 = vmatpush.bf16.msra.mxu0 %v2843
    %2859 = vmatpush.bf16.msra.mxu0 %v2842
    %2860 = vmatpush.bf16.msra.mxu0 %v2841
    %2861 = vmatpush.bf16.msra.mxu0 %v2840
    %2862 = vmatpush.bf16.msra.mxu0 %v2839
    %2863 = vmatmul.bf16.gmra.mxu0 %v2803
    %v2864 = vpop.f32.mrf.mxu0
    %v2865 = vadd.f32 %v2793, %v2864
    %v2866 = vpop.f32.mrf.mxu0
    %v2867 = vadd.f32 %v2793, %v2866
    %2868 = vmatmul.bf16.gmra.mxu0 %v2804
    %v2869 = vpop.f32.mrf.mxu0
    %v2870 = vadd.f32 %v2793, %v2869
    %v2871 = vpop.f32.mrf.mxu0
    %v2872 = vadd.f32 %v2793, %v2871
    %2873 = vdwg.mxu0
    %v2874 = vmax.f32 %v2865, 0.0
    %v2875 = vmax.f32 %v2867, 0.0
    %v2876 = vmax.f32 %v2870, 0.0
    %v2877 = vmax.f32 %v2872, 0.0
    %v2878 = vpack.c.bf16 %v2875, %v2874
    %v2879 = vpack.c.bf16 %v2877, %v2876
    %v2881 = vperm.slane %v2414, 0
    %v2899 = vunpack.c.l.b16 %v2397
    %v2900 = vunpack.c.l.b16 %v2398
    %v2901 = vunpack.c.l.b16 %v2399
    %v2902 = vunpack.c.l.b16 %v2400
    %v2903 = vunpack.c.l.b16 %v2401
    %v2904 = vunpack.c.l.b16 %v2402
    %v2905 = vunpack.c.l.b16 %v2403
    %v2906 = vunpack.c.l.b16 %v2404
    %v2907 = vunpack.c.l.b16 %v2405
    %v2908 = vunpack.c.l.b16 %v2406
    %v2909 = vunpack.c.l.b16 %v2407
    %v2910 = vunpack.c.l.b16 %v2408
    %v2911 = vunpack.c.l.b16 %v2409
    %v2912 = vunpack.c.l.b16 %v2410
    %v2913 = vunpack.c.l.b16 %v2411
    %v2914 = vunpack.c.l.b16 %v2412
    %v2915 = vpack.c.b16 %v2900, %v2899
    %v2916 = vpack.c.b16 %v2902, %v2901
    %v2917 = vpack.c.b16 %v2904, %v2903
    %v2918 = vpack.c.b16 %v2906, %v2905
    %v2919 = vpack.c.b16 %v2908, %v2907
    %v2920 = vpack.c.b16 %v2910, %v2909
    %v2921 = vpack.c.b16 %v2912, %v2911
    %v2922 = vpack.c.b16 %v2914, %v2913
    %2931 = vmatpush.bf16.msra.mxu0 %v2922
    %2932 = vmatpush.bf16.msra.mxu0 %v2921
    %2933 = vmatpush.bf16.msra.mxu0 %v2920
    %2934 = vmatpush.bf16.msra.mxu0 %v2919
    %2935 = vmatpush.bf16.msra.mxu0 %v2918
    %2936 = vmatpush.bf16.msra.mxu0 %v2917
    %2937 = vmatpush.bf16.msra.mxu0 %v2916
    %2938 = vmatpush.bf16.msra.mxu0 %v2915
    %2939 = vmatmul.bf16.gmra.mxu0 %v2878
    %v2940 = vpop.f32.mrf.mxu0
    %v2941 = vadd.f32 %v2881, %v2940
    %v2942 = vpop.f32.mrf.mxu0
    %v2943 = vadd.f32 %v2881, %v2942
    %2944 = vmatmul.bf16.gmra.mxu0 %v2879
    %v2945 = vpop.f32.mrf.mxu0
    %v2946 = vadd.f32 %v2881, %v2945
    %v2947 = vpop.f32.mrf.mxu0
    %v2948 = vadd.f32 %v2881, %v2947
    %2949 = vdwg.mxu0
    %v2950 = vpack.c.bf16 %v2943, %v2941
    %v2951 = vpack.c.bf16 %v2948, %v2946
    %v2952 = vld [vmem:[#allocation22] sm:$0xf]
    %v2953 = vld [vmem:[#allocation22 + $0x4] sm:$0xf]
    %v2954 = vld [vmem:[#allocation22 + $0x8] sm:$0xf]
    %v2955 = vld [vmem:[#allocation22 + $0xc] sm:$0xf]
    %v2956 = vld [vmem:[#allocation22 + $0x10] sm:$0xf]
    %v2957 = vld [vmem:[#allocation22 + $0x14] sm:$0xf]
    %v2958 = vld [vmem:[#allocation22 + $0x18] sm:$0xf]
    %v2959 = vld [vmem:[#allocation22 + $0x1c] sm:$0xf]
    %v2960 = vld [vmem:[#allocation22 + $0x20] sm:$0xf]
    %v2961 = vld [vmem:[#allocation22 + $0x24] sm:$0xf]
    %v2962 = vld [vmem:[#allocation22 + $0x28] sm:$0xf]
    %v2963 = vld [vmem:[#allocation22 + $0x2c] sm:$0xf]
    %v2964 = vld [vmem:[#allocation22 + $0x30] sm:$0xf]
    %v2965 = vld [vmem:[#allocation22 + $0x34] sm:$0xf]
    %v2966 = vld [vmem:[#allocation22 + $0x38] sm:$0xf]
    %v2967 = vld [vmem:[#allocation22 + $0x3c] sm:$0xf]
    %v2968 = vld [vmem:[#allocation23] sm:$0xf]
    %v2969 = vld [vmem:[#allocation23 + $0x4] sm:$0xf]
    %v2970 = vld [vmem:[#allocation23 + $0x8] sm:$0xf]
    %v2971 = vld [vmem:[#allocation23 + $0xc] sm:$0xf]
    %v2972 = vld [vmem:[#allocation23 + $0x10] sm:$0xf]
    %v2973 = vld [vmem:[#allocation23 + $0x14] sm:$0xf]
    %v2974 = vld [vmem:[#allocation23 + $0x18] sm:$0xf]
    %v2975 = vld [vmem:[#allocation23 + $0x1c] sm:$0xf]
    %v2976 = vld [vmem:[#allocation23 + $0x20] sm:$0xf]
    %v2977 = vld [vmem:[#allocation23 + $0x24] sm:$0xf]
    %v2978 = vld [vmem:[#allocation23 + $0x28] sm:$0xf]
    %v2979 = vld [vmem:[#allocation23 + $0x2c] sm:$0xf]
    %v2980 = vld [vmem:[#allocation23 + $0x30] sm:$0xf]
    %v2981 = vld [vmem:[#allocation23 + $0x34] sm:$0xf]
    %v2982 = vld [vmem:[#allocation23 + $0x38] sm:$0xf]
    %v2983 = vld [vmem:[#allocation23 + $0x3c] sm:$0xf]
    %v3000 = vunpack.c.l.b16 %v2968
    %v3001 = vunpack.c.l.b16 %v2969
    %v3002 = vunpack.c.l.b16 %v2970
    %v3003 = vunpack.c.l.b16 %v2971
    %v3004 = vunpack.c.l.b16 %v2972
    %v3005 = vunpack.c.l.b16 %v2973
    %v3006 = vunpack.c.l.b16 %v2974
    %v3007 = vunpack.c.l.b16 %v2975
    %v3008 = vunpack.c.l.b16 %v2976
    %v3009 = vunpack.c.l.b16 %v2977
    %v3010 = vunpack.c.l.b16 %v2978
    %v3011 = vunpack.c.l.b16 %v2979
    %v3012 = vunpack.c.l.b16 %v2980
    %v3013 = vunpack.c.l.b16 %v2981
    %v3014 = vunpack.c.l.b16 %v2982
    %v3015 = vunpack.c.l.b16 %v2983
    %v3016 = vpack.c.b16 %v3001, %v3000
    %v3017 = vpack.c.b16 %v3003, %v3002
    %v3018 = vpack.c.b16 %v3005, %v3004
    %v3019 = vpack.c.b16 %v3007, %v3006
    %v3020 = vpack.c.b16 %v3009, %v3008
    %v3021 = vpack.c.b16 %v3011, %v3010
    %v3022 = vpack.c.b16 %v3013, %v3012
    %v3023 = vpack.c.b16 %v3015, %v3014
    %3032 = vmatpush.bf16.msra.mxu0 %v3023
    %3033 = vmatpush.bf16.msra.mxu0 %v3022
    %3034 = vmatpush.bf16.msra.mxu0 %v3021
    %3035 = vmatpush.bf16.msra.mxu0 %v3020
    %3036 = vmatpush.bf16.msra.mxu0 %v3019
    %3037 = vmatpush.bf16.msra.mxu0 %v3018
    %3038 = vmatpush.bf16.msra.mxu0 %v3017
    %3039 = vmatpush.bf16.msra.mxu0 %v3016
    %3040 = vmatmul.bf16.gmra.mxu0 %v2950
    %v3041 = vpop.f32.mrf.mxu0
    %v3042 = vadd.f32 0.0, %v3041
    %v3043 = vpop.f32.mrf.mxu0
    %v3044 = vadd.f32 0.0, %v3043
    %3045 = vmatmul.bf16.gmra.mxu0 %v2951
    %v3046 = vpop.f32.mrf.mxu0
    %v3047 = vadd.f32 0.0, %v3046
    %v3048 = vpop.f32.mrf.mxu0
    %v3049 = vadd.f32 0.0, %v3048
    %3050 = vdwg.mxu0
    %v3067 = vunpack.c.l.b16 %v2952
    %v3068 = vunpack.c.l.b16 %v2953
    %v3069 = vunpack.c.l.b16 %v2954
    %v3070 = vunpack.c.l.b16 %v2955
    %v3071 = vunpack.c.l.b16 %v2956
    %v3072 = vunpack.c.l.b16 %v2957
    %v3073 = vunpack.c.l.b16 %v2958
    %v3074 = vunpack.c.l.b16 %v2959
    %v3075 = vunpack.c.l.b16 %v2960
    %v3076 = vunpack.c.l.b16 %v2961
    %v3077 = vunpack.c.l.b16 %v2962
    %v3078 = vunpack.c.l.b16 %v2963
    %v3079 = vunpack.c.l.b16 %v2964
    %v3080 = vunpack.c.l.b16 %v2965
    %v3081 = vunpack.c.l.b16 %v2966
    %v3082 = vunpack.c.l.b16 %v2967
    %v3083 = vpack.c.b16 %v3068, %v3067
    %v3084 = vpack.c.b16 %v3070, %v3069
    %v3085 = vpack.c.b16 %v3072, %v3071
    %v3086 = vpack.c.b16 %v3074, %v3073
    %v3087 = vpack.c.b16 %v3076, %v3075
    %v3088 = vpack.c.b16 %v3078, %v3077
    %v3089 = vpack.c.b16 %v3080, %v3079
    %v3090 = vpack.c.b16 %v3082, %v3081
    %3099 = vmatpush.bf16.msra.mxu0 %v3090
    %3100 = vmatpush.bf16.msra.mxu0 %v3089
    %3101 = vmatpush.bf16.msra.mxu0 %v3088
    %3102 = vmatpush.bf16.msra.mxu0 %v3087
    %3103 = vmatpush.bf16.msra.mxu0 %v3086
    %3104 = vmatpush.bf16.msra.mxu0 %v3085
    %3105 = vmatpush.bf16.msra.mxu0 %v3084
    %3106 = vmatpush.bf16.msra.mxu0 %v3083
    %3107 = vmatmul.bf16.gmra.mxu0 %v1673
    %v3108 = vpop.f32.mrf.mxu0
    %v3109 = vadd.f32 %v3042, %v3108
    %v3110 = vpop.f32.mrf.mxu0
    %v3111 = vadd.f32 %v3044, %v3110
    %3112 = vmatmul.bf16.gmra.mxu0 %v1674
    %v3113 = vpop.f32.mrf.mxu0
    %v3114 = vadd.f32 %v3047, %v3113
    %v3115 = vpop.f32.mrf.mxu0
    %v3116 = vadd.f32 %v3049, %v3115
    %3117 = vdwg.mxu0
    %v3118 = vld [vmem:[%s20] sm:$0x1]
    %v3120 = vperm.slane %v3118, 0
    %v3122 = vadd.f32 %v3109, %v3120
    %v3123 = vadd.f32 %v3111, %v3120
    %v3124 = vadd.f32 %v3114, %v3120
    %v3125 = vadd.f32 %v3116, %v3120
    %v3126 = vpack.c.bf16 %v3122, %v3122
    %v3127 = vpack.c.bf16 %v3123, %v3123
    %v3128 = vpack.c.bf16 %v3124, %v3124
    %v3129 = vpack.c.bf16 %v3125, %v3125
    %v3130 = vld [vmem:[#allocation26] sm:$0xf]
    %v3131 = vld [vmem:[#allocation26 + $0x4] sm:$0xf]
    %v3132 = vld [vmem:[#allocation26 + $0x8] sm:$0xf]
    %v3133 = vld [vmem:[#allocation26 + $0xc] sm:$0xf]
    %v3134 = vld [vmem:[#allocation26 + $0x10] sm:$0xf]
    %v3135 = vld [vmem:[#allocation26 + $0x14] sm:$0xf]
    %v3136 = vld [vmem:[#allocation26 + $0x18] sm:$0xf]
    %v3137 = vld [vmem:[#allocation26 + $0x1c] sm:$0xf]
    %v3138 = vld [vmem:[#allocation26 + $0x20] sm:$0xf]
    %v3139 = vld [vmem:[#allocation26 + $0x24] sm:$0xf]
    %v3140 = vld [vmem:[#allocation26 + $0x28] sm:$0xf]
    %v3141 = vld [vmem:[#allocation26 + $0x2c] sm:$0xf]
    %v3142 = vld [vmem:[#allocation26 + $0x30] sm:$0xf]
    %v3143 = vld [vmem:[#allocation26 + $0x34] sm:$0xf]
    %v3144 = vld [vmem:[#allocation26 + $0x38] sm:$0xf]
    %v3145 = vld [vmem:[#allocation26 + $0x3c] sm:$0xf]
    %v3150 = vunpack.c.l.b16 %v3126
    %v3151 = vunpack.c.l.b16 %v3127
    %v3152 = vunpack.c.l.b16 %v3128
    %v3153 = vunpack.c.l.b16 %v3129
    %v3154 = vpack.c.b16 %v3151, %v3150
    %v3155 = vpack.c.b16 %v3153, %v3152
    %v3174 = vunpack.c.l.b16 %v3130
    %v3175 = vunpack.c.l.b16 %v3131
    %v3176 = vunpack.c.l.b16 %v3132
    %v3177 = vunpack.c.l.b16 %v3133
    %v3178 = vunpack.c.l.b16 %v3134
    %v3179 = vunpack.c.l.b16 %v3135
    %v3180 = vunpack.c.l.b16 %v3136
    %v3181 = vunpack.c.l.b16 %v3137
    %v3182 = vunpack.c.l.b16 %v3138
    %v3183 = vunpack.c.l.b16 %v3139
    %v3184 = vunpack.c.l.b16 %v3140
    %v3185 = vunpack.c.l.b16 %v3141
    %v3186 = vunpack.c.l.b16 %v3142
    %v3187 = vunpack.c.l.b16 %v3143
    %v3188 = vunpack.c.l.b16 %v3144
    %v3189 = vunpack.c.l.b16 %v3145
    %v3190 = vpack.c.b16 %v3175, %v3174
    %v3191 = vpack.c.b16 %v3177, %v3176
    %v3192 = vpack.c.b16 %v3179, %v3178
    %v3193 = vpack.c.b16 %v3181, %v3180
    %v3194 = vpack.c.b16 %v3183, %v3182
    %v3195 = vpack.c.b16 %v3185, %v3184
    %v3196 = vpack.c.b16 %v3187, %v3186
    %v3197 = vpack.c.b16 %v3189, %v3188
    %3206 = vmatpush.bf16.msra.mxu0 %v3197
    %3207 = vmatpush.bf16.msra.mxu0 %v3196
    %3208 = vmatpush.bf16.msra.mxu0 %v3195
    %3209 = vmatpush.bf16.msra.mxu0 %v3194
    %3210 = vmatpush.bf16.msra.mxu0 %v3193
    %3211 = vmatpush.bf16.msra.mxu0 %v3192
    %3212 = vmatpush.bf16.msra.mxu0 %v3191
    %3213 = vmatpush.bf16.msra.mxu0 %v3190
    %3214 = vmatmul.bf16.gmra.mxu0 %v3154
    %v3215 = vpop.f32.mrf.mxu0
    %v3216 = vadd.f32 0.0, %v3215
    %v3217 = vpop.f32.mrf.mxu0
    %v3218 = vadd.f32 0.0, %v3217
    %3219 = vmatmul.bf16.gmra.mxu0 %v3155
    %v3220 = vpop.f32.mrf.mxu0
    %v3221 = vadd.f32 0.0, %v3220
    %v3222 = vpop.f32.mrf.mxu0
    %v3223 = vadd.f32 0.0, %v3222
    %3224 = vdwg.mxu0
    %v3225 = vpack.c.bf16 %v3216, %v3216
    %v3226 = vpack.c.bf16 %v3218, %v3218
    %v3227 = vpack.c.bf16 %v3221, %v3221
    %v3228 = vpack.c.bf16 %v3223, %v3223
    %v3229 = vld [vmem:[#allocation28] sm:$0xf]
    %v3230 = vld [vmem:[#allocation28 + $0x4] sm:$0xf]
    %v3231 = vld [vmem:[#allocation28 + $0x8] sm:$0xf]
    %v3232 = vld [vmem:[#allocation28 + $0xc] sm:$0xf]
    %v3233 = vld [vmem:[#allocation28 + $0x10] sm:$0xf]
    %v3234 = vld [vmem:[#allocation28 + $0x14] sm:$0xf]
    %v3235 = vld [vmem:[#allocation28 + $0x18] sm:$0xf]
    %v3236 = vld [vmem:[#allocation28 + $0x1c] sm:$0xf]
    %v3237 = vld [vmem:[#allocation28 + $0x20] sm:$0xf]
    %v3238 = vld [vmem:[#allocation28 + $0x24] sm:$0xf]
    %v3239 = vld [vmem:[#allocation28 + $0x28] sm:$0xf]
    %v3240 = vld [vmem:[#allocation28 + $0x2c] sm:$0xf]
    %v3241 = vld [vmem:[#allocation28 + $0x30] sm:$0xf]
    %v3242 = vld [vmem:[#allocation28 + $0x34] sm:$0xf]
    %v3243 = vld [vmem:[#allocation28 + $0x38] sm:$0xf]
    %v3244 = vld [vmem:[#allocation28 + $0x3c] sm:$0xf]
    %v3261 = vunpack.c.l.b16 %v3229
    %v3262 = vunpack.c.l.b16 %v3230
    %v3263 = vunpack.c.l.b16 %v3231
    %v3264 = vunpack.c.l.b16 %v3232
    %v3265 = vunpack.c.l.b16 %v3233
    %v3266 = vunpack.c.l.b16 %v3234
    %v3267 = vunpack.c.l.b16 %v3235
    %v3268 = vunpack.c.l.b16 %v3236
    %v3269 = vunpack.c.l.b16 %v3237
    %v3270 = vunpack.c.l.b16 %v3238
    %v3271 = vunpack.c.l.b16 %v3239
    %v3272 = vunpack.c.l.b16 %v3240
    %v3273 = vunpack.c.l.b16 %v3241
    %v3274 = vunpack.c.l.b16 %v3242
    %v3275 = vunpack.c.l.b16 %v3243
    %v3276 = vunpack.c.l.b16 %v3244
    %v3277 = vpack.c.b16 %v3262, %v3261
    %v3278 = vpack.c.b16 %v3264, %v3263
    %v3279 = vpack.c.b16 %v3266, %v3265
    %v3280 = vpack.c.b16 %v3268, %v3267
    %v3281 = vpack.c.b16 %v3270, %v3269
    %v3282 = vpack.c.b16 %v3272, %v3271
    %v3283 = vpack.c.b16 %v3274, %v3273
    %v3284 = vpack.c.b16 %v3276, %v3275
    %3293 = vmatpush.bf16.msra.mxu0 %v3284
    %3294 = vmatpush.bf16.msra.mxu0 %v3283
    %3295 = vmatpush.bf16.msra.mxu0 %v3282
    %3296 = vmatpush.bf16.msra.mxu0 %v3281
    %3297 = vmatpush.bf16.msra.mxu0 %v3280
    %3298 = vmatpush.bf16.msra.mxu0 %v3279
    %3299 = vmatpush.bf16.msra.mxu0 %v3278
    %3300 = vmatpush.bf16.msra.mxu0 %v3277
    %3301 = vmatmul.bf16.gmra.mxu0 %v3154
    %v3302 = vpop.f32.mrf.mxu0
    %v3303 = vadd.f32 0.0, %v3302
    %v3304 = vpop.f32.mrf.mxu0
    %v3305 = vadd.f32 0.0, %v3304
    %3306 = vmatmul.bf16.gmra.mxu0 %v3155
    %v3307 = vpop.f32.mrf.mxu0
    %v3308 = vadd.f32 0.0, %v3307
    %v3309 = vpop.f32.mrf.mxu0
    %v3310 = vadd.f32 0.0, %v3309
    %3311 = vdwg.mxu0
    %v3312 = vpack.c.bf16 %v3303, %v3303
    %v3313 = vpack.c.bf16 %v3305, %v3305
    %v3314 = vpack.c.bf16 %v3308, %v3308
    %v3315 = vpack.c.bf16 %v3310, %v3310
    %v3316 = vld [vmem:[#allocation25] sm:$0xf]
    %v3317 = vld [vmem:[#allocation25 + $0x4] sm:$0xf]
    %v3318 = vld [vmem:[#allocation25 + $0x8] sm:$0xf]
    %v3319 = vld [vmem:[#allocation25 + $0xc] sm:$0xf]
    %v3320 = vld [vmem:[#allocation25 + $0x10] sm:$0xf]
    %v3321 = vld [vmem:[#allocation25 + $0x14] sm:$0xf]
    %v3322 = vld [vmem:[#allocation25 + $0x18] sm:$0xf]
    %v3323 = vld [vmem:[#allocation25 + $0x1c] sm:$0xf]
    %v3324 = vld [vmem:[#allocation25 + $0x20] sm:$0xf]
    %v3325 = vld [vmem:[#allocation25 + $0x24] sm:$0xf]
    %v3326 = vld [vmem:[#allocation25 + $0x28] sm:$0xf]
    %v3327 = vld [vmem:[#allocation25 + $0x2c] sm:$0xf]
    %v3328 = vld [vmem:[#allocation25 + $0x30] sm:$0xf]
    %v3329 = vld [vmem:[#allocation25 + $0x34] sm:$0xf]
    %v3330 = vld [vmem:[#allocation25 + $0x38] sm:$0xf]
    %v3331 = vld [vmem:[#allocation25 + $0x3c] sm:$0xf]
    %v3332 = vpack.c.b16 %v3150, %v3150
    %v3333 = vpack.c.b16 %v3152, %v3152
    %v3334 = vunpack.c.l.b16 %v3332
    %v3335 = vunpack.c.l.b16 %v3333
    %v3336 = vrot.slane %v3335, 7
    %vm3337 = vcmask 1041409
    %v3338 = vsel %vm3337, %v3336, %v3334
    %v3339 = vpack.c.b16 %v3338, %v3338
    %v3357 = vunpack.c.l.b16 %v3316
    %v3358 = vunpack.c.l.b16 %v3317
    %v3359 = vunpack.c.l.b16 %v3318
    %v3360 = vunpack.c.l.b16 %v3319
    %v3361 = vunpack.c.l.b16 %v3320
    %v3362 = vunpack.c.l.b16 %v3321
    %v3363 = vunpack.c.l.b16 %v3322
    %v3364 = vunpack.c.l.b16 %v3323
    %v3365 = vunpack.c.l.b16 %v3324
    %v3366 = vunpack.c.l.b16 %v3325
    %v3367 = vunpack.c.l.b16 %v3326
    %v3368 = vunpack.c.l.b16 %v3327
    %v3369 = vunpack.c.l.b16 %v3328
    %v3370 = vunpack.c.l.b16 %v3329
    %v3371 = vunpack.c.l.b16 %v3330
    %v3372 = vunpack.c.l.b16 %v3331
    %v3373 = vpack.c.b16 %v3358, %v3357
    %v3374 = vpack.c.b16 %v3360, %v3359
    %v3375 = vpack.c.b16 %v3362, %v3361
    %v3376 = vpack.c.b16 %v3364, %v3363
    %v3377 = vpack.c.b16 %v3366, %v3365
    %v3378 = vpack.c.b16 %v3368, %v3367
    %v3379 = vpack.c.b16 %v3370, %v3369
    %v3380 = vpack.c.b16 %v3372, %v3371
    %3389 = vmatpush.bf16.msra.mxu0 %v3380
    %3390 = vmatpush.bf16.msra.mxu0 %v3379
    %3391 = vmatpush.bf16.msra.mxu0 %v3378
    %3392 = vmatpush.bf16.msra.mxu0 %v3377
    %3393 = vmatpush.bf16.msra.mxu0 %v3376
    %3394 = vmatpush.bf16.msra.mxu0 %v3375
    %3395 = vmatpush.bf16.msra.mxu0 %v3374
    %3396 = vmatpush.bf16.msra.mxu0 %v3373
    %3397 = vmatmul.bf16.gmra.mxu0 %v3339
    %v3398 = vpop.f32.mrf.mxu0
    %v3399 = vadd.f32 0.0, %v3398
    %v3400 = vpop.f32.mrf.mxu0
    %3401 = vdwg.mxu0
    %v3402 = vpack.c.bf16 %v3399, %v3399
    %v3404 = vrot.slane %v3402, 3
    %vm3405 = vcmask 1040384
    %v3408 = vsel %vm3405, %v3402, %v3404
    %v3410 = vunpack.i.l.s16 %v3408
    %v3411 = vunpack.i.h.s16 %v3408
    %v3412 = vpack.i.b16 %v3410, %v3410
    %v3413 = vperm.slane %v3412, 0
    %v3417 = vunpack.c.l.b16 %v3225
    %v3418 = vunpack.c.l.b16 %v3226
    %v3419 = vpack.c.b16 %v3418, %v3417
    %3421 = vmatpush.bf16.xpose.msra.mxu0 0
    %3422 = vmatpush.bf16.xpose.msra.mxu0 0
    %3423 = vmatpush.bf16.xpose.msra.mxu0 0
    %3424 = vmatpush.bf16.xpose.msra.mxu0 0
    %3425 = vmatpush.bf16.xpose.msra.mxu0 0
    %3426 = vmatpush.bf16.xpose.msra.mxu0 0
    %3427 = vmatpush.bf16.xpose.msra.mxu0 0
    %3428 = vmatpush.bf16.xpose.msra.mxu0 %v3419
    %3429 = vmatmul.bf16.gmra.mxu0 %v3413
    %v3430 = vpop.f32.mrf.mxu0
    %v3431 = vadd.f32 0.0, %v3430
    %v3432 = vpop.f32.mrf.mxu0
    %3433 = vdwg.mxu0
    %v3434 = vpack.i.b16 %v3411, %v3411
    %v3435 = vperm.slane %v3434, 0
    %v3439 = vunpack.c.l.b16 %v3227
    %v3440 = vunpack.c.l.b16 %v3228
    %v3441 = vpack.c.b16 %v3440, %v3439
    %3443 = vmatpush.bf16.xpose.msra.mxu0 0
    %3444 = vmatpush.bf16.xpose.msra.mxu0 0
    %3445 = vmatpush.bf16.xpose.msra.mxu0 0
    %3446 = vmatpush.bf16.xpose.msra.mxu0 0
    %3447 = vmatpush.bf16.xpose.msra.mxu0 0
    %3448 = vmatpush.bf16.xpose.msra.mxu0 0
    %3449 = vmatpush.bf16.xpose.msra.mxu0 0
    %3450 = vmatpush.bf16.xpose.msra.mxu0 %v3441
    %3451 = vmatmul.bf16.gmra.mxu0 %v3435
    %v3452 = vpop.f32.mrf.mxu0
    %v3453 = vadd.f32 0.0, %v3452
    %v3454 = vpop.f32.mrf.mxu0
    %3455 = vdwg.mxu0
    %vm3456 = vcmask 122880
    %v3457 = vsel %vm3456, %v3431, -inf
    %3458 = vmax.xlane.f32.xlu0 %v3457
    %v3459 = vpop.xlane.xlu0 %3458
    %v3460 = vsel %vm3456, %v3453, -inf
    %3461 = vmax.xlane.f32.xlu0 %v3460
    %v3462 = vpop.xlane.xlu0 %3461
    %v3463 = vsub.f32 %v3431, %v3459
    %v3464 = vsub.f32 %v3453, %v3462
    %v3465 = vmul.f32 %v3463, 1.442695
    %v3466 = vpow.pop %v3465
    %v3467 = vmul.f32 %v3464, 1.442695
    %v3468 = vpow.pop %v3467
    %v3469 = vsel %vm3456, %v3466, 0.0
    %3470 = vadd.xlane.f32.xlu0 %v3469
    %v3471 = vpop.xlane.xlu0 %3470
    %v3472 = vsel %vm3456, %v3468, 0.0
    %3473 = vadd.xlane.f32.xlu0 %v3472
    %v3474 = vpop.xlane.xlu0 %3473
    %v3475 = vrcp.pop %v3471
    %v3476 = vrcp.pop %v3474
    %v3477 = vmul.f32 %v3466, %v3475
    %v3478 = vmul.f32 %v3468, %v3476
    %v3479 = vpack.c.bf16 %v3477, %v3477
    %v3480 = vpack.c.bf16 %v3478, %v3478
    %v3483 = vunpack.c.l.b16 %v3312
    %v3484 = vunpack.c.l.b16 %v3313
    %v3485 = vpack.c.b16 %v3484, %v3483
    %v3488 = vsel %vm784, %v3479, 0
    %3490 = vmatpush.bf16.msra.mxu0 0
    %3491 = vmatpush.bf16.msra.mxu0 0
    %3492 = vmatpush.bf16.msra.mxu0 0
    %3493 = vmatpush.bf16.msra.mxu0 0
    %3494 = vmatpush.bf16.msra.mxu0 0
    %3495 = vmatpush.bf16.msra.mxu0 0
    %3496 = vmatpush.bf16.msra.mxu0 0
    %3497 = vmatpush.bf16.msra.mxu0 %v3485
    %3498 = vmatmul.bf16.gmra.mxu0 %v3488
    %v3499 = vpop.f32.mrf.mxu0
    %v3500 = vadd.f32 0.0, %v3499
    %v3501 = vpop.f32.mrf.mxu0
    %3502 = vdwg.mxu0
    %v3505 = vunpack.c.l.b16 %v3314
    %v3506 = vunpack.c.l.b16 %v3315
    %v3507 = vpack.c.b16 %v3506, %v3505
    %v3510 = vsel %vm784, %v3480, 0
    %3512 = vmatpush.bf16.msra.mxu0 0
    %3513 = vmatpush.bf16.msra.mxu0 0
    %3514 = vmatpush.bf16.msra.mxu0 0
    %3515 = vmatpush.bf16.msra.mxu0 0
    %3516 = vmatpush.bf16.msra.mxu0 0
    %3517 = vmatpush.bf16.msra.mxu0 0
    %3518 = vmatpush.bf16.msra.mxu0 0
    %3519 = vmatpush.bf16.msra.mxu0 %v3507
    %3520 = vmatmul.bf16.gmra.mxu0 %v3510
    %v3521 = vpop.f32.mrf.mxu0
    %v3522 = vadd.f32 0.0, %v3521
    %v3523 = vpop.f32.mrf.mxu0
    %3524 = vdwg.mxu0
    %v3525 = vpack.c.bf16 %v3500, %v3500
    %v3526 = vpack.c.bf16 %v3522, %v3522
    %v3527 = vld [vmem:[#allocation29] sm:$0xf]
    %v3528 = vld [vmem:[#allocation29 + $0x4] sm:$0xf]
    %v3529 = vld [vmem:[#allocation29 + $0x8] sm:$0xf]
    %v3530 = vld [vmem:[#allocation29 + $0xc] sm:$0xf]
    %v3531 = vld [vmem:[#allocation29 + $0x10] sm:$0xf]
    %v3532 = vld [vmem:[#allocation29 + $0x14] sm:$0xf]
    %v3533 = vld [vmem:[#allocation29 + $0x18] sm:$0xf]
    %v3534 = vld [vmem:[#allocation29 + $0x1c] sm:$0xf]
    %v3535 = vld [vmem:[#allocation29 + $0x20] sm:$0xf]
    %v3536 = vld [vmem:[#allocation29 + $0x24] sm:$0xf]
    %v3537 = vld [vmem:[#allocation29 + $0x28] sm:$0xf]
    %v3538 = vld [vmem:[#allocation29 + $0x2c] sm:$0xf]
    %v3539 = vld [vmem:[#allocation29 + $0x30] sm:$0xf]
    %v3540 = vld [vmem:[#allocation29 + $0x34] sm:$0xf]
    %v3541 = vld [vmem:[#allocation29 + $0x38] sm:$0xf]
    %v3542 = vld [vmem:[#allocation29 + $0x3c] sm:$0xf]
    %v3543 = vld [vmem:[%s25] sm:$0x1]
    %v3545 = vperm.slane %v3543, 0
    %v3549 = vunpack.c.l.b16 %v3525
    %v3550 = vunpack.c.l.b16 %v3526
    %v3551 = vrot.slane %v3550, 7
    %v3552 = vsel %vm3337, %v3551, %v3549
    %v3553 = vpack.c.b16 %v3552, %v3552
    %v3571 = vunpack.c.l.b16 %v3527
    %v3572 = vunpack.c.l.b16 %v3528
    %v3573 = vunpack.c.l.b16 %v3529
    %v3574 = vunpack.c.l.b16 %v3530
    %v3575 = vunpack.c.l.b16 %v3531
    %v3576 = vunpack.c.l.b16 %v3532
    %v3577 = vunpack.c.l.b16 %v3533
    %v3578 = vunpack.c.l.b16 %v3534
    %v3579 = vunpack.c.l.b16 %v3535
    %v3580 = vunpack.c.l.b16 %v3536
    %v3581 = vunpack.c.l.b16 %v3537
    %v3582 = vunpack.c.l.b16 %v3538
    %v3583 = vunpack.c.l.b16 %v3539
    %v3584 = vunpack.c.l.b16 %v3540
    %v3585 = vunpack.c.l.b16 %v3541
    %v3586 = vunpack.c.l.b16 %v3542
    %v3587 = vpack.c.b16 %v3572, %v3571
    %v3588 = vpack.c.b16 %v3574, %v3573
    %v3589 = vpack.c.b16 %v3576, %v3575
    %v3590 = vpack.c.b16 %v3578, %v3577
    %v3591 = vpack.c.b16 %v3580, %v3579
    %v3592 = vpack.c.b16 %v3582, %v3581
    %v3593 = vpack.c.b16 %v3584, %v3583
    %v3594 = vpack.c.b16 %v3586, %v3585
    %3603 = vmatpush.bf16.msra.mxu0 %v3594
    %3604 = vmatpush.bf16.msra.mxu0 %v3593
    %3605 = vmatpush.bf16.msra.mxu0 %v3592
    %3606 = vmatpush.bf16.msra.mxu0 %v3591
    %3607 = vmatpush.bf16.msra.mxu0 %v3590
    %3608 = vmatpush.bf16.msra.mxu0 %v3589
    %3609 = vmatpush.bf16.msra.mxu0 %v3588
    %3610 = vmatpush.bf16.msra.mxu0 %v3587
    %3611 = vmatmul.bf16.gmra.mxu0 %v3553
    %v3612 = vpop.f32.mrf.mxu0
    %v3613 = vadd.f32 %v3545, %v3612
    %v3614 = vpop.f32.mrf.mxu0
    %3615 = vdwg.mxu0
    %v3616 = vtanh.pop %v3613
    %v3617 = vpack.c.bf16 %v3616, %v3616
    %v3618 = vld [vmem:[#allocation31] sm:$0xf]
    %v3619 = vld [vmem:[#allocation31 + $0x4] sm:$0xf]
    %v3620 = vld [vmem:[#allocation31 + $0x8] sm:$0xf]
    %v3621 = vld [vmem:[#allocation31 + $0xc] sm:$0xf]
    %v3622 = vld [vmem:[#allocation31 + $0x10] sm:$0xf]
    %v3623 = vld [vmem:[#allocation31 + $0x14] sm:$0xf]
    %v3624 = vld [vmem:[#allocation31 + $0x18] sm:$0xf]
    %v3625 = vld [vmem:[#allocation31 + $0x1c] sm:$0xf]
    %v3626 = vld [vmem:[#allocation31 + $0x20] sm:$0xf]
    %v3627 = vld [vmem:[#allocation31 + $0x24] sm:$0xf]
    %v3628 = vld [vmem:[#allocation31 + $0x28] sm:$0xf]
    %v3629 = vld [vmem:[#allocation31 + $0x2c] sm:$0xf]
    %v3630 = vld [vmem:[#allocation31 + $0x30] sm:$0xf]
    %v3631 = vld [vmem:[#allocation31 + $0x34] sm:$0xf]
    %v3632 = vld [vmem:[#allocation31 + $0x38] sm:$0xf]
    %v3633 = vld [vmem:[#allocation31 + $0x3c] sm:$0xf]
    %v3634 = vld [vmem:[%s27] sm:$0x1]
    %v3636 = vperm.slane %v3634, 0
    %v3654 = vunpack.c.l.b16 %v3618
    %v3655 = vunpack.c.l.b16 %v3619
    %v3656 = vunpack.c.l.b16 %v3620
    %v3657 = vunpack.c.l.b16 %v3621
    %v3658 = vunpack.c.l.b16 %v3622
    %v3659 = vunpack.c.l.b16 %v3623
    %v3660 = vunpack.c.l.b16 %v3624
    %v3661 = vunpack.c.l.b16 %v3625
    %v3662 = vunpack.c.l.b16 %v3626
    %v3663 = vunpack.c.l.b16 %v3627
    %v3664 = vunpack.c.l.b16 %v3628
    %v3665 = vunpack.c.l.b16 %v3629
    %v3666 = vunpack.c.l.b16 %v3630
    %v3667 = vunpack.c.l.b16 %v3631
    %v3668 = vunpack.c.l.b16 %v3632
    %v3669 = vunpack.c.l.b16 %v3633
    %v3670 = vpack.c.b16 %v3655, %v3654
    %v3671 = vpack.c.b16 %v3657, %v3656
    %v3672 = vpack.c.b16 %v3659, %v3658
    %v3673 = vpack.c.b16 %v3661, %v3660
    %v3674 = vpack.c.b16 %v3663, %v3662
    %v3675 = vpack.c.b16 %v3665, %v3664
    %v3676 = vpack.c.b16 %v3667, %v3666
    %v3677 = vpack.c.b16 %v3669, %v3668
    %3686 = vmatpush.bf16.msra.mxu0 %v3677
    %3687 = vmatpush.bf16.msra.mxu0 %v3676
    %3688 = vmatpush.bf16.msra.mxu0 %v3675
    %3689 = vmatpush.bf16.msra.mxu0 %v3674
    %3690 = vmatpush.bf16.msra.mxu0 %v3673
    %3691 = vmatpush.bf16.msra.mxu0 %v3672
    %3692 = vmatpush.bf16.msra.mxu0 %v3671
    %3693 = vmatpush.bf16.msra.mxu0 %v3670
    %3694 = vmatmul.bf16.gmra.mxu0 %v3617
    %v3695 = vpop.f32.mrf.mxu0
    %v3696 = vadd.f32 %v3636, %v3695
    %v3697 = vpop.f32.mrf.mxu0
    %3698 = vdwg.mxu0
    %v3700 = vrot.slane %v3696, 1
    %3702 = vst [vmem:[#allocation32] sm:$0x1] %v3696
    %3703 = vst [vmem:[#allocation32 + $0x1] sm:$0x1] %v3700
    // Predicated region
    $region190: #{tpu_custom_call.1} parent=1 // pred_check
      _
    $region191: #{tpu_custom_call.1} parent=1 // pred_check_branch
      %3705 = sbr.rel (0) target = $region193
    $region192: #{tpu_custom_call.1} parent=1 // pred_region
      %3707 = vsyncadd [#allocation4], 0
      %s3708 = sshll.u32 [#allocation32], 4
      %s3709 = int_to_ptr.vmem [resolvable:$true] %s3708
      %s3710 = sshll.u32 %s28, 4
      %s3711 = int_to_ptr.hbm [resolvable:$true] %s3710
      %3716 = dma.vmem_to_hbm [thread:$0]  %s3709, 32, %s3711, [#allocation4], 16, 16, 1
    $region193: #{tpu_custom_call.1} parent=1 // pred_fallthru
      _
    // Predicated region
    $region194: #{tpu_custom_call.1} parent=1 // pred_check
      _
    $region195: #{tpu_custom_call.1} parent=1 // pred_check_branch
      %3718 = sbr.rel (0) target = $region197
    $region196: #{tpu_custom_call.1} parent=1 // pred_region
      %3720 = dma.done [#allocation4], 32
    $region197: #{tpu_custom_call.1} parent=1 // pred_fallthru
      _
    %3721 = vsyncpa [#allocation3], 1
    %3722 = vsyncpa [#allocation6], 1
    %3723 = vsyncpa [#allocation9], 1
    %3724 = vsyncpa [#allocation12], 1
    %3725 = vsyncpa [#allocation15], 1
    %3726 = vsyncpa [#allocation18], 1
    %3727 = vsyncpa [#allocation21], 1
    %3728 = vsyncpa [#allocation24], 1
    %3729 = vsyncpa [#allocation27], 1
    %3730 = vsyncpa [#allocation30], 1
    %3731 = vsyncpa [#allocation4], 1

</llo_original>
